<compile_context>
chip_gen: v7x
topology: tpu7x:2x2x1
jax: 0.10.0
libtpu: 0.0.40
codegen_flags: <defaults>
</compile_context>

<pallas_src>
import jax
import jax.numpy as jnp
from jax.experimental import pallas as pl
from jax.experimental.pallas import tpu as pltpu

KH = KW = 3
STRIDE = 2
PAD = 1
MAX_ROW_TILE = 8   # output rows per grid step (bounds the in-kernel unroll)


def _out_size(n):
    return (n + 2 * PAD - KH) // STRIDE + 1


def _pick_row_tile(ho, n_batch, max_th=MAX_ROW_TILE):
    """Largest divisor of `ho` <= max_th (no M padding); shrink further when
    possible so the total grid has >= 2 steps (both v7x TensorCores busy)."""
    th = 1
    for cand in range(min(ho, max_th), 0, -1):
        if ho % cand == 0:
            th = cand
            break
    while n_batch * (ho // th) < 2 and th > 1:
        nxt = 1
        for cand in range(th - 1, 0, -1):
            if ho % cand == 0:
                nxt = cand
                break
        th = nxt
    return th


def _conv3x3s2_bn_relu_kernel(xs_ref, w_ref, b_ref, o_ref):
    """Fused 3x3 stride-2 conv + folded-BN bias + ReLU for one row tile.

    xs_ref: (1, Hs, Ws, 4C)   bf16  space-to-depth image (whole, resident)
    w_ref : (4, 4C, Cout)     bf16  BN-folded weight, tap-major (di*2 + dj)
    b_ref : (1, Cout)         f32   BN-folded bias
    o_ref : (1, TH, Wo, Cout) bf16  output row tile
    """
    th_tile, wo, cout = o_ref.shape[1], o_ref.shape[2], o_ref.shape[3]
    r0 = pl.program_id(1) * th_tile
    bias = b_ref[...]                                   # (1, Cout) f32
    # Static unroll over the (small) row tile; every output row is four
    # contiguous-slice matmuls on the MXU with f32 accumulation in vregs.
    for th in range(th_tile):
        acc = jnp.zeros((wo, cout), jnp.float32)
        for t, (di, dj) in enumerate(((0, 0), (0, 1), (1, 0), (1, 1))):
            xs = xs_ref[0, r0 + th + di, pl.ds(dj, wo), :]      # (Wo, 4C)
            acc += jnp.dot(xs, w_ref[t], preferred_element_type=jnp.float32)
        o_ref[0, th] = jnp.maximum(acc + bias, 0.0).astype(o_ref.dtype)


def _space_to_depth_s2(x_nhwc, hs, ws):
    """Conv pad (=1), pad to even extents, and split the stride-2 parity
    phases into channels: (N, H, W, C) -> (N, hs, ws, 4C), channel order
    (row_parity, col_parity, c)."""
    n, h, w, c = x_nhwc.shape
    xp = jnp.pad(x_nhwc, ((0, 0), (PAD, 2 * hs - h - PAD),
                          (PAD, 2 * ws - w - PAD), (0, 0)))
    xs = xp.reshape(n, hs, 2, ws, 2, c)
    xs = jnp.transpose(xs, (0, 1, 3, 2, 4, 5))
    return xs.reshape(n, hs, ws, 4 * c)


def conv_bn_relu_nhwc(x_nhwc_bf16, p):
    """One stage: stride-2 3x3 conv + folded-BN bias + ReLU, bf16 NHWC in/out."""
    n, h, w, _ = x_nhwc_bf16.shape
    ho, wo = _out_size(h), _out_size(w)
    hs, ws = ho + 1, wo + 1
    cout = p["cout"]
    c4 = p["w4"].shape[1]

    # TODO(synk): the remaining ~1x space-to-depth copy could also be folded
    # into the kernel with halo-row DMAs from memory_space=pl.ANY; kept in
    # XLA for lowering robustness (it is ~1x activation bytes, vs 9x im2col).
    xs = _space_to_depth_s2(x_nhwc_bf16, hs, ws)        # (N, Hs, Ws, 4C) bf16

    th = _pick_row_tile(ho, n)
    grid = (n, ho // th)

    bytes_xs = hs * ws * c4 * 2
    bytes_out = th * wo * cout * 2
    bytes_w = 4 * c4 * cout * 2
    bytes_b = cout * 4
    # Need-based VMEM budget: double-buffered streaming blocks + resident
    # weight/bias, 4x headroom, small floor for Mosaic internal scratch.
    need = 2 * (bytes_xs + bytes_out) + 2 * (bytes_w + bytes_b)
    vmem_limit = int(min(max(4 * need, 8 * 2**20), 48 * 2**20))

    cost = pl.CostEstimate(
        flops=2 * n * ho * wo * 4 * c4 * cout,
        transcendentals=0,
        bytes_accessed=n * (bytes_xs + ho * wo * cout * 2) + bytes_w + bytes_b)

    return pl.pallas_call(
        _conv3x3s2_bn_relu_kernel,
        out_shape=jax.ShapeDtypeStruct((n, ho, wo, cout), jnp.bfloat16),
        grid_spec=pltpu.PrefetchScalarGridSpec(
            num_scalar_prefetch=0,
            grid=grid,
            in_specs=[
                # whole s2d image resident per batch element (re-used by all
                # row tiles; auto double-buffered across the batch axis).
                pl.BlockSpec((1, hs, ws, c4), lambda b, r: (b, 0, 0, 0)),
                # grid-invariant weight / bias: constant index map -> fetched
                # once.  TODO(synk): pipeline_mode=pl.Buffered(1) plus a
                # Cout/K grid axis (256-wide Cout tiles on v6e/v7x) once real
                # backbone widths make these large.
                pl.BlockSpec((4, c4, cout), lambda b, r: (0, 0, 0)),
                pl.BlockSpec((1, cout), lambda b, r: (0, 0)),
            ],
            out_specs=pl.BlockSpec((1, th, wo, cout),
                                   lambda b, r: (b, r, 0, 0)),
        ),
        compiler_params=pltpu.CompilerParams(
            dimension_semantics=("parallel", "parallel"),
            vmem_limit_bytes=vmem_limit),
        cost_estimate=cost,
    )(xs, p["w4"], p["bias_row"])


def init_backbone_params(key, in_ch, widths=(16, 32, 64, 128)):
    """Deterministic conv + BN params.  Keeps raw weights for the reference
    path and a Pallas-ready copy: BN scale folded into the weight, repacked
    to tap-major (4, 4*Cin, Cout) bf16 matching the space-to-depth layout."""
    params = []
    cin = in_ch
    eps = 1e-5
    for cout in widths:
        key, k1, k2, k3, k4, k5 = jax.random.split(key, 6)
        w = jax.random.normal(k1, (cout, cin, KH, KW), jnp.float32)
        w = w * (1.0 / jnp.sqrt(9.0 * cin))
        gamma = 1.0 + 0.1 * jax.random.normal(k2, (cout,), jnp.float32)
        beta = 0.1 * jax.random.normal(k3, (cout,), jnp.float32)
        mean = 0.1 * jax.random.normal(k4, (cout,), jnp.float32)
        var = jnp.abs(jax.random.normal(k5, (cout,), jnp.float32)) + 0.5
        scale = gamma / jnp.sqrt(var + eps)          # folded-BN scale
        bias = beta - mean * scale                   # folded-BN bias

        # Fold BN into the conv weight and repack for the fused kernel:
        #   tap t = (i//2)*2 + (j//2); s2d channel = (i%2)*2C + (j%2)*C + ci.
        w_folded = w * scale[:, None, None, None]            # (cout,cin,3,3)
        w6 = jnp.zeros((2, 2, 2, 2, cin, cout), jnp.float32)
        for i in range(KH):
            for j in range(KW):
                w6 = w6.at[i // 2, j // 2, i % 2, j % 2].set(
                    jnp.transpose(w_folded[:, :, i, j]))      # (cin, cout)
        w4 = w6.reshape(4, 4 * cin, cout)

        params.append({
            # raw (reference path)
            "w": w, "scale": scale, "bias": bias,
            # prepped (Pallas path)
            "w4": w4.astype(jnp.bfloat16),
            "bias_row": bias.reshape(1, cout).astype(jnp.float32),
            "cout": cout,
        })
        cin = cout
    return params


def selfsup_backbone_forward(params, x_nchw):
    """Equivalent of SelfSupBackbone.forward: returns tuple(features), NCHW.
    The whole chain runs in bf16 NHWC; NCHW / f32 only at the edges."""
    feats_nhwc = []
    h = jnp.transpose(x_nchw, (0, 2, 3, 1)).astype(jnp.bfloat16)
    for p in params:
        h = conv_bn_relu_nhwc(h, p)        # bf16 NHWC fed straight downstream
        feats_nhwc.append(h)
    # Emit the returned tuple as f32 NCHW (module semantics); transposes are
    # done on bf16 data and only cast at this edge.
    return tuple(jnp.transpose(f, (0, 3, 1, 2)).astype(jnp.float32)
                 for f in feats_nhwc)


def _reference_forward(params, x_nchw):
    """Pure-JAX f32 reference (lax.conv) for correctness checking."""
    feats = []
    h = x_nchw
    for p in params:
        y = jax.lax.conv_general_dilated(
            h, p["w"], window_strides=(STRIDE, STRIDE),
            padding=((PAD, PAD), (PAD, PAD)),
            dimension_numbers=("NCHW", "OIHW", "NCHW"))
        y = (y * p["scale"][None, :, None, None]
             + p["bias"][None, :, None, None])
        h = jnp.maximum(y, 0.0)
        feats.append(h)
    return tuple(feats)


if __name__ == "__main__":
    key = jax.random.PRNGKey(0)
    kx, kp = jax.random.split(key)

    # small, module-consistent shapes: batch=2, channels=4, spatial=16
    x = jax.random.normal(kx, (2, 4, 16, 16), jnp.float32)
    params = init_backbone_params(kp, in_ch=4)

    fwd = jax.jit(lambda inp: selfsup_backbone_forward(params, inp))
    feats = fwd(x)
    feats = jax.tree_util.tree_map(jax.block_until_ready, feats)

    ref = _reference_forward(params, x)
    assert isinstance(feats, tuple) and len(feats) == 4
    for f, r in zip(feats, ref):
        assert f.shape == r.shape and f.dtype == r.dtype
        err = float(jnp.max(jnp.abs(f - r)))
        mag = float(jnp.max(jnp.abs(r)))
        # bf16 MXU operands and bf16 inter-stage activations vs f32 reference.
        assert err <= 0.1 * mag + 1e-2, f"mismatch: err={err}, max|ref|={mag}"

    print("KERNEL_OK")
</pallas_src>

<mosaic_0001>
module attributes {stable_mosaic.version = 11 : i64} {
  func.func @_conv3x3s2_bn_relu_kernel(%arg0: i32, %arg1: i32, %arg2: memref<1x9x9x16xbf16, #tpu.memory_space<vmem>>, %arg3: memref<4x16x16xbf16, #tpu.memory_space<vmem>>, %arg4: memref<1x16xf32, #tpu.memory_space<vmem>>, %arg5: memref<1x8x8x16xbf16, #tpu.memory_space<vmem>>) attributes {dimension_semantics = [#tpu.dimension_semantics<parallel>, #tpu.dimension_semantics<parallel>], iteration_bounds = array<i64: 2, 1>, scalar_prefetch = 0 : i64, scratch_operands = 0 : i64, tpu.core_type = #tpu.core_type<tc>, window_params = [{transform_indices = @transform_0, window_bounds = array<i64: 1, 9, 9, 16>}, {pipeline_mode = #tpu.pipeline_mode<synchronous>, transform_indices = @transform_1, window_bounds = array<i64: 4, 16, 16>}, {pipeline_mode = #tpu.pipeline_mode<synchronous>, transform_indices = @transform_2, window_bounds = array<i64: 1, 16>}, {transform_indices = @transform_3, window_bounds = array<i64: 1, 8, 8, 16>}]} {
    %c8_i32 = arith.constant 8 : i32
    %0 = arith.muli %arg1, %c8_i32 : i32
    %c0 = arith.constant 0 : index
    %c0_0 = arith.constant 0 : index
    %1 = vector.load %arg4[%c0, %c0_0] : memref<1x16xf32, #tpu.memory_space<vmem>>, vector<1x16xf32>
    %cst = arith.constant 0.000000e+00 : f32
    %2 = vector.broadcast %cst : f32 to vector<8x16xf32>
    %c0_i32 = arith.constant 0 : i32
    %3 = arith.addi %0, %c0_i32 : i32
    %c0_i32_1 = arith.constant 0 : i32
    %4 = arith.addi %3, %c0_i32_1 : i32
    %c0_2 = arith.constant 0 : index
    %5 = arith.index_cast %4 : i32 to index
    %c0_3 = arith.constant 0 : index
    %c0_4 = arith.constant 0 : index
    %6 = vector.load %arg2[%c0_2, %5, %c0_3, %c0_4] : memref<1x9x9x16xbf16, #tpu.memory_space<vmem>>, vector<1x1x8x16xbf16>
    %7 = vector.shape_cast %6 : vector<1x1x8x16xbf16> to vector<8x16xbf16>
    %c0_5 = arith.constant 0 : index
    %c0_6 = arith.constant 0 : index
    %c0_7 = arith.constant 0 : index
    %8 = vector.load %arg3[%c0_5, %c0_6, %c0_7] : memref<4x16x16xbf16, #tpu.memory_space<vmem>>, vector<1x16x16xbf16>
    %9 = vector.shape_cast %8 : vector<1x16x16xbf16> to vector<16x16xbf16>
    %cst_8 = arith.constant dense<0.000000e+00> : vector<8x16xf32>
    %10 = tpu.matmul %7, %9, %cst_8 {dimension_numbers = #tpu.dot_dimension_numbers<[1], [0], [0], [1], [0, 0, 1, 1], [], []>} : vector<8x16xbf16>, vector<16x16xbf16>, vector<8x16xf32> -> vector<8x16xf32>
    %11 = arith.addf %2, %10 : vector<8x16xf32>
    %c0_i32_9 = arith.constant 0 : i32
    %12 = arith.addi %0, %c0_i32_9 : i32
    %c0_i32_10 = arith.constant 0 : i32
    %13 = arith.addi %12, %c0_i32_10 : i32
    %c0_11 = arith.constant 0 : index
    %14 = arith.index_cast %13 : i32 to index
    %c1 = arith.constant 1 : index
    %c0_12 = arith.constant 0 : index
    %15 = vector.load %arg2[%c0_11, %14, %c1, %c0_12] : memref<1x9x9x16xbf16, #tpu.memory_space<vmem>>, vector<1x1x8x16xbf16>
    %16 = vector.shape_cast %15 : vector<1x1x8x16xbf16> to vector<8x16xbf16>
    %c1_13 = arith.constant 1 : index
    %c0_14 = arith.constant 0 : index
    %c0_15 = arith.constant 0 : index
    %17 = vector.load %arg3[%c1_13, %c0_14, %c0_15] : memref<4x16x16xbf16, #tpu.memory_space<vmem>>, vector<1x16x16xbf16>
    %18 = vector.shape_cast %17 : vector<1x16x16xbf16> to vector<16x16xbf16>
    %cst_16 = arith.constant dense<0.000000e+00> : vector<8x16xf32>
    %19 = tpu.matmul %16, %18, %cst_16 {dimension_numbers = #tpu.dot_dimension_numbers<[1], [0], [0], [1], [0, 0, 1, 1], [], []>} : vector<8x16xbf16>, vector<16x16xbf16>, vector<8x16xf32> -> vector<8x16xf32>
    %20 = arith.addf %11, %19 : vector<8x16xf32>
    %c0_i32_17 = arith.constant 0 : i32
    %21 = arith.addi %0, %c0_i32_17 : i32
    %c1_i32 = arith.constant 1 : i32
    %22 = arith.addi %21, %c1_i32 : i32
    %c0_18 = arith.constant 0 : index
    %23 = arith.index_cast %22 : i32 to index
    %c0_19 = arith.constant 0 : index
    %c0_20 = arith.constant 0 : index
    %24 = vector.load %arg2[%c0_18, %23, %c0_19, %c0_20] : memref<1x9x9x16xbf16, #tpu.memory_space<vmem>>, vector<1x1x8x16xbf16>
    %25 = vector.shape_cast %24 : vector<1x1x8x16xbf16> to vector<8x16xbf16>
    %c2 = arith.constant 2 : index
    %c0_21 = arith.constant 0 : index
    %c0_22 = arith.constant 0 : index
    %26 = vector.load %arg3[%c2, %c0_21, %c0_22] : memref<4x16x16xbf16, #tpu.memory_space<vmem>>, vector<1x16x16xbf16>
    %27 = vector.shape_cast %26 : vector<1x16x16xbf16> to vector<16x16xbf16>
    %cst_23 = arith.constant dense<0.000000e+00> : vector<8x16xf32>
    %28 = tpu.matmul %25, %27, %cst_23 {dimension_numbers = #tpu.dot_dimension_numbers<[1], [0], [0], [1], [0, 0, 1, 1], [], []>} : vector<8x16xbf16>, vector<16x16xbf16>, vector<8x16xf32> -> vector<8x16xf32>
    %29 = arith.addf %20, %28 : vector<8x16xf32>
    %c0_i32_24 = arith.constant 0 : i32
    %30 = arith.addi %0, %c0_i32_24 : i32
    %c1_i32_25 = arith.constant 1 : i32
    %31 = arith.addi %30, %c1_i32_25 : i32
    %c0_26 = arith.constant 0 : index
    %32 = arith.index_cast %31 : i32 to index
    %c1_27 = arith.constant 1 : index
    %c0_28 = arith.constant 0 : index
    %33 = vector.load %arg2[%c0_26, %32, %c1_27, %c0_28] : memref<1x9x9x16xbf16, #tpu.memory_space<vmem>>, vector<1x1x8x16xbf16>
    %34 = vector.shape_cast %33 : vector<1x1x8x16xbf16> to vector<8x16xbf16>
    %c3 = arith.constant 3 : index
    %c0_29 = arith.constant 0 : index
    %c0_30 = arith.constant 0 : index
    %35 = vector.load %arg3[%c3, %c0_29, %c0_30] : memref<4x16x16xbf16, #tpu.memory_space<vmem>>, vector<1x16x16xbf16>
    %36 = vector.shape_cast %35 : vector<1x16x16xbf16> to vector<16x16xbf16>
    %cst_31 = arith.constant dense<0.000000e+00> : vector<8x16xf32>
    %37 = tpu.matmul %34, %36, %cst_31 {dimension_numbers = #tpu.dot_dimension_numbers<[1], [0], [0], [1], [0, 0, 1, 1], [], []>} : vector<8x16xbf16>, vector<16x16xbf16>, vector<8x16xf32> -> vector<8x16xf32>
    %38 = arith.addf %29, %37 : vector<8x16xf32>
    %39 = vector.broadcast %1 : vector<1x16xf32> to vector<8x16xf32>
    %40 = arith.addf %38, %39 : vector<8x16xf32>
    %cst_32 = arith.constant 0.000000e+00 : f32
    %41 = vector.broadcast %cst_32 : f32 to vector<8x16xf32>
    %42 = arith.maximumf %40, %41 : vector<8x16xf32>
    %43 = arith.truncf %42 : vector<8x16xf32> to vector<8x16xbf16>
    %c0_33 = arith.constant 0 : index
    %c0_34 = arith.constant 0 : index
    %c0_35 = arith.constant 0 : index
    %c0_36 = arith.constant 0 : index
    %44 = vector.load %arg5[%c0_33, %c0_34, %c0_35, %c0_36] : memref<1x8x8x16xbf16, #tpu.memory_space<vmem>>, vector<1x1x8x16xbf16>
    %45 = vector.shape_cast %44 : vector<1x1x8x16xbf16> to vector<8x16xbf16>
    %46 = vector.shape_cast %43 : vector<8x16xbf16> to vector<1x1x8x16xbf16>
    tpu.vector_store %arg5[%c0_33, %c0_34, %c0_35, %c0_36], %46 {strides = array<i32>} : memref<1x8x8x16xbf16, #tpu.memory_space<vmem>>, vector<1x1x8x16xbf16>,
    %cst_37 = arith.constant 0.000000e+00 : f32
    %47 = vector.broadcast %cst_37 : f32 to vector<8x16xf32>
    %c1_i32_38 = arith.constant 1 : i32
    %48 = arith.addi %0, %c1_i32_38 : i32
    %c0_i32_39 = arith.constant 0 : i32
    %49 = arith.addi %48, %c0_i32_39 : i32
    %c0_40 = arith.constant 0 : index
    %50 = arith.index_cast %49 : i32 to index
    %c0_41 = arith.constant 0 : index
    %c0_42 = arith.constant 0 : index
    %51 = vector.load %arg2[%c0_40, %50, %c0_41, %c0_42] : memref<1x9x9x16xbf16, #tpu.memory_space<vmem>>, vector<1x1x8x16xbf16>
    %52 = vector.shape_cast %51 : vector<1x1x8x16xbf16> to vector<8x16xbf16>
    %c0_43 = arith.constant 0 : index
    %c0_44 = arith.constant 0 : index
    %c0_45 = arith.constant 0 : index
    %53 = vector.load %arg3[%c0_43, %c0_44, %c0_45] : memref<4x16x16xbf16, #tpu.memory_space<vmem>>, vector<1x16x16xbf16>
    %54 = vector.shape_cast %53 : vector<1x16x16xbf16> to vector<16x16xbf16>
    %cst_46 = arith.constant dense<0.000000e+00> : vector<8x16xf32>
    %55 = tpu.matmul %52, %54, %cst_46 {dimension_numbers = #tpu.dot_dimension_numbers<[1], [0], [0], [1], [0, 0, 1, 1], [], []>} : vector<8x16xbf16>, vector<16x16xbf16>, vector<8x16xf32> -> vector<8x16xf32>
    %56 = arith.addf %47, %55 : vector<8x16xf32>
    %c1_i32_47 = arith.constant 1 : i32
    %57 = arith.addi %0, %c1_i32_47 : i32
    %c0_i32_48 = arith.constant 0 : i32
    %58 = arith.addi %57, %c0_i32_48 : i32
    %c0_49 = arith.constant 0 : index
    %59 = arith.index_cast %58 : i32 to index
    %c1_50 = arith.constant 1 : index
    %c0_51 = arith.constant 0 : index
    %60 = vector.load %arg2[%c0_49, %59, %c1_50, %c0_51] : memref<1x9x9x16xbf16, #tpu.memory_space<vmem>>, vector<1x1x8x16xbf16>
    %61 = vector.shape_cast %60 : vector<1x1x8x16xbf16> to vector<8x16xbf16>
    %c1_52 = arith.constant 1 : index
    %c0_53 = arith.constant 0 : index
    %c0_54 = arith.constant 0 : index
    %62 = vector.load %arg3[%c1_52, %c0_53, %c0_54] : memref<4x16x16xbf16, #tpu.memory_space<vmem>>, vector<1x16x16xbf16>
    %63 = vector.shape_cast %62 : vector<1x16x16xbf16> to vector<16x16xbf16>
    %cst_55 = arith.constant dense<0.000000e+00> : vector<8x16xf32>
    %64 = tpu.matmul %61, %63, %cst_55 {dimension_numbers = #tpu.dot_dimension_numbers<[1], [0], [0], [1], [0, 0, 1, 1], [], []>} : vector<8x16xbf16>, vector<16x16xbf16>, vector<8x16xf32> -> vector<8x16xf32>
    %65 = arith.addf %56, %64 : vector<8x16xf32>
    %c1_i32_56 = arith.constant 1 : i32
    %66 = arith.addi %0, %c1_i32_56 : i32
    %c1_i32_57 = arith.constant 1 : i32
    %67 = arith.addi %66, %c1_i32_57 : i32
    %c0_58 = arith.constant 0 : index
    %68 = arith.index_cast %67 : i32 to index
    %c0_59 = arith.constant 0 : index
    %c0_60 = arith.constant 0 : index
    %69 = vector.load %arg2[%c0_58, %68, %c0_59, %c0_60] : memref<1x9x9x16xbf16, #tpu.memory_space<vmem>>, vector<1x1x8x16xbf16>
    %70 = vector.shape_cast %69 : vector<1x1x8x16xbf16> to vector<8x16xbf16>
    %c2_61 = arith.constant 2 : index
    %c0_62 = arith.constant 0 : index
    %c0_63 = arith.constant 0 : index
    %71 = vector.load %arg3[%c2_61, %c0_62, %c0_63] : memref<4x16x16xbf16, #tpu.memory_space<vmem>>, vector<1x16x16xbf16>
    %72 = vector.shape_cast %71 : vector<1x16x16xbf16> to vector<16x16xbf16>
    %cst_64 = arith.constant dense<0.000000e+00> : vector<8x16xf32>
    %73 = tpu.matmul %70, %72, %cst_64 {dimension_numbers = #tpu.dot_dimension_numbers<[1], [0], [0], [1], [0, 0, 1, 1], [], []>} : vector<8x16xbf16>, vector<16x16xbf16>, vector<8x16xf32> -> vector<8x16xf32>
    %74 = arith.addf %65, %73 : vector<8x16xf32>
    %c1_i32_65 = arith.constant 1 : i32
    %75 = arith.addi %0, %c1_i32_65 : i32
    %c1_i32_66 = arith.constant 1 : i32
    %76 = arith.addi %75, %c1_i32_66 : i32
    %c0_67 = arith.constant 0 : index
    %77 = arith.index_cast %76 : i32 to index
    %c1_68 = arith.constant 1 : index
    %c0_69 = arith.constant 0 : index
    %78 = vector.load %arg2[%c0_67, %77, %c1_68, %c0_69] : memref<1x9x9x16xbf16, #tpu.memory_space<vmem>>, vector<1x1x8x16xbf16>
    %79 = vector.shape_cast %78 : vector<1x1x8x16xbf16> to vector<8x16xbf16>
    %c3_70 = arith.constant 3 : index
    %c0_71 = arith.constant 0 : index
    %c0_72 = arith.constant 0 : index
    %80 = vector.load %arg3[%c3_70, %c0_71, %c0_72] : memref<4x16x16xbf16, #tpu.memory_space<vmem>>, vector<1x16x16xbf16>
    %81 = vector.shape_cast %80 : vector<1x16x16xbf16> to vector<16x16xbf16>
    %cst_73 = arith.constant dense<0.000000e+00> : vector<8x16xf32>
    %82 = tpu.matmul %79, %81, %cst_73 {dimension_numbers = #tpu.dot_dimension_numbers<[1], [0], [0], [1], [0, 0, 1, 1], [], []>} : vector<8x16xbf16>, vector<16x16xbf16>, vector<8x16xf32> -> vector<8x16xf32>
    %83 = arith.addf %74, %82 : vector<8x16xf32>
    %84 = vector.broadcast %1 : vector<1x16xf32> to vector<8x16xf32>
    %85 = arith.addf %83, %84 : vector<8x16xf32>
    %cst_74 = arith.constant 0.000000e+00 : f32
    %86 = vector.broadcast %cst_74 : f32 to vector<8x16xf32>
    %87 = arith.maximumf %85, %86 : vector<8x16xf32>
    %88 = arith.truncf %87 : vector<8x16xf32> to vector<8x16xbf16>
    %c0_75 = arith.constant 0 : index
    %c1_76 = arith.constant 1 : index
    %c0_77 = arith.constant 0 : index
    %c0_78 = arith.constant 0 : index
    %89 = vector.load %arg5[%c0_75, %c1_76, %c0_77, %c0_78] : memref<1x8x8x16xbf16, #tpu.memory_space<vmem>>, vector<1x1x8x16xbf16>
    %90 = vector.shape_cast %89 : vector<1x1x8x16xbf16> to vector<8x16xbf16>
    %91 = vector.shape_cast %88 : vector<8x16xbf16> to vector<1x1x8x16xbf16>
    tpu.vector_store %arg5[%c0_75, %c1_76, %c0_77, %c0_78], %91 {strides = array<i32>} : memref<1x8x8x16xbf16, #tpu.memory_space<vmem>>, vector<1x1x8x16xbf16>,
    %cst_79 = arith.constant 0.000000e+00 : f32
    %92 = vector.broadcast %cst_79 : f32 to vector<8x16xf32>
    %c2_i32 = arith.constant 2 : i32
    %93 = arith.addi %0, %c2_i32 : i32
    %c0_i32_80 = arith.constant 0 : i32
    %94 = arith.addi %93, %c0_i32_80 : i32
    %c0_81 = arith.constant 0 : index
    %95 = arith.index_cast %94 : i32 to index
    %c0_82 = arith.constant 0 : index
    %c0_83 = arith.constant 0 : index
    %96 = vector.load %arg2[%c0_81, %95, %c0_82, %c0_83] : memref<1x9x9x16xbf16, #tpu.memory_space<vmem>>, vector<1x1x8x16xbf16>
    %97 = vector.shape_cast %96 : vector<1x1x8x16xbf16> to vector<8x16xbf16>
    %c0_84 = arith.constant 0 : index
    %c0_85 = arith.constant 0 : index
    %c0_86 = arith.constant 0 : index
    %98 = vector.load %arg3[%c0_84, %c0_85, %c0_86] : memref<4x16x16xbf16, #tpu.memory_space<vmem>>, vector<1x16x16xbf16>
    %99 = vector.shape_cast %98 : vector<1x16x16xbf16> to vector<16x16xbf16>
    %cst_87 = arith.constant dense<0.000000e+00> : vector<8x16xf32>
    %100 = tpu.matmul %97, %99, %cst_87 {dimension_numbers = #tpu.dot_dimension_numbers<[1], [0], [0], [1], [0, 0, 1, 1], [], []>} : vector<8x16xbf16>, vector<16x16xbf16>, vector<8x16xf32> -> vector<8x16xf32>
    %101 = arith.addf %92, %100 : vector<8x16xf32>
    %c2_i32_88 = arith.constant 2 : i32
    %102 = arith.addi %0, %c2_i32_88 : i32
    %c0_i32_89 = arith.constant 0 : i32
    %103 = arith.addi %102, %c0_i32_89 : i32
    %c0_90 = arith.constant 0 : index
    %104 = arith.index_cast %103 : i32 to index
    %c1_91 = arith.constant 1 : index
    %c0_92 = arith.constant 0 : index
    %105 = vector.load %arg2[%c0_90, %104, %c1_91, %c0_92] : memref<1x9x9x16xbf16, #tpu.memory_space<vmem>>, vector<1x1x8x16xbf16>
    %106 = vector.shape_cast %105 : vector<1x1x8x16xbf16> to vector<8x16xbf16>
    %c1_93 = arith.constant 1 : index
    %c0_94 = arith.constant 0 : index
    %c0_95 = arith.constant 0 : index
    %107 = vector.load %arg3[%c1_93, %c0_94, %c0_95] : memref<4x16x16xbf16, #tpu.memory_space<vmem>>, vector<1x16x16xbf16>
    %108 = vector.shape_cast %107 : vector<1x16x16xbf16> to vector<16x16xbf16>
    %cst_96 = arith.constant dense<0.000000e+00> : vector<8x16xf32>
    %109 = tpu.matmul %106, %108, %cst_96 {dimension_numbers = #tpu.dot_dimension_numbers<[1], [0], [0], [1], [0, 0, 1, 1], [], []>} : vector<8x16xbf16>, vector<16x16xbf16>, vector<8x16xf32> -> vector<8x16xf32>
    %110 = arith.addf %101, %109 : vector<8x16xf32>
    %c2_i32_97 = arith.constant 2 : i32
    %111 = arith.addi %0, %c2_i32_97 : i32
    %c1_i32_98 = arith.constant 1 : i32
    %112 = arith.addi %111, %c1_i32_98 : i32
    %c0_99 = arith.constant 0 : index
    %113 = arith.index_cast %112 : i32 to index
    %c0_100 = arith.constant 0 : index
    %c0_101 = arith.constant 0 : index
    %114 = vector.load %arg2[%c0_99, %113, %c0_100, %c0_101] : memref<1x9x9x16xbf16, #tpu.memory_space<vmem>>, vector<1x1x8x16xbf16>
    %115 = vector.shape_cast %114 : vector<1x1x8x16xbf16> to vector<8x16xbf16>
    %c2_102 = arith.constant 2 : index
    %c0_103 = arith.constant 0 : index
    %c0_104 = arith.constant 0 : index
    %116 = vector.load %arg3[%c2_102, %c0_103, %c0_104] : memref<4x16x16xbf16, #tpu.memory_space<vmem>>, vector<1x16x16xbf16>
    %117 = vector.shape_cast %116 : vector<1x16x16xbf16> to vector<16x16xbf16>
    %cst_105 = arith.constant dense<0.000000e+00> : vector<8x16xf32>
    %118 = tpu.matmul %115, %117, %cst_105 {dimension_numbers = #tpu.dot_dimension_numbers<[1], [0], [0], [1], [0, 0, 1, 1], [], []>} : vector<8x16xbf16>, vector<16x16xbf16>, vector<8x16xf32> -> vector<8x16xf32>
    %119 = arith.addf %110, %118 : vector<8x16xf32>
    %c2_i32_106 = arith.constant 2 : i32
    %120 = arith.addi %0, %c2_i32_106 : i32
    %c1_i32_107 = arith.constant 1 : i32
    %121 = arith.addi %120, %c1_i32_107 : i32
    %c0_108 = arith.constant 0 : index
    %122 = arith.index_cast %121 : i32 to index
    %c1_109 = arith.constant 1 : index
    %c0_110 = arith.constant 0 : index
    %123 = vector.load %arg2[%c0_108, %122, %c1_109, %c0_110] : memref<1x9x9x16xbf16, #tpu.memory_space<vmem>>, vector<1x1x8x16xbf16>
    %124 = vector.shape_cast %123 : vector<1x1x8x16xbf16> to vector<8x16xbf16>
    %c3_111 = arith.constant 3 : index
    %c0_112 = arith.constant 0 : index
    %c0_113 = arith.constant 0 : index
    %125 = vector.load %arg3[%c3_111, %c0_112, %c0_113] : memref<4x16x16xbf16, #tpu.memory_space<vmem>>, vector<1x16x16xbf16>
    %126 = vector.shape_cast %125 : vector<1x16x16xbf16> to vector<16x16xbf16>
    %cst_114 = arith.constant dense<0.000000e+00> : vector<8x16xf32>
    %127 = tpu.matmul %124, %126, %cst_114 {dimension_numbers = #tpu.dot_dimension_numbers<[1], [0], [0], [1], [0, 0, 1, 1], [], []>} : vector<8x16xbf16>, vector<16x16xbf16>, vector<8x16xf32> -> vector<8x16xf32>
    %128 = arith.addf %119, %127 : vector<8x16xf32>
    %129 = vector.broadcast %1 : vector<1x16xf32> to vector<8x16xf32>
    %130 = arith.addf %128, %129 : vector<8x16xf32>
    %cst_115 = arith.constant 0.000000e+00 : f32
    %131 = vector.broadcast %cst_115 : f32 to vector<8x16xf32>
    %132 = arith.maximumf %130, %131 : vector<8x16xf32>
    %133 = arith.truncf %132 : vector<8x16xf32> to vector<8x16xbf16>
    %c0_116 = arith.constant 0 : index
    %c2_117 = arith.constant 2 : index
    %c0_118 = arith.constant 0 : index
    %c0_119 = arith.constant 0 : index
    %134 = vector.load %arg5[%c0_116, %c2_117, %c0_118, %c0_119] : memref<1x8x8x16xbf16, #tpu.memory_space<vmem>>, vector<1x1x8x16xbf16>
    %135 = vector.shape_cast %134 : vector<1x1x8x16xbf16> to vector<8x16xbf16>
    %136 = vector.shape_cast %133 : vector<8x16xbf16> to vector<1x1x8x16xbf16>
    tpu.vector_store %arg5[%c0_116, %c2_117, %c0_118, %c0_119], %136 {strides = array<i32>} : memref<1x8x8x16xbf16, #tpu.memory_space<vmem>>, vector<1x1x8x16xbf16>,
    %cst_120 = arith.constant 0.000000e+00 : f32
    %137 = vector.broadcast %cst_120 : f32 to vector<8x16xf32>
    %c3_i32 = arith.constant 3 : i32
    %138 = arith.addi %0, %c3_i32 : i32
    %c0_i32_121 = arith.constant 0 : i32
    %139 = arith.addi %138, %c0_i32_121 : i32
    %c0_122 = arith.constant 0 : index
    %140 = arith.index_cast %139 : i32 to index
    %c0_123 = arith.constant 0 : index
    %c0_124 = arith.constant 0 : index
    %141 = vector.load %arg2[%c0_122, %140, %c0_123, %c0_124] : memref<1x9x9x16xbf16, #tpu.memory_space<vmem>>, vector<1x1x8x16xbf16>
    %142 = vector.shape_cast %141 : vector<1x1x8x16xbf16> to vector<8x16xbf16>
    %c0_125 = arith.constant 0 : index
    %c0_126 = arith.constant 0 : index
    %c0_127 = arith.constant 0 : index
    %143 = vector.load %arg3[%c0_125, %c0_126, %c0_127] : memref<4x16x16xbf16, #tpu.memory_space<vmem>>, vector<1x16x16xbf16>
    %144 = vector.shape_cast %143 : vector<1x16x16xbf16> to vector<16x16xbf16>
    %cst_128 = arith.constant dense<0.000000e+00> : vector<8x16xf32>
    %145 = tpu.matmul %142, %144, %cst_128 {dimension_numbers = #tpu.dot_dimension_numbers<[1], [0], [0], [1], [0, 0, 1, 1], [], []>} : vector<8x16xbf16>, vector<16x16xbf16>, vector<8x16xf32> -> vector<8x16xf32>
    %146 = arith.addf %137, %145 : vector<8x16xf32>
    %c3_i32_129 = arith.constant 3 : i32
    %147 = arith.addi %0, %c3_i32_129 : i32
    %c0_i32_130 = arith.constant 0 : i32
    %148 = arith.addi %147, %c0_i32_130 : i32
    %c0_131 = arith.constant 0 : index
    %149 = arith.index_cast %148 : i32 to index
    %c1_132 = arith.constant 1 : index
    %c0_133 = arith.constant 0 : index
    %150 = vector.load %arg2[%c0_131, %149, %c1_132, %c0_133] : memref<1x9x9x16xbf16, #tpu.memory_space<vmem>>, vector<1x1x8x16xbf16>
    %151 = vector.shape_cast %150 : vector<1x1x8x16xbf16> to vector<8x16xbf16>
    %c1_134 = arith.constant 1 : index
    %c0_135 = arith.constant 0 : index
    %c0_136 = arith.constant 0 : index
    %152 = vector.load %arg3[%c1_134, %c0_135, %c0_136] : memref<4x16x16xbf16, #tpu.memory_space<vmem>>, vector<1x16x16xbf16>
    %153 = vector.shape_cast %152 : vector<1x16x16xbf16> to vector<16x16xbf16>
    %cst_137 = arith.constant dense<0.000000e+00> : vector<8x16xf32>
    %154 = tpu.matmul %151, %153, %cst_137 {dimension_numbers = #tpu.dot_dimension_numbers<[1], [0], [0], [1], [0, 0, 1, 1], [], []>} : vector<8x16xbf16>, vector<16x16xbf16>, vector<8x16xf32> -> vector<8x16xf32>
    %155 = arith.addf %146, %154 : vector<8x16xf32>
    %c3_i32_138 = arith.constant 3 : i32
    %156 = arith.addi %0, %c3_i32_138 : i32
    %c1_i32_139 = arith.constant 1 : i32
    %157 = arith.addi %156, %c1_i32_139 : i32
    %c0_140 = arith.constant 0 : index
    %158 = arith.index_cast %157 : i32 to index
    %c0_141 = arith.constant 0 : index
    %c0_142 = arith.constant 0 : index
    %159 = vector.load %arg2[%c0_140, %158, %c0_141, %c0_142] : memref<1x9x9x16xbf16, #tpu.memory_space<vmem>>, vector<1x1x8x16xbf16>
    %160 = vector.shape_cast %159 : vector<1x1x8x16xbf16> to vector<8x16xbf16>
    %c2_143 = arith.constant 2 : index
    %c0_144 = arith.constant 0 : index
    %c0_145 = arith.constant 0 : index
    %161 = vector.load %arg3[%c2_143, %c0_144, %c0_145] : memref<4x16x16xbf16, #tpu.memory_space<vmem>>, vector<1x16x16xbf16>
    %162 = vector.shape_cast %161 : vector<1x16x16xbf16> to vector<16x16xbf16>
    %cst_146 = arith.constant dense<0.000000e+00> : vector<8x16xf32>
    %163 = tpu.matmul %160, %162, %cst_146 {dimension_numbers = #tpu.dot_dimension_numbers<[1], [0], [0], [1], [0, 0, 1, 1], [], []>} : vector<8x16xbf16>, vector<16x16xbf16>, vector<8x16xf32> -> vector<8x16xf32>
    %164 = arith.addf %155, %163 : vector<8x16xf32>
    %c3_i32_147 = arith.constant 3 : i32
    %165 = arith.addi %0, %c3_i32_147 : i32
    %c1_i32_148 = arith.constant 1 : i32
    %166 = arith.addi %165, %c1_i32_148 : i32
    %c0_149 = arith.constant 0 : index
    %167 = arith.index_cast %166 : i32 to index
    %c1_150 = arith.constant 1 : index
    %c0_151 = arith.constant 0 : index
    %168 = vector.load %arg2[%c0_149, %167, %c1_150, %c0_151] : memref<1x9x9x16xbf16, #tpu.memory_space<vmem>>, vector<1x1x8x16xbf16>
    %169 = vector.shape_cast %168 : vector<1x1x8x16xbf16> to vector<8x16xbf16>
    %c3_152 = arith.constant 3 : index
    %c0_153 = arith.constant 0 : index
    %c0_154 = arith.constant 0 : index
    %170 = vector.load %arg3[%c3_152, %c0_153, %c0_154] : memref<4x16x16xbf16, #tpu.memory_space<vmem>>, vector<1x16x16xbf16>
    %171 = vector.shape_cast %170 : vector<1x16x16xbf16> to vector<16x16xbf16>
    %cst_155 = arith.constant dense<0.000000e+00> : vector<8x16xf32>
    %172 = tpu.matmul %169, %171, %cst_155 {dimension_numbers = #tpu.dot_dimension_numbers<[1], [0], [0], [1], [0, 0, 1, 1], [], []>} : vector<8x16xbf16>, vector<16x16xbf16>, vector<8x16xf32> -> vector<8x16xf32>
    %173 = arith.addf %164, %172 : vector<8x16xf32>
    %174 = vector.broadcast %1 : vector<1x16xf32> to vector<8x16xf32>
    %175 = arith.addf %173, %174 : vector<8x16xf32>
    %cst_156 = arith.constant 0.000000e+00 : f32
    %176 = vector.broadcast %cst_156 : f32 to vector<8x16xf32>
    %177 = arith.maximumf %175, %176 : vector<8x16xf32>
    %178 = arith.truncf %177 : vector<8x16xf32> to vector<8x16xbf16>
    %c0_157 = arith.constant 0 : index
    %c3_158 = arith.constant 3 : index
    %c0_159 = arith.constant 0 : index
    %c0_160 = arith.constant 0 : index
    %179 = vector.load %arg5[%c0_157, %c3_158, %c0_159, %c0_160] : memref<1x8x8x16xbf16, #tpu.memory_space<vmem>>, vector<1x1x8x16xbf16>
    %180 = vector.shape_cast %179 : vector<1x1x8x16xbf16> to vector<8x16xbf16>
    %181 = vector.shape_cast %178 : vector<8x16xbf16> to vector<1x1x8x16xbf16>
    tpu.vector_store %arg5[%c0_157, %c3_158, %c0_159, %c0_160], %181 {strides = array<i32>} : memref<1x8x8x16xbf16, #tpu.memory_space<vmem>>, vector<1x1x8x16xbf16>,
    %cst_161 = arith.constant 0.000000e+00 : f32
    %182 = vector.broadcast %cst_161 : f32 to vector<8x16xf32>
    %c4_i32 = arith.constant 4 : i32
    %183 = arith.addi %0, %c4_i32 : i32
    %c0_i32_162 = arith.constant 0 : i32
    %184 = arith.addi %183, %c0_i32_162 : i32
    %c0_163 = arith.constant 0 : index
    %185 = arith.index_cast %184 : i32 to index
    %c0_164 = arith.constant 0 : index
    %c0_165 = arith.constant 0 : index
    %186 = vector.load %arg2[%c0_163, %185, %c0_164, %c0_165] : memref<1x9x9x16xbf16, #tpu.memory_space<vmem>>, vector<1x1x8x16xbf16>
    %187 = vector.shape_cast %186 : vector<1x1x8x16xbf16> to vector<8x16xbf16>
    %c0_166 = arith.constant 0 : index
    %c0_167 = arith.constant 0 : index
    %c0_168 = arith.constant 0 : index
    %188 = vector.load %arg3[%c0_166, %c0_167, %c0_168] : memref<4x16x16xbf16, #tpu.memory_space<vmem>>, vector<1x16x16xbf16>
    %189 = vector.shape_cast %188 : vector<1x16x16xbf16> to vector<16x16xbf16>
    %cst_169 = arith.constant dense<0.000000e+00> : vector<8x16xf32>
    %190 = tpu.matmul %187, %189, %cst_169 {dimension_numbers = #tpu.dot_dimension_numbers<[1], [0], [0], [1], [0, 0, 1, 1], [], []>} : vector<8x16xbf16>, vector<16x16xbf16>, vector<8x16xf32> -> vector<8x16xf32>
    %191 = arith.addf %182, %190 : vector<8x16xf32>
    %c4_i32_170 = arith.constant 4 : i32
    %192 = arith.addi %0, %c4_i32_170 : i32
    %c0_i32_171 = arith.constant 0 : i32
    %193 = arith.addi %192, %c0_i32_171 : i32
    %c0_172 = arith.constant 0 : index
    %194 = arith.index_cast %193 : i32 to index
    %c1_173 = arith.constant 1 : index
    %c0_174 = arith.constant 0 : index
    %195 = vector.load %arg2[%c0_172, %194, %c1_173, %c0_174] : memref<1x9x9x16xbf16, #tpu.memory_space<vmem>>, vector<1x1x8x16xbf16>
    %196 = vector.shape_cast %195 : vector<1x1x8x16xbf16> to vector<8x16xbf16>
    %c1_175 = arith.constant 1 : index
    %c0_176 = arith.constant 0 : index
    %c0_177 = arith.constant 0 : index
    %197 = vector.load %arg3[%c1_175, %c0_176, %c0_177] : memref<4x16x16xbf16, #tpu.memory_space<vmem>>, vector<1x16x16xbf16>
    %198 = vector.shape_cast %197 : vector<1x16x16xbf16> to vector<16x16xbf16>
    %cst_178 = arith.constant dense<0.000000e+00> : vector<8x16xf32>
    %199 = tpu.matmul %196, %198, %cst_178 {dimension_numbers = #tpu.dot_dimension_numbers<[1], [0], [0], [1], [0, 0, 1, 1], [], []>} : vector<8x16xbf16>, vector<16x16xbf16>, vector<8x16xf32> -> vector<8x16xf32>
    %200 = arith.addf %191, %199 : vector<8x16xf32>
    %c4_i32_179 = arith.constant 4 : i32
    %201 = arith.addi %0, %c4_i32_179 : i32
    %c1_i32_180 = arith.constant 1 : i32
    %202 = arith.addi %201, %c1_i32_180 : i32
    %c0_181 = arith.constant 0 : index
    %203 = arith.index_cast %202 : i32 to index
    %c0_182 = arith.constant 0 : index
    %c0_183 = arith.constant 0 : index
    %204 = vector.load %arg2[%c0_181, %203, %c0_182, %c0_183] : memref<1x9x9x16xbf16, #tpu.memory_space<vmem>>, vector<1x1x8x16xbf16>
    %205 = vector.shape_cast %204 : vector<1x1x8x16xbf16> to vector<8x16xbf16>
    %c2_184 = arith.constant 2 : index
    %c0_185 = arith.constant 0 : index
    %c0_186 = arith.constant 0 : index
    %206 = vector.load %arg3[%c2_184, %c0_185, %c0_186] : memref<4x16x16xbf16, #tpu.memory_space<vmem>>, vector<1x16x16xbf16>
    %207 = vector.shape_cast %206 : vector<1x16x16xbf16> to vector<16x16xbf16>
    %cst_187 = arith.constant dense<0.000000e+00> : vector<8x16xf32>
    %208 = tpu.matmul %205, %207, %cst_187 {dimension_numbers = #tpu.dot_dimension_numbers<[1], [0], [0], [1], [0, 0, 1, 1], [], []>} : vector<8x16xbf16>, vector<16x16xbf16>, vector<8x16xf32> -> vector<8x16xf32>
    %209 = arith.addf %200, %208 : vector<8x16xf32>
    %c4_i32_188 = arith.constant 4 : i32
    %210 = arith.addi %0, %c4_i32_188 : i32
    %c1_i32_189 = arith.constant 1 : i32
    %211 = arith.addi %210, %c1_i32_189 : i32
    %c0_190 = arith.constant 0 : index
    %212 = arith.index_cast %211 : i32 to index
    %c1_191 = arith.constant 1 : index
    %c0_192 = arith.constant 0 : index
    %213 = vector.load %arg2[%c0_190, %212, %c1_191, %c0_192] : memref<1x9x9x16xbf16, #tpu.memory_space<vmem>>, vector<1x1x8x16xbf16>
    %214 = vector.shape_cast %213 : vector<1x1x8x16xbf16> to vector<8x16xbf16>
    %c3_193 = arith.constant 3 : index
    %c0_194 = arith.constant 0 : index
    %c0_195 = arith.constant 0 : index
    %215 = vector.load %arg3[%c3_193, %c0_194, %c0_195] : memref<4x16x16xbf16, #tpu.memory_space<vmem>>, vector<1x16x16xbf16>
    %216 = vector.shape_cast %215 : vector<1x16x16xbf16> to vector<16x16xbf16>
    %cst_196 = arith.constant dense<0.000000e+00> : vector<8x16xf32>
    %217 = tpu.matmul %214, %216, %cst_196 {dimension_numbers = #tpu.dot_dimension_numbers<[1], [0], [0], [1], [0, 0, 1, 1], [], []>} : vector<8x16xbf16>, vector<16x16xbf16>, vector<8x16xf32> -> vector<8x16xf32>
    %218 = arith.addf %209, %217 : vector<8x16xf32>
    %219 = vector.broadcast %1 : vector<1x16xf32> to vector<8x16xf32>
    %220 = arith.addf %218, %219 : vector<8x16xf32>
    %cst_197 = arith.constant 0.000000e+00 : f32
    %221 = vector.broadcast %cst_197 : f32 to vector<8x16xf32>
    %222 = arith.maximumf %220, %221 : vector<8x16xf32>
    %223 = arith.truncf %222 : vector<8x16xf32> to vector<8x16xbf16>
    %c0_198 = arith.constant 0 : index
    %c4 = arith.constant 4 : index
    %c0_199 = arith.constant 0 : index
    %c0_200 = arith.constant 0 : index
    %224 = vector.load %arg5[%c0_198, %c4, %c0_199, %c0_200] : memref<1x8x8x16xbf16, #tpu.memory_space<vmem>>, vector<1x1x8x16xbf16>
    %225 = vector.shape_cast %224 : vector<1x1x8x16xbf16> to vector<8x16xbf16>
    %226 = vector.shape_cast %223 : vector<8x16xbf16> to vector<1x1x8x16xbf16>
    tpu.vector_store %arg5[%c0_198, %c4, %c0_199, %c0_200], %226 {strides = array<i32>} : memref<1x8x8x16xbf16, #tpu.memory_space<vmem>>, vector<1x1x8x16xbf16>,
    %cst_201 = arith.constant 0.000000e+00 : f32
    %227 = vector.broadcast %cst_201 : f32 to vector<8x16xf32>
    %c5_i32 = arith.constant 5 : i32
    %228 = arith.addi %0, %c5_i32 : i32
    %c0_i32_202 = arith.constant 0 : i32
    %229 = arith.addi %228, %c0_i32_202 : i32
    %c0_203 = arith.constant 0 : index
    %230 = arith.index_cast %229 : i32 to index
    %c0_204 = arith.constant 0 : index
    %c0_205 = arith.constant 0 : index
    %231 = vector.load %arg2[%c0_203, %230, %c0_204, %c0_205] : memref<1x9x9x16xbf16, #tpu.memory_space<vmem>>, vector<1x1x8x16xbf16>
    %232 = vector.shape_cast %231 : vector<1x1x8x16xbf16> to vector<8x16xbf16>
    %c0_206 = arith.constant 0 : index
    %c0_207 = arith.constant 0 : index
    %c0_208 = arith.constant 0 : index
    %233 = vector.load %arg3[%c0_206, %c0_207, %c0_208] : memref<4x16x16xbf16, #tpu.memory_space<vmem>>, vector<1x16x16xbf16>
    %234 = vector.shape_cast %233 : vector<1x16x16xbf16> to vector<16x16xbf16>
    %cst_209 = arith.constant dense<0.000000e+00> : vector<8x16xf32>
    %235 = tpu.matmul %232, %234, %cst_209 {dimension_numbers = #tpu.dot_dimension_numbers<[1], [0], [0], [1], [0, 0, 1, 1], [], []>} : vector<8x16xbf16>, vector<16x16xbf16>, vector<8x16xf32> -> vector<8x16xf32>
    %236 = arith.addf %227, %235 : vector<8x16xf32>
    %c5_i32_210 = arith.constant 5 : i32
    %237 = arith.addi %0, %c5_i32_210 : i32
    %c0_i32_211 = arith.constant 0 : i32
    %238 = arith.addi %237, %c0_i32_211 : i32
    %c0_212 = arith.constant 0 : index
    %239 = arith.index_cast %238 : i32 to index
    %c1_213 = arith.constant 1 : index
    %c0_214 = arith.constant 0 : index
    %240 = vector.load %arg2[%c0_212, %239, %c1_213, %c0_214] : memref<1x9x9x16xbf16, #tpu.memory_space<vmem>>, vector<1x1x8x16xbf16>
    %241 = vector.shape_cast %240 : vector<1x1x8x16xbf16> to vector<8x16xbf16>
    %c1_215 = arith.constant 1 : index
    %c0_216 = arith.constant 0 : index
    %c0_217 = arith.constant 0 : index
    %242 = vector.load %arg3[%c1_215, %c0_216, %c0_217] : memref<4x16x16xbf16, #tpu.memory_space<vmem>>, vector<1x16x16xbf16>
    %243 = vector.shape_cast %242 : vector<1x16x16xbf16> to vector<16x16xbf16>
    %cst_218 = arith.constant dense<0.000000e+00> : vector<8x16xf32>
    %244 = tpu.matmul %241, %243, %cst_218 {dimension_numbers = #tpu.dot_dimension_numbers<[1], [0], [0], [1], [0, 0, 1, 1], [], []>} : vector<8x16xbf16>, vector<16x16xbf16>, vector<8x16xf32> -> vector<8x16xf32>
    %245 = arith.addf %236, %244 : vector<8x16xf32>
    %c5_i32_219 = arith.constant 5 : i32
    %246 = arith.addi %0, %c5_i32_219 : i32
    %c1_i32_220 = arith.constant 1 : i32
    %247 = arith.addi %246, %c1_i32_220 : i32
    %c0_221 = arith.constant 0 : index
    %248 = arith.index_cast %247 : i32 to index
    %c0_222 = arith.constant 0 : index
    %c0_223 = arith.constant 0 : index
    %249 = vector.load %arg2[%c0_221, %248, %c0_222, %c0_223] : memref<1x9x9x16xbf16, #tpu.memory_space<vmem>>, vector<1x1x8x16xbf16>
    %250 = vector.shape_cast %249 : vector<1x1x8x16xbf16> to vector<8x16xbf16>
    %c2_224 = arith.constant 2 : index
    %c0_225 = arith.constant 0 : index
    %c0_226 = arith.constant 0 : index
    %251 = vector.load %arg3[%c2_224, %c0_225, %c0_226] : memref<4x16x16xbf16, #tpu.memory_space<vmem>>, vector<1x16x16xbf16>
    %252 = vector.shape_cast %251 : vector<1x16x16xbf16> to vector<16x16xbf16>
    %cst_227 = arith.constant dense<0.000000e+00> : vector<8x16xf32>
    %253 = tpu.matmul %250, %252, %cst_227 {dimension_numbers = #tpu.dot_dimension_numbers<[1], [0], [0], [1], [0, 0, 1, 1], [], []>} : vector<8x16xbf16>, vector<16x16xbf16>, vector<8x16xf32> -> vector<8x16xf32>
    %254 = arith.addf %245, %253 : vector<8x16xf32>
    %c5_i32_228 = arith.constant 5 : i32
    %255 = arith.addi %0, %c5_i32_228 : i32
    %c1_i32_229 = arith.constant 1 : i32
    %256 = arith.addi %255, %c1_i32_229 : i32
    %c0_230 = arith.constant 0 : index
    %257 = arith.index_cast %256 : i32 to index
    %c1_231 = arith.constant 1 : index
    %c0_232 = arith.constant 0 : index
    %258 = vector.load %arg2[%c0_230, %257, %c1_231, %c0_232] : memref<1x9x9x16xbf16, #tpu.memory_space<vmem>>, vector<1x1x8x16xbf16>
    %259 = vector.shape_cast %258 : vector<1x1x8x16xbf16> to vector<8x16xbf16>
    %c3_233 = arith.constant 3 : index
    %c0_234 = arith.constant 0 : index
    %c0_235 = arith.constant 0 : index
    %260 = vector.load %arg3[%c3_233, %c0_234, %c0_235] : memref<4x16x16xbf16, #tpu.memory_space<vmem>>, vector<1x16x16xbf16>
    %261 = vector.shape_cast %260 : vector<1x16x16xbf16> to vector<16x16xbf16>
    %cst_236 = arith.constant dense<0.000000e+00> : vector<8x16xf32>
    %262 = tpu.matmul %259, %261, %cst_236 {dimension_numbers = #tpu.dot_dimension_numbers<[1], [0], [0], [1], [0, 0, 1, 1], [], []>} : vector<8x16xbf16>, vector<16x16xbf16>, vector<8x16xf32> -> vector<8x16xf32>
    %263 = arith.addf %254, %262 : vector<8x16xf32>
    %264 = vector.broadcast %1 : vector<1x16xf32> to vector<8x16xf32>
    %265 = arith.addf %263, %264 : vector<8x16xf32>
    %cst_237 = arith.constant 0.000000e+00 : f32
    %266 = vector.broadcast %cst_237 : f32 to vector<8x16xf32>
    %267 = arith.maximumf %265, %266 : vector<8x16xf32>
    %268 = arith.truncf %267 : vector<8x16xf32> to vector<8x16xbf16>
    %c0_238 = arith.constant 0 : index
    %c5 = arith.constant 5 : index
    %c0_239 = arith.constant 0 : index
    %c0_240 = arith.constant 0 : index
    %269 = vector.load %arg5[%c0_238, %c5, %c0_239, %c0_240] : memref<1x8x8x16xbf16, #tpu.memory_space<vmem>>, vector<1x1x8x16xbf16>
    %270 = vector.shape_cast %269 : vector<1x1x8x16xbf16> to vector<8x16xbf16>
    %271 = vector.shape_cast %268 : vector<8x16xbf16> to vector<1x1x8x16xbf16>
    tpu.vector_store %arg5[%c0_238, %c5, %c0_239, %c0_240], %271 {strides = array<i32>} : memref<1x8x8x16xbf16, #tpu.memory_space<vmem>>, vector<1x1x8x16xbf16>,
    %cst_241 = arith.constant 0.000000e+00 : f32
    %272 = vector.broadcast %cst_241 : f32 to vector<8x16xf32>
    %c6_i32 = arith.constant 6 : i32
    %273 = arith.addi %0, %c6_i32 : i32
    %c0_i32_242 = arith.constant 0 : i32
    %274 = arith.addi %273, %c0_i32_242 : i32
    %c0_243 = arith.constant 0 : index
    %275 = arith.index_cast %274 : i32 to index
    %c0_244 = arith.constant 0 : index
    %c0_245 = arith.constant 0 : index
    %276 = vector.load %arg2[%c0_243, %275, %c0_244, %c0_245] : memref<1x9x9x16xbf16, #tpu.memory_space<vmem>>, vector<1x1x8x16xbf16>
    %277 = vector.shape_cast %276 : vector<1x1x8x16xbf16> to vector<8x16xbf16>
    %c0_246 = arith.constant 0 : index
    %c0_247 = arith.constant 0 : index
    %c0_248 = arith.constant 0 : index
    %278 = vector.load %arg3[%c0_246, %c0_247, %c0_248] : memref<4x16x16xbf16, #tpu.memory_space<vmem>>, vector<1x16x16xbf16>
    %279 = vector.shape_cast %278 : vector<1x16x16xbf16> to vector<16x16xbf16>
    %cst_249 = arith.constant dense<0.000000e+00> : vector<8x16xf32>
    %280 = tpu.matmul %277, %279, %cst_249 {dimension_numbers = #tpu.dot_dimension_numbers<[1], [0], [0], [1], [0, 0, 1, 1], [], []>} : vector<8x16xbf16>, vector<16x16xbf16>, vector<8x16xf32> -> vector<8x16xf32>
    %281 = arith.addf %272, %280 : vector<8x16xf32>
    %c6_i32_250 = arith.constant 6 : i32
    %282 = arith.addi %0, %c6_i32_250 : i32
    %c0_i32_251 = arith.constant 0 : i32
    %283 = arith.addi %282, %c0_i32_251 : i32
    %c0_252 = arith.constant 0 : index
    %284 = arith.index_cast %283 : i32 to index
    %c1_253 = arith.constant 1 : index
    %c0_254 = arith.constant 0 : index
    %285 = vector.load %arg2[%c0_252, %284, %c1_253, %c0_254] : memref<1x9x9x16xbf16, #tpu.memory_space<vmem>>, vector<1x1x8x16xbf16>
    %286 = vector.shape_cast %285 : vector<1x1x8x16xbf16> to vector<8x16xbf16>
    %c1_255 = arith.constant 1 : index
    %c0_256 = arith.constant 0 : index
    %c0_257 = arith.constant 0 : index
    %287 = vector.load %arg3[%c1_255, %c0_256, %c0_257] : memref<4x16x16xbf16, #tpu.memory_space<vmem>>, vector<1x16x16xbf16>
    %288 = vector.shape_cast %287 : vector<1x16x16xbf16> to vector<16x16xbf16>
    %cst_258 = arith.constant dense<0.000000e+00> : vector<8x16xf32>
    %289 = tpu.matmul %286, %288, %cst_258 {dimension_numbers = #tpu.dot_dimension_numbers<[1], [0], [0], [1], [0, 0, 1, 1], [], []>} : vector<8x16xbf16>, vector<16x16xbf16>, vector<8x16xf32> -> vector<8x16xf32>
    %290 = arith.addf %281, %289 : vector<8x16xf32>
    %c6_i32_259 = arith.constant 6 : i32
    %291 = arith.addi %0, %c6_i32_259 : i32
    %c1_i32_260 = arith.constant 1 : i32
    %292 = arith.addi %291, %c1_i32_260 : i32
    %c0_261 = arith.constant 0 : index
    %293 = arith.index_cast %292 : i32 to index
    %c0_262 = arith.constant 0 : index
    %c0_263 = arith.constant 0 : index
    %294 = vector.load %arg2[%c0_261, %293, %c0_262, %c0_263] : memref<1x9x9x16xbf16, #tpu.memory_space<vmem>>, vector<1x1x8x16xbf16>
    %295 = vector.shape_cast %294 : vector<1x1x8x16xbf16> to vector<8x16xbf16>
    %c2_264 = arith.constant 2 : index
    %c0_265 = arith.constant 0 : index
    %c0_266 = arith.constant 0 : index
    %296 = vector.load %arg3[%c2_264, %c0_265, %c0_266] : memref<4x16x16xbf16, #tpu.memory_space<vmem>>, vector<1x16x16xbf16>
    %297 = vector.shape_cast %296 : vector<1x16x16xbf16> to vector<16x16xbf16>
    %cst_267 = arith.constant dense<0.000000e+00> : vector<8x16xf32>
    %298 = tpu.matmul %295, %297, %cst_267 {dimension_numbers = #tpu.dot_dimension_numbers<[1], [0], [0], [1], [0, 0, 1, 1], [], []>} : vector<8x16xbf16>, vector<16x16xbf16>, vector<8x16xf32> -> vector<8x16xf32>
    %299 = arith.addf %290, %298 : vector<8x16xf32>
    %c6_i32_268 = arith.constant 6 : i32
    %300 = arith.addi %0, %c6_i32_268 : i32
    %c1_i32_269 = arith.constant 1 : i32
    %301 = arith.addi %300, %c1_i32_269 : i32
    %c0_270 = arith.constant 0 : index
    %302 = arith.index_cast %301 : i32 to index
    %c1_271 = arith.constant 1 : index
    %c0_272 = arith.constant 0 : index
    %303 = vector.load %arg2[%c0_270, %302, %c1_271, %c0_272] : memref<1x9x9x16xbf16, #tpu.memory_space<vmem>>, vector<1x1x8x16xbf16>
    %304 = vector.shape_cast %303 : vector<1x1x8x16xbf16> to vector<8x16xbf16>
    %c3_273 = arith.constant 3 : index
    %c0_274 = arith.constant 0 : index
    %c0_275 = arith.constant 0 : index
    %305 = vector.load %arg3[%c3_273, %c0_274, %c0_275] : memref<4x16x16xbf16, #tpu.memory_space<vmem>>, vector<1x16x16xbf16>
    %306 = vector.shape_cast %305 : vector<1x16x16xbf16> to vector<16x16xbf16>
    %cst_276 = arith.constant dense<0.000000e+00> : vector<8x16xf32>
    %307 = tpu.matmul %304, %306, %cst_276 {dimension_numbers = #tpu.dot_dimension_numbers<[1], [0], [0], [1], [0, 0, 1, 1], [], []>} : vector<8x16xbf16>, vector<16x16xbf16>, vector<8x16xf32> -> vector<8x16xf32>
    %308 = arith.addf %299, %307 : vector<8x16xf32>
    %309 = vector.broadcast %1 : vector<1x16xf32> to vector<8x16xf32>
    %310 = arith.addf %308, %309 : vector<8x16xf32>
    %cst_277 = arith.constant 0.000000e+00 : f32
    %311 = vector.broadcast %cst_277 : f32 to vector<8x16xf32>
    %312 = arith.maximumf %310, %311 : vector<8x16xf32>
    %313 = arith.truncf %312 : vector<8x16xf32> to vector<8x16xbf16>
    %c0_278 = arith.constant 0 : index
    %c6 = arith.constant 6 : index
    %c0_279 = arith.constant 0 : index
    %c0_280 = arith.constant 0 : index
    %314 = vector.load %arg5[%c0_278, %c6, %c0_279, %c0_280] : memref<1x8x8x16xbf16, #tpu.memory_space<vmem>>, vector<1x1x8x16xbf16>
    %315 = vector.shape_cast %314 : vector<1x1x8x16xbf16> to vector<8x16xbf16>
    %316 = vector.shape_cast %313 : vector<8x16xbf16> to vector<1x1x8x16xbf16>
    tpu.vector_store %arg5[%c0_278, %c6, %c0_279, %c0_280], %316 {strides = array<i32>} : memref<1x8x8x16xbf16, #tpu.memory_space<vmem>>, vector<1x1x8x16xbf16>,
    %cst_281 = arith.constant 0.000000e+00 : f32
    %317 = vector.broadcast %cst_281 : f32 to vector<8x16xf32>
    %c7_i32 = arith.constant 7 : i32
    %318 = arith.addi %0, %c7_i32 : i32
    %c0_i32_282 = arith.constant 0 : i32
    %319 = arith.addi %318, %c0_i32_282 : i32
    %c0_283 = arith.constant 0 : index
    %320 = arith.index_cast %319 : i32 to index
    %c0_284 = arith.constant 0 : index
    %c0_285 = arith.constant 0 : index
    %321 = vector.load %arg2[%c0_283, %320, %c0_284, %c0_285] : memref<1x9x9x16xbf16, #tpu.memory_space<vmem>>, vector<1x1x8x16xbf16>
    %322 = vector.shape_cast %321 : vector<1x1x8x16xbf16> to vector<8x16xbf16>
    %c0_286 = arith.constant 0 : index
    %c0_287 = arith.constant 0 : index
    %c0_288 = arith.constant 0 : index
    %323 = vector.load %arg3[%c0_286, %c0_287, %c0_288] : memref<4x16x16xbf16, #tpu.memory_space<vmem>>, vector<1x16x16xbf16>
    %324 = vector.shape_cast %323 : vector<1x16x16xbf16> to vector<16x16xbf16>
    %cst_289 = arith.constant dense<0.000000e+00> : vector<8x16xf32>
    %325 = tpu.matmul %322, %324, %cst_289 {dimension_numbers = #tpu.dot_dimension_numbers<[1], [0], [0], [1], [0, 0, 1, 1], [], []>} : vector<8x16xbf16>, vector<16x16xbf16>, vector<8x16xf32> -> vector<8x16xf32>
    %326 = arith.addf %317, %325 : vector<8x16xf32>
    %c7_i32_290 = arith.constant 7 : i32
    %327 = arith.addi %0, %c7_i32_290 : i32
    %c0_i32_291 = arith.constant 0 : i32
    %328 = arith.addi %327, %c0_i32_291 : i32
    %c0_292 = arith.constant 0 : index
    %329 = arith.index_cast %328 : i32 to index
    %c1_293 = arith.constant 1 : index
    %c0_294 = arith.constant 0 : index
    %330 = vector.load %arg2[%c0_292, %329, %c1_293, %c0_294] : memref<1x9x9x16xbf16, #tpu.memory_space<vmem>>, vector<1x1x8x16xbf16>
    %331 = vector.shape_cast %330 : vector<1x1x8x16xbf16> to vector<8x16xbf16>
    %c1_295 = arith.constant 1 : index
    %c0_296 = arith.constant 0 : index
    %c0_297 = arith.constant 0 : index
    %332 = vector.load %arg3[%c1_295, %c0_296, %c0_297] : memref<4x16x16xbf16, #tpu.memory_space<vmem>>, vector<1x16x16xbf16>
    %333 = vector.shape_cast %332 : vector<1x16x16xbf16> to vector<16x16xbf16>
    %cst_298 = arith.constant dense<0.000000e+00> : vector<8x16xf32>
    %334 = tpu.matmul %331, %333, %cst_298 {dimension_numbers = #tpu.dot_dimension_numbers<[1], [0], [0], [1], [0, 0, 1, 1], [], []>} : vector<8x16xbf16>, vector<16x16xbf16>, vector<8x16xf32> -> vector<8x16xf32>
    %335 = arith.addf %326, %334 : vector<8x16xf32>
    %c7_i32_299 = arith.constant 7 : i32
    %336 = arith.addi %0, %c7_i32_299 : i32
    %c1_i32_300 = arith.constant 1 : i32
    %337 = arith.addi %336, %c1_i32_300 : i32
    %c0_301 = arith.constant 0 : index
    %338 = arith.index_cast %337 : i32 to index
    %c0_302 = arith.constant 0 : index
    %c0_303 = arith.constant 0 : index
    %339 = vector.load %arg2[%c0_301, %338, %c0_302, %c0_303] : memref<1x9x9x16xbf16, #tpu.memory_space<vmem>>, vector<1x1x8x16xbf16>
    %340 = vector.shape_cast %339 : vector<1x1x8x16xbf16> to vector<8x16xbf16>
    %c2_304 = arith.constant 2 : index
    %c0_305 = arith.constant 0 : index
    %c0_306 = arith.constant 0 : index
    %341 = vector.load %arg3[%c2_304, %c0_305, %c0_306] : memref<4x16x16xbf16, #tpu.memory_space<vmem>>, vector<1x16x16xbf16>
    %342 = vector.shape_cast %341 : vector<1x16x16xbf16> to vector<16x16xbf16>
    %cst_307 = arith.constant dense<0.000000e+00> : vector<8x16xf32>
    %343 = tpu.matmul %340, %342, %cst_307 {dimension_numbers = #tpu.dot_dimension_numbers<[1], [0], [0], [1], [0, 0, 1, 1], [], []>} : vector<8x16xbf16>, vector<16x16xbf16>, vector<8x16xf32> -> vector<8x16xf32>
    %344 = arith.addf %335, %343 : vector<8x16xf32>
    %c7_i32_308 = arith.constant 7 : i32
    %345 = arith.addi %0, %c7_i32_308 : i32
    %c1_i32_309 = arith.constant 1 : i32
    %346 = arith.addi %345, %c1_i32_309 : i32
    %c0_310 = arith.constant 0 : index
    %347 = arith.index_cast %346 : i32 to index
    %c1_311 = arith.constant 1 : index
    %c0_312 = arith.constant 0 : index
    %348 = vector.load %arg2[%c0_310, %347, %c1_311, %c0_312] : memref<1x9x9x16xbf16, #tpu.memory_space<vmem>>, vector<1x1x8x16xbf16>
    %349 = vector.shape_cast %348 : vector<1x1x8x16xbf16> to vector<8x16xbf16>
    %c3_313 = arith.constant 3 : index
    %c0_314 = arith.constant 0 : index
    %c0_315 = arith.constant 0 : index
    %350 = vector.load %arg3[%c3_313, %c0_314, %c0_315] : memref<4x16x16xbf16, #tpu.memory_space<vmem>>, vector<1x16x16xbf16>
    %351 = vector.shape_cast %350 : vector<1x16x16xbf16> to vector<16x16xbf16>
    %cst_316 = arith.constant dense<0.000000e+00> : vector<8x16xf32>
    %352 = tpu.matmul %349, %351, %cst_316 {dimension_numbers = #tpu.dot_dimension_numbers<[1], [0], [0], [1], [0, 0, 1, 1], [], []>} : vector<8x16xbf16>, vector<16x16xbf16>, vector<8x16xf32> -> vector<8x16xf32>
    %353 = arith.addf %344, %352 : vector<8x16xf32>
    %354 = vector.broadcast %1 : vector<1x16xf32> to vector<8x16xf32>
    %355 = arith.addf %353, %354 : vector<8x16xf32>
    %cst_317 = arith.constant 0.000000e+00 : f32
    %356 = vector.broadcast %cst_317 : f32 to vector<8x16xf32>
    %357 = arith.maximumf %355, %356 : vector<8x16xf32>
    %358 = arith.truncf %357 : vector<8x16xf32> to vector<8x16xbf16>
    %c0_318 = arith.constant 0 : index
    %c7 = arith.constant 7 : index
    %c0_319 = arith.constant 0 : index
    %c0_320 = arith.constant 0 : index
    %359 = vector.load %arg5[%c0_318, %c7, %c0_319, %c0_320] : memref<1x8x8x16xbf16, #tpu.memory_space<vmem>>, vector<1x1x8x16xbf16>
    %360 = vector.shape_cast %359 : vector<1x1x8x16xbf16> to vector<8x16xbf16>
    %361 = vector.shape_cast %358 : vector<8x16xbf16> to vector<1x1x8x16xbf16>
    tpu.vector_store %arg5[%c0_318, %c7, %c0_319, %c0_320], %361 {strides = array<i32>} : memref<1x8x8x16xbf16, #tpu.memory_space<vmem>>, vector<1x1x8x16xbf16>,
    return
  }
  func.func @transform_0(%arg0: i32, %arg1: i32) -> (i32, i32, i32, i32) {
    %c0_i32 = arith.constant 0 : i32
    %c0_i32_0 = arith.constant 0 : i32
    %c0_i32_1 = arith.constant 0 : i32
    %c0_i32_2 = arith.constant 0 : i32
    return %arg0, %c0_i32, %c0_i32_0, %c0_i32_1 : i32, i32, i32, i32
  }
  func.func @transform_1(%arg0: i32, %arg1: i32) -> (i32, i32, i32) {
    %c0_i32 = arith.constant 0 : i32
    %c0_i32_0 = arith.constant 0 : i32
    %c0_i32_1 = arith.constant 0 : i32
    %c0_i32_2 = arith.constant 0 : i32
    return %c0_i32, %c0_i32_0, %c0_i32_1 : i32, i32, i32
  }
  func.func @transform_2(%arg0: i32, %arg1: i32) -> (i32, i32) {
    %c0_i32 = arith.constant 0 : i32
    %c0_i32_0 = arith.constant 0 : i32
    %c0_i32_1 = arith.constant 0 : i32
    return %c0_i32, %c0_i32_0 : i32, i32
  }
  func.func @transform_3(%arg0: i32, %arg1: i32) -> (i32, i32, i32, i32) {
    %c0_i32 = arith.constant 0 : i32
    %c0_i32_0 = arith.constant 0 : i32
    %c0_i32_1 = arith.constant 0 : i32
    return %arg0, %arg1, %c0_i32, %c0_i32_0 : i32, i32, i32, i32
  }
}

module attributes {stable_mosaic.version = 11 : i64} {
  func.func @_conv3x3s2_bn_relu_kernel(%arg0: i32, %arg1: i32, %arg2: memref<1x5x5x64xbf16, #tpu.memory_space<vmem>>, %arg3: memref<4x64x32xbf16, #tpu.memory_space<vmem>>, %arg4: memref<1x32xf32, #tpu.memory_space<vmem>>, %arg5: memref<1x4x4x32xbf16, #tpu.memory_space<vmem>>) attributes {dimension_semantics = [#tpu.dimension_semantics<parallel>, #tpu.dimension_semantics<parallel>], iteration_bounds = array<i64: 2, 1>, scalar_prefetch = 0 : i64, scratch_operands = 0 : i64, tpu.core_type = #tpu.core_type<tc>, window_params = [{transform_indices = @transform_0, window_bounds = array<i64: 1, 5, 5, 64>}, {pipeline_mode = #tpu.pipeline_mode<synchronous>, transform_indices = @transform_1, window_bounds = array<i64: 4, 64, 32>}, {pipeline_mode = #tpu.pipeline_mode<synchronous>, transform_indices = @transform_2, window_bounds = array<i64: 1, 32>}, {transform_indices = @transform_3, window_bounds = array<i64: 1, 4, 4, 32>}]} {
    %c4_i32 = arith.constant 4 : i32
    %0 = arith.muli %arg1, %c4_i32 : i32
    %c0 = arith.constant 0 : index
    %c0_0 = arith.constant 0 : index
    %1 = vector.load %arg4[%c0, %c0_0] : memref<1x32xf32, #tpu.memory_space<vmem>>, vector<1x32xf32>
    %cst = arith.constant 0.000000e+00 : f32
    %2 = vector.broadcast %cst : f32 to vector<4x32xf32>
    %c0_i32 = arith.constant 0 : i32
    %3 = arith.addi %0, %c0_i32 : i32
    %c0_i32_1 = arith.constant 0 : i32
    %4 = arith.addi %3, %c0_i32_1 : i32
    %c0_2 = arith.constant 0 : index
    %5 = arith.index_cast %4 : i32 to index
    %c0_3 = arith.constant 0 : index
    %c0_4 = arith.constant 0 : index
    %6 = vector.load %arg2[%c0_2, %5, %c0_3, %c0_4] : memref<1x5x5x64xbf16, #tpu.memory_space<vmem>>, vector<1x1x4x64xbf16>
    %7 = vector.shape_cast %6 : vector<1x1x4x64xbf16> to vector<4x64xbf16>
    %c0_5 = arith.constant 0 : index
    %c0_6 = arith.constant 0 : index
    %c0_7 = arith.constant 0 : index
    %8 = vector.load %arg3[%c0_5, %c0_6, %c0_7] : memref<4x64x32xbf16, #tpu.memory_space<vmem>>, vector<1x64x32xbf16>
    %9 = vector.shape_cast %8 : vector<1x64x32xbf16> to vector<64x32xbf16>
    %cst_8 = arith.constant dense<0.000000e+00> : vector<4x32xf32>
    %10 = tpu.matmul %7, %9, %cst_8 {dimension_numbers = #tpu.dot_dimension_numbers<[1], [0], [0], [1], [0, 0, 1, 1], [], []>} : vector<4x64xbf16>, vector<64x32xbf16>, vector<4x32xf32> -> vector<4x32xf32>
    %11 = arith.addf %2, %10 : vector<4x32xf32>
    %c0_i32_9 = arith.constant 0 : i32
    %12 = arith.addi %0, %c0_i32_9 : i32
    %c0_i32_10 = arith.constant 0 : i32
    %13 = arith.addi %12, %c0_i32_10 : i32
    %c0_11 = arith.constant 0 : index
    %14 = arith.index_cast %13 : i32 to index
    %c1 = arith.constant 1 : index
    %c0_12 = arith.constant 0 : index
    %15 = vector.load %arg2[%c0_11, %14, %c1, %c0_12] : memref<1x5x5x64xbf16, #tpu.memory_space<vmem>>, vector<1x1x4x64xbf16>
    %16 = vector.shape_cast %15 : vector<1x1x4x64xbf16> to vector<4x64xbf16>
    %c1_13 = arith.constant 1 : index
    %c0_14 = arith.constant 0 : index
    %c0_15 = arith.constant 0 : index
    %17 = vector.load %arg3[%c1_13, %c0_14, %c0_15] : memref<4x64x32xbf16, #tpu.memory_space<vmem>>, vector<1x64x32xbf16>
    %18 = vector.shape_cast %17 : vector<1x64x32xbf16> to vector<64x32xbf16>
    %cst_16 = arith.constant dense<0.000000e+00> : vector<4x32xf32>
    %19 = tpu.matmul %16, %18, %cst_16 {dimension_numbers = #tpu.dot_dimension_numbers<[1], [0], [0], [1], [0, 0, 1, 1], [], []>} : vector<4x64xbf16>, vector<64x32xbf16>, vector<4x32xf32> -> vector<4x32xf32>
    %20 = arith.addf %11, %19 : vector<4x32xf32>
    %c0_i32_17 = arith.constant 0 : i32
    %21 = arith.addi %0, %c0_i32_17 : i32
    %c1_i32 = arith.constant 1 : i32
    %22 = arith.addi %21, %c1_i32 : i32
    %c0_18 = arith.constant 0 : index
    %23 = arith.index_cast %22 : i32 to index
    %c0_19 = arith.constant 0 : index
    %c0_20 = arith.constant 0 : index
    %24 = vector.load %arg2[%c0_18, %23, %c0_19, %c0_20] : memref<1x5x5x64xbf16, #tpu.memory_space<vmem>>, vector<1x1x4x64xbf16>
    %25 = vector.shape_cast %24 : vector<1x1x4x64xbf16> to vector<4x64xbf16>
    %c2 = arith.constant 2 : index
    %c0_21 = arith.constant 0 : index
    %c0_22 = arith.constant 0 : index
    %26 = vector.load %arg3[%c2, %c0_21, %c0_22] : memref<4x64x32xbf16, #tpu.memory_space<vmem>>, vector<1x64x32xbf16>
    %27 = vector.shape_cast %26 : vector<1x64x32xbf16> to vector<64x32xbf16>
    %cst_23 = arith.constant dense<0.000000e+00> : vector<4x32xf32>
    %28 = tpu.matmul %25, %27, %cst_23 {dimension_numbers = #tpu.dot_dimension_numbers<[1], [0], [0], [1], [0, 0, 1, 1], [], []>} : vector<4x64xbf16>, vector<64x32xbf16>, vector<4x32xf32> -> vector<4x32xf32>
    %29 = arith.addf %20, %28 : vector<4x32xf32>
    %c0_i32_24 = arith.constant 0 : i32
    %30 = arith.addi %0, %c0_i32_24 : i32
    %c1_i32_25 = arith.constant 1 : i32
    %31 = arith.addi %30, %c1_i32_25 : i32
    %c0_26 = arith.constant 0 : index
    %32 = arith.index_cast %31 : i32 to index
    %c1_27 = arith.constant 1 : index
    %c0_28 = arith.constant 0 : index
    %33 = vector.load %arg2[%c0_26, %32, %c1_27, %c0_28] : memref<1x5x5x64xbf16, #tpu.memory_space<vmem>>, vector<1x1x4x64xbf16>
    %34 = vector.shape_cast %33 : vector<1x1x4x64xbf16> to vector<4x64xbf16>
    %c3 = arith.constant 3 : index
    %c0_29 = arith.constant 0 : index
    %c0_30 = arith.constant 0 : index
    %35 = vector.load %arg3[%c3, %c0_29, %c0_30] : memref<4x64x32xbf16, #tpu.memory_space<vmem>>, vector<1x64x32xbf16>
    %36 = vector.shape_cast %35 : vector<1x64x32xbf16> to vector<64x32xbf16>
    %cst_31 = arith.constant dense<0.000000e+00> : vector<4x32xf32>
    %37 = tpu.matmul %34, %36, %cst_31 {dimension_numbers = #tpu.dot_dimension_numbers<[1], [0], [0], [1], [0, 0, 1, 1], [], []>} : vector<4x64xbf16>, vector<64x32xbf16>, vector<4x32xf32> -> vector<4x32xf32>
    %38 = arith.addf %29, %37 : vector<4x32xf32>
    %39 = vector.broadcast %1 : vector<1x32xf32> to vector<4x32xf32>
    %40 = arith.addf %38, %39 : vector<4x32xf32>
    %cst_32 = arith.constant 0.000000e+00 : f32
    %41 = vector.broadcast %cst_32 : f32 to vector<4x32xf32>
    %42 = arith.maximumf %40, %41 : vector<4x32xf32>
    %43 = arith.truncf %42 : vector<4x32xf32> to vector<4x32xbf16>
    %c0_33 = arith.constant 0 : index
    %c0_34 = arith.constant 0 : index
    %c0_35 = arith.constant 0 : index
    %c0_36 = arith.constant 0 : index
    %44 = vector.load %arg5[%c0_33, %c0_34, %c0_35, %c0_36] : memref<1x4x4x32xbf16, #tpu.memory_space<vmem>>, vector<1x1x4x32xbf16>
    %45 = vector.shape_cast %44 : vector<1x1x4x32xbf16> to vector<4x32xbf16>
    %46 = vector.shape_cast %43 : vector<4x32xbf16> to vector<1x1x4x32xbf16>
    tpu.vector_store %arg5[%c0_33, %c0_34, %c0_35, %c0_36], %46 {strides = array<i32>} : memref<1x4x4x32xbf16, #tpu.memory_space<vmem>>, vector<1x1x4x32xbf16>,
    %cst_37 = arith.constant 0.000000e+00 : f32
    %47 = vector.broadcast %cst_37 : f32 to vector<4x32xf32>
    %c1_i32_38 = arith.constant 1 : i32
    %48 = arith.addi %0, %c1_i32_38 : i32
    %c0_i32_39 = arith.constant 0 : i32
    %49 = arith.addi %48, %c0_i32_39 : i32
    %c0_40 = arith.constant 0 : index
    %50 = arith.index_cast %49 : i32 to index
    %c0_41 = arith.constant 0 : index
    %c0_42 = arith.constant 0 : index
    %51 = vector.load %arg2[%c0_40, %50, %c0_41, %c0_42] : memref<1x5x5x64xbf16, #tpu.memory_space<vmem>>, vector<1x1x4x64xbf16>
    %52 = vector.shape_cast %51 : vector<1x1x4x64xbf16> to vector<4x64xbf16>
    %c0_43 = arith.constant 0 : index
    %c0_44 = arith.constant 0 : index
    %c0_45 = arith.constant 0 : index
    %53 = vector.load %arg3[%c0_43, %c0_44, %c0_45] : memref<4x64x32xbf16, #tpu.memory_space<vmem>>, vector<1x64x32xbf16>
    %54 = vector.shape_cast %53 : vector<1x64x32xbf16> to vector<64x32xbf16>
    %cst_46 = arith.constant dense<0.000000e+00> : vector<4x32xf32>
    %55 = tpu.matmul %52, %54, %cst_46 {dimension_numbers = #tpu.dot_dimension_numbers<[1], [0], [0], [1], [0, 0, 1, 1], [], []>} : vector<4x64xbf16>, vector<64x32xbf16>, vector<4x32xf32> -> vector<4x32xf32>
    %56 = arith.addf %47, %55 : vector<4x32xf32>
    %c1_i32_47 = arith.constant 1 : i32
    %57 = arith.addi %0, %c1_i32_47 : i32
    %c0_i32_48 = arith.constant 0 : i32
    %58 = arith.addi %57, %c0_i32_48 : i32
    %c0_49 = arith.constant 0 : index
    %59 = arith.index_cast %58 : i32 to index
    %c1_50 = arith.constant 1 : index
    %c0_51 = arith.constant 0 : index
    %60 = vector.load %arg2[%c0_49, %59, %c1_50, %c0_51] : memref<1x5x5x64xbf16, #tpu.memory_space<vmem>>, vector<1x1x4x64xbf16>
    %61 = vector.shape_cast %60 : vector<1x1x4x64xbf16> to vector<4x64xbf16>
    %c1_52 = arith.constant 1 : index
    %c0_53 = arith.constant 0 : index
    %c0_54 = arith.constant 0 : index
    %62 = vector.load %arg3[%c1_52, %c0_53, %c0_54] : memref<4x64x32xbf16, #tpu.memory_space<vmem>>, vector<1x64x32xbf16>
    %63 = vector.shape_cast %62 : vector<1x64x32xbf16> to vector<64x32xbf16>
    %cst_55 = arith.constant dense<0.000000e+00> : vector<4x32xf32>
    %64 = tpu.matmul %61, %63, %cst_55 {dimension_numbers = #tpu.dot_dimension_numbers<[1], [0], [0], [1], [0, 0, 1, 1], [], []>} : vector<4x64xbf16>, vector<64x32xbf16>, vector<4x32xf32> -> vector<4x32xf32>
    %65 = arith.addf %56, %64 : vector<4x32xf32>
    %c1_i32_56 = arith.constant 1 : i32
    %66 = arith.addi %0, %c1_i32_56 : i32
    %c1_i32_57 = arith.constant 1 : i32
    %67 = arith.addi %66, %c1_i32_57 : i32
    %c0_58 = arith.constant 0 : index
    %68 = arith.index_cast %67 : i32 to index
    %c0_59 = arith.constant 0 : index
    %c0_60 = arith.constant 0 : index
    %69 = vector.load %arg2[%c0_58, %68, %c0_59, %c0_60] : memref<1x5x5x64xbf16, #tpu.memory_space<vmem>>, vector<1x1x4x64xbf16>
    %70 = vector.shape_cast %69 : vector<1x1x4x64xbf16> to vector<4x64xbf16>
    %c2_61 = arith.constant 2 : index
    %c0_62 = arith.constant 0 : index
    %c0_63 = arith.constant 0 : index
    %71 = vector.load %arg3[%c2_61, %c0_62, %c0_63] : memref<4x64x32xbf16, #tpu.memory_space<vmem>>, vector<1x64x32xbf16>
    %72 = vector.shape_cast %71 : vector<1x64x32xbf16> to vector<64x32xbf16>
    %cst_64 = arith.constant dense<0.000000e+00> : vector<4x32xf32>
    %73 = tpu.matmul %70, %72, %cst_64 {dimension_numbers = #tpu.dot_dimension_numbers<[1], [0], [0], [1], [0, 0, 1, 1], [], []>} : vector<4x64xbf16>, vector<64x32xbf16>, vector<4x32xf32> -> vector<4x32xf32>
    %74 = arith.addf %65, %73 : vector<4x32xf32>
    %c1_i32_65 = arith.constant 1 : i32
    %75 = arith.addi %0, %c1_i32_65 : i32
    %c1_i32_66 = arith.constant 1 : i32
    %76 = arith.addi %75, %c1_i32_66 : i32
    %c0_67 = arith.constant 0 : index
    %77 = arith.index_cast %76 : i32 to index
    %c1_68 = arith.constant 1 : index
    %c0_69 = arith.constant 0 : index
    %78 = vector.load %arg2[%c0_67, %77, %c1_68, %c0_69] : memref<1x5x5x64xbf16, #tpu.memory_space<vmem>>, vector<1x1x4x64xbf16>
    %79 = vector.shape_cast %78 : vector<1x1x4x64xbf16> to vector<4x64xbf16>
    %c3_70 = arith.constant 3 : index
    %c0_71 = arith.constant 0 : index
    %c0_72 = arith.constant 0 : index
    %80 = vector.load %arg3[%c3_70, %c0_71, %c0_72] : memref<4x64x32xbf16, #tpu.memory_space<vmem>>, vector<1x64x32xbf16>
    %81 = vector.shape_cast %80 : vector<1x64x32xbf16> to vector<64x32xbf16>
    %cst_73 = arith.constant dense<0.000000e+00> : vector<4x32xf32>
    %82 = tpu.matmul %79, %81, %cst_73 {dimension_numbers = #tpu.dot_dimension_numbers<[1], [0], [0], [1], [0, 0, 1, 1], [], []>} : vector<4x64xbf16>, vector<64x32xbf16>, vector<4x32xf32> -> vector<4x32xf32>
    %83 = arith.addf %74, %82 : vector<4x32xf32>
    %84 = vector.broadcast %1 : vector<1x32xf32> to vector<4x32xf32>
    %85 = arith.addf %83, %84 : vector<4x32xf32>
    %cst_74 = arith.constant 0.000000e+00 : f32
    %86 = vector.broadcast %cst_74 : f32 to vector<4x32xf32>
    %87 = arith.maximumf %85, %86 : vector<4x32xf32>
    %88 = arith.truncf %87 : vector<4x32xf32> to vector<4x32xbf16>
    %c0_75 = arith.constant 0 : index
    %c1_76 = arith.constant 1 : index
    %c0_77 = arith.constant 0 : index
    %c0_78 = arith.constant 0 : index
    %89 = vector.load %arg5[%c0_75, %c1_76, %c0_77, %c0_78] : memref<1x4x4x32xbf16, #tpu.memory_space<vmem>>, vector<1x1x4x32xbf16>
    %90 = vector.shape_cast %89 : vector<1x1x4x32xbf16> to vector<4x32xbf16>
    %91 = vector.shape_cast %88 : vector<4x32xbf16> to vector<1x1x4x32xbf16>
    tpu.vector_store %arg5[%c0_75, %c1_76, %c0_77, %c0_78], %91 {strides = array<i32>} : memref<1x4x4x32xbf16, #tpu.memory_space<vmem>>, vector<1x1x4x32xbf16>,
    %cst_79 = arith.constant 0.000000e+00 : f32
    %92 = vector.broadcast %cst_79 : f32 to vector<4x32xf32>
    %c2_i32 = arith.constant 2 : i32
    %93 = arith.addi %0, %c2_i32 : i32
    %c0_i32_80 = arith.constant 0 : i32
    %94 = arith.addi %93, %c0_i32_80 : i32
    %c0_81 = arith.constant 0 : index
    %95 = arith.index_cast %94 : i32 to index
    %c0_82 = arith.constant 0 : index
    %c0_83 = arith.constant 0 : index
    %96 = vector.load %arg2[%c0_81, %95, %c0_82, %c0_83] : memref<1x5x5x64xbf16, #tpu.memory_space<vmem>>, vector<1x1x4x64xbf16>
    %97 = vector.shape_cast %96 : vector<1x1x4x64xbf16> to vector<4x64xbf16>
    %c0_84 = arith.constant 0 : index
    %c0_85 = arith.constant 0 : index
    %c0_86 = arith.constant 0 : index
    %98 = vector.load %arg3[%c0_84, %c0_85, %c0_86] : memref<4x64x32xbf16, #tpu.memory_space<vmem>>, vector<1x64x32xbf16>
    %99 = vector.shape_cast %98 : vector<1x64x32xbf16> to vector<64x32xbf16>
    %cst_87 = arith.constant dense<0.000000e+00> : vector<4x32xf32>
    %100 = tpu.matmul %97, %99, %cst_87 {dimension_numbers = #tpu.dot_dimension_numbers<[1], [0], [0], [1], [0, 0, 1, 1], [], []>} : vector<4x64xbf16>, vector<64x32xbf16>, vector<4x32xf32> -> vector<4x32xf32>
    %101 = arith.addf %92, %100 : vector<4x32xf32>
    %c2_i32_88 = arith.constant 2 : i32
    %102 = arith.addi %0, %c2_i32_88 : i32
    %c0_i32_89 = arith.constant 0 : i32
    %103 = arith.addi %102, %c0_i32_89 : i32
    %c0_90 = arith.constant 0 : index
    %104 = arith.index_cast %103 : i32 to index
    %c1_91 = arith.constant 1 : index
    %c0_92 = arith.constant 0 : index
    %105 = vector.load %arg2[%c0_90, %104, %c1_91, %c0_92] : memref<1x5x5x64xbf16, #tpu.memory_space<vmem>>, vector<1x1x4x64xbf16>
    %106 = vector.shape_cast %105 : vector<1x1x4x64xbf16> to vector<4x64xbf16>
    %c1_93 = arith.constant 1 : index
    %c0_94 = arith.constant 0 : index
    %c0_95 = arith.constant 0 : index
    %107 = vector.load %arg3[%c1_93, %c0_94, %c0_95] : memref<4x64x32xbf16, #tpu.memory_space<vmem>>, vector<1x64x32xbf16>
    %108 = vector.shape_cast %107 : vector<1x64x32xbf16> to vector<64x32xbf16>
    %cst_96 = arith.constant dense<0.000000e+00> : vector<4x32xf32>
    %109 = tpu.matmul %106, %108, %cst_96 {dimension_numbers = #tpu.dot_dimension_numbers<[1], [0], [0], [1], [0, 0, 1, 1], [], []>} : vector<4x64xbf16>, vector<64x32xbf16>, vector<4x32xf32> -> vector<4x32xf32>
    %110 = arith.addf %101, %109 : vector<4x32xf32>
    %c2_i32_97 = arith.constant 2 : i32
    %111 = arith.addi %0, %c2_i32_97 : i32
    %c1_i32_98 = arith.constant 1 : i32
    %112 = arith.addi %111, %c1_i32_98 : i32
    %c0_99 = arith.constant 0 : index
    %113 = arith.index_cast %112 : i32 to index
    %c0_100 = arith.constant 0 : index
    %c0_101 = arith.constant 0 : index
    %114 = vector.load %arg2[%c0_99, %113, %c0_100, %c0_101] : memref<1x5x5x64xbf16, #tpu.memory_space<vmem>>, vector<1x1x4x64xbf16>
    %115 = vector.shape_cast %114 : vector<1x1x4x64xbf16> to vector<4x64xbf16>
    %c2_102 = arith.constant 2 : index
    %c0_103 = arith.constant 0 : index
    %c0_104 = arith.constant 0 : index
    %116 = vector.load %arg3[%c2_102, %c0_103, %c0_104] : memref<4x64x32xbf16, #tpu.memory_space<vmem>>, vector<1x64x32xbf16>
    %117 = vector.shape_cast %116 : vector<1x64x32xbf16> to vector<64x32xbf16>
    %cst_105 = arith.constant dense<0.000000e+00> : vector<4x32xf32>
    %118 = tpu.matmul %115, %117, %cst_105 {dimension_numbers = #tpu.dot_dimension_numbers<[1], [0], [0], [1], [0, 0, 1, 1], [], []>} : vector<4x64xbf16>, vector<64x32xbf16>, vector<4x32xf32> -> vector<4x32xf32>
    %119 = arith.addf %110, %118 : vector<4x32xf32>
    %c2_i32_106 = arith.constant 2 : i32
    %120 = arith.addi %0, %c2_i32_106 : i32
    %c1_i32_107 = arith.constant 1 : i32
    %121 = arith.addi %120, %c1_i32_107 : i32
    %c0_108 = arith.constant 0 : index
    %122 = arith.index_cast %121 : i32 to index
    %c1_109 = arith.constant 1 : index
    %c0_110 = arith.constant 0 : index
    %123 = vector.load %arg2[%c0_108, %122, %c1_109, %c0_110] : memref<1x5x5x64xbf16, #tpu.memory_space<vmem>>, vector<1x1x4x64xbf16>
    %124 = vector.shape_cast %123 : vector<1x1x4x64xbf16> to vector<4x64xbf16>
    %c3_111 = arith.constant 3 : index
    %c0_112 = arith.constant 0 : index
    %c0_113 = arith.constant 0 : index
    %125 = vector.load %arg3[%c3_111, %c0_112, %c0_113] : memref<4x64x32xbf16, #tpu.memory_space<vmem>>, vector<1x64x32xbf16>
    %126 = vector.shape_cast %125 : vector<1x64x32xbf16> to vector<64x32xbf16>
    %cst_114 = arith.constant dense<0.000000e+00> : vector<4x32xf32>
    %127 = tpu.matmul %124, %126, %cst_114 {dimension_numbers = #tpu.dot_dimension_numbers<[1], [0], [0], [1], [0, 0, 1, 1], [], []>} : vector<4x64xbf16>, vector<64x32xbf16>, vector<4x32xf32> -> vector<4x32xf32>
    %128 = arith.addf %119, %127 : vector<4x32xf32>
    %129 = vector.broadcast %1 : vector<1x32xf32> to vector<4x32xf32>
    %130 = arith.addf %128, %129 : vector<4x32xf32>
    %cst_115 = arith.constant 0.000000e+00 : f32
    %131 = vector.broadcast %cst_115 : f32 to vector<4x32xf32>
    %132 = arith.maximumf %130, %131 : vector<4x32xf32>
    %133 = arith.truncf %132 : vector<4x32xf32> to vector<4x32xbf16>
    %c0_116 = arith.constant 0 : index
    %c2_117 = arith.constant 2 : index
    %c0_118 = arith.constant 0 : index
    %c0_119 = arith.constant 0 : index
    %134 = vector.load %arg5[%c0_116, %c2_117, %c0_118, %c0_119] : memref<1x4x4x32xbf16, #tpu.memory_space<vmem>>, vector<1x1x4x32xbf16>
    %135 = vector.shape_cast %134 : vector<1x1x4x32xbf16> to vector<4x32xbf16>
    %136 = vector.shape_cast %133 : vector<4x32xbf16> to vector<1x1x4x32xbf16>
    tpu.vector_store %arg5[%c0_116, %c2_117, %c0_118, %c0_119], %136 {strides = array<i32>} : memref<1x4x4x32xbf16, #tpu.memory_space<vmem>>, vector<1x1x4x32xbf16>,
    %cst_120 = arith.constant 0.000000e+00 : f32
    %137 = vector.broadcast %cst_120 : f32 to vector<4x32xf32>
    %c3_i32 = arith.constant 3 : i32
    %138 = arith.addi %0, %c3_i32 : i32
    %c0_i32_121 = arith.constant 0 : i32
    %139 = arith.addi %138, %c0_i32_121 : i32
    %c0_122 = arith.constant 0 : index
    %140 = arith.index_cast %139 : i32 to index
    %c0_123 = arith.constant 0 : index
    %c0_124 = arith.constant 0 : index
    %141 = vector.load %arg2[%c0_122, %140, %c0_123, %c0_124] : memref<1x5x5x64xbf16, #tpu.memory_space<vmem>>, vector<1x1x4x64xbf16>
    %142 = vector.shape_cast %141 : vector<1x1x4x64xbf16> to vector<4x64xbf16>
    %c0_125 = arith.constant 0 : index
    %c0_126 = arith.constant 0 : index
    %c0_127 = arith.constant 0 : index
    %143 = vector.load %arg3[%c0_125, %c0_126, %c0_127] : memref<4x64x32xbf16, #tpu.memory_space<vmem>>, vector<1x64x32xbf16>
    %144 = vector.shape_cast %143 : vector<1x64x32xbf16> to vector<64x32xbf16>
    %cst_128 = arith.constant dense<0.000000e+00> : vector<4x32xf32>
    %145 = tpu.matmul %142, %144, %cst_128 {dimension_numbers = #tpu.dot_dimension_numbers<[1], [0], [0], [1], [0, 0, 1, 1], [], []>} : vector<4x64xbf16>, vector<64x32xbf16>, vector<4x32xf32> -> vector<4x32xf32>
    %146 = arith.addf %137, %145 : vector<4x32xf32>
    %c3_i32_129 = arith.constant 3 : i32
    %147 = arith.addi %0, %c3_i32_129 : i32
    %c0_i32_130 = arith.constant 0 : i32
    %148 = arith.addi %147, %c0_i32_130 : i32
    %c0_131 = arith.constant 0 : index
    %149 = arith.index_cast %148 : i32 to index
    %c1_132 = arith.constant 1 : index
    %c0_133 = arith.constant 0 : index
    %150 = vector.load %arg2[%c0_131, %149, %c1_132, %c0_133] : memref<1x5x5x64xbf16, #tpu.memory_space<vmem>>, vector<1x1x4x64xbf16>
    %151 = vector.shape_cast %150 : vector<1x1x4x64xbf16> to vector<4x64xbf16>
    %c1_134 = arith.constant 1 : index
    %c0_135 = arith.constant 0 : index
    %c0_136 = arith.constant 0 : index
    %152 = vector.load %arg3[%c1_134, %c0_135, %c0_136] : memref<4x64x32xbf16, #tpu.memory_space<vmem>>, vector<1x64x32xbf16>
    %153 = vector.shape_cast %152 : vector<1x64x32xbf16> to vector<64x32xbf16>
    %cst_137 = arith.constant dense<0.000000e+00> : vector<4x32xf32>
    %154 = tpu.matmul %151, %153, %cst_137 {dimension_numbers = #tpu.dot_dimension_numbers<[1], [0], [0], [1], [0, 0, 1, 1], [], []>} : vector<4x64xbf16>, vector<64x32xbf16>, vector<4x32xf32> -> vector<4x32xf32>
    %155 = arith.addf %146, %154 : vector<4x32xf32>
    %c3_i32_138 = arith.constant 3 : i32
    %156 = arith.addi %0, %c3_i32_138 : i32
    %c1_i32_139 = arith.constant 1 : i32
    %157 = arith.addi %156, %c1_i32_139 : i32
    %c0_140 = arith.constant 0 : index
    %158 = arith.index_cast %157 : i32 to index
    %c0_141 = arith.constant 0 : index
    %c0_142 = arith.constant 0 : index
    %159 = vector.load %arg2[%c0_140, %158, %c0_141, %c0_142] : memref<1x5x5x64xbf16, #tpu.memory_space<vmem>>, vector<1x1x4x64xbf16>
    %160 = vector.shape_cast %159 : vector<1x1x4x64xbf16> to vector<4x64xbf16>
    %c2_143 = arith.constant 2 : index
    %c0_144 = arith.constant 0 : index
    %c0_145 = arith.constant 0 : index
    %161 = vector.load %arg3[%c2_143, %c0_144, %c0_145] : memref<4x64x32xbf16, #tpu.memory_space<vmem>>, vector<1x64x32xbf16>
    %162 = vector.shape_cast %161 : vector<1x64x32xbf16> to vector<64x32xbf16>
    %cst_146 = arith.constant dense<0.000000e+00> : vector<4x32xf32>
    %163 = tpu.matmul %160, %162, %cst_146 {dimension_numbers = #tpu.dot_dimension_numbers<[1], [0], [0], [1], [0, 0, 1, 1], [], []>} : vector<4x64xbf16>, vector<64x32xbf16>, vector<4x32xf32> -> vector<4x32xf32>
    %164 = arith.addf %155, %163 : vector<4x32xf32>
    %c3_i32_147 = arith.constant 3 : i32
    %165 = arith.addi %0, %c3_i32_147 : i32
    %c1_i32_148 = arith.constant 1 : i32
    %166 = arith.addi %165, %c1_i32_148 : i32
    %c0_149 = arith.constant 0 : index
    %167 = arith.index_cast %166 : i32 to index
    %c1_150 = arith.constant 1 : index
    %c0_151 = arith.constant 0 : index
    %168 = vector.load %arg2[%c0_149, %167, %c1_150, %c0_151] : memref<1x5x5x64xbf16, #tpu.memory_space<vmem>>, vector<1x1x4x64xbf16>
    %169 = vector.shape_cast %168 : vector<1x1x4x64xbf16> to vector<4x64xbf16>
    %c3_152 = arith.constant 3 : index
    %c0_153 = arith.constant 0 : index
    %c0_154 = arith.constant 0 : index
    %170 = vector.load %arg3[%c3_152, %c0_153, %c0_154] : memref<4x64x32xbf16, #tpu.memory_space<vmem>>, vector<1x64x32xbf16>
    %171 = vector.shape_cast %170 : vector<1x64x32xbf16> to vector<64x32xbf16>
    %cst_155 = arith.constant dense<0.000000e+00> : vector<4x32xf32>
    %172 = tpu.matmul %169, %171, %cst_155 {dimension_numbers = #tpu.dot_dimension_numbers<[1], [0], [0], [1], [0, 0, 1, 1], [], []>} : vector<4x64xbf16>, vector<64x32xbf16>, vector<4x32xf32> -> vector<4x32xf32>
    %173 = arith.addf %164, %172 : vector<4x32xf32>
    %174 = vector.broadcast %1 : vector<1x32xf32> to vector<4x32xf32>
    %175 = arith.addf %173, %174 : vector<4x32xf32>
    %cst_156 = arith.constant 0.000000e+00 : f32
    %176 = vector.broadcast %cst_156 : f32 to vector<4x32xf32>
    %177 = arith.maximumf %175, %176 : vector<4x32xf32>
    %178 = arith.truncf %177 : vector<4x32xf32> to vector<4x32xbf16>
    %c0_157 = arith.constant 0 : index
    %c3_158 = arith.constant 3 : index
    %c0_159 = arith.constant 0 : index
    %c0_160 = arith.constant 0 : index
    %179 = vector.load %arg5[%c0_157, %c3_158, %c0_159, %c0_160] : memref<1x4x4x32xbf16, #tpu.memory_space<vmem>>, vector<1x1x4x32xbf16>
    %180 = vector.shape_cast %179 : vector<1x1x4x32xbf16> to vector<4x32xbf16>
    %181 = vector.shape_cast %178 : vector<4x32xbf16> to vector<1x1x4x32xbf16>
    tpu.vector_store %arg5[%c0_157, %c3_158, %c0_159, %c0_160], %181 {strides = array<i32>} : memref<1x4x4x32xbf16, #tpu.memory_space<vmem>>, vector<1x1x4x32xbf16>,
    return
  }
  func.func @transform_0(%arg0: i32, %arg1: i32) -> (i32, i32, i32, i32) {
    %c0_i32 = arith.constant 0 : i32
    %c0_i32_0 = arith.constant 0 : i32
    %c0_i32_1 = arith.constant 0 : i32
    %c0_i32_2 = arith.constant 0 : i32
    return %arg0, %c0_i32, %c0_i32_0, %c0_i32_1 : i32, i32, i32, i32
  }
  func.func @transform_1(%arg0: i32, %arg1: i32) -> (i32, i32, i32) {
    %c0_i32 = arith.constant 0 : i32
    %c0_i32_0 = arith.constant 0 : i32
    %c0_i32_1 = arith.constant 0 : i32
    %c0_i32_2 = arith.constant 0 : i32
    return %c0_i32, %c0_i32_0, %c0_i32_1 : i32, i32, i32
  }
  func.func @transform_2(%arg0: i32, %arg1: i32) -> (i32, i32) {
    %c0_i32 = arith.constant 0 : i32
    %c0_i32_0 = arith.constant 0 : i32
    %c0_i32_1 = arith.constant 0 : i32
    return %c0_i32, %c0_i32_0 : i32, i32
  }
  func.func @transform_3(%arg0: i32, %arg1: i32) -> (i32, i32, i32, i32) {
    %c0_i32 = arith.constant 0 : i32
    %c0_i32_0 = arith.constant 0 : i32
    %c0_i32_1 = arith.constant 0 : i32
    return %arg0, %arg1, %c0_i32, %c0_i32_0 : i32, i32, i32, i32
  }
}

module attributes {stable_mosaic.version = 11 : i64} {
  func.func @_conv3x3s2_bn_relu_kernel(%arg0: i32, %arg1: i32, %arg2: memref<1x3x3x128xbf16, #tpu.memory_space<vmem>>, %arg3: memref<4x128x64xbf16, #tpu.memory_space<vmem>>, %arg4: memref<1x64xf32, #tpu.memory_space<vmem>>, %arg5: memref<1x2x2x64xbf16, #tpu.memory_space<vmem>>) attributes {dimension_semantics = [#tpu.dimension_semantics<parallel>, #tpu.dimension_semantics<parallel>], iteration_bounds = array<i64: 2, 1>, scalar_prefetch = 0 : i64, scratch_operands = 0 : i64, tpu.core_type = #tpu.core_type<tc>, window_params = [{transform_indices = @transform_0, window_bounds = array<i64: 1, 3, 3, 128>}, {pipeline_mode = #tpu.pipeline_mode<synchronous>, transform_indices = @transform_1, window_bounds = array<i64: 4, 128, 64>}, {pipeline_mode = #tpu.pipeline_mode<synchronous>, transform_indices = @transform_2, window_bounds = array<i64: 1, 64>}, {transform_indices = @transform_3, window_bounds = array<i64: 1, 2, 2, 64>}]} {
    %c2_i32 = arith.constant 2 : i32
    %0 = arith.muli %arg1, %c2_i32 : i32
    %c0 = arith.constant 0 : index
    %c0_0 = arith.constant 0 : index
    %1 = vector.load %arg4[%c0, %c0_0] : memref<1x64xf32, #tpu.memory_space<vmem>>, vector<1x64xf32>
    %cst = arith.constant 0.000000e+00 : f32
    %2 = vector.broadcast %cst : f32 to vector<2x64xf32>
    %c0_i32 = arith.constant 0 : i32
    %3 = arith.addi %0, %c0_i32 : i32
    %c0_i32_1 = arith.constant 0 : i32
    %4 = arith.addi %3, %c0_i32_1 : i32
    %c0_2 = arith.constant 0 : index
    %5 = arith.index_cast %4 : i32 to index
    %c0_3 = arith.constant 0 : index
    %c0_4 = arith.constant 0 : index
    %6 = vector.load %arg2[%c0_2, %5, %c0_3, %c0_4] : memref<1x3x3x128xbf16, #tpu.memory_space<vmem>>, vector<1x1x2x128xbf16>
    %7 = vector.shape_cast %6 : vector<1x1x2x128xbf16> to vector<2x128xbf16>
    %c0_5 = arith.constant 0 : index
    %c0_6 = arith.constant 0 : index
    %c0_7 = arith.constant 0 : index
    %8 = vector.load %arg3[%c0_5, %c0_6, %c0_7] : memref<4x128x64xbf16, #tpu.memory_space<vmem>>, vector<1x128x64xbf16>
    %9 = vector.shape_cast %8 : vector<1x128x64xbf16> to vector<128x64xbf16>
    %cst_8 = arith.constant dense<0.000000e+00> : vector<2x64xf32>
    %10 = tpu.matmul %7, %9, %cst_8 {dimension_numbers = #tpu.dot_dimension_numbers<[1], [0], [0], [1], [0, 0, 1, 1], [], []>} : vector<2x128xbf16>, vector<128x64xbf16>, vector<2x64xf32> -> vector<2x64xf32>
    %11 = arith.addf %2, %10 : vector<2x64xf32>
    %c0_i32_9 = arith.constant 0 : i32
    %12 = arith.addi %0, %c0_i32_9 : i32
    %c0_i32_10 = arith.constant 0 : i32
    %13 = arith.addi %12, %c0_i32_10 : i32
    %c0_11 = arith.constant 0 : index
    %14 = arith.index_cast %13 : i32 to index
    %c1 = arith.constant 1 : index
    %c0_12 = arith.constant 0 : index
    %15 = vector.load %arg2[%c0_11, %14, %c1, %c0_12] : memref<1x3x3x128xbf16, #tpu.memory_space<vmem>>, vector<1x1x2x128xbf16>
    %16 = vector.shape_cast %15 : vector<1x1x2x128xbf16> to vector<2x128xbf16>
    %c1_13 = arith.constant 1 : index
    %c0_14 = arith.constant 0 : index
    %c0_15 = arith.constant 0 : index
    %17 = vector.load %arg3[%c1_13, %c0_14, %c0_15] : memref<4x128x64xbf16, #tpu.memory_space<vmem>>, vector<1x128x64xbf16>
    %18 = vector.shape_cast %17 : vector<1x128x64xbf16> to vector<128x64xbf16>
    %cst_16 = arith.constant dense<0.000000e+00> : vector<2x64xf32>
    %19 = tpu.matmul %16, %18, %cst_16 {dimension_numbers = #tpu.dot_dimension_numbers<[1], [0], [0], [1], [0, 0, 1, 1], [], []>} : vector<2x128xbf16>, vector<128x64xbf16>, vector<2x64xf32> -> vector<2x64xf32>
    %20 = arith.addf %11, %19 : vector<2x64xf32>
    %c0_i32_17 = arith.constant 0 : i32
    %21 = arith.addi %0, %c0_i32_17 : i32
    %c1_i32 = arith.constant 1 : i32
    %22 = arith.addi %21, %c1_i32 : i32
    %c0_18 = arith.constant 0 : index
    %23 = arith.index_cast %22 : i32 to index
    %c0_19 = arith.constant 0 : index
    %c0_20 = arith.constant 0 : index
    %24 = vector.load %arg2[%c0_18, %23, %c0_19, %c0_20] : memref<1x3x3x128xbf16, #tpu.memory_space<vmem>>, vector<1x1x2x128xbf16>
    %25 = vector.shape_cast %24 : vector<1x1x2x128xbf16> to vector<2x128xbf16>
    %c2 = arith.constant 2 : index
    %c0_21 = arith.constant 0 : index
    %c0_22 = arith.constant 0 : index
    %26 = vector.load %arg3[%c2, %c0_21, %c0_22] : memref<4x128x64xbf16, #tpu.memory_space<vmem>>, vector<1x128x64xbf16>
    %27 = vector.shape_cast %26 : vector<1x128x64xbf16> to vector<128x64xbf16>
    %cst_23 = arith.constant dense<0.000000e+00> : vector<2x64xf32>
    %28 = tpu.matmul %25, %27, %cst_23 {dimension_numbers = #tpu.dot_dimension_numbers<[1], [0], [0], [1], [0, 0, 1, 1], [], []>} : vector<2x128xbf16>, vector<128x64xbf16>, vector<2x64xf32> -> vector<2x64xf32>
    %29 = arith.addf %20, %28 : vector<2x64xf32>
    %c0_i32_24 = arith.constant 0 : i32
    %30 = arith.addi %0, %c0_i32_24 : i32
    %c1_i32_25 = arith.constant 1 : i32
    %31 = arith.addi %30, %c1_i32_25 : i32
    %c0_26 = arith.constant 0 : index
    %32 = arith.index_cast %31 : i32 to index
    %c1_27 = arith.constant 1 : index
    %c0_28 = arith.constant 0 : index
    %33 = vector.load %arg2[%c0_26, %32, %c1_27, %c0_28] : memref<1x3x3x128xbf16, #tpu.memory_space<vmem>>, vector<1x1x2x128xbf16>
    %34 = vector.shape_cast %33 : vector<1x1x2x128xbf16> to vector<2x128xbf16>
    %c3 = arith.constant 3 : index
    %c0_29 = arith.constant 0 : index
    %c0_30 = arith.constant 0 : index
    %35 = vector.load %arg3[%c3, %c0_29, %c0_30] : memref<4x128x64xbf16, #tpu.memory_space<vmem>>, vector<1x128x64xbf16>
    %36 = vector.shape_cast %35 : vector<1x128x64xbf16> to vector<128x64xbf16>
    %cst_31 = arith.constant dense<0.000000e+00> : vector<2x64xf32>
    %37 = tpu.matmul %34, %36, %cst_31 {dimension_numbers = #tpu.dot_dimension_numbers<[1], [0], [0], [1], [0, 0, 1, 1], [], []>} : vector<2x128xbf16>, vector<128x64xbf16>, vector<2x64xf32> -> vector<2x64xf32>
    %38 = arith.addf %29, %37 : vector<2x64xf32>
    %39 = vector.broadcast %1 : vector<1x64xf32> to vector<2x64xf32>
    %40 = arith.addf %38, %39 : vector<2x64xf32>
    %cst_32 = arith.constant 0.000000e+00 : f32
    %41 = vector.broadcast %cst_32 : f32 to vector<2x64xf32>
    %42 = arith.maximumf %40, %41 : vector<2x64xf32>
    %43 = arith.truncf %42 : vector<2x64xf32> to vector<2x64xbf16>
    %c0_33 = arith.constant 0 : index
    %c0_34 = arith.constant 0 : index
    %c0_35 = arith.constant 0 : index
    %c0_36 = arith.constant 0 : index
    %44 = vector.load %arg5[%c0_33, %c0_34, %c0_35, %c0_36] : memref<1x2x2x64xbf16, #tpu.memory_space<vmem>>, vector<1x1x2x64xbf16>
    %45 = vector.shape_cast %44 : vector<1x1x2x64xbf16> to vector<2x64xbf16>
    %46 = vector.shape_cast %43 : vector<2x64xbf16> to vector<1x1x2x64xbf16>
    tpu.vector_store %arg5[%c0_33, %c0_34, %c0_35, %c0_36], %46 {strides = array<i32>} : memref<1x2x2x64xbf16, #tpu.memory_space<vmem>>, vector<1x1x2x64xbf16>,
    %cst_37 = arith.constant 0.000000e+00 : f32
    %47 = vector.broadcast %cst_37 : f32 to vector<2x64xf32>
    %c1_i32_38 = arith.constant 1 : i32
    %48 = arith.addi %0, %c1_i32_38 : i32
    %c0_i32_39 = arith.constant 0 : i32
    %49 = arith.addi %48, %c0_i32_39 : i32
    %c0_40 = arith.constant 0 : index
    %50 = arith.index_cast %49 : i32 to index
    %c0_41 = arith.constant 0 : index
    %c0_42 = arith.constant 0 : index
    %51 = vector.load %arg2[%c0_40, %50, %c0_41, %c0_42] : memref<1x3x3x128xbf16, #tpu.memory_space<vmem>>, vector<1x1x2x128xbf16>
    %52 = vector.shape_cast %51 : vector<1x1x2x128xbf16> to vector<2x128xbf16>
    %c0_43 = arith.constant 0 : index
    %c0_44 = arith.constant 0 : index
    %c0_45 = arith.constant 0 : index
    %53 = vector.load %arg3[%c0_43, %c0_44, %c0_45] : memref<4x128x64xbf16, #tpu.memory_space<vmem>>, vector<1x128x64xbf16>
    %54 = vector.shape_cast %53 : vector<1x128x64xbf16> to vector<128x64xbf16>
    %cst_46 = arith.constant dense<0.000000e+00> : vector<2x64xf32>
    %55 = tpu.matmul %52, %54, %cst_46 {dimension_numbers = #tpu.dot_dimension_numbers<[1], [0], [0], [1], [0, 0, 1, 1], [], []>} : vector<2x128xbf16>, vector<128x64xbf16>, vector<2x64xf32> -> vector<2x64xf32>
    %56 = arith.addf %47, %55 : vector<2x64xf32>
    %c1_i32_47 = arith.constant 1 : i32
    %57 = arith.addi %0, %c1_i32_47 : i32
    %c0_i32_48 = arith.constant 0 : i32
    %58 = arith.addi %57, %c0_i32_48 : i32
    %c0_49 = arith.constant 0 : index
    %59 = arith.index_cast %58 : i32 to index
    %c1_50 = arith.constant 1 : index
    %c0_51 = arith.constant 0 : index
    %60 = vector.load %arg2[%c0_49, %59, %c1_50, %c0_51] : memref<1x3x3x128xbf16, #tpu.memory_space<vmem>>, vector<1x1x2x128xbf16>
    %61 = vector.shape_cast %60 : vector<1x1x2x128xbf16> to vector<2x128xbf16>
    %c1_52 = arith.constant 1 : index
    %c0_53 = arith.constant 0 : index
    %c0_54 = arith.constant 0 : index
    %62 = vector.load %arg3[%c1_52, %c0_53, %c0_54] : memref<4x128x64xbf16, #tpu.memory_space<vmem>>, vector<1x128x64xbf16>
    %63 = vector.shape_cast %62 : vector<1x128x64xbf16> to vector<128x64xbf16>
    %cst_55 = arith.constant dense<0.000000e+00> : vector<2x64xf32>
    %64 = tpu.matmul %61, %63, %cst_55 {dimension_numbers = #tpu.dot_dimension_numbers<[1], [0], [0], [1], [0, 0, 1, 1], [], []>} : vector<2x128xbf16>, vector<128x64xbf16>, vector<2x64xf32> -> vector<2x64xf32>
    %65 = arith.addf %56, %64 : vector<2x64xf32>
    %c1_i32_56 = arith.constant 1 : i32
    %66 = arith.addi %0, %c1_i32_56 : i32
    %c1_i32_57 = arith.constant 1 : i32
    %67 = arith.addi %66, %c1_i32_57 : i32
    %c0_58 = arith.constant 0 : index
    %68 = arith.index_cast %67 : i32 to index
    %c0_59 = arith.constant 0 : index
    %c0_60 = arith.constant 0 : index
    %69 = vector.load %arg2[%c0_58, %68, %c0_59, %c0_60] : memref<1x3x3x128xbf16, #tpu.memory_space<vmem>>, vector<1x1x2x128xbf16>
    %70 = vector.shape_cast %69 : vector<1x1x2x128xbf16> to vector<2x128xbf16>
    %c2_61 = arith.constant 2 : index
    %c0_62 = arith.constant 0 : index
    %c0_63 = arith.constant 0 : index
    %71 = vector.load %arg3[%c2_61, %c0_62, %c0_63] : memref<4x128x64xbf16, #tpu.memory_space<vmem>>, vector<1x128x64xbf16>
    %72 = vector.shape_cast %71 : vector<1x128x64xbf16> to vector<128x64xbf16>
    %cst_64 = arith.constant dense<0.000000e+00> : vector<2x64xf32>
    %73 = tpu.matmul %70, %72, %cst_64 {dimension_numbers = #tpu.dot_dimension_numbers<[1], [0], [0], [1], [0, 0, 1, 1], [], []>} : vector<2x128xbf16>, vector<128x64xbf16>, vector<2x64xf32> -> vector<2x64xf32>
    %74 = arith.addf %65, %73 : vector<2x64xf32>
    %c1_i32_65 = arith.constant 1 : i32
    %75 = arith.addi %0, %c1_i32_65 : i32
    %c1_i32_66 = arith.constant 1 : i32
    %76 = arith.addi %75, %c1_i32_66 : i32
    %c0_67 = arith.constant 0 : index
    %77 = arith.index_cast %76 : i32 to index
    %c1_68 = arith.constant 1 : index
    %c0_69 = arith.constant 0 : index
    %78 = vector.load %arg2[%c0_67, %77, %c1_68, %c0_69] : memref<1x3x3x128xbf16, #tpu.memory_space<vmem>>, vector<1x1x2x128xbf16>
    %79 = vector.shape_cast %78 : vector<1x1x2x128xbf16> to vector<2x128xbf16>
    %c3_70 = arith.constant 3 : index
    %c0_71 = arith.constant 0 : index
    %c0_72 = arith.constant 0 : index
    %80 = vector.load %arg3[%c3_70, %c0_71, %c0_72] : memref<4x128x64xbf16, #tpu.memory_space<vmem>>, vector<1x128x64xbf16>
    %81 = vector.shape_cast %80 : vector<1x128x64xbf16> to vector<128x64xbf16>
    %cst_73 = arith.constant dense<0.000000e+00> : vector<2x64xf32>
    %82 = tpu.matmul %79, %81, %cst_73 {dimension_numbers = #tpu.dot_dimension_numbers<[1], [0], [0], [1], [0, 0, 1, 1], [], []>} : vector<2x128xbf16>, vector<128x64xbf16>, vector<2x64xf32> -> vector<2x64xf32>
    %83 = arith.addf %74, %82 : vector<2x64xf32>
    %84 = vector.broadcast %1 : vector<1x64xf32> to vector<2x64xf32>
    %85 = arith.addf %83, %84 : vector<2x64xf32>
    %cst_74 = arith.constant 0.000000e+00 : f32
    %86 = vector.broadcast %cst_74 : f32 to vector<2x64xf32>
    %87 = arith.maximumf %85, %86 : vector<2x64xf32>
    %88 = arith.truncf %87 : vector<2x64xf32> to vector<2x64xbf16>
    %c0_75 = arith.constant 0 : index
    %c1_76 = arith.constant 1 : index
    %c0_77 = arith.constant 0 : index
    %c0_78 = arith.constant 0 : index
    %89 = vector.load %arg5[%c0_75, %c1_76, %c0_77, %c0_78] : memref<1x2x2x64xbf16, #tpu.memory_space<vmem>>, vector<1x1x2x64xbf16>
    %90 = vector.shape_cast %89 : vector<1x1x2x64xbf16> to vector<2x64xbf16>
    %91 = vector.shape_cast %88 : vector<2x64xbf16> to vector<1x1x2x64xbf16>
    tpu.vector_store %arg5[%c0_75, %c1_76, %c0_77, %c0_78], %91 {strides = array<i32>} : memref<1x2x2x64xbf16, #tpu.memory_space<vmem>>, vector<1x1x2x64xbf16>,
    return
  }
  func.func @transform_0(%arg0: i32, %arg1: i32) -> (i32, i32, i32, i32) {
    %c0_i32 = arith.constant 0 : i32
    %c0_i32_0 = arith.constant 0 : i32
    %c0_i32_1 = arith.constant 0 : i32
    %c0_i32_2 = arith.constant 0 : i32
    return %arg0, %c0_i32, %c0_i32_0, %c0_i32_1 : i32, i32, i32, i32
  }
  func.func @transform_1(%arg0: i32, %arg1: i32) -> (i32, i32, i32) {
    %c0_i32 = arith.constant 0 : i32
    %c0_i32_0 = arith.constant 0 : i32
    %c0_i32_1 = arith.constant 0 : i32
    %c0_i32_2 = arith.constant 0 : i32
    return %c0_i32, %c0_i32_0, %c0_i32_1 : i32, i32, i32
  }
  func.func @transform_2(%arg0: i32, %arg1: i32) -> (i32, i32) {
    %c0_i32 = arith.constant 0 : i32
    %c0_i32_0 = arith.constant 0 : i32
    %c0_i32_1 = arith.constant 0 : i32
    return %c0_i32, %c0_i32_0 : i32, i32
  }
  func.func @transform_3(%arg0: i32, %arg1: i32) -> (i32, i32, i32, i32) {
    %c0_i32 = arith.constant 0 : i32
    %c0_i32_0 = arith.constant 0 : i32
    %c0_i32_1 = arith.constant 0 : i32
    return %arg0, %arg1, %c0_i32, %c0_i32_0 : i32, i32, i32, i32
  }
}

module attributes {stable_mosaic.version = 11 : i64} {
  func.func @_conv3x3s2_bn_relu_kernel(%arg0: i32, %arg1: i32, %arg2: memref<1x2x2x256xbf16, #tpu.memory_space<vmem>>, %arg3: memref<4x256x128xbf16, #tpu.memory_space<vmem>>, %arg4: memref<1x128xf32, #tpu.memory_space<vmem>>, %arg5: memref<1x1x1x128xbf16, #tpu.memory_space<vmem>>) attributes {dimension_semantics = [#tpu.dimension_semantics<parallel>, #tpu.dimension_semantics<parallel>], iteration_bounds = array<i64: 2, 1>, scalar_prefetch = 0 : i64, scratch_operands = 0 : i64, tpu.core_type = #tpu.core_type<tc>, window_params = [{transform_indices = @transform_0, window_bounds = array<i64: 1, 2, 2, 256>}, {pipeline_mode = #tpu.pipeline_mode<synchronous>, transform_indices = @transform_1, window_bounds = array<i64: 4, 256, 128>}, {pipeline_mode = #tpu.pipeline_mode<synchronous>, transform_indices = @transform_2, window_bounds = array<i64: 1, 128>}, {transform_indices = @transform_3, window_bounds = array<i64: 1, 1, 1, 128>}]} {
    %c1_i32 = arith.constant 1 : i32
    %0 = arith.muli %arg1, %c1_i32 : i32
    %c0 = arith.constant 0 : index
    %c0_0 = arith.constant 0 : index
    %1 = vector.load %arg4[%c0, %c0_0] : memref<1x128xf32, #tpu.memory_space<vmem>>, vector<1x128xf32>
    %cst = arith.constant 0.000000e+00 : f32
    %2 = vector.broadcast %cst : f32 to vector<1x128xf32>
    %c0_i32 = arith.constant 0 : i32
    %3 = arith.addi %0, %c0_i32 : i32
    %c0_i32_1 = arith.constant 0 : i32
    %4 = arith.addi %3, %c0_i32_1 : i32
    %c0_2 = arith.constant 0 : index
    %5 = arith.index_cast %4 : i32 to index
    %c0_3 = arith.constant 0 : index
    %c0_4 = arith.constant 0 : index
    %6 = vector.load %arg2[%c0_2, %5, %c0_3, %c0_4] : memref<1x2x2x256xbf16, #tpu.memory_space<vmem>>, vector<1x1x1x256xbf16>
    %7 = vector.shape_cast %6 : vector<1x1x1x256xbf16> to vector<1x256xbf16>
    %c0_5 = arith.constant 0 : index
    %c0_6 = arith.constant 0 : index
    %c0_7 = arith.constant 0 : index
    %8 = vector.load %arg3[%c0_5, %c0_6, %c0_7] : memref<4x256x128xbf16, #tpu.memory_space<vmem>>, vector<1x256x128xbf16>
    %9 = vector.shape_cast %8 : vector<1x256x128xbf16> to vector<256x128xbf16>
    %cst_8 = arith.constant dense<0.000000e+00> : vector<1x128xf32>
    %10 = tpu.matmul %7, %9, %cst_8 {dimension_numbers = #tpu.dot_dimension_numbers<[1], [0], [0], [1], [0, 0, 1, 1], [], []>} : vector<1x256xbf16>, vector<256x128xbf16>, vector<1x128xf32> -> vector<1x128xf32>
    %11 = arith.addf %2, %10 : vector<1x128xf32>
    %c0_i32_9 = arith.constant 0 : i32
    %12 = arith.addi %0, %c0_i32_9 : i32
    %c0_i32_10 = arith.constant 0 : i32
    %13 = arith.addi %12, %c0_i32_10 : i32
    %c0_11 = arith.constant 0 : index
    %14 = arith.index_cast %13 : i32 to index
    %c1 = arith.constant 1 : index
    %c0_12 = arith.constant 0 : index
    %15 = vector.load %arg2[%c0_11, %14, %c1, %c0_12] : memref<1x2x2x256xbf16, #tpu.memory_space<vmem>>, vector<1x1x1x256xbf16>
    %16 = vector.shape_cast %15 : vector<1x1x1x256xbf16> to vector<1x256xbf16>
    %c1_13 = arith.constant 1 : index
    %c0_14 = arith.constant 0 : index
    %c0_15 = arith.constant 0 : index
    %17 = vector.load %arg3[%c1_13, %c0_14, %c0_15] : memref<4x256x128xbf16, #tpu.memory_space<vmem>>, vector<1x256x128xbf16>
    %18 = vector.shape_cast %17 : vector<1x256x128xbf16> to vector<256x128xbf16>
    %cst_16 = arith.constant dense<0.000000e+00> : vector<1x128xf32>
    %19 = tpu.matmul %16, %18, %cst_16 {dimension_numbers = #tpu.dot_dimension_numbers<[1], [0], [0], [1], [0, 0, 1, 1], [], []>} : vector<1x256xbf16>, vector<256x128xbf16>, vector<1x128xf32> -> vector<1x128xf32>
    %20 = arith.addf %11, %19 : vector<1x128xf32>
    %c0_i32_17 = arith.constant 0 : i32
    %21 = arith.addi %0, %c0_i32_17 : i32
    %c1_i32_18 = arith.constant 1 : i32
    %22 = arith.addi %21, %c1_i32_18 : i32
    %c0_19 = arith.constant 0 : index
    %23 = arith.index_cast %22 : i32 to index
    %c0_20 = arith.constant 0 : index
    %c0_21 = arith.constant 0 : index
    %24 = vector.load %arg2[%c0_19, %23, %c0_20, %c0_21] : memref<1x2x2x256xbf16, #tpu.memory_space<vmem>>, vector<1x1x1x256xbf16>
    %25 = vector.shape_cast %24 : vector<1x1x1x256xbf16> to vector<1x256xbf16>
    %c2 = arith.constant 2 : index
    %c0_22 = arith.constant 0 : index
    %c0_23 = arith.constant 0 : index
    %26 = vector.load %arg3[%c2, %c0_22, %c0_23] : memref<4x256x128xbf16, #tpu.memory_space<vmem>>, vector<1x256x128xbf16>
    %27 = vector.shape_cast %26 : vector<1x256x128xbf16> to vector<256x128xbf16>
    %cst_24 = arith.constant dense<0.000000e+00> : vector<1x128xf32>
    %28 = tpu.matmul %25, %27, %cst_24 {dimension_numbers = #tpu.dot_dimension_numbers<[1], [0], [0], [1], [0, 0, 1, 1], [], []>} : vector<1x256xbf16>, vector<256x128xbf16>, vector<1x128xf32> -> vector<1x128xf32>
    %29 = arith.addf %20, %28 : vector<1x128xf32>
    %c0_i32_25 = arith.constant 0 : i32
    %30 = arith.addi %0, %c0_i32_25 : i32
    %c1_i32_26 = arith.constant 1 : i32
    %31 = arith.addi %30, %c1_i32_26 : i32
    %c0_27 = arith.constant 0 : index
    %32 = arith.index_cast %31 : i32 to index
    %c1_28 = arith.constant 1 : index
    %c0_29 = arith.constant 0 : index
    %33 = vector.load %arg2[%c0_27, %32, %c1_28, %c0_29] : memref<1x2x2x256xbf16, #tpu.memory_space<vmem>>, vector<1x1x1x256xbf16>
    %34 = vector.shape_cast %33 : vector<1x1x1x256xbf16> to vector<1x256xbf16>
    %c3 = arith.constant 3 : index
    %c0_30 = arith.constant 0 : index
    %c0_31 = arith.constant 0 : index
    %35 = vector.load %arg3[%c3, %c0_30, %c0_31] : memref<4x256x128xbf16, #tpu.memory_space<vmem>>, vector<1x256x128xbf16>
    %36 = vector.shape_cast %35 : vector<1x256x128xbf16> to vector<256x128xbf16>
    %cst_32 = arith.constant dense<0.000000e+00> : vector<1x128xf32>
    %37 = tpu.matmul %34, %36, %cst_32 {dimension_numbers = #tpu.dot_dimension_numbers<[1], [0], [0], [1], [0, 0, 1, 1], [], []>} : vector<1x256xbf16>, vector<256x128xbf16>, vector<1x128xf32> -> vector<1x128xf32>
    %38 = arith.addf %29, %37 : vector<1x128xf32>
    %39 = arith.addf %38, %1 : vector<1x128xf32>
    %cst_33 = arith.constant 0.000000e+00 : f32
    %40 = vector.broadcast %cst_33 : f32 to vector<1x128xf32>
    %41 = arith.maximumf %39, %40 : vector<1x128xf32>
    %42 = arith.truncf %41 : vector<1x128xf32> to vector<1x128xbf16>
    %c0_34 = arith.constant 0 : index
    %c0_35 = arith.constant 0 : index
    %c0_36 = arith.constant 0 : index
    %c0_37 = arith.constant 0 : index
    %43 = vector.load %arg5[%c0_34, %c0_35, %c0_36, %c0_37] : memref<1x1x1x128xbf16, #tpu.memory_space<vmem>>, vector<1x1x1x128xbf16>
    %44 = vector.shape_cast %43 : vector<1x1x1x128xbf16> to vector<1x128xbf16>
    %45 = vector.shape_cast %42 : vector<1x128xbf16> to vector<1x1x1x128xbf16>
    tpu.vector_store %arg5[%c0_34, %c0_35, %c0_36, %c0_37], %45 {strides = array<i32>} : memref<1x1x1x128xbf16, #tpu.memory_space<vmem>>, vector<1x1x1x128xbf16>,
    return
  }
  func.func @transform_0(%arg0: i32, %arg1: i32) -> (i32, i32, i32, i32) {
    %c0_i32 = arith.constant 0 : i32
    %c0_i32_0 = arith.constant 0 : i32
    %c0_i32_1 = arith.constant 0 : i32
    %c0_i32_2 = arith.constant 0 : i32
    return %arg0, %c0_i32, %c0_i32_0, %c0_i32_1 : i32, i32, i32, i32
  }
  func.func @transform_1(%arg0: i32, %arg1: i32) -> (i32, i32, i32) {
    %c0_i32 = arith.constant 0 : i32
    %c0_i32_0 = arith.constant 0 : i32
    %c0_i32_1 = arith.constant 0 : i32
    %c0_i32_2 = arith.constant 0 : i32
    return %c0_i32, %c0_i32_0, %c0_i32_1 : i32, i32, i32
  }
  func.func @transform_2(%arg0: i32, %arg1: i32) -> (i32, i32) {
    %c0_i32 = arith.constant 0 : i32
    %c0_i32_0 = arith.constant 0 : i32
    %c0_i32_1 = arith.constant 0 : i32
    return %c0_i32, %c0_i32_0 : i32, i32
  }
  func.func @transform_3(%arg0: i32, %arg1: i32) -> (i32, i32, i32, i32) {
    %c0_i32 = arith.constant 0 : i32
    %c0_i32_0 = arith.constant 0 : i32
    %c0_i32_1 = arith.constant 0 : i32
    return %arg0, %arg1, %c0_i32, %c0_i32_0 : i32, i32, i32, i32
  }
}

</mosaic_0001>

<llo_original>
// kernel: _lambda_.4
$region0: #{_lambda_.4}
  #allocation0 [shape = 'u32[]', space=smem, size = 0x4, offset = 0x4, fixed_abs, tag = 'smem constant byte address 0x4 - core index']
  #allocation1 [shape = 'u32[144,128]{1,0:T(1,128)}', space=vmem, size = 0x12000, scoped, tag = 'internal scratch']
  %s0 = inlined_call_operand.vmem [shape: bf16[2,9,9,16], index: 0, kind: input, shape index: {}]
  %s1 = inlined_call_operand.vmem [shape: bf16[4,16,16], index: 1, kind: input, shape index: {}]
  %s2 = inlined_call_operand.vmem [shape: f32[1,16], index: 2, kind: input, shape index: {}]
  %s3 = inlined_call_operand.vmem [shape: bf16[2,8,8,16], index: 3, kind: output, shape index: {}]
  %s4 = sld [smem:[#allocation0]]
  $region45: #{_lambda_.4} parent=0
    _
  %s6 = ssub.s32 1, %s4
  %s7 = scalar_select 0, %s6, %s4
  loop: start=0, step=1, limit=4
  $region2: #{_lambda_.4} parent=0 // loop_pre_header
    _
  $region3: #{_lambda_.4} parent=0 // loop_header
    %s9 = sphi 0, %s13
    %p10 = scmp.ge.s32.totalorder %s9, 4
    %s16 = sphi 0, %s28
    %s17 = sphi 0, %s24
    %s18 = sphi 0, %s16
    %s19 = sphi 0, %s17
    %s20 = sphi 0, %s18
    %s21 = sphi 0, %s19
    %s31 = sphi 0, %s33
    %s34 = sphi 0, %s31
    %s35 = sphi 0, %s34
    %s51 = sphi 0, %s35
    %s55 = sphi 0, %s55
    %s57 = sphi 0, %s55
    %s58 = sphi 0, %s57
    %s72 = sphi 0, %s58
    %s76 = sphi 0, %s76
    %s78 = sphi 0, %s76
    %s79 = sphi 0, %s78
    %s93 = sphi 0, %s79
    %s101 = sphi 0, %s103
    %s104 = sphi 0, %s101
    %s105 = sphi 0, %s104
    %s121 = sphi 0, %s105
  $region4: #{_lambda_.4} parent=0 // loop_header_branch
    %12 = sbr.rel (%p10) target = $region8
  $region5: #{_lambda_.4} parent=0 // loop_body
    %s14 = ssub.s32 %s9, 1
    %s15 = ssub.s32 %s9, 2
    %s22 = sadd.s32 1, %s17
    %p23 = scmp.ge.s32.totalorder %s22, 1
    %s24 = scalar_select %p23, 0, %s22
    %s25 = sadd.s32 1, %s16
    %s26 = scalar_select %p23, %s25, %s16
    %p27 = scmp.ge.s32.totalorder %s26, 2
    %s28 = scalar_select %p27, 0, %s26
    %s29 = ssub.s32 %s16, %s28
    %p30 = scmp.eq.s32.totalorder %s29, 0
    %s32 = sadd.s32 %s31, 1
    %s33 = scalar_select %p30, %s31, %s32
    %p36 = pneg %p30
    %p37 = scmp.eq.s32.totalorder %s9, 1
    %p38 = por %p36, %p37
    %p39 = scmp.ne.s32.totalorder %s31, %s34
    %p40 = scmp.eq.s32.totalorder %s9, 0
    %p41 = por %p39, %p40
    %p42 = scmp.ne.s32.totalorder %s31, %s34
    %p43 = scmp.eq.s32.totalorder %s14, 1
    %p44 = por %p42, %p43
    %p45 = scmp.ne.s32.totalorder %s34, %s35
    %p46 = scmp.eq.s32.totalorder %s14, 0
    %p47 = por %p45, %p46
    %p48 = scmp.ne.s32.totalorder %s34, %s35
    %p49 = scmp.eq.s32.totalorder %s15, 1
    %p50 = por %p48, %p49
    %p52 = scmp.ne.s32.totalorder %s35, %s51
    %p53 = scmp.eq.s32.totalorder %s15, 0
    %p54 = por %p52, %p53
    %s56 = sadd.s32 %s55, 1
    %p59 = scmp.eq.s32.totalorder %s9, 1
    %p60 = scmp.ne.s32.totalorder %s55, %s57
    %p61 = scmp.eq.s32.totalorder %s9, 0
    %p62 = por %p60, %p61
    %p63 = scmp.ne.s32.totalorder %s55, %s57
    %p64 = scmp.eq.s32.totalorder %s14, 1
    %p65 = por %p63, %p64
    %p66 = scmp.ne.s32.totalorder %s57, %s58
    %p67 = scmp.eq.s32.totalorder %s14, 0
    %p68 = por %p66, %p67
    %p69 = scmp.ne.s32.totalorder %s57, %s58
    %p70 = scmp.eq.s32.totalorder %s15, 1
    %p71 = por %p69, %p70
    %p73 = scmp.ne.s32.totalorder %s58, %s72
    %p74 = scmp.eq.s32.totalorder %s15, 0
    %p75 = por %p73, %p74
    %s77 = sadd.s32 %s76, 1
    %p80 = scmp.eq.s32.totalorder %s9, 1
    %p81 = scmp.ne.s32.totalorder %s76, %s78
    %p82 = scmp.eq.s32.totalorder %s9, 0
    %p83 = por %p81, %p82
    %p84 = scmp.ne.s32.totalorder %s76, %s78
    %p85 = scmp.eq.s32.totalorder %s14, 1
    %p86 = por %p84, %p85
    %p87 = scmp.ne.s32.totalorder %s78, %s79
    %p88 = scmp.eq.s32.totalorder %s14, 0
    %p89 = por %p87, %p88
    %p90 = scmp.ne.s32.totalorder %s78, %s79
    %p91 = scmp.eq.s32.totalorder %s15, 1
    %p92 = por %p90, %p91
    %p94 = scmp.ne.s32.totalorder %s79, %s93
    %p95 = scmp.eq.s32.totalorder %s15, 0
    %p96 = por %p94, %p95
    %s97 = ssub.s32 %s16, %s28
    %s98 = ssub.s32 %s17, %s24
    %s99 = sor.u32 %s97, %s98
    %p100 = scmp.eq.s32.totalorder %s99, 0
    %s102 = sadd.s32 %s101, 1
    %s103 = scalar_select %p100, %s101, %s102
    %p106 = pneg %p100
    %p107 = scmp.eq.s32.totalorder %s9, 1
    %p108 = por %p106, %p107
    %p109 = scmp.ne.s32.totalorder %s101, %s104
    %p110 = scmp.eq.s32.totalorder %s9, 0
    %p111 = por %p109, %p110
    %p112 = scmp.ne.s32.totalorder %s101, %s104
    %p113 = scmp.eq.s32.totalorder %s14, 1
    %p114 = por %p112, %p113
    %p115 = scmp.ne.s32.totalorder %s104, %s105
    %p116 = scmp.eq.s32.totalorder %s14, 0
    %p117 = por %p115, %p116
    %p118 = scmp.ne.s32.totalorder %s104, %s105
    %p119 = scmp.eq.s32.totalorder %s15, 1
    %p120 = por %p118, %p119
    %p122 = scmp.ne.s32.totalorder %s105, %s121
    %p123 = scmp.eq.s32.totalorder %s15, 0
    %p124 = por %p122, %p123
    %p125 = scmp.le.s32.totalorder 1, %s9
    %p126 = scmp.lt.s32.totalorder %s9, 3
    %p127 = pnand %p125, %p126
    %p128 = pneg %p127
    // Predicated region
    $region9: #{_lambda_.4} parent=5 // pred_check
      _
    $region10: #{_lambda_.4} parent=5 // pred_check_branch
      %130 = sbr.rel (%p127) target = $region12
    $region11: #{_lambda_.4} parent=5 // pred_region
      %s131 = ssub.s32 %s9, 1
      // Predicated region
      $region13: #{_lambda_.4} parent=11 // pred_check
        %p132 = pneg %p68
      $region14: #{_lambda_.4} parent=11 // pred_check_branch
        %134 = sbr.rel (%p132) target = $region16
      $region15: #{_lambda_.4} parent=11 // pred_region
        _
      $region16: #{_lambda_.4} parent=11 // pred_fallthru
        _
      // Predicated region
      $region17: #{_lambda_.4} parent=11 // pred_check
        %p135 = pneg %p89
      $region18: #{_lambda_.4} parent=11 // pred_check_branch
        %137 = sbr.rel (%p135) target = $region20
      $region19: #{_lambda_.4} parent=11 // pred_region
        _
      $region20: #{_lambda_.4} parent=11 // pred_fallthru
        _
    $region12: #{_lambda_.4} parent=5 // pred_fallthru
      _
    %p138 = scmp.lt.s32.totalorder %s9, 2
    // Predicated region
    $region21: #{_lambda_.4} parent=5 // pred_check
      %p139 = pneg %p138
    $region22: #{_lambda_.4} parent=5 // pred_check_branch
      %141 = sbr.rel (%p139) target = $region24
    $region23: #{_lambda_.4} parent=5 // pred_region
      // Predicated region
      $region25: #{_lambda_.4} parent=23 // pred_check
        %p142 = pneg %p41
      $region26: #{_lambda_.4} parent=23 // pred_check_branch
        %144 = sbr.rel (%p142) target = $region28
      $region27: #{_lambda_.4} parent=23 // pred_region
        %p145 = scmp.lt.s32.totalorder %s16, 1
        %s146 = scalar_select %p145, %s16, 1
        %s147 = smul.addr %s146, 18
        %s148 = smul.addr %s147, 4
        %s149 = scalar_lea.vmem %s0, %s148
      $region28: #{_lambda_.4} parent=23 // pred_fallthru
        _
    $region24: #{_lambda_.4} parent=5 // pred_fallthru
      _
    %p150 = scmp.le.s32.totalorder 1, %s9
    %p151 = scmp.lt.s32.totalorder %s9, 3
    %p152 = pnand %p150, %p151
    %p153 = pneg %p152
    // Predicated region
    $region29: #{_lambda_.4} parent=5 // pred_check
      _
    $region30: #{_lambda_.4} parent=5 // pred_check_branch
      %155 = sbr.rel (%p152) target = $region32
    $region31: #{_lambda_.4} parent=5 // pred_region
      %s156 = ssub.s32 %s9, 1
      %p157 = scmp.lt.s32.totalorder %s18, 1
      %s158 = scalar_select %p157, %s18, 1
      %s159 = smul.addr %s158, 18
      %s160 = smul.addr %s159, 4
      %s161 = scalar_lea.vmem %s0, %s160
      %p162 = pneg %p47
      %p163 = pneg %p44
      %p164 = pneg %p68
      %p165 = pneg %p65
      %p166 = pneg %p89
      %p167 = pneg %p86
      %p168 = pneg %p117
      %p169 = pneg %p114
      %s170 = smul.u32 8, %s19
      %p171 = scmp.lt.s32.totalorder %s18, 1
      %s172 = scalar_select %p171, %s18, 1
      %p173 = scmp.lt.s32.totalorder %s170, 7
      %s174 = scalar_select %p173, %s170, 7
      %s175 = smul.addr %s172, 8
      %s176 = sadd.s32 %s174, %s175
      %s177 = smul.addr %s176, 4
      %s178 = scalar_lea.vmem %s3, %s177
      %p179 = scmp.lt.s32.totalorder %s18, 1
      %s180 = scalar_select %p179, %s18, 1
      %s181 = smul.addr %s180, 18
      %s182 = smul.addr %s181, 4
      %s183 = scalar_lea.vmem %s0, %s182
      %s184 = smul.u32 8, %s19
      %p185 = scmp.lt.s32.totalorder %s18, 1
      %s186 = scalar_select %p185, %s18, 1
      %p187 = scmp.lt.s32.totalorder %s184, 7
      %s188 = scalar_select %p187, %s184, 7
      %s189 = smul.addr %s186, 8
      %s190 = sadd.s32 %s188, %s189
      %s191 = smul.addr %s190, 4
      %s192 = scalar_lea.vmem %s3, %s191
      %s193 = smul.u32 8, %s19
      %s195 = smul.u32 %s19, 8
      %v196 = vld [vmem:[%s2] sm:$0x1]
      %s197 = smul.u32 %s195, 2
      %s198 = smul.addr %s197, 4
      %s199 = scalar_lea.vmem %s183, %s198
      %v200 = vld [vmem:[%s199] sm:$0xf]
      %v201 = vld [vmem:[%s1] sm:$0xf]
      %v202 = vld [vmem:[%s1 + $0x4] sm:$0xf]
      %v203 = vld [vmem:[%s199 + $0x4] sm:$0x1]
      %s204 = scalar_lea.vmem %s1, 8
      %v205 = vld [vmem:[%s204] sm:$0xf]
      %v206 = vld [vmem:[%s204 + $0x4] sm:$0xf]
      %v209 = vunpack.c.l.b16 %v200
      %v210 = vunpack.c.l.b16 %v203
      %v211 = vpack.c.b16 %v210, %v209
      %v213 = vshrl.u32 %v211, 16
      %v215 = vshll.u32 %v211, 16
      %v217 = vrot.slane %v215, 1
      %v218 = vor.u32 %v213, %v217
      %v221 = vunpack.c.l.b16 %v205
      %v222 = vunpack.c.l.b16 %v206
      %v223 = vpack.c.b16 %v222, %v221
      %vm225 = vcmask 130048
      %v227 = vsel %vm225, %v218, 0
      %229 = vmatprep.subr.bf16.mxu0 0
      %230 = vmatpush1.bf16.msra.mxu0 %v223
      %231 = vmatprep.subr.bf16.mxu0 0
      %232 = vmatpush1.bf16.msra.mxu0 0
      %233 = vmatprep.subr.bf16.mxu0 0
      %234 = vmatpush1.bf16.msra.mxu0 0
      %235 = vmatprep.subr.bf16.mxu0 0
      %236 = vmatpush1.bf16.msra.mxu0 0
      %237 = vmatprep.subr.bf16.mxu0 0
      %238 = vmatpush1.bf16.msra.mxu0 0
      %239 = vmatprep.subr.bf16.mxu0 0
      %240 = vmatpush1.bf16.msra.mxu0 0
      %241 = vmatprep.subr.bf16.mxu0 0
      %242 = vmatpush1.bf16.msra.mxu0 0
      %243 = vmatprep.subr.bf16.mxu0 0
      %244 = vmatpush1.bf16.msra.mxu0 0
      %245 = vmatprep.subr.bf16.mxu0 0
      %246 = vmatpush1.bf16.msra.mxu0 0
      %247 = vmatprep.subr.bf16.mxu0 0
      %248 = vmatpush1.bf16.msra.mxu0 0
      %249 = vmatprep.subr.bf16.mxu0 0
      %250 = vmatpush1.bf16.msra.mxu0 0
      %251 = vmatprep.subr.bf16.mxu0 0
      %252 = vmatpush1.bf16.msra.mxu0 0
      %253 = vmatprep.subr.bf16.mxu0 0
      %254 = vmatpush1.bf16.msra.mxu0 0
      %255 = vmatprep.subr.bf16.mxu0 0
      %256 = vmatpush1.bf16.msra.mxu0 0
      %257 = vmatprep.subr.bf16.mxu0 0
      %258 = vmatpush1.bf16.msra.mxu0 0
      %259 = vmatprep.subr.bf16.mxu0 0
      %260 = vmatpush1.bf16.msra.mxu0 0
      %261 = vmatprep.mubr.bf16.mxu0 0
      %262 = vmatmul.mubr.bf16.gmra.mrb[0].mxu0 %v227
      %v263 = vpop.f32.mrb[0].mxu0
      %v264 = vadd.f32 0.0, %v263
      %v265 = vpop.f32.mrb[0].mxu0
      %v266 = vpop.f32.mrb[0].mxu0
      %v267 = vpop.f32.mrb[0].mxu0
      %268 = vdwg.mxu0
      %v271 = vunpack.c.l.b16 %v201
      %v272 = vunpack.c.l.b16 %v202
      %v273 = vpack.c.b16 %v272, %v271
      %v276 = vsel %vm225, %v200, 0
      %278 = vmatprep.subr.bf16.mxu0 0
      %279 = vmatpush1.bf16.msra.mxu0 %v273
      %280 = vmatprep.subr.bf16.mxu0 0
      %281 = vmatpush1.bf16.msra.mxu0 0
      %282 = vmatprep.subr.bf16.mxu0 0
      %283 = vmatpush1.bf16.msra.mxu0 0
      %284 = vmatprep.subr.bf16.mxu0 0
      %285 = vmatpush1.bf16.msra.mxu0 0
      %286 = vmatprep.subr.bf16.mxu0 0
      %287 = vmatpush1.bf16.msra.mxu0 0
      %288 = vmatprep.subr.bf16.mxu0 0
      %289 = vmatpush1.bf16.msra.mxu0 0
      %290 = vmatprep.subr.bf16.mxu0 0
      %291 = vmatpush1.bf16.msra.mxu0 0
      %292 = vmatprep.subr.bf16.mxu0 0
      %293 = vmatpush1.bf16.msra.mxu0 0
      %294 = vmatprep.subr.bf16.mxu0 0
      %295 = vmatpush1.bf16.msra.mxu0 0
      %296 = vmatprep.subr.bf16.mxu0 0
      %297 = vmatpush1.bf16.msra.mxu0 0
      %298 = vmatprep.subr.bf16.mxu0 0
      %299 = vmatpush1.bf16.msra.mxu0 0
      %300 = vmatprep.subr.bf16.mxu0 0
      %301 = vmatpush1.bf16.msra.mxu0 0
      %302 = vmatprep.subr.bf16.mxu0 0
      %303 = vmatpush1.bf16.msra.mxu0 0
      %304 = vmatprep.subr.bf16.mxu0 0
      %305 = vmatpush1.bf16.msra.mxu0 0
      %306 = vmatprep.subr.bf16.mxu0 0
      %307 = vmatpush1.bf16.msra.mxu0 0
      %308 = vmatprep.subr.bf16.mxu0 0
      %309 = vmatpush1.bf16.msra.mxu0 0
      %310 = vmatprep.mubr.bf16.mxu0 0
      %311 = vmatmul.mubr.bf16.gmra.mrb[0].mxu0 %v276
      %v312 = vpop.f32.mrb[0].mxu0
      %v313 = vadd.f32 %v264, %v312
      %v314 = vpop.f32.mrb[0].mxu0
      %v315 = vpop.f32.mrb[0].mxu0
      %v316 = vpop.f32.mrb[0].mxu0
      %317 = vdwg.mxu0
      %s318 = sadd.s32 %s195, 1
      %s319 = smul.u32 %s318, 2
      %s320 = smul.addr %s319, 4
      %s321 = scalar_lea.vmem %s183, %s320
      %v322 = vld [vmem:[%s321] sm:$0xf]
      %s323 = scalar_lea.vmem %s1, 16
      %v324 = vld [vmem:[%s323] sm:$0xf]
      %v325 = vld [vmem:[%s323 + $0x4] sm:$0xf]
      %v328 = vunpack.c.l.b16 %v324
      %v329 = vunpack.c.l.b16 %v325
      %v330 = vpack.c.b16 %v329, %v328
      %v333 = vsel %vm225, %v322, 0
      %335 = vmatprep.subr.bf16.mxu0 0
      %336 = vmatpush1.bf16.msra.mxu0 %v330
      %337 = vmatprep.subr.bf16.mxu0 0
      %338 = vmatpush1.bf16.msra.mxu0 0
      %339 = vmatprep.subr.bf16.mxu0 0
      %340 = vmatpush1.bf16.msra.mxu0 0
      %341 = vmatprep.subr.bf16.mxu0 0
      %342 = vmatpush1.bf16.msra.mxu0 0
      %343 = vmatprep.subr.bf16.mxu0 0
      %344 = vmatpush1.bf16.msra.mxu0 0
      %345 = vmatprep.subr.bf16.mxu0 0
      %346 = vmatpush1.bf16.msra.mxu0 0
      %347 = vmatprep.subr.bf16.mxu0 0
      %348 = vmatpush1.bf16.msra.mxu0 0
      %349 = vmatprep.subr.bf16.mxu0 0
      %350 = vmatpush1.bf16.msra.mxu0 0
      %351 = vmatprep.subr.bf16.mxu0 0
      %352 = vmatpush1.bf16.msra.mxu0 0
      %353 = vmatprep.subr.bf16.mxu0 0
      %354 = vmatpush1.bf16.msra.mxu0 0
      %355 = vmatprep.subr.bf16.mxu0 0
      %356 = vmatpush1.bf16.msra.mxu0 0
      %357 = vmatprep.subr.bf16.mxu0 0
      %358 = vmatpush1.bf16.msra.mxu0 0
      %359 = vmatprep.subr.bf16.mxu0 0
      %360 = vmatpush1.bf16.msra.mxu0 0
      %361 = vmatprep.subr.bf16.mxu0 0
      %362 = vmatpush1.bf16.msra.mxu0 0
      %363 = vmatprep.subr.bf16.mxu0 0
      %364 = vmatpush1.bf16.msra.mxu0 0
      %365 = vmatprep.subr.bf16.mxu0 0
      %366 = vmatpush1.bf16.msra.mxu0 0
      %367 = vmatprep.mubr.bf16.mxu0 0
      %368 = vmatmul.mubr.bf16.gmra.mrb[0].mxu0 %v333
      %v369 = vpop.f32.mrb[0].mxu0
      %v370 = vadd.f32 0.0, %v369
      %v371 = vpop.f32.mrb[0].mxu0
      %v372 = vpop.f32.mrb[0].mxu0
      %v373 = vpop.f32.mrb[0].mxu0
      %374 = vdwg.mxu0
      %v375 = vadd.f32 %v313, %v370
      %v376 = vld [vmem:[%s321] sm:$0xf]
      %v377 = vld [vmem:[%s321 + $0x4] sm:$0x1]
      %s378 = scalar_lea.vmem %s1, 24
      %v379 = vld [vmem:[%s378] sm:$0xf]
      %v380 = vld [vmem:[%s378 + $0x4] sm:$0xf]
      %v383 = vunpack.c.l.b16 %v376
      %v384 = vunpack.c.l.b16 %v377
      %v385 = vpack.c.b16 %v384, %v383
      %v387 = vshrl.u32 %v385, 16
      %v389 = vshll.u32 %v385, 16
      %v391 = vrot.slane %v389, 1
      %v392 = vor.u32 %v387, %v391
      %v395 = vunpack.c.l.b16 %v379
      %v396 = vunpack.c.l.b16 %v380
      %v397 = vpack.c.b16 %v396, %v395
      %v400 = vsel %vm225, %v392, 0
      %402 = vmatprep.subr.bf16.mxu0 0
      %403 = vmatpush1.bf16.msra.mxu0 %v397
      %404 = vmatprep.subr.bf16.mxu0 0
      %405 = vmatpush1.bf16.msra.mxu0 0
      %406 = vmatprep.subr.bf16.mxu0 0
      %407 = vmatpush1.bf16.msra.mxu0 0
      %408 = vmatprep.subr.bf16.mxu0 0
      %409 = vmatpush1.bf16.msra.mxu0 0
      %410 = vmatprep.subr.bf16.mxu0 0
      %411 = vmatpush1.bf16.msra.mxu0 0
      %412 = vmatprep.subr.bf16.mxu0 0
      %413 = vmatpush1.bf16.msra.mxu0 0
      %414 = vmatprep.subr.bf16.mxu0 0
      %415 = vmatpush1.bf16.msra.mxu0 0
      %416 = vmatprep.subr.bf16.mxu0 0
      %417 = vmatpush1.bf16.msra.mxu0 0
      %418 = vmatprep.subr.bf16.mxu0 0
      %419 = vmatpush1.bf16.msra.mxu0 0
      %420 = vmatprep.subr.bf16.mxu0 0
      %421 = vmatpush1.bf16.msra.mxu0 0
      %422 = vmatprep.subr.bf16.mxu0 0
      %423 = vmatpush1.bf16.msra.mxu0 0
      %424 = vmatprep.subr.bf16.mxu0 0
      %425 = vmatpush1.bf16.msra.mxu0 0
      %426 = vmatprep.subr.bf16.mxu0 0
      %427 = vmatpush1.bf16.msra.mxu0 0
      %428 = vmatprep.subr.bf16.mxu0 0
      %429 = vmatpush1.bf16.msra.mxu0 0
      %430 = vmatprep.subr.bf16.mxu0 0
      %431 = vmatpush1.bf16.msra.mxu0 0
      %432 = vmatprep.subr.bf16.mxu0 0
      %433 = vmatpush1.bf16.msra.mxu0 0
      %434 = vmatprep.mubr.bf16.mxu0 0
      %435 = vmatmul.mubr.bf16.gmra.mrb[0].mxu0 %v400
      %v436 = vpop.f32.mrb[0].mxu0
      %v437 = vadd.f32 0.0, %v436
      %v438 = vpop.f32.mrb[0].mxu0
      %v439 = vpop.f32.mrb[0].mxu0
      %v440 = vpop.f32.mrb[0].mxu0
      %441 = vdwg.mxu0
      %v442 = vadd.f32 %v375, %v437
      %v444 = vlaneseq
      %v445 = vshrl.u32 %v444, 7
      %v446 = vsub.s32 0, %v445
      %v447 = vrot.slane %v196, %v446
      %v449 = vadd.f32 %v442, %v447
      %v450 = vmax.f32 %v449, 0.0
      %v451 = vpack.c.bf16 %v450, %v450
      %vm452 = vcmask 125952
      %453 = vst.msk [vmem:[%s192] sm:$0xf] %vm452, %v451
      %v454 = vld [vmem:[%s321] sm:$0xf]
      %v455 = vld [vmem:[%s1] sm:$0xf]
      %v456 = vld [vmem:[%s1 + $0x4] sm:$0xf]
      %v457 = vld [vmem:[%s321 + $0x4] sm:$0x1]
      %v458 = vld [vmem:[%s204] sm:$0xf]
      %v459 = vld [vmem:[%s204 + $0x4] sm:$0xf]
      %v462 = vunpack.c.l.b16 %v454
      %v463 = vunpack.c.l.b16 %v457
      %v464 = vpack.c.b16 %v463, %v462
      %v466 = vshrl.u32 %v464, 16
      %v468 = vshll.u32 %v464, 16
      %v470 = vrot.slane %v468, 1
      %v471 = vor.u32 %v466, %v470
      %v474 = vunpack.c.l.b16 %v458
      %v475 = vunpack.c.l.b16 %v459
      %v476 = vpack.c.b16 %v475, %v474
      %v479 = vsel %vm225, %v471, 0
      %481 = vmatprep.subr.bf16.mxu0 0
      %482 = vmatpush1.bf16.msra.mxu0 %v476
      %483 = vmatprep.subr.bf16.mxu0 0
      %484 = vmatpush1.bf16.msra.mxu0 0
      %485 = vmatprep.subr.bf16.mxu0 0
      %486 = vmatpush1.bf16.msra.mxu0 0
      %487 = vmatprep.subr.bf16.mxu0 0
      %488 = vmatpush1.bf16.msra.mxu0 0
      %489 = vmatprep.subr.bf16.mxu0 0
      %490 = vmatpush1.bf16.msra.mxu0 0
      %491 = vmatprep.subr.bf16.mxu0 0
      %492 = vmatpush1.bf16.msra.mxu0 0
      %493 = vmatprep.subr.bf16.mxu0 0
      %494 = vmatpush1.bf16.msra.mxu0 0
      %495 = vmatprep.subr.bf16.mxu0 0
      %496 = vmatpush1.bf16.msra.mxu0 0
      %497 = vmatprep.subr.bf16.mxu0 0
      %498 = vmatpush1.bf16.msra.mxu0 0
      %499 = vmatprep.subr.bf16.mxu0 0
      %500 = vmatpush1.bf16.msra.mxu0 0
      %501 = vmatprep.subr.bf16.mxu0 0
      %502 = vmatpush1.bf16.msra.mxu0 0
      %503 = vmatprep.subr.bf16.mxu0 0
      %504 = vmatpush1.bf16.msra.mxu0 0
      %505 = vmatprep.subr.bf16.mxu0 0
      %506 = vmatpush1.bf16.msra.mxu0 0
      %507 = vmatprep.subr.bf16.mxu0 0
      %508 = vmatpush1.bf16.msra.mxu0 0
      %509 = vmatprep.subr.bf16.mxu0 0
      %510 = vmatpush1.bf16.msra.mxu0 0
      %511 = vmatprep.subr.bf16.mxu0 0
      %512 = vmatpush1.bf16.msra.mxu0 0
      %513 = vmatprep.mubr.bf16.mxu0 0
      %514 = vmatmul.mubr.bf16.gmra.mrb[0].mxu0 %v479
      %v515 = vpop.f32.mrb[0].mxu0
      %v516 = vadd.f32 0.0, %v515
      %v517 = vpop.f32.mrb[0].mxu0
      %v518 = vpop.f32.mrb[0].mxu0
      %v519 = vpop.f32.mrb[0].mxu0
      %520 = vdwg.mxu0
      %v523 = vunpack.c.l.b16 %v455
      %v524 = vunpack.c.l.b16 %v456
      %v525 = vpack.c.b16 %v524, %v523
      %v528 = vsel %vm225, %v454, 0
      %530 = vmatprep.subr.bf16.mxu0 0
      %531 = vmatpush1.bf16.msra.mxu0 %v525
      %532 = vmatprep.subr.bf16.mxu0 0
      %533 = vmatpush1.bf16.msra.mxu0 0
      %534 = vmatprep.subr.bf16.mxu0 0
      %535 = vmatpush1.bf16.msra.mxu0 0
      %536 = vmatprep.subr.bf16.mxu0 0
      %537 = vmatpush1.bf16.msra.mxu0 0
      %538 = vmatprep.subr.bf16.mxu0 0
      %539 = vmatpush1.bf16.msra.mxu0 0
      %540 = vmatprep.subr.bf16.mxu0 0
      %541 = vmatpush1.bf16.msra.mxu0 0
      %542 = vmatprep.subr.bf16.mxu0 0
      %543 = vmatpush1.bf16.msra.mxu0 0
      %544 = vmatprep.subr.bf16.mxu0 0
      %545 = vmatpush1.bf16.msra.mxu0 0
      %546 = vmatprep.subr.bf16.mxu0 0
      %547 = vmatpush1.bf16.msra.mxu0 0
      %548 = vmatprep.subr.bf16.mxu0 0
      %549 = vmatpush1.bf16.msra.mxu0 0
      %550 = vmatprep.subr.bf16.mxu0 0
      %551 = vmatpush1.bf16.msra.mxu0 0
      %552 = vmatprep.subr.bf16.mxu0 0
      %553 = vmatpush1.bf16.msra.mxu0 0
      %554 = vmatprep.subr.bf16.mxu0 0
      %555 = vmatpush1.bf16.msra.mxu0 0
      %556 = vmatprep.subr.bf16.mxu0 0
      %557 = vmatpush1.bf16.msra.mxu0 0
      %558 = vmatprep.subr.bf16.mxu0 0
      %559 = vmatpush1.bf16.msra.mxu0 0
      %560 = vmatprep.subr.bf16.mxu0 0
      %561 = vmatpush1.bf16.msra.mxu0 0
      %562 = vmatprep.mubr.bf16.mxu0 0
      %563 = vmatmul.mubr.bf16.gmra.mrb[0].mxu0 %v528
      %v564 = vpop.f32.mrb[0].mxu0
      %v565 = vadd.f32 %v516, %v564
      %v566 = vpop.f32.mrb[0].mxu0
      %v567 = vpop.f32.mrb[0].mxu0
      %v568 = vpop.f32.mrb[0].mxu0
      %569 = vdwg.mxu0
      %s570 = sadd.s32 %s195, 2
      %s571 = smul.u32 %s570, 2
      %s572 = smul.addr %s571, 4
      %s573 = scalar_lea.vmem %s183, %s572
      %v574 = vld [vmem:[%s573] sm:$0xf]
      %v575 = vld [vmem:[%s323] sm:$0xf]
      %v576 = vld [vmem:[%s323 + $0x4] sm:$0xf]
      %v579 = vunpack.c.l.b16 %v575
      %v580 = vunpack.c.l.b16 %v576
      %v581 = vpack.c.b16 %v580, %v579
      %v584 = vsel %vm225, %v574, 0
      %586 = vmatprep.subr.bf16.mxu0 0
      %587 = vmatpush1.bf16.msra.mxu0 %v581
      %588 = vmatprep.subr.bf16.mxu0 0
      %589 = vmatpush1.bf16.msra.mxu0 0
      %590 = vmatprep.subr.bf16.mxu0 0
      %591 = vmatpush1.bf16.msra.mxu0 0
      %592 = vmatprep.subr.bf16.mxu0 0
      %593 = vmatpush1.bf16.msra.mxu0 0
      %594 = vmatprep.subr.bf16.mxu0 0
      %595 = vmatpush1.bf16.msra.mxu0 0
      %596 = vmatprep.subr.bf16.mxu0 0
      %597 = vmatpush1.bf16.msra.mxu0 0
      %598 = vmatprep.subr.bf16.mxu0 0
      %599 = vmatpush1.bf16.msra.mxu0 0
      %600 = vmatprep.subr.bf16.mxu0 0
      %601 = vmatpush1.bf16.msra.mxu0 0
      %602 = vmatprep.subr.bf16.mxu0 0
      %603 = vmatpush1.bf16.msra.mxu0 0
      %604 = vmatprep.subr.bf16.mxu0 0
      %605 = vmatpush1.bf16.msra.mxu0 0
      %606 = vmatprep.subr.bf16.mxu0 0
      %607 = vmatpush1.bf16.msra.mxu0 0
      %608 = vmatprep.subr.bf16.mxu0 0
      %609 = vmatpush1.bf16.msra.mxu0 0
      %610 = vmatprep.subr.bf16.mxu0 0
      %611 = vmatpush1.bf16.msra.mxu0 0
      %612 = vmatprep.subr.bf16.mxu0 0
      %613 = vmatpush1.bf16.msra.mxu0 0
      %614 = vmatprep.subr.bf16.mxu0 0
      %615 = vmatpush1.bf16.msra.mxu0 0
      %616 = vmatprep.subr.bf16.mxu0 0
      %617 = vmatpush1.bf16.msra.mxu0 0
      %618 = vmatprep.mubr.bf16.mxu0 0
      %619 = vmatmul.mubr.bf16.gmra.mrb[0].mxu0 %v584
      %v620 = vpop.f32.mrb[0].mxu0
      %v621 = vadd.f32 0.0, %v620
      %v622 = vpop.f32.mrb[0].mxu0
      %v623 = vpop.f32.mrb[0].mxu0
      %v624 = vpop.f32.mrb[0].mxu0
      %625 = vdwg.mxu0
      %v626 = vadd.f32 %v565, %v621
      %v627 = vld [vmem:[%s573] sm:$0xf]
      %v628 = vld [vmem:[%s573 + $0x4] sm:$0x1]
      %v629 = vld [vmem:[%s378] sm:$0xf]
      %v630 = vld [vmem:[%s378 + $0x4] sm:$0xf]
      %v633 = vunpack.c.l.b16 %v627
      %v634 = vunpack.c.l.b16 %v628
      %v635 = vpack.c.b16 %v634, %v633
      %v637 = vshrl.u32 %v635, 16
      %v639 = vshll.u32 %v635, 16
      %v641 = vrot.slane %v639, 1
      %v642 = vor.u32 %v637, %v641
      %v645 = vunpack.c.l.b16 %v629
      %v646 = vunpack.c.l.b16 %v630
      %v647 = vpack.c.b16 %v646, %v645
      %v650 = vsel %vm225, %v642, 0
      %652 = vmatprep.subr.bf16.mxu0 0
      %653 = vmatpush1.bf16.msra.mxu0 %v647
      %654 = vmatprep.subr.bf16.mxu0 0
      %655 = vmatpush1.bf16.msra.mxu0 0
      %656 = vmatprep.subr.bf16.mxu0 0
      %657 = vmatpush1.bf16.msra.mxu0 0
      %658 = vmatprep.subr.bf16.mxu0 0
      %659 = vmatpush1.bf16.msra.mxu0 0
      %660 = vmatprep.subr.bf16.mxu0 0
      %661 = vmatpush1.bf16.msra.mxu0 0
      %662 = vmatprep.subr.bf16.mxu0 0
      %663 = vmatpush1.bf16.msra.mxu0 0
      %664 = vmatprep.subr.bf16.mxu0 0
      %665 = vmatpush1.bf16.msra.mxu0 0
      %666 = vmatprep.subr.bf16.mxu0 0
      %667 = vmatpush1.bf16.msra.mxu0 0
      %668 = vmatprep.subr.bf16.mxu0 0
      %669 = vmatpush1.bf16.msra.mxu0 0
      %670 = vmatprep.subr.bf16.mxu0 0
      %671 = vmatpush1.bf16.msra.mxu0 0
      %672 = vmatprep.subr.bf16.mxu0 0
      %673 = vmatpush1.bf16.msra.mxu0 0
      %674 = vmatprep.subr.bf16.mxu0 0
      %675 = vmatpush1.bf16.msra.mxu0 0
      %676 = vmatprep.subr.bf16.mxu0 0
      %677 = vmatpush1.bf16.msra.mxu0 0
      %678 = vmatprep.subr.bf16.mxu0 0
      %679 = vmatpush1.bf16.msra.mxu0 0
      %680 = vmatprep.subr.bf16.mxu0 0
      %681 = vmatpush1.bf16.msra.mxu0 0
      %682 = vmatprep.subr.bf16.mxu0 0
      %683 = vmatpush1.bf16.msra.mxu0 0
      %684 = vmatprep.mubr.bf16.mxu0 0
      %685 = vmatmul.mubr.bf16.gmra.mrb[0].mxu0 %v650
      %v686 = vpop.f32.mrb[0].mxu0
      %v687 = vadd.f32 0.0, %v686
      %v688 = vpop.f32.mrb[0].mxu0
      %v689 = vpop.f32.mrb[0].mxu0
      %v690 = vpop.f32.mrb[0].mxu0
      %691 = vdwg.mxu0
      %v692 = vadd.f32 %v626, %v687
      %v693 = vadd.f32 %v692, %v447
      %v694 = vmax.f32 %v693, 0.0
      %v695 = vpack.c.bf16 %v694, %v694
      %s696 = scalar_lea.vmem %s192, 4
      %697 = vst.msk [vmem:[%s696] sm:$0xf] %vm452, %v695
      %v698 = vld [vmem:[%s573] sm:$0xf]
      %v699 = vld [vmem:[%s1] sm:$0xf]
      %v700 = vld [vmem:[%s1 + $0x4] sm:$0xf]
      %v701 = vld [vmem:[%s573 + $0x4] sm:$0x1]
      %v702 = vld [vmem:[%s204] sm:$0xf]
      %v703 = vld [vmem:[%s204 + $0x4] sm:$0xf]
      %v706 = vunpack.c.l.b16 %v698
      %v707 = vunpack.c.l.b16 %v701
      %v708 = vpack.c.b16 %v707, %v706
      %v710 = vshrl.u32 %v708, 16
      %v712 = vshll.u32 %v708, 16
      %v714 = vrot.slane %v712, 1
      %v715 = vor.u32 %v710, %v714
      %v718 = vunpack.c.l.b16 %v702
      %v719 = vunpack.c.l.b16 %v703
      %v720 = vpack.c.b16 %v719, %v718
      %v723 = vsel %vm225, %v715, 0
      %725 = vmatprep.subr.bf16.mxu0 0
      %726 = vmatpush1.bf16.msra.mxu0 %v720
      %727 = vmatprep.subr.bf16.mxu0 0
      %728 = vmatpush1.bf16.msra.mxu0 0
      %729 = vmatprep.subr.bf16.mxu0 0
      %730 = vmatpush1.bf16.msra.mxu0 0
      %731 = vmatprep.subr.bf16.mxu0 0
      %732 = vmatpush1.bf16.msra.mxu0 0
      %733 = vmatprep.subr.bf16.mxu0 0
      %734 = vmatpush1.bf16.msra.mxu0 0
      %735 = vmatprep.subr.bf16.mxu0 0
      %736 = vmatpush1.bf16.msra.mxu0 0
      %737 = vmatprep.subr.bf16.mxu0 0
      %738 = vmatpush1.bf16.msra.mxu0 0
      %739 = vmatprep.subr.bf16.mxu0 0
      %740 = vmatpush1.bf16.msra.mxu0 0
      %741 = vmatprep.subr.bf16.mxu0 0
      %742 = vmatpush1.bf16.msra.mxu0 0
      %743 = vmatprep.subr.bf16.mxu0 0
      %744 = vmatpush1.bf16.msra.mxu0 0
      %745 = vmatprep.subr.bf16.mxu0 0
      %746 = vmatpush1.bf16.msra.mxu0 0
      %747 = vmatprep.subr.bf16.mxu0 0
      %748 = vmatpush1.bf16.msra.mxu0 0
      %749 = vmatprep.subr.bf16.mxu0 0
      %750 = vmatpush1.bf16.msra.mxu0 0
      %751 = vmatprep.subr.bf16.mxu0 0
      %752 = vmatpush1.bf16.msra.mxu0 0
      %753 = vmatprep.subr.bf16.mxu0 0
      %754 = vmatpush1.bf16.msra.mxu0 0
      %755 = vmatprep.subr.bf16.mxu0 0
      %756 = vmatpush1.bf16.msra.mxu0 0
      %757 = vmatprep.mubr.bf16.mxu0 0
      %758 = vmatmul.mubr.bf16.gmra.mrb[0].mxu0 %v723
      %v759 = vpop.f32.mrb[0].mxu0
      %v760 = vadd.f32 0.0, %v759
      %v761 = vpop.f32.mrb[0].mxu0
      %v762 = vpop.f32.mrb[0].mxu0
      %v763 = vpop.f32.mrb[0].mxu0
      %764 = vdwg.mxu0
      %v767 = vunpack.c.l.b16 %v699
      %v768 = vunpack.c.l.b16 %v700
      %v769 = vpack.c.b16 %v768, %v767
      %v772 = vsel %vm225, %v698, 0
      %774 = vmatprep.subr.bf16.mxu0 0
      %775 = vmatpush1.bf16.msra.mxu0 %v769
      %776 = vmatprep.subr.bf16.mxu0 0
      %777 = vmatpush1.bf16.msra.mxu0 0
      %778 = vmatprep.subr.bf16.mxu0 0
      %779 = vmatpush1.bf16.msra.mxu0 0
      %780 = vmatprep.subr.bf16.mxu0 0
      %781 = vmatpush1.bf16.msra.mxu0 0
      %782 = vmatprep.subr.bf16.mxu0 0
      %783 = vmatpush1.bf16.msra.mxu0 0
      %784 = vmatprep.subr.bf16.mxu0 0
      %785 = vmatpush1.bf16.msra.mxu0 0
      %786 = vmatprep.subr.bf16.mxu0 0
      %787 = vmatpush1.bf16.msra.mxu0 0
      %788 = vmatprep.subr.bf16.mxu0 0
      %789 = vmatpush1.bf16.msra.mxu0 0
      %790 = vmatprep.subr.bf16.mxu0 0
      %791 = vmatpush1.bf16.msra.mxu0 0
      %792 = vmatprep.subr.bf16.mxu0 0
      %793 = vmatpush1.bf16.msra.mxu0 0
      %794 = vmatprep.subr.bf16.mxu0 0
      %795 = vmatpush1.bf16.msra.mxu0 0
      %796 = vmatprep.subr.bf16.mxu0 0
      %797 = vmatpush1.bf16.msra.mxu0 0
      %798 = vmatprep.subr.bf16.mxu0 0
      %799 = vmatpush1.bf16.msra.mxu0 0
      %800 = vmatprep.subr.bf16.mxu0 0
      %801 = vmatpush1.bf16.msra.mxu0 0
      %802 = vmatprep.subr.bf16.mxu0 0
      %803 = vmatpush1.bf16.msra.mxu0 0
      %804 = vmatprep.subr.bf16.mxu0 0
      %805 = vmatpush1.bf16.msra.mxu0 0
      %806 = vmatprep.mubr.bf16.mxu0 0
      %807 = vmatmul.mubr.bf16.gmra.mrb[0].mxu0 %v772
      %v808 = vpop.f32.mrb[0].mxu0
      %v809 = vadd.f32 %v760, %v808
      %v810 = vpop.f32.mrb[0].mxu0
      %v811 = vpop.f32.mrb[0].mxu0
      %v812 = vpop.f32.mrb[0].mxu0
      %813 = vdwg.mxu0
      %s814 = sadd.s32 %s195, 3
      %s815 = smul.u32 %s814, 2
      %s816 = smul.addr %s815, 4
      %s817 = scalar_lea.vmem %s183, %s816
      %v818 = vld [vmem:[%s817] sm:$0xf]
      %v819 = vld [vmem:[%s323] sm:$0xf]
      %v820 = vld [vmem:[%s323 + $0x4] sm:$0xf]
      %v823 = vunpack.c.l.b16 %v819
      %v824 = vunpack.c.l.b16 %v820
      %v825 = vpack.c.b16 %v824, %v823
      %v828 = vsel %vm225, %v818, 0
      %830 = vmatprep.subr.bf16.mxu0 0
      %831 = vmatpush1.bf16.msra.mxu0 %v825
      %832 = vmatprep.subr.bf16.mxu0 0
      %833 = vmatpush1.bf16.msra.mxu0 0
      %834 = vmatprep.subr.bf16.mxu0 0
      %835 = vmatpush1.bf16.msra.mxu0 0
      %836 = vmatprep.subr.bf16.mxu0 0
      %837 = vmatpush1.bf16.msra.mxu0 0
      %838 = vmatprep.subr.bf16.mxu0 0
      %839 = vmatpush1.bf16.msra.mxu0 0
      %840 = vmatprep.subr.bf16.mxu0 0
      %841 = vmatpush1.bf16.msra.mxu0 0
      %842 = vmatprep.subr.bf16.mxu0 0
      %843 = vmatpush1.bf16.msra.mxu0 0
      %844 = vmatprep.subr.bf16.mxu0 0
      %845 = vmatpush1.bf16.msra.mxu0 0
      %846 = vmatprep.subr.bf16.mxu0 0
      %847 = vmatpush1.bf16.msra.mxu0 0
      %848 = vmatprep.subr.bf16.mxu0 0
      %849 = vmatpush1.bf16.msra.mxu0 0
      %850 = vmatprep.subr.bf16.mxu0 0
      %851 = vmatpush1.bf16.msra.mxu0 0
      %852 = vmatprep.subr.bf16.mxu0 0
      %853 = vmatpush1.bf16.msra.mxu0 0
      %854 = vmatprep.subr.bf16.mxu0 0
      %855 = vmatpush1.bf16.msra.mxu0 0
      %856 = vmatprep.subr.bf16.mxu0 0
      %857 = vmatpush1.bf16.msra.mxu0 0
      %858 = vmatprep.subr.bf16.mxu0 0
      %859 = vmatpush1.bf16.msra.mxu0 0
      %860 = vmatprep.subr.bf16.mxu0 0
      %861 = vmatpush1.bf16.msra.mxu0 0
      %862 = vmatprep.mubr.bf16.mxu0 0
      %863 = vmatmul.mubr.bf16.gmra.mrb[0].mxu0 %v828
      %v864 = vpop.f32.mrb[0].mxu0
      %v865 = vadd.f32 0.0, %v864
      %v866 = vpop.f32.mrb[0].mxu0
      %v867 = vpop.f32.mrb[0].mxu0
      %v868 = vpop.f32.mrb[0].mxu0
      %869 = vdwg.mxu0
      %v870 = vadd.f32 %v809, %v865
      %v871 = vld [vmem:[%s817] sm:$0xf]
      %v872 = vld [vmem:[%s817 + $0x4] sm:$0x1]
      %v873 = vld [vmem:[%s378] sm:$0xf]
      %v874 = vld [vmem:[%s378 + $0x4] sm:$0xf]
      %v877 = vunpack.c.l.b16 %v871
      %v878 = vunpack.c.l.b16 %v872
      %v879 = vpack.c.b16 %v878, %v877
      %v881 = vshrl.u32 %v879, 16
      %v883 = vshll.u32 %v879, 16
      %v885 = vrot.slane %v883, 1
      %v886 = vor.u32 %v881, %v885
      %v889 = vunpack.c.l.b16 %v873
      %v890 = vunpack.c.l.b16 %v874
      %v891 = vpack.c.b16 %v890, %v889
      %v894 = vsel %vm225, %v886, 0
      %896 = vmatprep.subr.bf16.mxu0 0
      %897 = vmatpush1.bf16.msra.mxu0 %v891
      %898 = vmatprep.subr.bf16.mxu0 0
      %899 = vmatpush1.bf16.msra.mxu0 0
      %900 = vmatprep.subr.bf16.mxu0 0
      %901 = vmatpush1.bf16.msra.mxu0 0
      %902 = vmatprep.subr.bf16.mxu0 0
      %903 = vmatpush1.bf16.msra.mxu0 0
      %904 = vmatprep.subr.bf16.mxu0 0
      %905 = vmatpush1.bf16.msra.mxu0 0
      %906 = vmatprep.subr.bf16.mxu0 0
      %907 = vmatpush1.bf16.msra.mxu0 0
      %908 = vmatprep.subr.bf16.mxu0 0
      %909 = vmatpush1.bf16.msra.mxu0 0
      %910 = vmatprep.subr.bf16.mxu0 0
      %911 = vmatpush1.bf16.msra.mxu0 0
      %912 = vmatprep.subr.bf16.mxu0 0
      %913 = vmatpush1.bf16.msra.mxu0 0
      %914 = vmatprep.subr.bf16.mxu0 0
      %915 = vmatpush1.bf16.msra.mxu0 0
      %916 = vmatprep.subr.bf16.mxu0 0
      %917 = vmatpush1.bf16.msra.mxu0 0
      %918 = vmatprep.subr.bf16.mxu0 0
      %919 = vmatpush1.bf16.msra.mxu0 0
      %920 = vmatprep.subr.bf16.mxu0 0
      %921 = vmatpush1.bf16.msra.mxu0 0
      %922 = vmatprep.subr.bf16.mxu0 0
      %923 = vmatpush1.bf16.msra.mxu0 0
      %924 = vmatprep.subr.bf16.mxu0 0
      %925 = vmatpush1.bf16.msra.mxu0 0
      %926 = vmatprep.subr.bf16.mxu0 0
      %927 = vmatpush1.bf16.msra.mxu0 0
      %928 = vmatprep.mubr.bf16.mxu0 0
      %929 = vmatmul.mubr.bf16.gmra.mrb[0].mxu0 %v894
      %v930 = vpop.f32.mrb[0].mxu0
      %v931 = vadd.f32 0.0, %v930
      %v932 = vpop.f32.mrb[0].mxu0
      %v933 = vpop.f32.mrb[0].mxu0
      %v934 = vpop.f32.mrb[0].mxu0
      %935 = vdwg.mxu0
      %v936 = vadd.f32 %v870, %v931
      %v937 = vadd.f32 %v936, %v447
      %v938 = vmax.f32 %v937, 0.0
      %v939 = vpack.c.bf16 %v938, %v938
      %s940 = scalar_lea.vmem %s192, 8
      %941 = vst.msk [vmem:[%s940] sm:$0xf] %vm452, %v939
      %v942 = vld [vmem:[%s817] sm:$0xf]
      %v943 = vld [vmem:[%s1] sm:$0xf]
      %v944 = vld [vmem:[%s1 + $0x4] sm:$0xf]
      %v945 = vld [vmem:[%s817 + $0x4] sm:$0x1]
      %v946 = vld [vmem:[%s204] sm:$0xf]
      %v947 = vld [vmem:[%s204 + $0x4] sm:$0xf]
      %v950 = vunpack.c.l.b16 %v942
      %v951 = vunpack.c.l.b16 %v945
      %v952 = vpack.c.b16 %v951, %v950
      %v954 = vshrl.u32 %v952, 16
      %v956 = vshll.u32 %v952, 16
      %v958 = vrot.slane %v956, 1
      %v959 = vor.u32 %v954, %v958
      %v962 = vunpack.c.l.b16 %v946
      %v963 = vunpack.c.l.b16 %v947
      %v964 = vpack.c.b16 %v963, %v962
      %v967 = vsel %vm225, %v959, 0
      %969 = vmatprep.subr.bf16.mxu0 0
      %970 = vmatpush1.bf16.msra.mxu0 %v964
      %971 = vmatprep.subr.bf16.mxu0 0
      %972 = vmatpush1.bf16.msra.mxu0 0
      %973 = vmatprep.subr.bf16.mxu0 0
      %974 = vmatpush1.bf16.msra.mxu0 0
      %975 = vmatprep.subr.bf16.mxu0 0
      %976 = vmatpush1.bf16.msra.mxu0 0
      %977 = vmatprep.subr.bf16.mxu0 0
      %978 = vmatpush1.bf16.msra.mxu0 0
      %979 = vmatprep.subr.bf16.mxu0 0
      %980 = vmatpush1.bf16.msra.mxu0 0
      %981 = vmatprep.subr.bf16.mxu0 0
      %982 = vmatpush1.bf16.msra.mxu0 0
      %983 = vmatprep.subr.bf16.mxu0 0
      %984 = vmatpush1.bf16.msra.mxu0 0
      %985 = vmatprep.subr.bf16.mxu0 0
      %986 = vmatpush1.bf16.msra.mxu0 0
      %987 = vmatprep.subr.bf16.mxu0 0
      %988 = vmatpush1.bf16.msra.mxu0 0
      %989 = vmatprep.subr.bf16.mxu0 0
      %990 = vmatpush1.bf16.msra.mxu0 0
      %991 = vmatprep.subr.bf16.mxu0 0
      %992 = vmatpush1.bf16.msra.mxu0 0
      %993 = vmatprep.subr.bf16.mxu0 0
      %994 = vmatpush1.bf16.msra.mxu0 0
      %995 = vmatprep.subr.bf16.mxu0 0
      %996 = vmatpush1.bf16.msra.mxu0 0
      %997 = vmatprep.subr.bf16.mxu0 0
      %998 = vmatpush1.bf16.msra.mxu0 0
      %999 = vmatprep.subr.bf16.mxu0 0
      %1000 = vmatpush1.bf16.msra.mxu0 0
      %1001 = vmatprep.mubr.bf16.mxu0 0
      %1002 = vmatmul.mubr.bf16.gmra.mrb[0].mxu0 %v967
      %v1003 = vpop.f32.mrb[0].mxu0
      %v1004 = vadd.f32 0.0, %v1003
      %v1005 = vpop.f32.mrb[0].mxu0
      %v1006 = vpop.f32.mrb[0].mxu0
      %v1007 = vpop.f32.mrb[0].mxu0
      %1008 = vdwg.mxu0
      %v1011 = vunpack.c.l.b16 %v943
      %v1012 = vunpack.c.l.b16 %v944
      %v1013 = vpack.c.b16 %v1012, %v1011
      %v1016 = vsel %vm225, %v942, 0
      %1018 = vmatprep.subr.bf16.mxu0 0
      %1019 = vmatpush1.bf16.msra.mxu0 %v1013
      %1020 = vmatprep.subr.bf16.mxu0 0
      %1021 = vmatpush1.bf16.msra.mxu0 0
      %1022 = vmatprep.subr.bf16.mxu0 0
      %1023 = vmatpush1.bf16.msra.mxu0 0
      %1024 = vmatprep.subr.bf16.mxu0 0
      %1025 = vmatpush1.bf16.msra.mxu0 0
      %1026 = vmatprep.subr.bf16.mxu0 0
      %1027 = vmatpush1.bf16.msra.mxu0 0
      %1028 = vmatprep.subr.bf16.mxu0 0
      %1029 = vmatpush1.bf16.msra.mxu0 0
      %1030 = vmatprep.subr.bf16.mxu0 0
      %1031 = vmatpush1.bf16.msra.mxu0 0
      %1032 = vmatprep.subr.bf16.mxu0 0
      %1033 = vmatpush1.bf16.msra.mxu0 0
      %1034 = vmatprep.subr.bf16.mxu0 0
      %1035 = vmatpush1.bf16.msra.mxu0 0
      %1036 = vmatprep.subr.bf16.mxu0 0
      %1037 = vmatpush1.bf16.msra.mxu0 0
      %1038 = vmatprep.subr.bf16.mxu0 0
      %1039 = vmatpush1.bf16.msra.mxu0 0
      %1040 = vmatprep.subr.bf16.mxu0 0
      %1041 = vmatpush1.bf16.msra.mxu0 0
      %1042 = vmatprep.subr.bf16.mxu0 0
      %1043 = vmatpush1.bf16.msra.mxu0 0
      %1044 = vmatprep.subr.bf16.mxu0 0
      %1045 = vmatpush1.bf16.msra.mxu0 0
      %1046 = vmatprep.subr.bf16.mxu0 0
      %1047 = vmatpush1.bf16.msra.mxu0 0
      %1048 = vmatprep.subr.bf16.mxu0 0
      %1049 = vmatpush1.bf16.msra.mxu0 0
      %1050 = vmatprep.mubr.bf16.mxu0 0
      %1051 = vmatmul.mubr.bf16.gmra.mrb[0].mxu0 %v1016
      %v1052 = vpop.f32.mrb[0].mxu0
      %v1053 = vadd.f32 %v1004, %v1052
      %v1054 = vpop.f32.mrb[0].mxu0
      %v1055 = vpop.f32.mrb[0].mxu0
      %v1056 = vpop.f32.mrb[0].mxu0
      %1057 = vdwg.mxu0
      %s1058 = sadd.s32 %s195, 4
      %s1059 = smul.u32 %s1058, 2
      %s1060 = smul.addr %s1059, 4
      %s1061 = scalar_lea.vmem %s183, %s1060
      %v1062 = vld [vmem:[%s1061] sm:$0xf]
      %v1063 = vld [vmem:[%s323] sm:$0xf]
      %v1064 = vld [vmem:[%s323 + $0x4] sm:$0xf]
      %v1067 = vunpack.c.l.b16 %v1063
      %v1068 = vunpack.c.l.b16 %v1064
      %v1069 = vpack.c.b16 %v1068, %v1067
      %v1072 = vsel %vm225, %v1062, 0
      %1074 = vmatprep.subr.bf16.mxu0 0
      %1075 = vmatpush1.bf16.msra.mxu0 %v1069
      %1076 = vmatprep.subr.bf16.mxu0 0
      %1077 = vmatpush1.bf16.msra.mxu0 0
      %1078 = vmatprep.subr.bf16.mxu0 0
      %1079 = vmatpush1.bf16.msra.mxu0 0
      %1080 = vmatprep.subr.bf16.mxu0 0
      %1081 = vmatpush1.bf16.msra.mxu0 0
      %1082 = vmatprep.subr.bf16.mxu0 0
      %1083 = vmatpush1.bf16.msra.mxu0 0
      %1084 = vmatprep.subr.bf16.mxu0 0
      %1085 = vmatpush1.bf16.msra.mxu0 0
      %1086 = vmatprep.subr.bf16.mxu0 0
      %1087 = vmatpush1.bf16.msra.mxu0 0
      %1088 = vmatprep.subr.bf16.mxu0 0
      %1089 = vmatpush1.bf16.msra.mxu0 0
      %1090 = vmatprep.subr.bf16.mxu0 0
      %1091 = vmatpush1.bf16.msra.mxu0 0
      %1092 = vmatprep.subr.bf16.mxu0 0
      %1093 = vmatpush1.bf16.msra.mxu0 0
      %1094 = vmatprep.subr.bf16.mxu0 0
      %1095 = vmatpush1.bf16.msra.mxu0 0
      %1096 = vmatprep.subr.bf16.mxu0 0
      %1097 = vmatpush1.bf16.msra.mxu0 0
      %1098 = vmatprep.subr.bf16.mxu0 0
      %1099 = vmatpush1.bf16.msra.mxu0 0
      %1100 = vmatprep.subr.bf16.mxu0 0
      %1101 = vmatpush1.bf16.msra.mxu0 0
      %1102 = vmatprep.subr.bf16.mxu0 0
      %1103 = vmatpush1.bf16.msra.mxu0 0
      %1104 = vmatprep.subr.bf16.mxu0 0
      %1105 = vmatpush1.bf16.msra.mxu0 0
      %1106 = vmatprep.mubr.bf16.mxu0 0
      %1107 = vmatmul.mubr.bf16.gmra.mrb[0].mxu0 %v1072
      %v1108 = vpop.f32.mrb[0].mxu0
      %v1109 = vadd.f32 0.0, %v1108
      %v1110 = vpop.f32.mrb[0].mxu0
      %v1111 = vpop.f32.mrb[0].mxu0
      %v1112 = vpop.f32.mrb[0].mxu0
      %1113 = vdwg.mxu0
      %v1114 = vadd.f32 %v1053, %v1109
      %v1115 = vld [vmem:[%s1061] sm:$0xf]
      %v1116 = vld [vmem:[%s1061 + $0x4] sm:$0x1]
      %v1117 = vld [vmem:[%s378] sm:$0xf]
      %v1118 = vld [vmem:[%s378 + $0x4] sm:$0xf]
      %v1121 = vunpack.c.l.b16 %v1115
      %v1122 = vunpack.c.l.b16 %v1116
      %v1123 = vpack.c.b16 %v1122, %v1121
      %v1125 = vshrl.u32 %v1123, 16
      %v1127 = vshll.u32 %v1123, 16
      %v1129 = vrot.slane %v1127, 1
      %v1130 = vor.u32 %v1125, %v1129
      %v1133 = vunpack.c.l.b16 %v1117
      %v1134 = vunpack.c.l.b16 %v1118
      %v1135 = vpack.c.b16 %v1134, %v1133
      %v1138 = vsel %vm225, %v1130, 0
      %1140 = vmatprep.subr.bf16.mxu0 0
      %1141 = vmatpush1.bf16.msra.mxu0 %v1135
      %1142 = vmatprep.subr.bf16.mxu0 0
      %1143 = vmatpush1.bf16.msra.mxu0 0
      %1144 = vmatprep.subr.bf16.mxu0 0
      %1145 = vmatpush1.bf16.msra.mxu0 0
      %1146 = vmatprep.subr.bf16.mxu0 0
      %1147 = vmatpush1.bf16.msra.mxu0 0
      %1148 = vmatprep.subr.bf16.mxu0 0
      %1149 = vmatpush1.bf16.msra.mxu0 0
      %1150 = vmatprep.subr.bf16.mxu0 0
      %1151 = vmatpush1.bf16.msra.mxu0 0
      %1152 = vmatprep.subr.bf16.mxu0 0
      %1153 = vmatpush1.bf16.msra.mxu0 0
      %1154 = vmatprep.subr.bf16.mxu0 0
      %1155 = vmatpush1.bf16.msra.mxu0 0
      %1156 = vmatprep.subr.bf16.mxu0 0
      %1157 = vmatpush1.bf16.msra.mxu0 0
      %1158 = vmatprep.subr.bf16.mxu0 0
      %1159 = vmatpush1.bf16.msra.mxu0 0
      %1160 = vmatprep.subr.bf16.mxu0 0
      %1161 = vmatpush1.bf16.msra.mxu0 0
      %1162 = vmatprep.subr.bf16.mxu0 0
      %1163 = vmatpush1.bf16.msra.mxu0 0
      %1164 = vmatprep.subr.bf16.mxu0 0
      %1165 = vmatpush1.bf16.msra.mxu0 0
      %1166 = vmatprep.subr.bf16.mxu0 0
      %1167 = vmatpush1.bf16.msra.mxu0 0
      %1168 = vmatprep.subr.bf16.mxu0 0
      %1169 = vmatpush1.bf16.msra.mxu0 0
      %1170 = vmatprep.subr.bf16.mxu0 0
      %1171 = vmatpush1.bf16.msra.mxu0 0
      %1172 = vmatprep.mubr.bf16.mxu0 0
      %1173 = vmatmul.mubr.bf16.gmra.mrb[0].mxu0 %v1138
      %v1174 = vpop.f32.mrb[0].mxu0
      %v1175 = vadd.f32 0.0, %v1174
      %v1176 = vpop.f32.mrb[0].mxu0
      %v1177 = vpop.f32.mrb[0].mxu0
      %v1178 = vpop.f32.mrb[0].mxu0
      %1179 = vdwg.mxu0
      %v1180 = vadd.f32 %v1114, %v1175
      %v1181 = vadd.f32 %v1180, %v447
      %v1182 = vmax.f32 %v1181, 0.0
      %v1183 = vpack.c.bf16 %v1182, %v1182
      %s1184 = scalar_lea.vmem %s192, 12
      %1185 = vst.msk [vmem:[%s1184] sm:$0xf] %vm452, %v1183
      %v1186 = vld [vmem:[%s1061] sm:$0xf]
      %v1187 = vld [vmem:[%s1] sm:$0xf]
      %v1188 = vld [vmem:[%s1 + $0x4] sm:$0xf]
      %v1189 = vld [vmem:[%s1061 + $0x4] sm:$0x1]
      %v1190 = vld [vmem:[%s204] sm:$0xf]
      %v1191 = vld [vmem:[%s204 + $0x4] sm:$0xf]
      %v1194 = vunpack.c.l.b16 %v1186
      %v1195 = vunpack.c.l.b16 %v1189
      %v1196 = vpack.c.b16 %v1195, %v1194
      %v1198 = vshrl.u32 %v1196, 16
      %v1200 = vshll.u32 %v1196, 16
      %v1202 = vrot.slane %v1200, 1
      %v1203 = vor.u32 %v1198, %v1202
      %v1206 = vunpack.c.l.b16 %v1190
      %v1207 = vunpack.c.l.b16 %v1191
      %v1208 = vpack.c.b16 %v1207, %v1206
      %v1211 = vsel %vm225, %v1203, 0
      %1213 = vmatprep.subr.bf16.mxu0 0
      %1214 = vmatpush1.bf16.msra.mxu0 %v1208
      %1215 = vmatprep.subr.bf16.mxu0 0
      %1216 = vmatpush1.bf16.msra.mxu0 0
      %1217 = vmatprep.subr.bf16.mxu0 0
      %1218 = vmatpush1.bf16.msra.mxu0 0
      %1219 = vmatprep.subr.bf16.mxu0 0
      %1220 = vmatpush1.bf16.msra.mxu0 0
      %1221 = vmatprep.subr.bf16.mxu0 0
      %1222 = vmatpush1.bf16.msra.mxu0 0
      %1223 = vmatprep.subr.bf16.mxu0 0
      %1224 = vmatpush1.bf16.msra.mxu0 0
      %1225 = vmatprep.subr.bf16.mxu0 0
      %1226 = vmatpush1.bf16.msra.mxu0 0
      %1227 = vmatprep.subr.bf16.mxu0 0
      %1228 = vmatpush1.bf16.msra.mxu0 0
      %1229 = vmatprep.subr.bf16.mxu0 0
      %1230 = vmatpush1.bf16.msra.mxu0 0
      %1231 = vmatprep.subr.bf16.mxu0 0
      %1232 = vmatpush1.bf16.msra.mxu0 0
      %1233 = vmatprep.subr.bf16.mxu0 0
      %1234 = vmatpush1.bf16.msra.mxu0 0
      %1235 = vmatprep.subr.bf16.mxu0 0
      %1236 = vmatpush1.bf16.msra.mxu0 0
      %1237 = vmatprep.subr.bf16.mxu0 0
      %1238 = vmatpush1.bf16.msra.mxu0 0
      %1239 = vmatprep.subr.bf16.mxu0 0
      %1240 = vmatpush1.bf16.msra.mxu0 0
      %1241 = vmatprep.subr.bf16.mxu0 0
      %1242 = vmatpush1.bf16.msra.mxu0 0
      %1243 = vmatprep.subr.bf16.mxu0 0
      %1244 = vmatpush1.bf16.msra.mxu0 0
      %1245 = vmatprep.mubr.bf16.mxu0 0
      %1246 = vmatmul.mubr.bf16.gmra.mrb[0].mxu0 %v1211
      %v1247 = vpop.f32.mrb[0].mxu0
      %v1248 = vadd.f32 0.0, %v1247
      %v1249 = vpop.f32.mrb[0].mxu0
      %v1250 = vpop.f32.mrb[0].mxu0
      %v1251 = vpop.f32.mrb[0].mxu0
      %1252 = vdwg.mxu0
      %v1255 = vunpack.c.l.b16 %v1187
      %v1256 = vunpack.c.l.b16 %v1188
      %v1257 = vpack.c.b16 %v1256, %v1255
      %v1260 = vsel %vm225, %v1186, 0
      %1262 = vmatprep.subr.bf16.mxu0 0
      %1263 = vmatpush1.bf16.msra.mxu0 %v1257
      %1264 = vmatprep.subr.bf16.mxu0 0
      %1265 = vmatpush1.bf16.msra.mxu0 0
      %1266 = vmatprep.subr.bf16.mxu0 0
      %1267 = vmatpush1.bf16.msra.mxu0 0
      %1268 = vmatprep.subr.bf16.mxu0 0
      %1269 = vmatpush1.bf16.msra.mxu0 0
      %1270 = vmatprep.subr.bf16.mxu0 0
      %1271 = vmatpush1.bf16.msra.mxu0 0
      %1272 = vmatprep.subr.bf16.mxu0 0
      %1273 = vmatpush1.bf16.msra.mxu0 0
      %1274 = vmatprep.subr.bf16.mxu0 0
      %1275 = vmatpush1.bf16.msra.mxu0 0
      %1276 = vmatprep.subr.bf16.mxu0 0
      %1277 = vmatpush1.bf16.msra.mxu0 0
      %1278 = vmatprep.subr.bf16.mxu0 0
      %1279 = vmatpush1.bf16.msra.mxu0 0
      %1280 = vmatprep.subr.bf16.mxu0 0
      %1281 = vmatpush1.bf16.msra.mxu0 0
      %1282 = vmatprep.subr.bf16.mxu0 0
      %1283 = vmatpush1.bf16.msra.mxu0 0
      %1284 = vmatprep.subr.bf16.mxu0 0
      %1285 = vmatpush1.bf16.msra.mxu0 0
      %1286 = vmatprep.subr.bf16.mxu0 0
      %1287 = vmatpush1.bf16.msra.mxu0 0
      %1288 = vmatprep.subr.bf16.mxu0 0
      %1289 = vmatpush1.bf16.msra.mxu0 0
      %1290 = vmatprep.subr.bf16.mxu0 0
      %1291 = vmatpush1.bf16.msra.mxu0 0
      %1292 = vmatprep.subr.bf16.mxu0 0
      %1293 = vmatpush1.bf16.msra.mxu0 0
      %1294 = vmatprep.mubr.bf16.mxu0 0
      %1295 = vmatmul.mubr.bf16.gmra.mrb[0].mxu0 %v1260
      %v1296 = vpop.f32.mrb[0].mxu0
      %v1297 = vadd.f32 %v1248, %v1296
      %v1298 = vpop.f32.mrb[0].mxu0
      %v1299 = vpop.f32.mrb[0].mxu0
      %v1300 = vpop.f32.mrb[0].mxu0
      %1301 = vdwg.mxu0
      %s1302 = sadd.s32 %s195, 5
      %s1303 = smul.u32 %s1302, 2
      %s1304 = smul.addr %s1303, 4
      %s1305 = scalar_lea.vmem %s183, %s1304
      %v1306 = vld [vmem:[%s1305] sm:$0xf]
      %v1307 = vld [vmem:[%s323] sm:$0xf]
      %v1308 = vld [vmem:[%s323 + $0x4] sm:$0xf]
      %v1311 = vunpack.c.l.b16 %v1307
      %v1312 = vunpack.c.l.b16 %v1308
      %v1313 = vpack.c.b16 %v1312, %v1311
      %v1316 = vsel %vm225, %v1306, 0
      %1318 = vmatprep.subr.bf16.mxu0 0
      %1319 = vmatpush1.bf16.msra.mxu0 %v1313
      %1320 = vmatprep.subr.bf16.mxu0 0
      %1321 = vmatpush1.bf16.msra.mxu0 0
      %1322 = vmatprep.subr.bf16.mxu0 0
      %1323 = vmatpush1.bf16.msra.mxu0 0
      %1324 = vmatprep.subr.bf16.mxu0 0
      %1325 = vmatpush1.bf16.msra.mxu0 0
      %1326 = vmatprep.subr.bf16.mxu0 0
      %1327 = vmatpush1.bf16.msra.mxu0 0
      %1328 = vmatprep.subr.bf16.mxu0 0
      %1329 = vmatpush1.bf16.msra.mxu0 0
      %1330 = vmatprep.subr.bf16.mxu0 0
      %1331 = vmatpush1.bf16.msra.mxu0 0
      %1332 = vmatprep.subr.bf16.mxu0 0
      %1333 = vmatpush1.bf16.msra.mxu0 0
      %1334 = vmatprep.subr.bf16.mxu0 0
      %1335 = vmatpush1.bf16.msra.mxu0 0
      %1336 = vmatprep.subr.bf16.mxu0 0
      %1337 = vmatpush1.bf16.msra.mxu0 0
      %1338 = vmatprep.subr.bf16.mxu0 0
      %1339 = vmatpush1.bf16.msra.mxu0 0
      %1340 = vmatprep.subr.bf16.mxu0 0
      %1341 = vmatpush1.bf16.msra.mxu0 0
      %1342 = vmatprep.subr.bf16.mxu0 0
      %1343 = vmatpush1.bf16.msra.mxu0 0
      %1344 = vmatprep.subr.bf16.mxu0 0
      %1345 = vmatpush1.bf16.msra.mxu0 0
      %1346 = vmatprep.subr.bf16.mxu0 0
      %1347 = vmatpush1.bf16.msra.mxu0 0
      %1348 = vmatprep.subr.bf16.mxu0 0
      %1349 = vmatpush1.bf16.msra.mxu0 0
      %1350 = vmatprep.mubr.bf16.mxu0 0
      %1351 = vmatmul.mubr.bf16.gmra.mrb[0].mxu0 %v1316
      %v1352 = vpop.f32.mrb[0].mxu0
      %v1353 = vadd.f32 0.0, %v1352
      %v1354 = vpop.f32.mrb[0].mxu0
      %v1355 = vpop.f32.mrb[0].mxu0
      %v1356 = vpop.f32.mrb[0].mxu0
      %1357 = vdwg.mxu0
      %v1358 = vadd.f32 %v1297, %v1353
      %v1359 = vld [vmem:[%s1305] sm:$0xf]
      %v1360 = vld [vmem:[%s1305 + $0x4] sm:$0x1]
      %v1361 = vld [vmem:[%s378] sm:$0xf]
      %v1362 = vld [vmem:[%s378 + $0x4] sm:$0xf]
      %v1365 = vunpack.c.l.b16 %v1359
      %v1366 = vunpack.c.l.b16 %v1360
      %v1367 = vpack.c.b16 %v1366, %v1365
      %v1369 = vshrl.u32 %v1367, 16
      %v1371 = vshll.u32 %v1367, 16
      %v1373 = vrot.slane %v1371, 1
      %v1374 = vor.u32 %v1369, %v1373
      %v1377 = vunpack.c.l.b16 %v1361
      %v1378 = vunpack.c.l.b16 %v1362
      %v1379 = vpack.c.b16 %v1378, %v1377
      %v1382 = vsel %vm225, %v1374, 0
      %1384 = vmatprep.subr.bf16.mxu0 0
      %1385 = vmatpush1.bf16.msra.mxu0 %v1379
      %1386 = vmatprep.subr.bf16.mxu0 0
      %1387 = vmatpush1.bf16.msra.mxu0 0
      %1388 = vmatprep.subr.bf16.mxu0 0
      %1389 = vmatpush1.bf16.msra.mxu0 0
      %1390 = vmatprep.subr.bf16.mxu0 0
      %1391 = vmatpush1.bf16.msra.mxu0 0
      %1392 = vmatprep.subr.bf16.mxu0 0
      %1393 = vmatpush1.bf16.msra.mxu0 0
      %1394 = vmatprep.subr.bf16.mxu0 0
      %1395 = vmatpush1.bf16.msra.mxu0 0
      %1396 = vmatprep.subr.bf16.mxu0 0
      %1397 = vmatpush1.bf16.msra.mxu0 0
      %1398 = vmatprep.subr.bf16.mxu0 0
      %1399 = vmatpush1.bf16.msra.mxu0 0
      %1400 = vmatprep.subr.bf16.mxu0 0
      %1401 = vmatpush1.bf16.msra.mxu0 0
      %1402 = vmatprep.subr.bf16.mxu0 0
      %1403 = vmatpush1.bf16.msra.mxu0 0
      %1404 = vmatprep.subr.bf16.mxu0 0
      %1405 = vmatpush1.bf16.msra.mxu0 0
      %1406 = vmatprep.subr.bf16.mxu0 0
      %1407 = vmatpush1.bf16.msra.mxu0 0
      %1408 = vmatprep.subr.bf16.mxu0 0
      %1409 = vmatpush1.bf16.msra.mxu0 0
      %1410 = vmatprep.subr.bf16.mxu0 0
      %1411 = vmatpush1.bf16.msra.mxu0 0
      %1412 = vmatprep.subr.bf16.mxu0 0
      %1413 = vmatpush1.bf16.msra.mxu0 0
      %1414 = vmatprep.subr.bf16.mxu0 0
      %1415 = vmatpush1.bf16.msra.mxu0 0
      %1416 = vmatprep.mubr.bf16.mxu0 0
      %1417 = vmatmul.mubr.bf16.gmra.mrb[0].mxu0 %v1382
      %v1418 = vpop.f32.mrb[0].mxu0
      %v1419 = vadd.f32 0.0, %v1418
      %v1420 = vpop.f32.mrb[0].mxu0
      %v1421 = vpop.f32.mrb[0].mxu0
      %v1422 = vpop.f32.mrb[0].mxu0
      %1423 = vdwg.mxu0
      %v1424 = vadd.f32 %v1358, %v1419
      %v1425 = vadd.f32 %v1424, %v447
      %v1426 = vmax.f32 %v1425, 0.0
      %v1427 = vpack.c.bf16 %v1426, %v1426
      %s1428 = scalar_lea.vmem %s192, 16
      %1429 = vst.msk [vmem:[%s1428] sm:$0xf] %vm452, %v1427
      %v1430 = vld [vmem:[%s1305] sm:$0xf]
      %v1431 = vld [vmem:[%s1] sm:$0xf]
      %v1432 = vld [vmem:[%s1 + $0x4] sm:$0xf]
      %v1433 = vld [vmem:[%s1305 + $0x4] sm:$0x1]
      %v1434 = vld [vmem:[%s204] sm:$0xf]
      %v1435 = vld [vmem:[%s204 + $0x4] sm:$0xf]
      %v1438 = vunpack.c.l.b16 %v1430
      %v1439 = vunpack.c.l.b16 %v1433
      %v1440 = vpack.c.b16 %v1439, %v1438
      %v1442 = vshrl.u32 %v1440, 16
      %v1444 = vshll.u32 %v1440, 16
      %v1446 = vrot.slane %v1444, 1
      %v1447 = vor.u32 %v1442, %v1446
      %v1450 = vunpack.c.l.b16 %v1434
      %v1451 = vunpack.c.l.b16 %v1435
      %v1452 = vpack.c.b16 %v1451, %v1450
      %v1455 = vsel %vm225, %v1447, 0
      %1457 = vmatprep.subr.bf16.mxu0 0
      %1458 = vmatpush1.bf16.msra.mxu0 %v1452
      %1459 = vmatprep.subr.bf16.mxu0 0
      %1460 = vmatpush1.bf16.msra.mxu0 0
      %1461 = vmatprep.subr.bf16.mxu0 0
      %1462 = vmatpush1.bf16.msra.mxu0 0
      %1463 = vmatprep.subr.bf16.mxu0 0
      %1464 = vmatpush1.bf16.msra.mxu0 0
      %1465 = vmatprep.subr.bf16.mxu0 0
      %1466 = vmatpush1.bf16.msra.mxu0 0
      %1467 = vmatprep.subr.bf16.mxu0 0
      %1468 = vmatpush1.bf16.msra.mxu0 0
      %1469 = vmatprep.subr.bf16.mxu0 0
      %1470 = vmatpush1.bf16.msra.mxu0 0
      %1471 = vmatprep.subr.bf16.mxu0 0
      %1472 = vmatpush1.bf16.msra.mxu0 0
      %1473 = vmatprep.subr.bf16.mxu0 0
      %1474 = vmatpush1.bf16.msra.mxu0 0
      %1475 = vmatprep.subr.bf16.mxu0 0
      %1476 = vmatpush1.bf16.msra.mxu0 0
      %1477 = vmatprep.subr.bf16.mxu0 0
      %1478 = vmatpush1.bf16.msra.mxu0 0
      %1479 = vmatprep.subr.bf16.mxu0 0
      %1480 = vmatpush1.bf16.msra.mxu0 0
      %1481 = vmatprep.subr.bf16.mxu0 0
      %1482 = vmatpush1.bf16.msra.mxu0 0
      %1483 = vmatprep.subr.bf16.mxu0 0
      %1484 = vmatpush1.bf16.msra.mxu0 0
      %1485 = vmatprep.subr.bf16.mxu0 0
      %1486 = vmatpush1.bf16.msra.mxu0 0
      %1487 = vmatprep.subr.bf16.mxu0 0
      %1488 = vmatpush1.bf16.msra.mxu0 0
      %1489 = vmatprep.mubr.bf16.mxu0 0
      %1490 = vmatmul.mubr.bf16.gmra.mrb[0].mxu0 %v1455
      %v1491 = vpop.f32.mrb[0].mxu0
      %v1492 = vadd.f32 0.0, %v1491
      %v1493 = vpop.f32.mrb[0].mxu0
      %v1494 = vpop.f32.mrb[0].mxu0
      %v1495 = vpop.f32.mrb[0].mxu0
      %1496 = vdwg.mxu0
      %v1499 = vunpack.c.l.b16 %v1431
      %v1500 = vunpack.c.l.b16 %v1432
      %v1501 = vpack.c.b16 %v1500, %v1499
      %v1504 = vsel %vm225, %v1430, 0
      %1506 = vmatprep.subr.bf16.mxu0 0
      %1507 = vmatpush1.bf16.msra.mxu0 %v1501
      %1508 = vmatprep.subr.bf16.mxu0 0
      %1509 = vmatpush1.bf16.msra.mxu0 0
      %1510 = vmatprep.subr.bf16.mxu0 0
      %1511 = vmatpush1.bf16.msra.mxu0 0
      %1512 = vmatprep.subr.bf16.mxu0 0
      %1513 = vmatpush1.bf16.msra.mxu0 0
      %1514 = vmatprep.subr.bf16.mxu0 0
      %1515 = vmatpush1.bf16.msra.mxu0 0
      %1516 = vmatprep.subr.bf16.mxu0 0
      %1517 = vmatpush1.bf16.msra.mxu0 0
      %1518 = vmatprep.subr.bf16.mxu0 0
      %1519 = vmatpush1.bf16.msra.mxu0 0
      %1520 = vmatprep.subr.bf16.mxu0 0
      %1521 = vmatpush1.bf16.msra.mxu0 0
      %1522 = vmatprep.subr.bf16.mxu0 0
      %1523 = vmatpush1.bf16.msra.mxu0 0
      %1524 = vmatprep.subr.bf16.mxu0 0
      %1525 = vmatpush1.bf16.msra.mxu0 0
      %1526 = vmatprep.subr.bf16.mxu0 0
      %1527 = vmatpush1.bf16.msra.mxu0 0
      %1528 = vmatprep.subr.bf16.mxu0 0
      %1529 = vmatpush1.bf16.msra.mxu0 0
      %1530 = vmatprep.subr.bf16.mxu0 0
      %1531 = vmatpush1.bf16.msra.mxu0 0
      %1532 = vmatprep.subr.bf16.mxu0 0
      %1533 = vmatpush1.bf16.msra.mxu0 0
      %1534 = vmatprep.subr.bf16.mxu0 0
      %1535 = vmatpush1.bf16.msra.mxu0 0
      %1536 = vmatprep.subr.bf16.mxu0 0
      %1537 = vmatpush1.bf16.msra.mxu0 0
      %1538 = vmatprep.mubr.bf16.mxu0 0
      %1539 = vmatmul.mubr.bf16.gmra.mrb[0].mxu0 %v1504
      %v1540 = vpop.f32.mrb[0].mxu0
      %v1541 = vadd.f32 %v1492, %v1540
      %v1542 = vpop.f32.mrb[0].mxu0
      %v1543 = vpop.f32.mrb[0].mxu0
      %v1544 = vpop.f32.mrb[0].mxu0
      %1545 = vdwg.mxu0
      %s1546 = sadd.s32 %s195, 6
      %s1547 = smul.u32 %s1546, 2
      %s1548 = smul.addr %s1547, 4
      %s1549 = scalar_lea.vmem %s183, %s1548
      %v1550 = vld [vmem:[%s1549] sm:$0xf]
      %v1551 = vld [vmem:[%s323] sm:$0xf]
      %v1552 = vld [vmem:[%s323 + $0x4] sm:$0xf]
      %v1555 = vunpack.c.l.b16 %v1551
      %v1556 = vunpack.c.l.b16 %v1552
      %v1557 = vpack.c.b16 %v1556, %v1555
      %v1560 = vsel %vm225, %v1550, 0
      %1562 = vmatprep.subr.bf16.mxu0 0
      %1563 = vmatpush1.bf16.msra.mxu0 %v1557
      %1564 = vmatprep.subr.bf16.mxu0 0
      %1565 = vmatpush1.bf16.msra.mxu0 0
      %1566 = vmatprep.subr.bf16.mxu0 0
      %1567 = vmatpush1.bf16.msra.mxu0 0
      %1568 = vmatprep.subr.bf16.mxu0 0
      %1569 = vmatpush1.bf16.msra.mxu0 0
      %1570 = vmatprep.subr.bf16.mxu0 0
      %1571 = vmatpush1.bf16.msra.mxu0 0
      %1572 = vmatprep.subr.bf16.mxu0 0
      %1573 = vmatpush1.bf16.msra.mxu0 0
      %1574 = vmatprep.subr.bf16.mxu0 0
      %1575 = vmatpush1.bf16.msra.mxu0 0
      %1576 = vmatprep.subr.bf16.mxu0 0
      %1577 = vmatpush1.bf16.msra.mxu0 0
      %1578 = vmatprep.subr.bf16.mxu0 0
      %1579 = vmatpush1.bf16.msra.mxu0 0
      %1580 = vmatprep.subr.bf16.mxu0 0
      %1581 = vmatpush1.bf16.msra.mxu0 0
      %1582 = vmatprep.subr.bf16.mxu0 0
      %1583 = vmatpush1.bf16.msra.mxu0 0
      %1584 = vmatprep.subr.bf16.mxu0 0
      %1585 = vmatpush1.bf16.msra.mxu0 0
      %1586 = vmatprep.subr.bf16.mxu0 0
      %1587 = vmatpush1.bf16.msra.mxu0 0
      %1588 = vmatprep.subr.bf16.mxu0 0
      %1589 = vmatpush1.bf16.msra.mxu0 0
      %1590 = vmatprep.subr.bf16.mxu0 0
      %1591 = vmatpush1.bf16.msra.mxu0 0
      %1592 = vmatprep.subr.bf16.mxu0 0
      %1593 = vmatpush1.bf16.msra.mxu0 0
      %1594 = vmatprep.mubr.bf16.mxu0 0
      %1595 = vmatmul.mubr.bf16.gmra.mrb[0].mxu0 %v1560
      %v1596 = vpop.f32.mrb[0].mxu0
      %v1597 = vadd.f32 0.0, %v1596
      %v1598 = vpop.f32.mrb[0].mxu0
      %v1599 = vpop.f32.mrb[0].mxu0
      %v1600 = vpop.f32.mrb[0].mxu0
      %1601 = vdwg.mxu0
      %v1602 = vadd.f32 %v1541, %v1597
      %v1603 = vld [vmem:[%s1549] sm:$0xf]
      %v1604 = vld [vmem:[%s1549 + $0x4] sm:$0x1]
      %v1605 = vld [vmem:[%s378] sm:$0xf]
      %v1606 = vld [vmem:[%s378 + $0x4] sm:$0xf]
      %v1609 = vunpack.c.l.b16 %v1603
      %v1610 = vunpack.c.l.b16 %v1604
      %v1611 = vpack.c.b16 %v1610, %v1609
      %v1613 = vshrl.u32 %v1611, 16
      %v1615 = vshll.u32 %v1611, 16
      %v1617 = vrot.slane %v1615, 1
      %v1618 = vor.u32 %v1613, %v1617
      %v1621 = vunpack.c.l.b16 %v1605
      %v1622 = vunpack.c.l.b16 %v1606
      %v1623 = vpack.c.b16 %v1622, %v1621
      %v1626 = vsel %vm225, %v1618, 0
      %1628 = vmatprep.subr.bf16.mxu0 0
      %1629 = vmatpush1.bf16.msra.mxu0 %v1623
      %1630 = vmatprep.subr.bf16.mxu0 0
      %1631 = vmatpush1.bf16.msra.mxu0 0
      %1632 = vmatprep.subr.bf16.mxu0 0
      %1633 = vmatpush1.bf16.msra.mxu0 0
      %1634 = vmatprep.subr.bf16.mxu0 0
      %1635 = vmatpush1.bf16.msra.mxu0 0
      %1636 = vmatprep.subr.bf16.mxu0 0
      %1637 = vmatpush1.bf16.msra.mxu0 0
      %1638 = vmatprep.subr.bf16.mxu0 0
      %1639 = vmatpush1.bf16.msra.mxu0 0
      %1640 = vmatprep.subr.bf16.mxu0 0
      %1641 = vmatpush1.bf16.msra.mxu0 0
      %1642 = vmatprep.subr.bf16.mxu0 0
      %1643 = vmatpush1.bf16.msra.mxu0 0
      %1644 = vmatprep.subr.bf16.mxu0 0
      %1645 = vmatpush1.bf16.msra.mxu0 0
      %1646 = vmatprep.subr.bf16.mxu0 0
      %1647 = vmatpush1.bf16.msra.mxu0 0
      %1648 = vmatprep.subr.bf16.mxu0 0
      %1649 = vmatpush1.bf16.msra.mxu0 0
      %1650 = vmatprep.subr.bf16.mxu0 0
      %1651 = vmatpush1.bf16.msra.mxu0 0
      %1652 = vmatprep.subr.bf16.mxu0 0
      %1653 = vmatpush1.bf16.msra.mxu0 0
      %1654 = vmatprep.subr.bf16.mxu0 0
      %1655 = vmatpush1.bf16.msra.mxu0 0
      %1656 = vmatprep.subr.bf16.mxu0 0
      %1657 = vmatpush1.bf16.msra.mxu0 0
      %1658 = vmatprep.subr.bf16.mxu0 0
      %1659 = vmatpush1.bf16.msra.mxu0 0
      %1660 = vmatprep.mubr.bf16.mxu0 0
      %1661 = vmatmul.mubr.bf16.gmra.mrb[0].mxu0 %v1626
      %v1662 = vpop.f32.mrb[0].mxu0
      %v1663 = vadd.f32 0.0, %v1662
      %v1664 = vpop.f32.mrb[0].mxu0
      %v1665 = vpop.f32.mrb[0].mxu0
      %v1666 = vpop.f32.mrb[0].mxu0
      %1667 = vdwg.mxu0
      %v1668 = vadd.f32 %v1602, %v1663
      %v1669 = vadd.f32 %v1668, %v447
      %v1670 = vmax.f32 %v1669, 0.0
      %v1671 = vpack.c.bf16 %v1670, %v1670
      %s1672 = scalar_lea.vmem %s192, 20
      %1673 = vst.msk [vmem:[%s1672] sm:$0xf] %vm452, %v1671
      %v1674 = vld [vmem:[%s1549] sm:$0xf]
      %v1675 = vld [vmem:[%s1] sm:$0xf]
      %v1676 = vld [vmem:[%s1 + $0x4] sm:$0xf]
      %v1677 = vld [vmem:[%s1549 + $0x4] sm:$0x1]
      %v1678 = vld [vmem:[%s204] sm:$0xf]
      %v1679 = vld [vmem:[%s204 + $0x4] sm:$0xf]
      %v1682 = vunpack.c.l.b16 %v1674
      %v1683 = vunpack.c.l.b16 %v1677
      %v1684 = vpack.c.b16 %v1683, %v1682
      %v1686 = vshrl.u32 %v1684, 16
      %v1688 = vshll.u32 %v1684, 16
      %v1690 = vrot.slane %v1688, 1
      %v1691 = vor.u32 %v1686, %v1690
      %v1694 = vunpack.c.l.b16 %v1678
      %v1695 = vunpack.c.l.b16 %v1679
      %v1696 = vpack.c.b16 %v1695, %v1694
      %v1699 = vsel %vm225, %v1691, 0
      %1701 = vmatprep.subr.bf16.mxu0 0
      %1702 = vmatpush1.bf16.msra.mxu0 %v1696
      %1703 = vmatprep.subr.bf16.mxu0 0
      %1704 = vmatpush1.bf16.msra.mxu0 0
      %1705 = vmatprep.subr.bf16.mxu0 0
      %1706 = vmatpush1.bf16.msra.mxu0 0
      %1707 = vmatprep.subr.bf16.mxu0 0
      %1708 = vmatpush1.bf16.msra.mxu0 0
      %1709 = vmatprep.subr.bf16.mxu0 0
      %1710 = vmatpush1.bf16.msra.mxu0 0
      %1711 = vmatprep.subr.bf16.mxu0 0
      %1712 = vmatpush1.bf16.msra.mxu0 0
      %1713 = vmatprep.subr.bf16.mxu0 0
      %1714 = vmatpush1.bf16.msra.mxu0 0
      %1715 = vmatprep.subr.bf16.mxu0 0
      %1716 = vmatpush1.bf16.msra.mxu0 0
      %1717 = vmatprep.subr.bf16.mxu0 0
      %1718 = vmatpush1.bf16.msra.mxu0 0
      %1719 = vmatprep.subr.bf16.mxu0 0
      %1720 = vmatpush1.bf16.msra.mxu0 0
      %1721 = vmatprep.subr.bf16.mxu0 0
      %1722 = vmatpush1.bf16.msra.mxu0 0
      %1723 = vmatprep.subr.bf16.mxu0 0
      %1724 = vmatpush1.bf16.msra.mxu0 0
      %1725 = vmatprep.subr.bf16.mxu0 0
      %1726 = vmatpush1.bf16.msra.mxu0 0
      %1727 = vmatprep.subr.bf16.mxu0 0
      %1728 = vmatpush1.bf16.msra.mxu0 0
      %1729 = vmatprep.subr.bf16.mxu0 0
      %1730 = vmatpush1.bf16.msra.mxu0 0
      %1731 = vmatprep.subr.bf16.mxu0 0
      %1732 = vmatpush1.bf16.msra.mxu0 0
      %1733 = vmatprep.mubr.bf16.mxu0 0
      %1734 = vmatmul.mubr.bf16.gmra.mrb[0].mxu0 %v1699
      %v1735 = vpop.f32.mrb[0].mxu0
      %v1736 = vadd.f32 0.0, %v1735
      %v1737 = vpop.f32.mrb[0].mxu0
      %v1738 = vpop.f32.mrb[0].mxu0
      %v1739 = vpop.f32.mrb[0].mxu0
      %1740 = vdwg.mxu0
      %v1743 = vunpack.c.l.b16 %v1675
      %v1744 = vunpack.c.l.b16 %v1676
      %v1745 = vpack.c.b16 %v1744, %v1743
      %v1748 = vsel %vm225, %v1674, 0
      %1750 = vmatprep.subr.bf16.mxu0 0
      %1751 = vmatpush1.bf16.msra.mxu0 %v1745
      %1752 = vmatprep.subr.bf16.mxu0 0
      %1753 = vmatpush1.bf16.msra.mxu0 0
      %1754 = vmatprep.subr.bf16.mxu0 0
      %1755 = vmatpush1.bf16.msra.mxu0 0
      %1756 = vmatprep.subr.bf16.mxu0 0
      %1757 = vmatpush1.bf16.msra.mxu0 0
      %1758 = vmatprep.subr.bf16.mxu0 0
      %1759 = vmatpush1.bf16.msra.mxu0 0
      %1760 = vmatprep.subr.bf16.mxu0 0
      %1761 = vmatpush1.bf16.msra.mxu0 0
      %1762 = vmatprep.subr.bf16.mxu0 0
      %1763 = vmatpush1.bf16.msra.mxu0 0
      %1764 = vmatprep.subr.bf16.mxu0 0
      %1765 = vmatpush1.bf16.msra.mxu0 0
      %1766 = vmatprep.subr.bf16.mxu0 0
      %1767 = vmatpush1.bf16.msra.mxu0 0
      %1768 = vmatprep.subr.bf16.mxu0 0
      %1769 = vmatpush1.bf16.msra.mxu0 0
      %1770 = vmatprep.subr.bf16.mxu0 0
      %1771 = vmatpush1.bf16.msra.mxu0 0
      %1772 = vmatprep.subr.bf16.mxu0 0
      %1773 = vmatpush1.bf16.msra.mxu0 0
      %1774 = vmatprep.subr.bf16.mxu0 0
      %1775 = vmatpush1.bf16.msra.mxu0 0
      %1776 = vmatprep.subr.bf16.mxu0 0
      %1777 = vmatpush1.bf16.msra.mxu0 0
      %1778 = vmatprep.subr.bf16.mxu0 0
      %1779 = vmatpush1.bf16.msra.mxu0 0
      %1780 = vmatprep.subr.bf16.mxu0 0
      %1781 = vmatpush1.bf16.msra.mxu0 0
      %1782 = vmatprep.mubr.bf16.mxu0 0
      %1783 = vmatmul.mubr.bf16.gmra.mrb[0].mxu0 %v1748
      %v1784 = vpop.f32.mrb[0].mxu0
      %v1785 = vadd.f32 %v1736, %v1784
      %v1786 = vpop.f32.mrb[0].mxu0
      %v1787 = vpop.f32.mrb[0].mxu0
      %v1788 = vpop.f32.mrb[0].mxu0
      %1789 = vdwg.mxu0
      %s1790 = sadd.s32 %s195, 7
      %s1791 = smul.u32 %s1790, 2
      %s1792 = smul.addr %s1791, 4
      %s1793 = scalar_lea.vmem %s183, %s1792
      %v1794 = vld [vmem:[%s1793] sm:$0xf]
      %v1795 = vld [vmem:[%s323] sm:$0xf]
      %v1796 = vld [vmem:[%s323 + $0x4] sm:$0xf]
      %v1799 = vunpack.c.l.b16 %v1795
      %v1800 = vunpack.c.l.b16 %v1796
      %v1801 = vpack.c.b16 %v1800, %v1799
      %v1804 = vsel %vm225, %v1794, 0
      %1806 = vmatprep.subr.bf16.mxu0 0
      %1807 = vmatpush1.bf16.msra.mxu0 %v1801
      %1808 = vmatprep.subr.bf16.mxu0 0
      %1809 = vmatpush1.bf16.msra.mxu0 0
      %1810 = vmatprep.subr.bf16.mxu0 0
      %1811 = vmatpush1.bf16.msra.mxu0 0
      %1812 = vmatprep.subr.bf16.mxu0 0
      %1813 = vmatpush1.bf16.msra.mxu0 0
      %1814 = vmatprep.subr.bf16.mxu0 0
      %1815 = vmatpush1.bf16.msra.mxu0 0
      %1816 = vmatprep.subr.bf16.mxu0 0
      %1817 = vmatpush1.bf16.msra.mxu0 0
      %1818 = vmatprep.subr.bf16.mxu0 0
      %1819 = vmatpush1.bf16.msra.mxu0 0
      %1820 = vmatprep.subr.bf16.mxu0 0
      %1821 = vmatpush1.bf16.msra.mxu0 0
      %1822 = vmatprep.subr.bf16.mxu0 0
      %1823 = vmatpush1.bf16.msra.mxu0 0
      %1824 = vmatprep.subr.bf16.mxu0 0
      %1825 = vmatpush1.bf16.msra.mxu0 0
      %1826 = vmatprep.subr.bf16.mxu0 0
      %1827 = vmatpush1.bf16.msra.mxu0 0
      %1828 = vmatprep.subr.bf16.mxu0 0
      %1829 = vmatpush1.bf16.msra.mxu0 0
      %1830 = vmatprep.subr.bf16.mxu0 0
      %1831 = vmatpush1.bf16.msra.mxu0 0
      %1832 = vmatprep.subr.bf16.mxu0 0
      %1833 = vmatpush1.bf16.msra.mxu0 0
      %1834 = vmatprep.subr.bf16.mxu0 0
      %1835 = vmatpush1.bf16.msra.mxu0 0
      %1836 = vmatprep.subr.bf16.mxu0 0
      %1837 = vmatpush1.bf16.msra.mxu0 0
      %1838 = vmatprep.mubr.bf16.mxu0 0
      %1839 = vmatmul.mubr.bf16.gmra.mrb[0].mxu0 %v1804
      %v1840 = vpop.f32.mrb[0].mxu0
      %v1841 = vadd.f32 0.0, %v1840
      %v1842 = vpop.f32.mrb[0].mxu0
      %v1843 = vpop.f32.mrb[0].mxu0
      %v1844 = vpop.f32.mrb[0].mxu0
      %1845 = vdwg.mxu0
      %v1846 = vadd.f32 %v1785, %v1841
      %v1847 = vld [vmem:[%s1793] sm:$0xf]
      %v1848 = vld [vmem:[%s1793 + $0x4] sm:$0x1]
      %v1849 = vld [vmem:[%s378] sm:$0xf]
      %v1850 = vld [vmem:[%s378 + $0x4] sm:$0xf]
      %v1853 = vunpack.c.l.b16 %v1847
      %v1854 = vunpack.c.l.b16 %v1848
      %v1855 = vpack.c.b16 %v1854, %v1853
      %v1857 = vshrl.u32 %v1855, 16
      %v1859 = vshll.u32 %v1855, 16
      %v1861 = vrot.slane %v1859, 1
      %v1862 = vor.u32 %v1857, %v1861
      %v1865 = vunpack.c.l.b16 %v1849
      %v1866 = vunpack.c.l.b16 %v1850
      %v1867 = vpack.c.b16 %v1866, %v1865
      %v1870 = vsel %vm225, %v1862, 0
      %1872 = vmatprep.subr.bf16.mxu0 0
      %1873 = vmatpush1.bf16.msra.mxu0 %v1867
      %1874 = vmatprep.subr.bf16.mxu0 0
      %1875 = vmatpush1.bf16.msra.mxu0 0
      %1876 = vmatprep.subr.bf16.mxu0 0
      %1877 = vmatpush1.bf16.msra.mxu0 0
      %1878 = vmatprep.subr.bf16.mxu0 0
      %1879 = vmatpush1.bf16.msra.mxu0 0
      %1880 = vmatprep.subr.bf16.mxu0 0
      %1881 = vmatpush1.bf16.msra.mxu0 0
      %1882 = vmatprep.subr.bf16.mxu0 0
      %1883 = vmatpush1.bf16.msra.mxu0 0
      %1884 = vmatprep.subr.bf16.mxu0 0
      %1885 = vmatpush1.bf16.msra.mxu0 0
      %1886 = vmatprep.subr.bf16.mxu0 0
      %1887 = vmatpush1.bf16.msra.mxu0 0
      %1888 = vmatprep.subr.bf16.mxu0 0
      %1889 = vmatpush1.bf16.msra.mxu0 0
      %1890 = vmatprep.subr.bf16.mxu0 0
      %1891 = vmatpush1.bf16.msra.mxu0 0
      %1892 = vmatprep.subr.bf16.mxu0 0
      %1893 = vmatpush1.bf16.msra.mxu0 0
      %1894 = vmatprep.subr.bf16.mxu0 0
      %1895 = vmatpush1.bf16.msra.mxu0 0
      %1896 = vmatprep.subr.bf16.mxu0 0
      %1897 = vmatpush1.bf16.msra.mxu0 0
      %1898 = vmatprep.subr.bf16.mxu0 0
      %1899 = vmatpush1.bf16.msra.mxu0 0
      %1900 = vmatprep.subr.bf16.mxu0 0
      %1901 = vmatpush1.bf16.msra.mxu0 0
      %1902 = vmatprep.subr.bf16.mxu0 0
      %1903 = vmatpush1.bf16.msra.mxu0 0
      %1904 = vmatprep.mubr.bf16.mxu0 0
      %1905 = vmatmul.mubr.bf16.gmra.mrb[0].mxu0 %v1870
      %v1906 = vpop.f32.mrb[0].mxu0
      %v1907 = vadd.f32 0.0, %v1906
      %v1908 = vpop.f32.mrb[0].mxu0
      %v1909 = vpop.f32.mrb[0].mxu0
      %v1910 = vpop.f32.mrb[0].mxu0
      %1911 = vdwg.mxu0
      %v1912 = vadd.f32 %v1846, %v1907
      %v1913 = vadd.f32 %v1912, %v447
      %v1914 = vmax.f32 %v1913, 0.0
      %v1915 = vpack.c.bf16 %v1914, %v1914
      %s1916 = scalar_lea.vmem %s192, 24
      %1917 = vst.msk [vmem:[%s1916] sm:$0xf] %vm452, %v1915
      %v1918 = vld [vmem:[%s1793] sm:$0xf]
      %v1919 = vld [vmem:[%s1] sm:$0xf]
      %v1920 = vld [vmem:[%s1 + $0x4] sm:$0xf]
      %v1921 = vld [vmem:[%s1793 + $0x4] sm:$0x1]
      %v1922 = vld [vmem:[%s204] sm:$0xf]
      %v1923 = vld [vmem:[%s204 + $0x4] sm:$0xf]
      %v1926 = vunpack.c.l.b16 %v1918
      %v1927 = vunpack.c.l.b16 %v1921
      %v1928 = vpack.c.b16 %v1927, %v1926
      %v1930 = vshrl.u32 %v1928, 16
      %v1932 = vshll.u32 %v1928, 16
      %v1934 = vrot.slane %v1932, 1
      %v1935 = vor.u32 %v1930, %v1934
      %v1938 = vunpack.c.l.b16 %v1922
      %v1939 = vunpack.c.l.b16 %v1923
      %v1940 = vpack.c.b16 %v1939, %v1938
      %v1943 = vsel %vm225, %v1935, 0
      %1945 = vmatprep.subr.bf16.mxu0 0
      %1946 = vmatpush1.bf16.msra.mxu0 %v1940
      %1947 = vmatprep.subr.bf16.mxu0 0
      %1948 = vmatpush1.bf16.msra.mxu0 0
      %1949 = vmatprep.subr.bf16.mxu0 0
      %1950 = vmatpush1.bf16.msra.mxu0 0
      %1951 = vmatprep.subr.bf16.mxu0 0
      %1952 = vmatpush1.bf16.msra.mxu0 0
      %1953 = vmatprep.subr.bf16.mxu0 0
      %1954 = vmatpush1.bf16.msra.mxu0 0
      %1955 = vmatprep.subr.bf16.mxu0 0
      %1956 = vmatpush1.bf16.msra.mxu0 0
      %1957 = vmatprep.subr.bf16.mxu0 0
      %1958 = vmatpush1.bf16.msra.mxu0 0
      %1959 = vmatprep.subr.bf16.mxu0 0
      %1960 = vmatpush1.bf16.msra.mxu0 0
      %1961 = vmatprep.subr.bf16.mxu0 0
      %1962 = vmatpush1.bf16.msra.mxu0 0
      %1963 = vmatprep.subr.bf16.mxu0 0
      %1964 = vmatpush1.bf16.msra.mxu0 0
      %1965 = vmatprep.subr.bf16.mxu0 0
      %1966 = vmatpush1.bf16.msra.mxu0 0
      %1967 = vmatprep.subr.bf16.mxu0 0
      %1968 = vmatpush1.bf16.msra.mxu0 0
      %1969 = vmatprep.subr.bf16.mxu0 0
      %1970 = vmatpush1.bf16.msra.mxu0 0
      %1971 = vmatprep.subr.bf16.mxu0 0
      %1972 = vmatpush1.bf16.msra.mxu0 0
      %1973 = vmatprep.subr.bf16.mxu0 0
      %1974 = vmatpush1.bf16.msra.mxu0 0
      %1975 = vmatprep.subr.bf16.mxu0 0
      %1976 = vmatpush1.bf16.msra.mxu0 0
      %1977 = vmatprep.mubr.bf16.mxu0 0
      %1978 = vmatmul.mubr.bf16.gmra.mrb[0].mxu0 %v1943
      %v1979 = vpop.f32.mrb[0].mxu0
      %v1980 = vadd.f32 0.0, %v1979
      %v1981 = vpop.f32.mrb[0].mxu0
      %v1982 = vpop.f32.mrb[0].mxu0
      %v1983 = vpop.f32.mrb[0].mxu0
      %1984 = vdwg.mxu0
      %v1987 = vunpack.c.l.b16 %v1919
      %v1988 = vunpack.c.l.b16 %v1920
      %v1989 = vpack.c.b16 %v1988, %v1987
      %v1992 = vsel %vm225, %v1918, 0
      %1994 = vmatprep.subr.bf16.mxu0 0
      %1995 = vmatpush1.bf16.msra.mxu0 %v1989
      %1996 = vmatprep.subr.bf16.mxu0 0
      %1997 = vmatpush1.bf16.msra.mxu0 0
      %1998 = vmatprep.subr.bf16.mxu0 0
      %1999 = vmatpush1.bf16.msra.mxu0 0
      %2000 = vmatprep.subr.bf16.mxu0 0
      %2001 = vmatpush1.bf16.msra.mxu0 0
      %2002 = vmatprep.subr.bf16.mxu0 0
      %2003 = vmatpush1.bf16.msra.mxu0 0
      %2004 = vmatprep.subr.bf16.mxu0 0
      %2005 = vmatpush1.bf16.msra.mxu0 0
      %2006 = vmatprep.subr.bf16.mxu0 0
      %2007 = vmatpush1.bf16.msra.mxu0 0
      %2008 = vmatprep.subr.bf16.mxu0 0
      %2009 = vmatpush1.bf16.msra.mxu0 0
      %2010 = vmatprep.subr.bf16.mxu0 0
      %2011 = vmatpush1.bf16.msra.mxu0 0
      %2012 = vmatprep.subr.bf16.mxu0 0
      %2013 = vmatpush1.bf16.msra.mxu0 0
      %2014 = vmatprep.subr.bf16.mxu0 0
      %2015 = vmatpush1.bf16.msra.mxu0 0
      %2016 = vmatprep.subr.bf16.mxu0 0
      %2017 = vmatpush1.bf16.msra.mxu0 0
      %2018 = vmatprep.subr.bf16.mxu0 0
      %2019 = vmatpush1.bf16.msra.mxu0 0
      %2020 = vmatprep.subr.bf16.mxu0 0
      %2021 = vmatpush1.bf16.msra.mxu0 0
      %2022 = vmatprep.subr.bf16.mxu0 0
      %2023 = vmatpush1.bf16.msra.mxu0 0
      %2024 = vmatprep.subr.bf16.mxu0 0
      %2025 = vmatpush1.bf16.msra.mxu0 0
      %2026 = vmatprep.mubr.bf16.mxu0 0
      %2027 = vmatmul.mubr.bf16.gmra.mrb[0].mxu0 %v1992
      %v2028 = vpop.f32.mrb[0].mxu0
      %v2029 = vadd.f32 %v1980, %v2028
      %v2030 = vpop.f32.mrb[0].mxu0
      %v2031 = vpop.f32.mrb[0].mxu0
      %v2032 = vpop.f32.mrb[0].mxu0
      %2033 = vdwg.mxu0
      %s2034 = sadd.s32 %s195, 8
      %s2035 = smul.u32 %s2034, 2
      %s2036 = smul.addr %s2035, 4
      %s2037 = scalar_lea.vmem %s183, %s2036
      %v2038 = vld [vmem:[%s2037] sm:$0xf]
      %v2039 = vld [vmem:[%s323] sm:$0xf]
      %v2040 = vld [vmem:[%s323 + $0x4] sm:$0xf]
      %v2043 = vunpack.c.l.b16 %v2039
      %v2044 = vunpack.c.l.b16 %v2040
      %v2045 = vpack.c.b16 %v2044, %v2043
      %v2048 = vsel %vm225, %v2038, 0
      %2050 = vmatprep.subr.bf16.mxu0 0
      %2051 = vmatpush1.bf16.msra.mxu0 %v2045
      %2052 = vmatprep.subr.bf16.mxu0 0
      %2053 = vmatpush1.bf16.msra.mxu0 0
      %2054 = vmatprep.subr.bf16.mxu0 0
      %2055 = vmatpush1.bf16.msra.mxu0 0
      %2056 = vmatprep.subr.bf16.mxu0 0
      %2057 = vmatpush1.bf16.msra.mxu0 0
      %2058 = vmatprep.subr.bf16.mxu0 0
      %2059 = vmatpush1.bf16.msra.mxu0 0
      %2060 = vmatprep.subr.bf16.mxu0 0
      %2061 = vmatpush1.bf16.msra.mxu0 0
      %2062 = vmatprep.subr.bf16.mxu0 0
      %2063 = vmatpush1.bf16.msra.mxu0 0
      %2064 = vmatprep.subr.bf16.mxu0 0
      %2065 = vmatpush1.bf16.msra.mxu0 0
      %2066 = vmatprep.subr.bf16.mxu0 0
      %2067 = vmatpush1.bf16.msra.mxu0 0
      %2068 = vmatprep.subr.bf16.mxu0 0
      %2069 = vmatpush1.bf16.msra.mxu0 0
      %2070 = vmatprep.subr.bf16.mxu0 0
      %2071 = vmatpush1.bf16.msra.mxu0 0
      %2072 = vmatprep.subr.bf16.mxu0 0
      %2073 = vmatpush1.bf16.msra.mxu0 0
      %2074 = vmatprep.subr.bf16.mxu0 0
      %2075 = vmatpush1.bf16.msra.mxu0 0
      %2076 = vmatprep.subr.bf16.mxu0 0
      %2077 = vmatpush1.bf16.msra.mxu0 0
      %2078 = vmatprep.subr.bf16.mxu0 0
      %2079 = vmatpush1.bf16.msra.mxu0 0
      %2080 = vmatprep.subr.bf16.mxu0 0
      %2081 = vmatpush1.bf16.msra.mxu0 0
      %2082 = vmatprep.mubr.bf16.mxu0 0
      %2083 = vmatmul.mubr.bf16.gmra.mrb[0].mxu0 %v2048
      %v2084 = vpop.f32.mrb[0].mxu0
      %v2085 = vadd.f32 0.0, %v2084
      %v2086 = vpop.f32.mrb[0].mxu0
      %v2087 = vpop.f32.mrb[0].mxu0
      %v2088 = vpop.f32.mrb[0].mxu0
      %2089 = vdwg.mxu0
      %v2090 = vadd.f32 %v2029, %v2085
      %v2091 = vld [vmem:[%s2037] sm:$0xf]
      %v2092 = vld [vmem:[%s2037 + $0x4] sm:$0x1]
      %v2093 = vld [vmem:[%s378] sm:$0xf]
      %v2094 = vld [vmem:[%s378 + $0x4] sm:$0xf]
      %v2097 = vunpack.c.l.b16 %v2091
      %v2098 = vunpack.c.l.b16 %v2092
      %v2099 = vpack.c.b16 %v2098, %v2097
      %v2101 = vshrl.u32 %v2099, 16
      %v2103 = vshll.u32 %v2099, 16
      %v2105 = vrot.slane %v2103, 1
      %v2106 = vor.u32 %v2101, %v2105
      %v2109 = vunpack.c.l.b16 %v2093
      %v2110 = vunpack.c.l.b16 %v2094
      %v2111 = vpack.c.b16 %v2110, %v2109
      %v2114 = vsel %vm225, %v2106, 0
      %2116 = vmatprep.subr.bf16.mxu0 0
      %2117 = vmatpush1.bf16.msra.mxu0 %v2111
      %2118 = vmatprep.subr.bf16.mxu0 0
      %2119 = vmatpush1.bf16.msra.mxu0 0
      %2120 = vmatprep.subr.bf16.mxu0 0
      %2121 = vmatpush1.bf16.msra.mxu0 0
      %2122 = vmatprep.subr.bf16.mxu0 0
      %2123 = vmatpush1.bf16.msra.mxu0 0
      %2124 = vmatprep.subr.bf16.mxu0 0
      %2125 = vmatpush1.bf16.msra.mxu0 0
      %2126 = vmatprep.subr.bf16.mxu0 0
      %2127 = vmatpush1.bf16.msra.mxu0 0
      %2128 = vmatprep.subr.bf16.mxu0 0
      %2129 = vmatpush1.bf16.msra.mxu0 0
      %2130 = vmatprep.subr.bf16.mxu0 0
      %2131 = vmatpush1.bf16.msra.mxu0 0
      %2132 = vmatprep.subr.bf16.mxu0 0
      %2133 = vmatpush1.bf16.msra.mxu0 0
      %2134 = vmatprep.subr.bf16.mxu0 0
      %2135 = vmatpush1.bf16.msra.mxu0 0
      %2136 = vmatprep.subr.bf16.mxu0 0
      %2137 = vmatpush1.bf16.msra.mxu0 0
      %2138 = vmatprep.subr.bf16.mxu0 0
      %2139 = vmatpush1.bf16.msra.mxu0 0
      %2140 = vmatprep.subr.bf16.mxu0 0
      %2141 = vmatpush1.bf16.msra.mxu0 0
      %2142 = vmatprep.subr.bf16.mxu0 0
      %2143 = vmatpush1.bf16.msra.mxu0 0
      %2144 = vmatprep.subr.bf16.mxu0 0
      %2145 = vmatpush1.bf16.msra.mxu0 0
      %2146 = vmatprep.subr.bf16.mxu0 0
      %2147 = vmatpush1.bf16.msra.mxu0 0
      %2148 = vmatprep.mubr.bf16.mxu0 0
      %2149 = vmatmul.mubr.bf16.gmra.mrb[0].mxu0 %v2114
      %v2150 = vpop.f32.mrb[0].mxu0
      %v2151 = vadd.f32 0.0, %v2150
      %v2152 = vpop.f32.mrb[0].mxu0
      %v2153 = vpop.f32.mrb[0].mxu0
      %v2154 = vpop.f32.mrb[0].mxu0
      %2155 = vdwg.mxu0
      %v2156 = vadd.f32 %v2090, %v2151
      %v2157 = vadd.f32 %v2156, %v447
      %v2158 = vmax.f32 %v2157, 0.0
      %v2159 = vpack.c.bf16 %v2158, %v2158
      %s2160 = scalar_lea.vmem %s192, 28
      %2161 = vst.msk [vmem:[%s2160] sm:$0xf] %vm452, %v2159
      %s2162 = smul.u32 8, %s19
      %p2163 = scmp.lt.s32.totalorder %s18, 1
      %s2164 = scalar_select %p2163, %s18, 1
      %p2165 = scmp.lt.s32.totalorder %s2162, 7
      %s2166 = scalar_select %p2165, %s2162, 7
      %s2167 = smul.addr %s2164, 8
      %s2168 = sadd.s32 %s2166, %s2167
      %s2169 = smul.addr %s2168, 4
      %s2170 = scalar_lea.vmem %s3, %s2169
      // Predicated region
      $region33: #{_lambda_.4} parent=31 // pred_check
        %p2171 = pneg %p114
      $region34: #{_lambda_.4} parent=31 // pred_check_branch
        %2173 = sbr.rel (%p2171) target = $region36
      $region35: #{_lambda_.4} parent=31 // pred_region
        %s2174 = smul.u32 8, %s19
      $region36: #{_lambda_.4} parent=31 // pred_fallthru
        _
    $region32: #{_lambda_.4} parent=5 // pred_fallthru
      _
    %p2175 = scmp.le.s32.totalorder 2, %s9
    // Predicated region
    $region37: #{_lambda_.4} parent=5 // pred_check
      %p2176 = pneg %p2175
    $region38: #{_lambda_.4} parent=5 // pred_check_branch
      %2178 = sbr.rel (%p2176) target = $region40
    $region39: #{_lambda_.4} parent=5 // pred_region
      %s2179 = ssub.s32 %s9, 2
      // Predicated region
      $region41: #{_lambda_.4} parent=39 // pred_check
        %p2180 = pneg %p120
      $region42: #{_lambda_.4} parent=39 // pred_check_branch
        %2182 = sbr.rel (%p2180) target = $region44
      $region43: #{_lambda_.4} parent=39 // pred_region
        %s2183 = smul.u32 8, %s21
        %p2184 = scmp.lt.s32.totalorder %s20, 1
        %s2185 = scalar_select %p2184, %s20, 1
        %p2186 = scmp.lt.s32.totalorder %s2183, 7
        %s2187 = scalar_select %p2186, %s2183, 7
        %s2188 = smul.addr %s2185, 8
        %s2189 = sadd.s32 %s2187, %s2188
        %s2190 = smul.addr %s2189, 4
        %s2191 = scalar_lea.vmem %s3, %s2190
      $region44: #{_lambda_.4} parent=39 // pred_fallthru
        _
    $region40: #{_lambda_.4} parent=5 // pred_fallthru
      _
  $region6: #{_lambda_.4} parent=0 // loop_footer
    %s13 = sadd.s32 1, %s9
  $region7: #{_lambda_.4} parent=0 // loop_footer_branch
    %8 = sbr.rel target = $region3
  $region8: #{_lambda_.4} parent=0 // loop_exit
    _

// kernel: _lambda_.5
$region0: #{_lambda_.5}
  #allocation0 [shape = 'u32[]', space=smem, size = 0x4, offset = 0x4, fixed_abs, tag = 'smem constant byte address 0x4 - core index']
  #allocation1 [shape = 'u32[144,128]{1,0:T(1,128)}', space=vmem, size = 0x12000, scoped, tag = 'internal scratch']
  %s0 = inlined_call_operand.vmem [shape: bf16[2,5,5,64], index: 0, kind: input, shape index: {}]
  %s1 = inlined_call_operand.vmem [shape: bf16[4,64,32], index: 1, kind: input, shape index: {}]
  %s2 = inlined_call_operand.vmem [shape: f32[1,32], index: 2, kind: input, shape index: {}]
  %s3 = inlined_call_operand.vmem [shape: bf16[2,4,4,32], index: 3, kind: output, shape index: {}]
  %s4 = sld [smem:[#allocation0]]
  $region45: #{_lambda_.5} parent=0
    _
  %s6 = ssub.s32 1, %s4
  %s7 = scalar_select 0, %s6, %s4
  loop: start=0, step=1, limit=4
  $region2: #{_lambda_.5} parent=0 // loop_pre_header
    _
  $region3: #{_lambda_.5} parent=0 // loop_header
    %s9 = sphi 0, %s13
    %p10 = scmp.ge.s32.totalorder %s9, 4
    %s16 = sphi 0, %s28
    %s17 = sphi 0, %s24
    %s18 = sphi 0, %s16
    %s19 = sphi 0, %s17
    %s20 = sphi 0, %s18
    %s21 = sphi 0, %s19
    %s31 = sphi 0, %s33
    %s34 = sphi 0, %s31
    %s35 = sphi 0, %s34
    %s51 = sphi 0, %s35
    %s55 = sphi 0, %s55
    %s57 = sphi 0, %s55
    %s58 = sphi 0, %s57
    %s72 = sphi 0, %s58
    %s76 = sphi 0, %s76
    %s78 = sphi 0, %s76
    %s79 = sphi 0, %s78
    %s93 = sphi 0, %s79
    %s101 = sphi 0, %s103
    %s104 = sphi 0, %s101
    %s105 = sphi 0, %s104
    %s121 = sphi 0, %s105
  $region4: #{_lambda_.5} parent=0 // loop_header_branch
    %12 = sbr.rel (%p10) target = $region8
  $region5: #{_lambda_.5} parent=0 // loop_body
    %s14 = ssub.s32 %s9, 1
    %s15 = ssub.s32 %s9, 2
    %s22 = sadd.s32 1, %s17
    %p23 = scmp.ge.s32.totalorder %s22, 1
    %s24 = scalar_select %p23, 0, %s22
    %s25 = sadd.s32 1, %s16
    %s26 = scalar_select %p23, %s25, %s16
    %p27 = scmp.ge.s32.totalorder %s26, 2
    %s28 = scalar_select %p27, 0, %s26
    %s29 = ssub.s32 %s16, %s28
    %p30 = scmp.eq.s32.totalorder %s29, 0
    %s32 = sadd.s32 %s31, 1
    %s33 = scalar_select %p30, %s31, %s32
    %p36 = pneg %p30
    %p37 = scmp.eq.s32.totalorder %s9, 1
    %p38 = por %p36, %p37
    %p39 = scmp.ne.s32.totalorder %s31, %s34
    %p40 = scmp.eq.s32.totalorder %s9, 0
    %p41 = por %p39, %p40
    %p42 = scmp.ne.s32.totalorder %s31, %s34
    %p43 = scmp.eq.s32.totalorder %s14, 1
    %p44 = por %p42, %p43
    %p45 = scmp.ne.s32.totalorder %s34, %s35
    %p46 = scmp.eq.s32.totalorder %s14, 0
    %p47 = por %p45, %p46
    %p48 = scmp.ne.s32.totalorder %s34, %s35
    %p49 = scmp.eq.s32.totalorder %s15, 1
    %p50 = por %p48, %p49
    %p52 = scmp.ne.s32.totalorder %s35, %s51
    %p53 = scmp.eq.s32.totalorder %s15, 0
    %p54 = por %p52, %p53
    %s56 = sadd.s32 %s55, 1
    %p59 = scmp.eq.s32.totalorder %s9, 1
    %p60 = scmp.ne.s32.totalorder %s55, %s57
    %p61 = scmp.eq.s32.totalorder %s9, 0
    %p62 = por %p60, %p61
    %p63 = scmp.ne.s32.totalorder %s55, %s57
    %p64 = scmp.eq.s32.totalorder %s14, 1
    %p65 = por %p63, %p64
    %p66 = scmp.ne.s32.totalorder %s57, %s58
    %p67 = scmp.eq.s32.totalorder %s14, 0
    %p68 = por %p66, %p67
    %p69 = scmp.ne.s32.totalorder %s57, %s58
    %p70 = scmp.eq.s32.totalorder %s15, 1
    %p71 = por %p69, %p70
    %p73 = scmp.ne.s32.totalorder %s58, %s72
    %p74 = scmp.eq.s32.totalorder %s15, 0
    %p75 = por %p73, %p74
    %s77 = sadd.s32 %s76, 1
    %p80 = scmp.eq.s32.totalorder %s9, 1
    %p81 = scmp.ne.s32.totalorder %s76, %s78
    %p82 = scmp.eq.s32.totalorder %s9, 0
    %p83 = por %p81, %p82
    %p84 = scmp.ne.s32.totalorder %s76, %s78
    %p85 = scmp.eq.s32.totalorder %s14, 1
    %p86 = por %p84, %p85
    %p87 = scmp.ne.s32.totalorder %s78, %s79
    %p88 = scmp.eq.s32.totalorder %s14, 0
    %p89 = por %p87, %p88
    %p90 = scmp.ne.s32.totalorder %s78, %s79
    %p91 = scmp.eq.s32.totalorder %s15, 1
    %p92 = por %p90, %p91
    %p94 = scmp.ne.s32.totalorder %s79, %s93
    %p95 = scmp.eq.s32.totalorder %s15, 0
    %p96 = por %p94, %p95
    %s97 = ssub.s32 %s16, %s28
    %s98 = ssub.s32 %s17, %s24
    %s99 = sor.u32 %s97, %s98
    %p100 = scmp.eq.s32.totalorder %s99, 0
    %s102 = sadd.s32 %s101, 1
    %s103 = scalar_select %p100, %s101, %s102
    %p106 = pneg %p100
    %p107 = scmp.eq.s32.totalorder %s9, 1
    %p108 = por %p106, %p107
    %p109 = scmp.ne.s32.totalorder %s101, %s104
    %p110 = scmp.eq.s32.totalorder %s9, 0
    %p111 = por %p109, %p110
    %p112 = scmp.ne.s32.totalorder %s101, %s104
    %p113 = scmp.eq.s32.totalorder %s14, 1
    %p114 = por %p112, %p113
    %p115 = scmp.ne.s32.totalorder %s104, %s105
    %p116 = scmp.eq.s32.totalorder %s14, 0
    %p117 = por %p115, %p116
    %p118 = scmp.ne.s32.totalorder %s104, %s105
    %p119 = scmp.eq.s32.totalorder %s15, 1
    %p120 = por %p118, %p119
    %p122 = scmp.ne.s32.totalorder %s105, %s121
    %p123 = scmp.eq.s32.totalorder %s15, 0
    %p124 = por %p122, %p123
    %p125 = scmp.le.s32.totalorder 1, %s9
    %p126 = scmp.lt.s32.totalorder %s9, 3
    %p127 = pnand %p125, %p126
    %p128 = pneg %p127
    // Predicated region
    $region9: #{_lambda_.5} parent=5 // pred_check
      _
    $region10: #{_lambda_.5} parent=5 // pred_check_branch
      %130 = sbr.rel (%p127) target = $region12
    $region11: #{_lambda_.5} parent=5 // pred_region
      %s131 = ssub.s32 %s9, 1
      // Predicated region
      $region13: #{_lambda_.5} parent=11 // pred_check
        %p132 = pneg %p68
      $region14: #{_lambda_.5} parent=11 // pred_check_branch
        %134 = sbr.rel (%p132) target = $region16
      $region15: #{_lambda_.5} parent=11 // pred_region
        _
      $region16: #{_lambda_.5} parent=11 // pred_fallthru
        _
      // Predicated region
      $region17: #{_lambda_.5} parent=11 // pred_check
        %p135 = pneg %p89
      $region18: #{_lambda_.5} parent=11 // pred_check_branch
        %137 = sbr.rel (%p135) target = $region20
      $region19: #{_lambda_.5} parent=11 // pred_region
        _
      $region20: #{_lambda_.5} parent=11 // pred_fallthru
        _
    $region12: #{_lambda_.5} parent=5 // pred_fallthru
      _
    %p138 = scmp.lt.s32.totalorder %s9, 2
    // Predicated region
    $region21: #{_lambda_.5} parent=5 // pred_check
      %p139 = pneg %p138
    $region22: #{_lambda_.5} parent=5 // pred_check_branch
      %141 = sbr.rel (%p139) target = $region24
    $region23: #{_lambda_.5} parent=5 // pred_region
      // Predicated region
      $region25: #{_lambda_.5} parent=23 // pred_check
        %p142 = pneg %p41
      $region26: #{_lambda_.5} parent=23 // pred_check_branch
        %144 = sbr.rel (%p142) target = $region28
      $region27: #{_lambda_.5} parent=23 // pred_region
        %p145 = scmp.lt.s32.totalorder %s16, 1
        %s146 = scalar_select %p145, %s16, 1
        %s147 = smul.addr %s146, 5
        %s148 = smul.addr %s147, 4
        %s149 = scalar_lea.vmem %s0, %s148
      $region28: #{_lambda_.5} parent=23 // pred_fallthru
        _
    $region24: #{_lambda_.5} parent=5 // pred_fallthru
      _
    %p150 = scmp.le.s32.totalorder 1, %s9
    %p151 = scmp.lt.s32.totalorder %s9, 3
    %p152 = pnand %p150, %p151
    %p153 = pneg %p152
    // Predicated region
    $region29: #{_lambda_.5} parent=5 // pred_check
      _
    $region30: #{_lambda_.5} parent=5 // pred_check_branch
      %155 = sbr.rel (%p152) target = $region32
    $region31: #{_lambda_.5} parent=5 // pred_region
      %s156 = ssub.s32 %s9, 1
      %p157 = scmp.lt.s32.totalorder %s18, 1
      %s158 = scalar_select %p157, %s18, 1
      %s159 = smul.addr %s158, 5
      %s160 = smul.addr %s159, 4
      %s161 = scalar_lea.vmem %s0, %s160
      %p162 = pneg %p47
      %p163 = pneg %p44
      %p164 = pneg %p68
      %p165 = pneg %p65
      %p166 = pneg %p89
      %p167 = pneg %p86
      %p168 = pneg %p117
      %p169 = pneg %p114
      %s170 = smul.u32 4, %s19
      %p171 = scmp.lt.s32.totalorder %s18, 1
      %s172 = scalar_select %p171, %s18, 1
      %p173 = scmp.lt.s32.totalorder %s170, 3
      %s174 = scalar_select %p173, %s170, 3
      %s175 = smul.addr %s172, 4
      %s176 = sadd.s32 %s174, %s175
      %s177 = smul.addr %s176, 2
      %s178 = scalar_lea.vmem %s3, %s177
      %p179 = scmp.lt.s32.totalorder %s18, 1
      %s180 = scalar_select %p179, %s18, 1
      %s181 = smul.addr %s180, 5
      %s182 = smul.addr %s181, 4
      %s183 = scalar_lea.vmem %s0, %s182
      %s184 = smul.u32 4, %s19
      %p185 = scmp.lt.s32.totalorder %s18, 1
      %s186 = scalar_select %p185, %s18, 1
      %p187 = scmp.lt.s32.totalorder %s184, 3
      %s188 = scalar_select %p187, %s184, 3
      %s189 = smul.addr %s186, 4
      %s190 = sadd.s32 %s188, %s189
      %s191 = smul.addr %s190, 2
      %s192 = scalar_lea.vmem %s3, %s191
      %s193 = smul.u32 4, %s19
      %s195 = smul.u32 %s19, 4
      %v196 = vld [vmem:[%s2] sm:$0x1]
      %s197 = smul.addr %s195, 4
      %s198 = scalar_lea.vmem %s183, %s197
      %v199 = vld [vmem:[%s198] sm:$0x3]
      %v200 = vld [vmem:[%s1] sm:$0xf]
      %v201 = vld [vmem:[%s1 + $0x4] sm:$0xf]
      %v202 = vld [vmem:[%s1 + $0x8] sm:$0xf]
      %v203 = vld [vmem:[%s1 + $0xc] sm:$0xf]
      %v204 = vld [vmem:[%s1 + $0x10] sm:$0xf]
      %v205 = vld [vmem:[%s1 + $0x14] sm:$0xf]
      %v206 = vld [vmem:[%s1 + $0x18] sm:$0xf]
      %v207 = vld [vmem:[%s1 + $0x1c] sm:$0xf]
      %v208 = vld [vmem:[%s198] sm:$0x7]
      %s209 = scalar_lea.vmem %s1, 32
      %v210 = vld [vmem:[%s209] sm:$0xf]
      %v211 = vld [vmem:[%s209 + $0x4] sm:$0xf]
      %v212 = vld [vmem:[%s209 + $0x8] sm:$0xf]
      %v213 = vld [vmem:[%s209 + $0xc] sm:$0xf]
      %v214 = vld [vmem:[%s209 + $0x10] sm:$0xf]
      %v215 = vld [vmem:[%s209 + $0x14] sm:$0xf]
      %v216 = vld [vmem:[%s209 + $0x18] sm:$0xf]
      %v217 = vld [vmem:[%s209 + $0x1c] sm:$0xf]
      %v219 = vunpack.c.l.b16 %v208
      %v220 = vpack.c.b16 %v219, %v219
      %v222 = vshrl.u32 %v220, 16
      %v224 = vshll.u32 %v220, 16
      %v226 = vrot.slane %v224, 1
      %v227 = vor.u32 %v222, %v226
      %v236 = vunpack.c.l.b16 %v210
      %v237 = vunpack.c.l.b16 %v211
      %v238 = vunpack.c.l.b16 %v212
      %v239 = vunpack.c.l.b16 %v213
      %v240 = vunpack.c.l.b16 %v214
      %v241 = vunpack.c.l.b16 %v215
      %v242 = vunpack.c.l.b16 %v216
      %v243 = vunpack.c.l.b16 %v217
      %v244 = vpack.c.b16 %v237, %v236
      %v245 = vpack.c.b16 %v239, %v238
      %v246 = vpack.c.b16 %v241, %v240
      %v247 = vpack.c.b16 %v243, %v242
      %vm252 = vcmask 523264
      %v254 = vsel %vm252, %v227, 0
      %256 = vmatprep.subr.bf16.mxu0 0
      %257 = vmatpush1.bf16.msra.mxu0 %v244
      %258 = vmatprep.subr.bf16.mxu0 0
      %259 = vmatpush1.bf16.msra.mxu0 %v245
      %260 = vmatprep.subr.bf16.mxu0 0
      %261 = vmatpush1.bf16.msra.mxu0 %v246
      %262 = vmatprep.subr.bf16.mxu0 0
      %263 = vmatpush1.bf16.msra.mxu0 %v247
      %264 = vmatprep.subr.bf16.mxu0 0
      %265 = vmatpush1.bf16.msra.mxu0 0
      %266 = vmatprep.subr.bf16.mxu0 0
      %267 = vmatpush1.bf16.msra.mxu0 0
      %268 = vmatprep.subr.bf16.mxu0 0
      %269 = vmatpush1.bf16.msra.mxu0 0
      %270 = vmatprep.subr.bf16.mxu0 0
      %271 = vmatpush1.bf16.msra.mxu0 0
      %272 = vmatprep.subr.bf16.mxu0 0
      %273 = vmatpush1.bf16.msra.mxu0 0
      %274 = vmatprep.subr.bf16.mxu0 0
      %275 = vmatpush1.bf16.msra.mxu0 0
      %276 = vmatprep.subr.bf16.mxu0 0
      %277 = vmatpush1.bf16.msra.mxu0 0
      %278 = vmatprep.subr.bf16.mxu0 0
      %279 = vmatpush1.bf16.msra.mxu0 0
      %280 = vmatprep.subr.bf16.mxu0 0
      %281 = vmatpush1.bf16.msra.mxu0 0
      %282 = vmatprep.subr.bf16.mxu0 0
      %283 = vmatpush1.bf16.msra.mxu0 0
      %284 = vmatprep.subr.bf16.mxu0 0
      %285 = vmatpush1.bf16.msra.mxu0 0
      %286 = vmatprep.subr.bf16.mxu0 0
      %287 = vmatpush1.bf16.msra.mxu0 0
      %288 = vmatprep.mubr.bf16.mxu0 0
      %289 = vmatmul.mubr.bf16.gmra.mrb[0].mxu0 %v254
      %v290 = vpop.f32.mrb[0].mxu0
      %v291 = vadd.f32 0.0, %v290
      %v292 = vpop.f32.mrb[0].mxu0
      %v293 = vpop.f32.mrb[0].mxu0
      %v294 = vpop.f32.mrb[0].mxu0
      %295 = vdwg.mxu0
      %v304 = vunpack.c.l.b16 %v200
      %v305 = vunpack.c.l.b16 %v201
      %v306 = vunpack.c.l.b16 %v202
      %v307 = vunpack.c.l.b16 %v203
      %v308 = vunpack.c.l.b16 %v204
      %v309 = vunpack.c.l.b16 %v205
      %v310 = vunpack.c.l.b16 %v206
      %v311 = vunpack.c.l.b16 %v207
      %v312 = vpack.c.b16 %v305, %v304
      %v313 = vpack.c.b16 %v307, %v306
      %v314 = vpack.c.b16 %v309, %v308
      %v315 = vpack.c.b16 %v311, %v310
      %v321 = vsel %vm252, %v199, 0
      %323 = vmatprep.subr.bf16.mxu0 0
      %324 = vmatpush1.bf16.msra.mxu0 %v312
      %325 = vmatprep.subr.bf16.mxu0 0
      %326 = vmatpush1.bf16.msra.mxu0 %v313
      %327 = vmatprep.subr.bf16.mxu0 0
      %328 = vmatpush1.bf16.msra.mxu0 %v314
      %329 = vmatprep.subr.bf16.mxu0 0
      %330 = vmatpush1.bf16.msra.mxu0 %v315
      %331 = vmatprep.subr.bf16.mxu0 0
      %332 = vmatpush1.bf16.msra.mxu0 0
      %333 = vmatprep.subr.bf16.mxu0 0
      %334 = vmatpush1.bf16.msra.mxu0 0
      %335 = vmatprep.subr.bf16.mxu0 0
      %336 = vmatpush1.bf16.msra.mxu0 0
      %337 = vmatprep.subr.bf16.mxu0 0
      %338 = vmatpush1.bf16.msra.mxu0 0
      %339 = vmatprep.subr.bf16.mxu0 0
      %340 = vmatpush1.bf16.msra.mxu0 0
      %341 = vmatprep.subr.bf16.mxu0 0
      %342 = vmatpush1.bf16.msra.mxu0 0
      %343 = vmatprep.subr.bf16.mxu0 0
      %344 = vmatpush1.bf16.msra.mxu0 0
      %345 = vmatprep.subr.bf16.mxu0 0
      %346 = vmatpush1.bf16.msra.mxu0 0
      %347 = vmatprep.subr.bf16.mxu0 0
      %348 = vmatpush1.bf16.msra.mxu0 0
      %349 = vmatprep.subr.bf16.mxu0 0
      %350 = vmatpush1.bf16.msra.mxu0 0
      %351 = vmatprep.subr.bf16.mxu0 0
      %352 = vmatpush1.bf16.msra.mxu0 0
      %353 = vmatprep.subr.bf16.mxu0 0
      %354 = vmatpush1.bf16.msra.mxu0 0
      %355 = vmatprep.mubr.bf16.mxu0 0
      %356 = vmatmul.mubr.bf16.gmra.mrb[0].mxu0 %v321
      %v357 = vpop.f32.mrb[0].mxu0
      %v358 = vadd.f32 %v291, %v357
      %v359 = vpop.f32.mrb[0].mxu0
      %v360 = vpop.f32.mrb[0].mxu0
      %v361 = vpop.f32.mrb[0].mxu0
      %362 = vdwg.mxu0
      %s363 = sadd.s32 %s195, 1
      %s364 = smul.addr %s363, 4
      %s365 = scalar_lea.vmem %s183, %s364
      %v366 = vld [vmem:[%s365] sm:$0x3]
      %s367 = scalar_lea.vmem %s1, 64
      %v368 = vld [vmem:[%s367] sm:$0xf]
      %v369 = vld [vmem:[%s367 + $0x4] sm:$0xf]
      %v370 = vld [vmem:[%s367 + $0x8] sm:$0xf]
      %v371 = vld [vmem:[%s367 + $0xc] sm:$0xf]
      %v372 = vld [vmem:[%s367 + $0x10] sm:$0xf]
      %v373 = vld [vmem:[%s367 + $0x14] sm:$0xf]
      %v374 = vld [vmem:[%s367 + $0x18] sm:$0xf]
      %v375 = vld [vmem:[%s367 + $0x1c] sm:$0xf]
      %v384 = vunpack.c.l.b16 %v368
      %v385 = vunpack.c.l.b16 %v369
      %v386 = vunpack.c.l.b16 %v370
      %v387 = vunpack.c.l.b16 %v371
      %v388 = vunpack.c.l.b16 %v372
      %v389 = vunpack.c.l.b16 %v373
      %v390 = vunpack.c.l.b16 %v374
      %v391 = vunpack.c.l.b16 %v375
      %v392 = vpack.c.b16 %v385, %v384
      %v393 = vpack.c.b16 %v387, %v386
      %v394 = vpack.c.b16 %v389, %v388
      %v395 = vpack.c.b16 %v391, %v390
      %v401 = vsel %vm252, %v366, 0
      %403 = vmatprep.subr.bf16.mxu0 0
      %404 = vmatpush1.bf16.msra.mxu0 %v392
      %405 = vmatprep.subr.bf16.mxu0 0
      %406 = vmatpush1.bf16.msra.mxu0 %v393
      %407 = vmatprep.subr.bf16.mxu0 0
      %408 = vmatpush1.bf16.msra.mxu0 %v394
      %409 = vmatprep.subr.bf16.mxu0 0
      %410 = vmatpush1.bf16.msra.mxu0 %v395
      %411 = vmatprep.subr.bf16.mxu0 0
      %412 = vmatpush1.bf16.msra.mxu0 0
      %413 = vmatprep.subr.bf16.mxu0 0
      %414 = vmatpush1.bf16.msra.mxu0 0
      %415 = vmatprep.subr.bf16.mxu0 0
      %416 = vmatpush1.bf16.msra.mxu0 0
      %417 = vmatprep.subr.bf16.mxu0 0
      %418 = vmatpush1.bf16.msra.mxu0 0
      %419 = vmatprep.subr.bf16.mxu0 0
      %420 = vmatpush1.bf16.msra.mxu0 0
      %421 = vmatprep.subr.bf16.mxu0 0
      %422 = vmatpush1.bf16.msra.mxu0 0
      %423 = vmatprep.subr.bf16.mxu0 0
      %424 = vmatpush1.bf16.msra.mxu0 0
      %425 = vmatprep.subr.bf16.mxu0 0
      %426 = vmatpush1.bf16.msra.mxu0 0
      %427 = vmatprep.subr.bf16.mxu0 0
      %428 = vmatpush1.bf16.msra.mxu0 0
      %429 = vmatprep.subr.bf16.mxu0 0
      %430 = vmatpush1.bf16.msra.mxu0 0
      %431 = vmatprep.subr.bf16.mxu0 0
      %432 = vmatpush1.bf16.msra.mxu0 0
      %433 = vmatprep.subr.bf16.mxu0 0
      %434 = vmatpush1.bf16.msra.mxu0 0
      %435 = vmatprep.mubr.bf16.mxu0 0
      %436 = vmatmul.mubr.bf16.gmra.mrb[0].mxu0 %v401
      %v437 = vpop.f32.mrb[0].mxu0
      %v438 = vadd.f32 0.0, %v437
      %v439 = vpop.f32.mrb[0].mxu0
      %v440 = vpop.f32.mrb[0].mxu0
      %v441 = vpop.f32.mrb[0].mxu0
      %442 = vdwg.mxu0
      %v443 = vadd.f32 %v358, %v438
      %v444 = vld [vmem:[%s365] sm:$0x7]
      %s445 = scalar_lea.vmem %s1, 96
      %v446 = vld [vmem:[%s445] sm:$0xf]
      %v447 = vld [vmem:[%s445 + $0x4] sm:$0xf]
      %v448 = vld [vmem:[%s445 + $0x8] sm:$0xf]
      %v449 = vld [vmem:[%s445 + $0xc] sm:$0xf]
      %v450 = vld [vmem:[%s445 + $0x10] sm:$0xf]
      %v451 = vld [vmem:[%s445 + $0x14] sm:$0xf]
      %v452 = vld [vmem:[%s445 + $0x18] sm:$0xf]
      %v453 = vld [vmem:[%s445 + $0x1c] sm:$0xf]
      %v455 = vunpack.c.l.b16 %v444
      %v456 = vpack.c.b16 %v455, %v455
      %v458 = vshrl.u32 %v456, 16
      %v460 = vshll.u32 %v456, 16
      %v462 = vrot.slane %v460, 1
      %v463 = vor.u32 %v458, %v462
      %v472 = vunpack.c.l.b16 %v446
      %v473 = vunpack.c.l.b16 %v447
      %v474 = vunpack.c.l.b16 %v448
      %v475 = vunpack.c.l.b16 %v449
      %v476 = vunpack.c.l.b16 %v450
      %v477 = vunpack.c.l.b16 %v451
      %v478 = vunpack.c.l.b16 %v452
      %v479 = vunpack.c.l.b16 %v453
      %v480 = vpack.c.b16 %v473, %v472
      %v481 = vpack.c.b16 %v475, %v474
      %v482 = vpack.c.b16 %v477, %v476
      %v483 = vpack.c.b16 %v479, %v478
      %v489 = vsel %vm252, %v463, 0
      %491 = vmatprep.subr.bf16.mxu0 0
      %492 = vmatpush1.bf16.msra.mxu0 %v480
      %493 = vmatprep.subr.bf16.mxu0 0
      %494 = vmatpush1.bf16.msra.mxu0 %v481
      %495 = vmatprep.subr.bf16.mxu0 0
      %496 = vmatpush1.bf16.msra.mxu0 %v482
      %497 = vmatprep.subr.bf16.mxu0 0
      %498 = vmatpush1.bf16.msra.mxu0 %v483
      %499 = vmatprep.subr.bf16.mxu0 0
      %500 = vmatpush1.bf16.msra.mxu0 0
      %501 = vmatprep.subr.bf16.mxu0 0
      %502 = vmatpush1.bf16.msra.mxu0 0
      %503 = vmatprep.subr.bf16.mxu0 0
      %504 = vmatpush1.bf16.msra.mxu0 0
      %505 = vmatprep.subr.bf16.mxu0 0
      %506 = vmatpush1.bf16.msra.mxu0 0
      %507 = vmatprep.subr.bf16.mxu0 0
      %508 = vmatpush1.bf16.msra.mxu0 0
      %509 = vmatprep.subr.bf16.mxu0 0
      %510 = vmatpush1.bf16.msra.mxu0 0
      %511 = vmatprep.subr.bf16.mxu0 0
      %512 = vmatpush1.bf16.msra.mxu0 0
      %513 = vmatprep.subr.bf16.mxu0 0
      %514 = vmatpush1.bf16.msra.mxu0 0
      %515 = vmatprep.subr.bf16.mxu0 0
      %516 = vmatpush1.bf16.msra.mxu0 0
      %517 = vmatprep.subr.bf16.mxu0 0
      %518 = vmatpush1.bf16.msra.mxu0 0
      %519 = vmatprep.subr.bf16.mxu0 0
      %520 = vmatpush1.bf16.msra.mxu0 0
      %521 = vmatprep.subr.bf16.mxu0 0
      %522 = vmatpush1.bf16.msra.mxu0 0
      %523 = vmatprep.mubr.bf16.mxu0 0
      %524 = vmatmul.mubr.bf16.gmra.mrb[0].mxu0 %v489
      %v525 = vpop.f32.mrb[0].mxu0
      %v526 = vadd.f32 0.0, %v525
      %v527 = vpop.f32.mrb[0].mxu0
      %v528 = vpop.f32.mrb[0].mxu0
      %v529 = vpop.f32.mrb[0].mxu0
      %530 = vdwg.mxu0
      %v531 = vadd.f32 %v443, %v526
      %v533 = vlaneseq
      %v534 = vshrl.u32 %v533, 7
      %v535 = vsub.s32 0, %v534
      %v536 = vrot.slane %v196, %v535
      %v538 = vadd.f32 %v531, %v536
      %v539 = vmax.f32 %v538, 0.0
      %v540 = vpack.c.bf16 %v539, %v539
      %vm541 = vcmask 254976
      %542 = vst.msk [vmem:[%s192] sm:$0x3] %vm541, %v540
      %v543 = vld [vmem:[%s365] sm:$0x3]
      %v544 = vld [vmem:[%s1] sm:$0xf]
      %v545 = vld [vmem:[%s1 + $0x4] sm:$0xf]
      %v546 = vld [vmem:[%s1 + $0x8] sm:$0xf]
      %v547 = vld [vmem:[%s1 + $0xc] sm:$0xf]
      %v548 = vld [vmem:[%s1 + $0x10] sm:$0xf]
      %v549 = vld [vmem:[%s1 + $0x14] sm:$0xf]
      %v550 = vld [vmem:[%s1 + $0x18] sm:$0xf]
      %v551 = vld [vmem:[%s1 + $0x1c] sm:$0xf]
      %v552 = vld [vmem:[%s365] sm:$0x7]
      %v553 = vld [vmem:[%s209] sm:$0xf]
      %v554 = vld [vmem:[%s209 + $0x4] sm:$0xf]
      %v555 = vld [vmem:[%s209 + $0x8] sm:$0xf]
      %v556 = vld [vmem:[%s209 + $0xc] sm:$0xf]
      %v557 = vld [vmem:[%s209 + $0x10] sm:$0xf]
      %v558 = vld [vmem:[%s209 + $0x14] sm:$0xf]
      %v559 = vld [vmem:[%s209 + $0x18] sm:$0xf]
      %v560 = vld [vmem:[%s209 + $0x1c] sm:$0xf]
      %v562 = vunpack.c.l.b16 %v552
      %v563 = vpack.c.b16 %v562, %v562
      %v565 = vshrl.u32 %v563, 16
      %v567 = vshll.u32 %v563, 16
      %v569 = vrot.slane %v567, 1
      %v570 = vor.u32 %v565, %v569
      %v579 = vunpack.c.l.b16 %v553
      %v580 = vunpack.c.l.b16 %v554
      %v581 = vunpack.c.l.b16 %v555
      %v582 = vunpack.c.l.b16 %v556
      %v583 = vunpack.c.l.b16 %v557
      %v584 = vunpack.c.l.b16 %v558
      %v585 = vunpack.c.l.b16 %v559
      %v586 = vunpack.c.l.b16 %v560
      %v587 = vpack.c.b16 %v580, %v579
      %v588 = vpack.c.b16 %v582, %v581
      %v589 = vpack.c.b16 %v584, %v583
      %v590 = vpack.c.b16 %v586, %v585
      %v596 = vsel %vm252, %v570, 0
      %598 = vmatprep.subr.bf16.mxu0 0
      %599 = vmatpush1.bf16.msra.mxu0 %v587
      %600 = vmatprep.subr.bf16.mxu0 0
      %601 = vmatpush1.bf16.msra.mxu0 %v588
      %602 = vmatprep.subr.bf16.mxu0 0
      %603 = vmatpush1.bf16.msra.mxu0 %v589
      %604 = vmatprep.subr.bf16.mxu0 0
      %605 = vmatpush1.bf16.msra.mxu0 %v590
      %606 = vmatprep.subr.bf16.mxu0 0
      %607 = vmatpush1.bf16.msra.mxu0 0
      %608 = vmatprep.subr.bf16.mxu0 0
      %609 = vmatpush1.bf16.msra.mxu0 0
      %610 = vmatprep.subr.bf16.mxu0 0
      %611 = vmatpush1.bf16.msra.mxu0 0
      %612 = vmatprep.subr.bf16.mxu0 0
      %613 = vmatpush1.bf16.msra.mxu0 0
      %614 = vmatprep.subr.bf16.mxu0 0
      %615 = vmatpush1.bf16.msra.mxu0 0
      %616 = vmatprep.subr.bf16.mxu0 0
      %617 = vmatpush1.bf16.msra.mxu0 0
      %618 = vmatprep.subr.bf16.mxu0 0
      %619 = vmatpush1.bf16.msra.mxu0 0
      %620 = vmatprep.subr.bf16.mxu0 0
      %621 = vmatpush1.bf16.msra.mxu0 0
      %622 = vmatprep.subr.bf16.mxu0 0
      %623 = vmatpush1.bf16.msra.mxu0 0
      %624 = vmatprep.subr.bf16.mxu0 0
      %625 = vmatpush1.bf16.msra.mxu0 0
      %626 = vmatprep.subr.bf16.mxu0 0
      %627 = vmatpush1.bf16.msra.mxu0 0
      %628 = vmatprep.subr.bf16.mxu0 0
      %629 = vmatpush1.bf16.msra.mxu0 0
      %630 = vmatprep.mubr.bf16.mxu0 0
      %631 = vmatmul.mubr.bf16.gmra.mrb[0].mxu0 %v596
      %v632 = vpop.f32.mrb[0].mxu0
      %v633 = vadd.f32 0.0, %v632
      %v634 = vpop.f32.mrb[0].mxu0
      %v635 = vpop.f32.mrb[0].mxu0
      %v636 = vpop.f32.mrb[0].mxu0
      %637 = vdwg.mxu0
      %v646 = vunpack.c.l.b16 %v544
      %v647 = vunpack.c.l.b16 %v545
      %v648 = vunpack.c.l.b16 %v546
      %v649 = vunpack.c.l.b16 %v547
      %v650 = vunpack.c.l.b16 %v548
      %v651 = vunpack.c.l.b16 %v549
      %v652 = vunpack.c.l.b16 %v550
      %v653 = vunpack.c.l.b16 %v551
      %v654 = vpack.c.b16 %v647, %v646
      %v655 = vpack.c.b16 %v649, %v648
      %v656 = vpack.c.b16 %v651, %v650
      %v657 = vpack.c.b16 %v653, %v652
      %v663 = vsel %vm252, %v543, 0
      %665 = vmatprep.subr.bf16.mxu0 0
      %666 = vmatpush1.bf16.msra.mxu0 %v654
      %667 = vmatprep.subr.bf16.mxu0 0
      %668 = vmatpush1.bf16.msra.mxu0 %v655
      %669 = vmatprep.subr.bf16.mxu0 0
      %670 = vmatpush1.bf16.msra.mxu0 %v656
      %671 = vmatprep.subr.bf16.mxu0 0
      %672 = vmatpush1.bf16.msra.mxu0 %v657
      %673 = vmatprep.subr.bf16.mxu0 0
      %674 = vmatpush1.bf16.msra.mxu0 0
      %675 = vmatprep.subr.bf16.mxu0 0
      %676 = vmatpush1.bf16.msra.mxu0 0
      %677 = vmatprep.subr.bf16.mxu0 0
      %678 = vmatpush1.bf16.msra.mxu0 0
      %679 = vmatprep.subr.bf16.mxu0 0
      %680 = vmatpush1.bf16.msra.mxu0 0
      %681 = vmatprep.subr.bf16.mxu0 0
      %682 = vmatpush1.bf16.msra.mxu0 0
      %683 = vmatprep.subr.bf16.mxu0 0
      %684 = vmatpush1.bf16.msra.mxu0 0
      %685 = vmatprep.subr.bf16.mxu0 0
      %686 = vmatpush1.bf16.msra.mxu0 0
      %687 = vmatprep.subr.bf16.mxu0 0
      %688 = vmatpush1.bf16.msra.mxu0 0
      %689 = vmatprep.subr.bf16.mxu0 0
      %690 = vmatpush1.bf16.msra.mxu0 0
      %691 = vmatprep.subr.bf16.mxu0 0
      %692 = vmatpush1.bf16.msra.mxu0 0
      %693 = vmatprep.subr.bf16.mxu0 0
      %694 = vmatpush1.bf16.msra.mxu0 0
      %695 = vmatprep.subr.bf16.mxu0 0
      %696 = vmatpush1.bf16.msra.mxu0 0
      %697 = vmatprep.mubr.bf16.mxu0 0
      %698 = vmatmul.mubr.bf16.gmra.mrb[0].mxu0 %v663
      %v699 = vpop.f32.mrb[0].mxu0
      %v700 = vadd.f32 %v633, %v699
      %v701 = vpop.f32.mrb[0].mxu0
      %v702 = vpop.f32.mrb[0].mxu0
      %v703 = vpop.f32.mrb[0].mxu0
      %704 = vdwg.mxu0
      %s705 = sadd.s32 %s195, 2
      %s706 = smul.addr %s705, 4
      %s707 = scalar_lea.vmem %s183, %s706
      %v708 = vld [vmem:[%s707] sm:$0x3]
      %v709 = vld [vmem:[%s367] sm:$0xf]
      %v710 = vld [vmem:[%s367 + $0x4] sm:$0xf]
      %v711 = vld [vmem:[%s367 + $0x8] sm:$0xf]
      %v712 = vld [vmem:[%s367 + $0xc] sm:$0xf]
      %v713 = vld [vmem:[%s367 + $0x10] sm:$0xf]
      %v714 = vld [vmem:[%s367 + $0x14] sm:$0xf]
      %v715 = vld [vmem:[%s367 + $0x18] sm:$0xf]
      %v716 = vld [vmem:[%s367 + $0x1c] sm:$0xf]
      %v725 = vunpack.c.l.b16 %v709
      %v726 = vunpack.c.l.b16 %v710
      %v727 = vunpack.c.l.b16 %v711
      %v728 = vunpack.c.l.b16 %v712
      %v729 = vunpack.c.l.b16 %v713
      %v730 = vunpack.c.l.b16 %v714
      %v731 = vunpack.c.l.b16 %v715
      %v732 = vunpack.c.l.b16 %v716
      %v733 = vpack.c.b16 %v726, %v725
      %v734 = vpack.c.b16 %v728, %v727
      %v735 = vpack.c.b16 %v730, %v729
      %v736 = vpack.c.b16 %v732, %v731
      %v742 = vsel %vm252, %v708, 0
      %744 = vmatprep.subr.bf16.mxu0 0
      %745 = vmatpush1.bf16.msra.mxu0 %v733
      %746 = vmatprep.subr.bf16.mxu0 0
      %747 = vmatpush1.bf16.msra.mxu0 %v734
      %748 = vmatprep.subr.bf16.mxu0 0
      %749 = vmatpush1.bf16.msra.mxu0 %v735
      %750 = vmatprep.subr.bf16.mxu0 0
      %751 = vmatpush1.bf16.msra.mxu0 %v736
      %752 = vmatprep.subr.bf16.mxu0 0
      %753 = vmatpush1.bf16.msra.mxu0 0
      %754 = vmatprep.subr.bf16.mxu0 0
      %755 = vmatpush1.bf16.msra.mxu0 0
      %756 = vmatprep.subr.bf16.mxu0 0
      %757 = vmatpush1.bf16.msra.mxu0 0
      %758 = vmatprep.subr.bf16.mxu0 0
      %759 = vmatpush1.bf16.msra.mxu0 0
      %760 = vmatprep.subr.bf16.mxu0 0
      %761 = vmatpush1.bf16.msra.mxu0 0
      %762 = vmatprep.subr.bf16.mxu0 0
      %763 = vmatpush1.bf16.msra.mxu0 0
      %764 = vmatprep.subr.bf16.mxu0 0
      %765 = vmatpush1.bf16.msra.mxu0 0
      %766 = vmatprep.subr.bf16.mxu0 0
      %767 = vmatpush1.bf16.msra.mxu0 0
      %768 = vmatprep.subr.bf16.mxu0 0
      %769 = vmatpush1.bf16.msra.mxu0 0
      %770 = vmatprep.subr.bf16.mxu0 0
      %771 = vmatpush1.bf16.msra.mxu0 0
      %772 = vmatprep.subr.bf16.mxu0 0
      %773 = vmatpush1.bf16.msra.mxu0 0
      %774 = vmatprep.subr.bf16.mxu0 0
      %775 = vmatpush1.bf16.msra.mxu0 0
      %776 = vmatprep.mubr.bf16.mxu0 0
      %777 = vmatmul.mubr.bf16.gmra.mrb[0].mxu0 %v742
      %v778 = vpop.f32.mrb[0].mxu0
      %v779 = vadd.f32 0.0, %v778
      %v780 = vpop.f32.mrb[0].mxu0
      %v781 = vpop.f32.mrb[0].mxu0
      %v782 = vpop.f32.mrb[0].mxu0
      %783 = vdwg.mxu0
      %v784 = vadd.f32 %v700, %v779
      %v785 = vld [vmem:[%s707] sm:$0x7]
      %v786 = vld [vmem:[%s445] sm:$0xf]
      %v787 = vld [vmem:[%s445 + $0x4] sm:$0xf]
      %v788 = vld [vmem:[%s445 + $0x8] sm:$0xf]
      %v789 = vld [vmem:[%s445 + $0xc] sm:$0xf]
      %v790 = vld [vmem:[%s445 + $0x10] sm:$0xf]
      %v791 = vld [vmem:[%s445 + $0x14] sm:$0xf]
      %v792 = vld [vmem:[%s445 + $0x18] sm:$0xf]
      %v793 = vld [vmem:[%s445 + $0x1c] sm:$0xf]
      %v795 = vunpack.c.l.b16 %v785
      %v796 = vpack.c.b16 %v795, %v795
      %v798 = vshrl.u32 %v796, 16
      %v800 = vshll.u32 %v796, 16
      %v802 = vrot.slane %v800, 1
      %v803 = vor.u32 %v798, %v802
      %v812 = vunpack.c.l.b16 %v786
      %v813 = vunpack.c.l.b16 %v787
      %v814 = vunpack.c.l.b16 %v788
      %v815 = vunpack.c.l.b16 %v789
      %v816 = vunpack.c.l.b16 %v790
      %v817 = vunpack.c.l.b16 %v791
      %v818 = vunpack.c.l.b16 %v792
      %v819 = vunpack.c.l.b16 %v793
      %v820 = vpack.c.b16 %v813, %v812
      %v821 = vpack.c.b16 %v815, %v814
      %v822 = vpack.c.b16 %v817, %v816
      %v823 = vpack.c.b16 %v819, %v818
      %v829 = vsel %vm252, %v803, 0
      %831 = vmatprep.subr.bf16.mxu0 0
      %832 = vmatpush1.bf16.msra.mxu0 %v820
      %833 = vmatprep.subr.bf16.mxu0 0
      %834 = vmatpush1.bf16.msra.mxu0 %v821
      %835 = vmatprep.subr.bf16.mxu0 0
      %836 = vmatpush1.bf16.msra.mxu0 %v822
      %837 = vmatprep.subr.bf16.mxu0 0
      %838 = vmatpush1.bf16.msra.mxu0 %v823
      %839 = vmatprep.subr.bf16.mxu0 0
      %840 = vmatpush1.bf16.msra.mxu0 0
      %841 = vmatprep.subr.bf16.mxu0 0
      %842 = vmatpush1.bf16.msra.mxu0 0
      %843 = vmatprep.subr.bf16.mxu0 0
      %844 = vmatpush1.bf16.msra.mxu0 0
      %845 = vmatprep.subr.bf16.mxu0 0
      %846 = vmatpush1.bf16.msra.mxu0 0
      %847 = vmatprep.subr.bf16.mxu0 0
      %848 = vmatpush1.bf16.msra.mxu0 0
      %849 = vmatprep.subr.bf16.mxu0 0
      %850 = vmatpush1.bf16.msra.mxu0 0
      %851 = vmatprep.subr.bf16.mxu0 0
      %852 = vmatpush1.bf16.msra.mxu0 0
      %853 = vmatprep.subr.bf16.mxu0 0
      %854 = vmatpush1.bf16.msra.mxu0 0
      %855 = vmatprep.subr.bf16.mxu0 0
      %856 = vmatpush1.bf16.msra.mxu0 0
      %857 = vmatprep.subr.bf16.mxu0 0
      %858 = vmatpush1.bf16.msra.mxu0 0
      %859 = vmatprep.subr.bf16.mxu0 0
      %860 = vmatpush1.bf16.msra.mxu0 0
      %861 = vmatprep.subr.bf16.mxu0 0
      %862 = vmatpush1.bf16.msra.mxu0 0
      %863 = vmatprep.mubr.bf16.mxu0 0
      %864 = vmatmul.mubr.bf16.gmra.mrb[0].mxu0 %v829
      %v865 = vpop.f32.mrb[0].mxu0
      %v866 = vadd.f32 0.0, %v865
      %v867 = vpop.f32.mrb[0].mxu0
      %v868 = vpop.f32.mrb[0].mxu0
      %v869 = vpop.f32.mrb[0].mxu0
      %870 = vdwg.mxu0
      %v871 = vadd.f32 %v784, %v866
      %v872 = vadd.f32 %v871, %v536
      %v873 = vmax.f32 %v872, 0.0
      %v874 = vpack.c.bf16 %v873, %v873
      %s875 = scalar_lea.vmem %s192, 2
      %876 = vst.msk [vmem:[%s875] sm:$0x3] %vm541, %v874
      %v877 = vld [vmem:[%s707] sm:$0x3]
      %v878 = vld [vmem:[%s1] sm:$0xf]
      %v879 = vld [vmem:[%s1 + $0x4] sm:$0xf]
      %v880 = vld [vmem:[%s1 + $0x8] sm:$0xf]
      %v881 = vld [vmem:[%s1 + $0xc] sm:$0xf]
      %v882 = vld [vmem:[%s1 + $0x10] sm:$0xf]
      %v883 = vld [vmem:[%s1 + $0x14] sm:$0xf]
      %v884 = vld [vmem:[%s1 + $0x18] sm:$0xf]
      %v885 = vld [vmem:[%s1 + $0x1c] sm:$0xf]
      %v886 = vld [vmem:[%s707] sm:$0x7]
      %v887 = vld [vmem:[%s209] sm:$0xf]
      %v888 = vld [vmem:[%s209 + $0x4] sm:$0xf]
      %v889 = vld [vmem:[%s209 + $0x8] sm:$0xf]
      %v890 = vld [vmem:[%s209 + $0xc] sm:$0xf]
      %v891 = vld [vmem:[%s209 + $0x10] sm:$0xf]
      %v892 = vld [vmem:[%s209 + $0x14] sm:$0xf]
      %v893 = vld [vmem:[%s209 + $0x18] sm:$0xf]
      %v894 = vld [vmem:[%s209 + $0x1c] sm:$0xf]
      %v896 = vunpack.c.l.b16 %v886
      %v897 = vpack.c.b16 %v896, %v896
      %v899 = vshrl.u32 %v897, 16
      %v901 = vshll.u32 %v897, 16
      %v903 = vrot.slane %v901, 1
      %v904 = vor.u32 %v899, %v903
      %v913 = vunpack.c.l.b16 %v887
      %v914 = vunpack.c.l.b16 %v888
      %v915 = vunpack.c.l.b16 %v889
      %v916 = vunpack.c.l.b16 %v890
      %v917 = vunpack.c.l.b16 %v891
      %v918 = vunpack.c.l.b16 %v892
      %v919 = vunpack.c.l.b16 %v893
      %v920 = vunpack.c.l.b16 %v894
      %v921 = vpack.c.b16 %v914, %v913
      %v922 = vpack.c.b16 %v916, %v915
      %v923 = vpack.c.b16 %v918, %v917
      %v924 = vpack.c.b16 %v920, %v919
      %v930 = vsel %vm252, %v904, 0
      %932 = vmatprep.subr.bf16.mxu0 0
      %933 = vmatpush1.bf16.msra.mxu0 %v921
      %934 = vmatprep.subr.bf16.mxu0 0
      %935 = vmatpush1.bf16.msra.mxu0 %v922
      %936 = vmatprep.subr.bf16.mxu0 0
      %937 = vmatpush1.bf16.msra.mxu0 %v923
      %938 = vmatprep.subr.bf16.mxu0 0
      %939 = vmatpush1.bf16.msra.mxu0 %v924
      %940 = vmatprep.subr.bf16.mxu0 0
      %941 = vmatpush1.bf16.msra.mxu0 0
      %942 = vmatprep.subr.bf16.mxu0 0
      %943 = vmatpush1.bf16.msra.mxu0 0
      %944 = vmatprep.subr.bf16.mxu0 0
      %945 = vmatpush1.bf16.msra.mxu0 0
      %946 = vmatprep.subr.bf16.mxu0 0
      %947 = vmatpush1.bf16.msra.mxu0 0
      %948 = vmatprep.subr.bf16.mxu0 0
      %949 = vmatpush1.bf16.msra.mxu0 0
      %950 = vmatprep.subr.bf16.mxu0 0
      %951 = vmatpush1.bf16.msra.mxu0 0
      %952 = vmatprep.subr.bf16.mxu0 0
      %953 = vmatpush1.bf16.msra.mxu0 0
      %954 = vmatprep.subr.bf16.mxu0 0
      %955 = vmatpush1.bf16.msra.mxu0 0
      %956 = vmatprep.subr.bf16.mxu0 0
      %957 = vmatpush1.bf16.msra.mxu0 0
      %958 = vmatprep.subr.bf16.mxu0 0
      %959 = vmatpush1.bf16.msra.mxu0 0
      %960 = vmatprep.subr.bf16.mxu0 0
      %961 = vmatpush1.bf16.msra.mxu0 0
      %962 = vmatprep.subr.bf16.mxu0 0
      %963 = vmatpush1.bf16.msra.mxu0 0
      %964 = vmatprep.mubr.bf16.mxu0 0
      %965 = vmatmul.mubr.bf16.gmra.mrb[0].mxu0 %v930
      %v966 = vpop.f32.mrb[0].mxu0
      %v967 = vadd.f32 0.0, %v966
      %v968 = vpop.f32.mrb[0].mxu0
      %v969 = vpop.f32.mrb[0].mxu0
      %v970 = vpop.f32.mrb[0].mxu0
      %971 = vdwg.mxu0
      %v980 = vunpack.c.l.b16 %v878
      %v981 = vunpack.c.l.b16 %v879
      %v982 = vunpack.c.l.b16 %v880
      %v983 = vunpack.c.l.b16 %v881
      %v984 = vunpack.c.l.b16 %v882
      %v985 = vunpack.c.l.b16 %v883
      %v986 = vunpack.c.l.b16 %v884
      %v987 = vunpack.c.l.b16 %v885
      %v988 = vpack.c.b16 %v981, %v980
      %v989 = vpack.c.b16 %v983, %v982
      %v990 = vpack.c.b16 %v985, %v984
      %v991 = vpack.c.b16 %v987, %v986
      %v997 = vsel %vm252, %v877, 0
      %999 = vmatprep.subr.bf16.mxu0 0
      %1000 = vmatpush1.bf16.msra.mxu0 %v988
      %1001 = vmatprep.subr.bf16.mxu0 0
      %1002 = vmatpush1.bf16.msra.mxu0 %v989
      %1003 = vmatprep.subr.bf16.mxu0 0
      %1004 = vmatpush1.bf16.msra.mxu0 %v990
      %1005 = vmatprep.subr.bf16.mxu0 0
      %1006 = vmatpush1.bf16.msra.mxu0 %v991
      %1007 = vmatprep.subr.bf16.mxu0 0
      %1008 = vmatpush1.bf16.msra.mxu0 0
      %1009 = vmatprep.subr.bf16.mxu0 0
      %1010 = vmatpush1.bf16.msra.mxu0 0
      %1011 = vmatprep.subr.bf16.mxu0 0
      %1012 = vmatpush1.bf16.msra.mxu0 0
      %1013 = vmatprep.subr.bf16.mxu0 0
      %1014 = vmatpush1.bf16.msra.mxu0 0
      %1015 = vmatprep.subr.bf16.mxu0 0
      %1016 = vmatpush1.bf16.msra.mxu0 0
      %1017 = vmatprep.subr.bf16.mxu0 0
      %1018 = vmatpush1.bf16.msra.mxu0 0
      %1019 = vmatprep.subr.bf16.mxu0 0
      %1020 = vmatpush1.bf16.msra.mxu0 0
      %1021 = vmatprep.subr.bf16.mxu0 0
      %1022 = vmatpush1.bf16.msra.mxu0 0
      %1023 = vmatprep.subr.bf16.mxu0 0
      %1024 = vmatpush1.bf16.msra.mxu0 0
      %1025 = vmatprep.subr.bf16.mxu0 0
      %1026 = vmatpush1.bf16.msra.mxu0 0
      %1027 = vmatprep.subr.bf16.mxu0 0
      %1028 = vmatpush1.bf16.msra.mxu0 0
      %1029 = vmatprep.subr.bf16.mxu0 0
      %1030 = vmatpush1.bf16.msra.mxu0 0
      %1031 = vmatprep.mubr.bf16.mxu0 0
      %1032 = vmatmul.mubr.bf16.gmra.mrb[0].mxu0 %v997
      %v1033 = vpop.f32.mrb[0].mxu0
      %v1034 = vadd.f32 %v967, %v1033
      %v1035 = vpop.f32.mrb[0].mxu0
      %v1036 = vpop.f32.mrb[0].mxu0
      %v1037 = vpop.f32.mrb[0].mxu0
      %1038 = vdwg.mxu0
      %s1039 = sadd.s32 %s195, 3
      %s1040 = smul.addr %s1039, 4
      %s1041 = scalar_lea.vmem %s183, %s1040
      %v1042 = vld [vmem:[%s1041] sm:$0x3]
      %v1043 = vld [vmem:[%s367] sm:$0xf]
      %v1044 = vld [vmem:[%s367 + $0x4] sm:$0xf]
      %v1045 = vld [vmem:[%s367 + $0x8] sm:$0xf]
      %v1046 = vld [vmem:[%s367 + $0xc] sm:$0xf]
      %v1047 = vld [vmem:[%s367 + $0x10] sm:$0xf]
      %v1048 = vld [vmem:[%s367 + $0x14] sm:$0xf]
      %v1049 = vld [vmem:[%s367 + $0x18] sm:$0xf]
      %v1050 = vld [vmem:[%s367 + $0x1c] sm:$0xf]
      %v1059 = vunpack.c.l.b16 %v1043
      %v1060 = vunpack.c.l.b16 %v1044
      %v1061 = vunpack.c.l.b16 %v1045
      %v1062 = vunpack.c.l.b16 %v1046
      %v1063 = vunpack.c.l.b16 %v1047
      %v1064 = vunpack.c.l.b16 %v1048
      %v1065 = vunpack.c.l.b16 %v1049
      %v1066 = vunpack.c.l.b16 %v1050
      %v1067 = vpack.c.b16 %v1060, %v1059
      %v1068 = vpack.c.b16 %v1062, %v1061
      %v1069 = vpack.c.b16 %v1064, %v1063
      %v1070 = vpack.c.b16 %v1066, %v1065
      %v1076 = vsel %vm252, %v1042, 0
      %1078 = vmatprep.subr.bf16.mxu0 0
      %1079 = vmatpush1.bf16.msra.mxu0 %v1067
      %1080 = vmatprep.subr.bf16.mxu0 0
      %1081 = vmatpush1.bf16.msra.mxu0 %v1068
      %1082 = vmatprep.subr.bf16.mxu0 0
      %1083 = vmatpush1.bf16.msra.mxu0 %v1069
      %1084 = vmatprep.subr.bf16.mxu0 0
      %1085 = vmatpush1.bf16.msra.mxu0 %v1070
      %1086 = vmatprep.subr.bf16.mxu0 0
      %1087 = vmatpush1.bf16.msra.mxu0 0
      %1088 = vmatprep.subr.bf16.mxu0 0
      %1089 = vmatpush1.bf16.msra.mxu0 0
      %1090 = vmatprep.subr.bf16.mxu0 0
      %1091 = vmatpush1.bf16.msra.mxu0 0
      %1092 = vmatprep.subr.bf16.mxu0 0
      %1093 = vmatpush1.bf16.msra.mxu0 0
      %1094 = vmatprep.subr.bf16.mxu0 0
      %1095 = vmatpush1.bf16.msra.mxu0 0
      %1096 = vmatprep.subr.bf16.mxu0 0
      %1097 = vmatpush1.bf16.msra.mxu0 0
      %1098 = vmatprep.subr.bf16.mxu0 0
      %1099 = vmatpush1.bf16.msra.mxu0 0
      %1100 = vmatprep.subr.bf16.mxu0 0
      %1101 = vmatpush1.bf16.msra.mxu0 0
      %1102 = vmatprep.subr.bf16.mxu0 0
      %1103 = vmatpush1.bf16.msra.mxu0 0
      %1104 = vmatprep.subr.bf16.mxu0 0
      %1105 = vmatpush1.bf16.msra.mxu0 0
      %1106 = vmatprep.subr.bf16.mxu0 0
      %1107 = vmatpush1.bf16.msra.mxu0 0
      %1108 = vmatprep.subr.bf16.mxu0 0
      %1109 = vmatpush1.bf16.msra.mxu0 0
      %1110 = vmatprep.mubr.bf16.mxu0 0
      %1111 = vmatmul.mubr.bf16.gmra.mrb[0].mxu0 %v1076
      %v1112 = vpop.f32.mrb[0].mxu0
      %v1113 = vadd.f32 0.0, %v1112
      %v1114 = vpop.f32.mrb[0].mxu0
      %v1115 = vpop.f32.mrb[0].mxu0
      %v1116 = vpop.f32.mrb[0].mxu0
      %1117 = vdwg.mxu0
      %v1118 = vadd.f32 %v1034, %v1113
      %v1119 = vld [vmem:[%s1041] sm:$0x7]
      %v1120 = vld [vmem:[%s445] sm:$0xf]
      %v1121 = vld [vmem:[%s445 + $0x4] sm:$0xf]
      %v1122 = vld [vmem:[%s445 + $0x8] sm:$0xf]
      %v1123 = vld [vmem:[%s445 + $0xc] sm:$0xf]
      %v1124 = vld [vmem:[%s445 + $0x10] sm:$0xf]
      %v1125 = vld [vmem:[%s445 + $0x14] sm:$0xf]
      %v1126 = vld [vmem:[%s445 + $0x18] sm:$0xf]
      %v1127 = vld [vmem:[%s445 + $0x1c] sm:$0xf]
      %v1129 = vunpack.c.l.b16 %v1119
      %v1130 = vpack.c.b16 %v1129, %v1129
      %v1132 = vshrl.u32 %v1130, 16
      %v1134 = vshll.u32 %v1130, 16
      %v1136 = vrot.slane %v1134, 1
      %v1137 = vor.u32 %v1132, %v1136
      %v1146 = vunpack.c.l.b16 %v1120
      %v1147 = vunpack.c.l.b16 %v1121
      %v1148 = vunpack.c.l.b16 %v1122
      %v1149 = vunpack.c.l.b16 %v1123
      %v1150 = vunpack.c.l.b16 %v1124
      %v1151 = vunpack.c.l.b16 %v1125
      %v1152 = vunpack.c.l.b16 %v1126
      %v1153 = vunpack.c.l.b16 %v1127
      %v1154 = vpack.c.b16 %v1147, %v1146
      %v1155 = vpack.c.b16 %v1149, %v1148
      %v1156 = vpack.c.b16 %v1151, %v1150
      %v1157 = vpack.c.b16 %v1153, %v1152
      %v1163 = vsel %vm252, %v1137, 0
      %1165 = vmatprep.subr.bf16.mxu0 0
      %1166 = vmatpush1.bf16.msra.mxu0 %v1154
      %1167 = vmatprep.subr.bf16.mxu0 0
      %1168 = vmatpush1.bf16.msra.mxu0 %v1155
      %1169 = vmatprep.subr.bf16.mxu0 0
      %1170 = vmatpush1.bf16.msra.mxu0 %v1156
      %1171 = vmatprep.subr.bf16.mxu0 0
      %1172 = vmatpush1.bf16.msra.mxu0 %v1157
      %1173 = vmatprep.subr.bf16.mxu0 0
      %1174 = vmatpush1.bf16.msra.mxu0 0
      %1175 = vmatprep.subr.bf16.mxu0 0
      %1176 = vmatpush1.bf16.msra.mxu0 0
      %1177 = vmatprep.subr.bf16.mxu0 0
      %1178 = vmatpush1.bf16.msra.mxu0 0
      %1179 = vmatprep.subr.bf16.mxu0 0
      %1180 = vmatpush1.bf16.msra.mxu0 0
      %1181 = vmatprep.subr.bf16.mxu0 0
      %1182 = vmatpush1.bf16.msra.mxu0 0
      %1183 = vmatprep.subr.bf16.mxu0 0
      %1184 = vmatpush1.bf16.msra.mxu0 0
      %1185 = vmatprep.subr.bf16.mxu0 0
      %1186 = vmatpush1.bf16.msra.mxu0 0
      %1187 = vmatprep.subr.bf16.mxu0 0
      %1188 = vmatpush1.bf16.msra.mxu0 0
      %1189 = vmatprep.subr.bf16.mxu0 0
      %1190 = vmatpush1.bf16.msra.mxu0 0
      %1191 = vmatprep.subr.bf16.mxu0 0
      %1192 = vmatpush1.bf16.msra.mxu0 0
      %1193 = vmatprep.subr.bf16.mxu0 0
      %1194 = vmatpush1.bf16.msra.mxu0 0
      %1195 = vmatprep.subr.bf16.mxu0 0
      %1196 = vmatpush1.bf16.msra.mxu0 0
      %1197 = vmatprep.mubr.bf16.mxu0 0
      %1198 = vmatmul.mubr.bf16.gmra.mrb[0].mxu0 %v1163
      %v1199 = vpop.f32.mrb[0].mxu0
      %v1200 = vadd.f32 0.0, %v1199
      %v1201 = vpop.f32.mrb[0].mxu0
      %v1202 = vpop.f32.mrb[0].mxu0
      %v1203 = vpop.f32.mrb[0].mxu0
      %1204 = vdwg.mxu0
      %v1205 = vadd.f32 %v1118, %v1200
      %v1206 = vadd.f32 %v1205, %v536
      %v1207 = vmax.f32 %v1206, 0.0
      %v1208 = vpack.c.bf16 %v1207, %v1207
      %s1209 = scalar_lea.vmem %s192, 4
      %1210 = vst.msk [vmem:[%s1209] sm:$0x3] %vm541, %v1208
      %v1211 = vld [vmem:[%s1041] sm:$0x3]
      %v1212 = vld [vmem:[%s1] sm:$0xf]
      %v1213 = vld [vmem:[%s1 + $0x4] sm:$0xf]
      %v1214 = vld [vmem:[%s1 + $0x8] sm:$0xf]
      %v1215 = vld [vmem:[%s1 + $0xc] sm:$0xf]
      %v1216 = vld [vmem:[%s1 + $0x10] sm:$0xf]
      %v1217 = vld [vmem:[%s1 + $0x14] sm:$0xf]
      %v1218 = vld [vmem:[%s1 + $0x18] sm:$0xf]
      %v1219 = vld [vmem:[%s1 + $0x1c] sm:$0xf]
      %v1220 = vld [vmem:[%s1041] sm:$0x7]
      %v1221 = vld [vmem:[%s209] sm:$0xf]
      %v1222 = vld [vmem:[%s209 + $0x4] sm:$0xf]
      %v1223 = vld [vmem:[%s209 + $0x8] sm:$0xf]
      %v1224 = vld [vmem:[%s209 + $0xc] sm:$0xf]
      %v1225 = vld [vmem:[%s209 + $0x10] sm:$0xf]
      %v1226 = vld [vmem:[%s209 + $0x14] sm:$0xf]
      %v1227 = vld [vmem:[%s209 + $0x18] sm:$0xf]
      %v1228 = vld [vmem:[%s209 + $0x1c] sm:$0xf]
      %v1230 = vunpack.c.l.b16 %v1220
      %v1231 = vpack.c.b16 %v1230, %v1230
      %v1233 = vshrl.u32 %v1231, 16
      %v1235 = vshll.u32 %v1231, 16
      %v1237 = vrot.slane %v1235, 1
      %v1238 = vor.u32 %v1233, %v1237
      %v1247 = vunpack.c.l.b16 %v1221
      %v1248 = vunpack.c.l.b16 %v1222
      %v1249 = vunpack.c.l.b16 %v1223
      %v1250 = vunpack.c.l.b16 %v1224
      %v1251 = vunpack.c.l.b16 %v1225
      %v1252 = vunpack.c.l.b16 %v1226
      %v1253 = vunpack.c.l.b16 %v1227
      %v1254 = vunpack.c.l.b16 %v1228
      %v1255 = vpack.c.b16 %v1248, %v1247
      %v1256 = vpack.c.b16 %v1250, %v1249
      %v1257 = vpack.c.b16 %v1252, %v1251
      %v1258 = vpack.c.b16 %v1254, %v1253
      %v1264 = vsel %vm252, %v1238, 0
      %1266 = vmatprep.subr.bf16.mxu0 0
      %1267 = vmatpush1.bf16.msra.mxu0 %v1255
      %1268 = vmatprep.subr.bf16.mxu0 0
      %1269 = vmatpush1.bf16.msra.mxu0 %v1256
      %1270 = vmatprep.subr.bf16.mxu0 0
      %1271 = vmatpush1.bf16.msra.mxu0 %v1257
      %1272 = vmatprep.subr.bf16.mxu0 0
      %1273 = vmatpush1.bf16.msra.mxu0 %v1258
      %1274 = vmatprep.subr.bf16.mxu0 0
      %1275 = vmatpush1.bf16.msra.mxu0 0
      %1276 = vmatprep.subr.bf16.mxu0 0
      %1277 = vmatpush1.bf16.msra.mxu0 0
      %1278 = vmatprep.subr.bf16.mxu0 0
      %1279 = vmatpush1.bf16.msra.mxu0 0
      %1280 = vmatprep.subr.bf16.mxu0 0
      %1281 = vmatpush1.bf16.msra.mxu0 0
      %1282 = vmatprep.subr.bf16.mxu0 0
      %1283 = vmatpush1.bf16.msra.mxu0 0
      %1284 = vmatprep.subr.bf16.mxu0 0
      %1285 = vmatpush1.bf16.msra.mxu0 0
      %1286 = vmatprep.subr.bf16.mxu0 0
      %1287 = vmatpush1.bf16.msra.mxu0 0
      %1288 = vmatprep.subr.bf16.mxu0 0
      %1289 = vmatpush1.bf16.msra.mxu0 0
      %1290 = vmatprep.subr.bf16.mxu0 0
      %1291 = vmatpush1.bf16.msra.mxu0 0
      %1292 = vmatprep.subr.bf16.mxu0 0
      %1293 = vmatpush1.bf16.msra.mxu0 0
      %1294 = vmatprep.subr.bf16.mxu0 0
      %1295 = vmatpush1.bf16.msra.mxu0 0
      %1296 = vmatprep.subr.bf16.mxu0 0
      %1297 = vmatpush1.bf16.msra.mxu0 0
      %1298 = vmatprep.mubr.bf16.mxu0 0
      %1299 = vmatmul.mubr.bf16.gmra.mrb[0].mxu0 %v1264
      %v1300 = vpop.f32.mrb[0].mxu0
      %v1301 = vadd.f32 0.0, %v1300
      %v1302 = vpop.f32.mrb[0].mxu0
      %v1303 = vpop.f32.mrb[0].mxu0
      %v1304 = vpop.f32.mrb[0].mxu0
      %1305 = vdwg.mxu0
      %v1314 = vunpack.c.l.b16 %v1212
      %v1315 = vunpack.c.l.b16 %v1213
      %v1316 = vunpack.c.l.b16 %v1214
      %v1317 = vunpack.c.l.b16 %v1215
      %v1318 = vunpack.c.l.b16 %v1216
      %v1319 = vunpack.c.l.b16 %v1217
      %v1320 = vunpack.c.l.b16 %v1218
      %v1321 = vunpack.c.l.b16 %v1219
      %v1322 = vpack.c.b16 %v1315, %v1314
      %v1323 = vpack.c.b16 %v1317, %v1316
      %v1324 = vpack.c.b16 %v1319, %v1318
      %v1325 = vpack.c.b16 %v1321, %v1320
      %v1331 = vsel %vm252, %v1211, 0
      %1333 = vmatprep.subr.bf16.mxu0 0
      %1334 = vmatpush1.bf16.msra.mxu0 %v1322
      %1335 = vmatprep.subr.bf16.mxu0 0
      %1336 = vmatpush1.bf16.msra.mxu0 %v1323
      %1337 = vmatprep.subr.bf16.mxu0 0
      %1338 = vmatpush1.bf16.msra.mxu0 %v1324
      %1339 = vmatprep.subr.bf16.mxu0 0
      %1340 = vmatpush1.bf16.msra.mxu0 %v1325
      %1341 = vmatprep.subr.bf16.mxu0 0
      %1342 = vmatpush1.bf16.msra.mxu0 0
      %1343 = vmatprep.subr.bf16.mxu0 0
      %1344 = vmatpush1.bf16.msra.mxu0 0
      %1345 = vmatprep.subr.bf16.mxu0 0
      %1346 = vmatpush1.bf16.msra.mxu0 0
      %1347 = vmatprep.subr.bf16.mxu0 0
      %1348 = vmatpush1.bf16.msra.mxu0 0
      %1349 = vmatprep.subr.bf16.mxu0 0
      %1350 = vmatpush1.bf16.msra.mxu0 0
      %1351 = vmatprep.subr.bf16.mxu0 0
      %1352 = vmatpush1.bf16.msra.mxu0 0
      %1353 = vmatprep.subr.bf16.mxu0 0
      %1354 = vmatpush1.bf16.msra.mxu0 0
      %1355 = vmatprep.subr.bf16.mxu0 0
      %1356 = vmatpush1.bf16.msra.mxu0 0
      %1357 = vmatprep.subr.bf16.mxu0 0
      %1358 = vmatpush1.bf16.msra.mxu0 0
      %1359 = vmatprep.subr.bf16.mxu0 0
      %1360 = vmatpush1.bf16.msra.mxu0 0
      %1361 = vmatprep.subr.bf16.mxu0 0
      %1362 = vmatpush1.bf16.msra.mxu0 0
      %1363 = vmatprep.subr.bf16.mxu0 0
      %1364 = vmatpush1.bf16.msra.mxu0 0
      %1365 = vmatprep.mubr.bf16.mxu0 0
      %1366 = vmatmul.mubr.bf16.gmra.mrb[0].mxu0 %v1331
      %v1367 = vpop.f32.mrb[0].mxu0
      %v1368 = vadd.f32 %v1301, %v1367
      %v1369 = vpop.f32.mrb[0].mxu0
      %v1370 = vpop.f32.mrb[0].mxu0
      %v1371 = vpop.f32.mrb[0].mxu0
      %1372 = vdwg.mxu0
      %s1373 = sadd.s32 %s195, 4
      %s1374 = smul.addr %s1373, 4
      %s1375 = scalar_lea.vmem %s183, %s1374
      %v1376 = vld [vmem:[%s1375] sm:$0x3]
      %v1377 = vld [vmem:[%s367] sm:$0xf]
      %v1378 = vld [vmem:[%s367 + $0x4] sm:$0xf]
      %v1379 = vld [vmem:[%s367 + $0x8] sm:$0xf]
      %v1380 = vld [vmem:[%s367 + $0xc] sm:$0xf]
      %v1381 = vld [vmem:[%s367 + $0x10] sm:$0xf]
      %v1382 = vld [vmem:[%s367 + $0x14] sm:$0xf]
      %v1383 = vld [vmem:[%s367 + $0x18] sm:$0xf]
      %v1384 = vld [vmem:[%s367 + $0x1c] sm:$0xf]
      %v1393 = vunpack.c.l.b16 %v1377
      %v1394 = vunpack.c.l.b16 %v1378
      %v1395 = vunpack.c.l.b16 %v1379
      %v1396 = vunpack.c.l.b16 %v1380
      %v1397 = vunpack.c.l.b16 %v1381
      %v1398 = vunpack.c.l.b16 %v1382
      %v1399 = vunpack.c.l.b16 %v1383
      %v1400 = vunpack.c.l.b16 %v1384
      %v1401 = vpack.c.b16 %v1394, %v1393
      %v1402 = vpack.c.b16 %v1396, %v1395
      %v1403 = vpack.c.b16 %v1398, %v1397
      %v1404 = vpack.c.b16 %v1400, %v1399
      %v1410 = vsel %vm252, %v1376, 0
      %1412 = vmatprep.subr.bf16.mxu0 0
      %1413 = vmatpush1.bf16.msra.mxu0 %v1401
      %1414 = vmatprep.subr.bf16.mxu0 0
      %1415 = vmatpush1.bf16.msra.mxu0 %v1402
      %1416 = vmatprep.subr.bf16.mxu0 0
      %1417 = vmatpush1.bf16.msra.mxu0 %v1403
      %1418 = vmatprep.subr.bf16.mxu0 0
      %1419 = vmatpush1.bf16.msra.mxu0 %v1404
      %1420 = vmatprep.subr.bf16.mxu0 0
      %1421 = vmatpush1.bf16.msra.mxu0 0
      %1422 = vmatprep.subr.bf16.mxu0 0
      %1423 = vmatpush1.bf16.msra.mxu0 0
      %1424 = vmatprep.subr.bf16.mxu0 0
      %1425 = vmatpush1.bf16.msra.mxu0 0
      %1426 = vmatprep.subr.bf16.mxu0 0
      %1427 = vmatpush1.bf16.msra.mxu0 0
      %1428 = vmatprep.subr.bf16.mxu0 0
      %1429 = vmatpush1.bf16.msra.mxu0 0
      %1430 = vmatprep.subr.bf16.mxu0 0
      %1431 = vmatpush1.bf16.msra.mxu0 0
      %1432 = vmatprep.subr.bf16.mxu0 0
      %1433 = vmatpush1.bf16.msra.mxu0 0
      %1434 = vmatprep.subr.bf16.mxu0 0
      %1435 = vmatpush1.bf16.msra.mxu0 0
      %1436 = vmatprep.subr.bf16.mxu0 0
      %1437 = vmatpush1.bf16.msra.mxu0 0
      %1438 = vmatprep.subr.bf16.mxu0 0
      %1439 = vmatpush1.bf16.msra.mxu0 0
      %1440 = vmatprep.subr.bf16.mxu0 0
      %1441 = vmatpush1.bf16.msra.mxu0 0
      %1442 = vmatprep.subr.bf16.mxu0 0
      %1443 = vmatpush1.bf16.msra.mxu0 0
      %1444 = vmatprep.mubr.bf16.mxu0 0
      %1445 = vmatmul.mubr.bf16.gmra.mrb[0].mxu0 %v1410
      %v1446 = vpop.f32.mrb[0].mxu0
      %v1447 = vadd.f32 0.0, %v1446
      %v1448 = vpop.f32.mrb[0].mxu0
      %v1449 = vpop.f32.mrb[0].mxu0
      %v1450 = vpop.f32.mrb[0].mxu0
      %1451 = vdwg.mxu0
      %v1452 = vadd.f32 %v1368, %v1447
      %v1453 = vld [vmem:[%s1375] sm:$0x7]
      %v1454 = vld [vmem:[%s445] sm:$0xf]
      %v1455 = vld [vmem:[%s445 + $0x4] sm:$0xf]
      %v1456 = vld [vmem:[%s445 + $0x8] sm:$0xf]
      %v1457 = vld [vmem:[%s445 + $0xc] sm:$0xf]
      %v1458 = vld [vmem:[%s445 + $0x10] sm:$0xf]
      %v1459 = vld [vmem:[%s445 + $0x14] sm:$0xf]
      %v1460 = vld [vmem:[%s445 + $0x18] sm:$0xf]
      %v1461 = vld [vmem:[%s445 + $0x1c] sm:$0xf]
      %v1463 = vunpack.c.l.b16 %v1453
      %v1464 = vpack.c.b16 %v1463, %v1463
      %v1466 = vshrl.u32 %v1464, 16
      %v1468 = vshll.u32 %v1464, 16
      %v1470 = vrot.slane %v1468, 1
      %v1471 = vor.u32 %v1466, %v1470
      %v1480 = vunpack.c.l.b16 %v1454
      %v1481 = vunpack.c.l.b16 %v1455
      %v1482 = vunpack.c.l.b16 %v1456
      %v1483 = vunpack.c.l.b16 %v1457
      %v1484 = vunpack.c.l.b16 %v1458
      %v1485 = vunpack.c.l.b16 %v1459
      %v1486 = vunpack.c.l.b16 %v1460
      %v1487 = vunpack.c.l.b16 %v1461
      %v1488 = vpack.c.b16 %v1481, %v1480
      %v1489 = vpack.c.b16 %v1483, %v1482
      %v1490 = vpack.c.b16 %v1485, %v1484
      %v1491 = vpack.c.b16 %v1487, %v1486
      %v1497 = vsel %vm252, %v1471, 0
      %1499 = vmatprep.subr.bf16.mxu0 0
      %1500 = vmatpush1.bf16.msra.mxu0 %v1488
      %1501 = vmatprep.subr.bf16.mxu0 0
      %1502 = vmatpush1.bf16.msra.mxu0 %v1489
      %1503 = vmatprep.subr.bf16.mxu0 0
      %1504 = vmatpush1.bf16.msra.mxu0 %v1490
      %1505 = vmatprep.subr.bf16.mxu0 0
      %1506 = vmatpush1.bf16.msra.mxu0 %v1491
      %1507 = vmatprep.subr.bf16.mxu0 0
      %1508 = vmatpush1.bf16.msra.mxu0 0
      %1509 = vmatprep.subr.bf16.mxu0 0
      %1510 = vmatpush1.bf16.msra.mxu0 0
      %1511 = vmatprep.subr.bf16.mxu0 0
      %1512 = vmatpush1.bf16.msra.mxu0 0
      %1513 = vmatprep.subr.bf16.mxu0 0
      %1514 = vmatpush1.bf16.msra.mxu0 0
      %1515 = vmatprep.subr.bf16.mxu0 0
      %1516 = vmatpush1.bf16.msra.mxu0 0
      %1517 = vmatprep.subr.bf16.mxu0 0
      %1518 = vmatpush1.bf16.msra.mxu0 0
      %1519 = vmatprep.subr.bf16.mxu0 0
      %1520 = vmatpush1.bf16.msra.mxu0 0
      %1521 = vmatprep.subr.bf16.mxu0 0
      %1522 = vmatpush1.bf16.msra.mxu0 0
      %1523 = vmatprep.subr.bf16.mxu0 0
      %1524 = vmatpush1.bf16.msra.mxu0 0
      %1525 = vmatprep.subr.bf16.mxu0 0
      %1526 = vmatpush1.bf16.msra.mxu0 0
      %1527 = vmatprep.subr.bf16.mxu0 0
      %1528 = vmatpush1.bf16.msra.mxu0 0
      %1529 = vmatprep.subr.bf16.mxu0 0
      %1530 = vmatpush1.bf16.msra.mxu0 0
      %1531 = vmatprep.mubr.bf16.mxu0 0
      %1532 = vmatmul.mubr.bf16.gmra.mrb[0].mxu0 %v1497
      %v1533 = vpop.f32.mrb[0].mxu0
      %v1534 = vadd.f32 0.0, %v1533
      %v1535 = vpop.f32.mrb[0].mxu0
      %v1536 = vpop.f32.mrb[0].mxu0
      %v1537 = vpop.f32.mrb[0].mxu0
      %1538 = vdwg.mxu0
      %v1539 = vadd.f32 %v1452, %v1534
      %v1540 = vadd.f32 %v1539, %v536
      %v1541 = vmax.f32 %v1540, 0.0
      %v1542 = vpack.c.bf16 %v1541, %v1541
      %s1543 = scalar_lea.vmem %s192, 6
      %1544 = vst.msk [vmem:[%s1543] sm:$0x3] %vm541, %v1542
      %s1545 = smul.u32 4, %s19
      %p1546 = scmp.lt.s32.totalorder %s18, 1
      %s1547 = scalar_select %p1546, %s18, 1
      %p1548 = scmp.lt.s32.totalorder %s1545, 3
      %s1549 = scalar_select %p1548, %s1545, 3
      %s1550 = smul.addr %s1547, 4
      %s1551 = sadd.s32 %s1549, %s1550
      %s1552 = smul.addr %s1551, 2
      %s1553 = scalar_lea.vmem %s3, %s1552
      // Predicated region
      $region33: #{_lambda_.5} parent=31 // pred_check
        %p1554 = pneg %p114
      $region34: #{_lambda_.5} parent=31 // pred_check_branch
        %1556 = sbr.rel (%p1554) target = $region36
      $region35: #{_lambda_.5} parent=31 // pred_region
        %s1557 = smul.u32 4, %s19
      $region36: #{_lambda_.5} parent=31 // pred_fallthru
        _
    $region32: #{_lambda_.5} parent=5 // pred_fallthru
      _
    %p1558 = scmp.le.s32.totalorder 2, %s9
    // Predicated region
    $region37: #{_lambda_.5} parent=5 // pred_check
      %p1559 = pneg %p1558
    $region38: #{_lambda_.5} parent=5 // pred_check_branch
      %1561 = sbr.rel (%p1559) target = $region40
    $region39: #{_lambda_.5} parent=5 // pred_region
      %s1562 = ssub.s32 %s9, 2
      // Predicated region
      $region41: #{_lambda_.5} parent=39 // pred_check
        %p1563 = pneg %p120
      $region42: #{_lambda_.5} parent=39 // pred_check_branch
        %1565 = sbr.rel (%p1563) target = $region44
      $region43: #{_lambda_.5} parent=39 // pred_region
        %s1566 = smul.u32 4, %s21
        %p1567 = scmp.lt.s32.totalorder %s20, 1
        %s1568 = scalar_select %p1567, %s20, 1
        %p1569 = scmp.lt.s32.totalorder %s1566, 3
        %s1570 = scalar_select %p1569, %s1566, 3
        %s1571 = smul.addr %s1568, 4
        %s1572 = sadd.s32 %s1570, %s1571
        %s1573 = smul.addr %s1572, 2
        %s1574 = scalar_lea.vmem %s3, %s1573
      $region44: #{_lambda_.5} parent=39 // pred_fallthru
        _
    $region40: #{_lambda_.5} parent=5 // pred_fallthru
      _
  $region6: #{_lambda_.5} parent=0 // loop_footer
    %s13 = sadd.s32 1, %s9
  $region7: #{_lambda_.5} parent=0 // loop_footer_branch
    %8 = sbr.rel target = $region3
  $region8: #{_lambda_.5} parent=0 // loop_exit
    _

// kernel: _lambda_.6
$region0: #{_lambda_.6}
  #allocation0 [shape = 'u32[]', space=smem, size = 0x4, offset = 0x4, fixed_abs, tag = 'smem constant byte address 0x4 - core index']
  #allocation1 [shape = 'u32[144,128]{1,0:T(1,128)}', space=vmem, size = 0x12000, scoped, tag = 'internal scratch']
  %s0 = inlined_call_operand.vmem [shape: bf16[2,3,3,128], index: 0, kind: input, shape index: {}]
  %s1 = inlined_call_operand.vmem [shape: bf16[4,128,64], index: 1, kind: input, shape index: {}]
  %s2 = inlined_call_operand.vmem [shape: f32[1,64], index: 2, kind: input, shape index: {}]
  %s3 = inlined_call_operand.vmem [shape: bf16[2,2,2,64], index: 3, kind: output, shape index: {}]
  %s4 = sld [smem:[#allocation0]]
  $region45: #{_lambda_.6} parent=0
    _
  %s6 = ssub.s32 1, %s4
  %s7 = scalar_select 0, %s6, %s4
  loop: start=0, step=1, limit=4
  $region2: #{_lambda_.6} parent=0 // loop_pre_header
    _
  $region3: #{_lambda_.6} parent=0 // loop_header
    %s9 = sphi 0, %s13
    %p10 = scmp.ge.s32.totalorder %s9, 4
    %s16 = sphi 0, %s28
    %s17 = sphi 0, %s24
    %s18 = sphi 0, %s16
    %s19 = sphi 0, %s17
    %s20 = sphi 0, %s18
    %s21 = sphi 0, %s19
    %s31 = sphi 0, %s33
    %s34 = sphi 0, %s31
    %s35 = sphi 0, %s34
    %s51 = sphi 0, %s35
    %s55 = sphi 0, %s55
    %s57 = sphi 0, %s55
    %s58 = sphi 0, %s57
    %s72 = sphi 0, %s58
    %s76 = sphi 0, %s76
    %s78 = sphi 0, %s76
    %s79 = sphi 0, %s78
    %s93 = sphi 0, %s79
    %s101 = sphi 0, %s103
    %s104 = sphi 0, %s101
    %s105 = sphi 0, %s104
    %s121 = sphi 0, %s105
  $region4: #{_lambda_.6} parent=0 // loop_header_branch
    %12 = sbr.rel (%p10) target = $region8
  $region5: #{_lambda_.6} parent=0 // loop_body
    %s14 = ssub.s32 %s9, 1
    %s15 = ssub.s32 %s9, 2
    %s22 = sadd.s32 1, %s17
    %p23 = scmp.ge.s32.totalorder %s22, 1
    %s24 = scalar_select %p23, 0, %s22
    %s25 = sadd.s32 1, %s16
    %s26 = scalar_select %p23, %s25, %s16
    %p27 = scmp.ge.s32.totalorder %s26, 2
    %s28 = scalar_select %p27, 0, %s26
    %s29 = ssub.s32 %s16, %s28
    %p30 = scmp.eq.s32.totalorder %s29, 0
    %s32 = sadd.s32 %s31, 1
    %s33 = scalar_select %p30, %s31, %s32
    %p36 = pneg %p30
    %p37 = scmp.eq.s32.totalorder %s9, 1
    %p38 = por %p36, %p37
    %p39 = scmp.ne.s32.totalorder %s31, %s34
    %p40 = scmp.eq.s32.totalorder %s9, 0
    %p41 = por %p39, %p40
    %p42 = scmp.ne.s32.totalorder %s31, %s34
    %p43 = scmp.eq.s32.totalorder %s14, 1
    %p44 = por %p42, %p43
    %p45 = scmp.ne.s32.totalorder %s34, %s35
    %p46 = scmp.eq.s32.totalorder %s14, 0
    %p47 = por %p45, %p46
    %p48 = scmp.ne.s32.totalorder %s34, %s35
    %p49 = scmp.eq.s32.totalorder %s15, 1
    %p50 = por %p48, %p49
    %p52 = scmp.ne.s32.totalorder %s35, %s51
    %p53 = scmp.eq.s32.totalorder %s15, 0
    %p54 = por %p52, %p53
    %s56 = sadd.s32 %s55, 1
    %p59 = scmp.eq.s32.totalorder %s9, 1
    %p60 = scmp.ne.s32.totalorder %s55, %s57
    %p61 = scmp.eq.s32.totalorder %s9, 0
    %p62 = por %p60, %p61
    %p63 = scmp.ne.s32.totalorder %s55, %s57
    %p64 = scmp.eq.s32.totalorder %s14, 1
    %p65 = por %p63, %p64
    %p66 = scmp.ne.s32.totalorder %s57, %s58
    %p67 = scmp.eq.s32.totalorder %s14, 0
    %p68 = por %p66, %p67
    %p69 = scmp.ne.s32.totalorder %s57, %s58
    %p70 = scmp.eq.s32.totalorder %s15, 1
    %p71 = por %p69, %p70
    %p73 = scmp.ne.s32.totalorder %s58, %s72
    %p74 = scmp.eq.s32.totalorder %s15, 0
    %p75 = por %p73, %p74
    %s77 = sadd.s32 %s76, 1
    %p80 = scmp.eq.s32.totalorder %s9, 1
    %p81 = scmp.ne.s32.totalorder %s76, %s78
    %p82 = scmp.eq.s32.totalorder %s9, 0
    %p83 = por %p81, %p82
    %p84 = scmp.ne.s32.totalorder %s76, %s78
    %p85 = scmp.eq.s32.totalorder %s14, 1
    %p86 = por %p84, %p85
    %p87 = scmp.ne.s32.totalorder %s78, %s79
    %p88 = scmp.eq.s32.totalorder %s14, 0
    %p89 = por %p87, %p88
    %p90 = scmp.ne.s32.totalorder %s78, %s79
    %p91 = scmp.eq.s32.totalorder %s15, 1
    %p92 = por %p90, %p91
    %p94 = scmp.ne.s32.totalorder %s79, %s93
    %p95 = scmp.eq.s32.totalorder %s15, 0
    %p96 = por %p94, %p95
    %s97 = ssub.s32 %s16, %s28
    %s98 = ssub.s32 %s17, %s24
    %s99 = sor.u32 %s97, %s98
    %p100 = scmp.eq.s32.totalorder %s99, 0
    %s102 = sadd.s32 %s101, 1
    %s103 = scalar_select %p100, %s101, %s102
    %p106 = pneg %p100
    %p107 = scmp.eq.s32.totalorder %s9, 1
    %p108 = por %p106, %p107
    %p109 = scmp.ne.s32.totalorder %s101, %s104
    %p110 = scmp.eq.s32.totalorder %s9, 0
    %p111 = por %p109, %p110
    %p112 = scmp.ne.s32.totalorder %s101, %s104
    %p113 = scmp.eq.s32.totalorder %s14, 1
    %p114 = por %p112, %p113
    %p115 = scmp.ne.s32.totalorder %s104, %s105
    %p116 = scmp.eq.s32.totalorder %s14, 0
    %p117 = por %p115, %p116
    %p118 = scmp.ne.s32.totalorder %s104, %s105
    %p119 = scmp.eq.s32.totalorder %s15, 1
    %p120 = por %p118, %p119
    %p122 = scmp.ne.s32.totalorder %s105, %s121
    %p123 = scmp.eq.s32.totalorder %s15, 0
    %p124 = por %p122, %p123
    %p125 = scmp.le.s32.totalorder 1, %s9
    %p126 = scmp.lt.s32.totalorder %s9, 3
    %p127 = pnand %p125, %p126
    %p128 = pneg %p127
    // Predicated region
    $region9: #{_lambda_.6} parent=5 // pred_check
      _
    $region10: #{_lambda_.6} parent=5 // pred_check_branch
      %130 = sbr.rel (%p127) target = $region12
    $region11: #{_lambda_.6} parent=5 // pred_region
      %s131 = ssub.s32 %s9, 1
      // Predicated region
      $region13: #{_lambda_.6} parent=11 // pred_check
        %p132 = pneg %p68
      $region14: #{_lambda_.6} parent=11 // pred_check_branch
        %134 = sbr.rel (%p132) target = $region16
      $region15: #{_lambda_.6} parent=11 // pred_region
        _
      $region16: #{_lambda_.6} parent=11 // pred_fallthru
        _
      // Predicated region
      $region17: #{_lambda_.6} parent=11 // pred_check
        %p135 = pneg %p89
      $region18: #{_lambda_.6} parent=11 // pred_check_branch
        %137 = sbr.rel (%p135) target = $region20
      $region19: #{_lambda_.6} parent=11 // pred_region
        _
      $region20: #{_lambda_.6} parent=11 // pred_fallthru
        _
    $region12: #{_lambda_.6} parent=5 // pred_fallthru
      _
    %p138 = scmp.lt.s32.totalorder %s9, 2
    // Predicated region
    $region21: #{_lambda_.6} parent=5 // pred_check
      %p139 = pneg %p138
    $region22: #{_lambda_.6} parent=5 // pred_check_branch
      %141 = sbr.rel (%p139) target = $region24
    $region23: #{_lambda_.6} parent=5 // pred_region
      // Predicated region
      $region25: #{_lambda_.6} parent=23 // pred_check
        %p142 = pneg %p41
      $region26: #{_lambda_.6} parent=23 // pred_check_branch
        %144 = sbr.rel (%p142) target = $region28
      $region27: #{_lambda_.6} parent=23 // pred_region
        %p145 = scmp.lt.s32.totalorder %s16, 1
        %s146 = scalar_select %p145, %s16, 1
        %s147 = smul.addr %s146, 3
        %s148 = smul.addr %s147, 2
        %s149 = scalar_lea.vmem %s0, %s148
      $region28: #{_lambda_.6} parent=23 // pred_fallthru
        _
    $region24: #{_lambda_.6} parent=5 // pred_fallthru
      _
    %p150 = scmp.le.s32.totalorder 1, %s9
    %p151 = scmp.lt.s32.totalorder %s9, 3
    %p152 = pnand %p150, %p151
    %p153 = pneg %p152
    // Predicated region
    $region29: #{_lambda_.6} parent=5 // pred_check
      _
    $region30: #{_lambda_.6} parent=5 // pred_check_branch
      %155 = sbr.rel (%p152) target = $region32
    $region31: #{_lambda_.6} parent=5 // pred_region
      %s156 = ssub.s32 %s9, 1
      %p157 = scmp.lt.s32.totalorder %s18, 1
      %s158 = scalar_select %p157, %s18, 1
      %s159 = smul.addr %s158, 3
      %s160 = smul.addr %s159, 2
      %s161 = scalar_lea.vmem %s0, %s160
      %p162 = pneg %p47
      %p163 = pneg %p44
      %p164 = pneg %p68
      %p165 = pneg %p65
      %p166 = pneg %p89
      %p167 = pneg %p86
      %p168 = pneg %p117
      %p169 = pneg %p114
      %s170 = smul.u32 2, %s19
      %p171 = scmp.lt.s32.totalorder %s18, 1
      %s172 = scalar_select %p171, %s18, 1
      %p173 = scmp.lt.s32.totalorder %s170, 1
      %s174 = scalar_select %p173, %s170, 1
      %s175 = smul.addr %s172, 2
      %s176 = sadd.s32 %s174, %s175
      %s177 = scalar_lea.vmem %s3, %s176
      %p178 = scmp.lt.s32.totalorder %s18, 1
      %s179 = scalar_select %p178, %s18, 1
      %s180 = smul.addr %s179, 3
      %s181 = smul.addr %s180, 2
      %s182 = scalar_lea.vmem %s0, %s181
      %s183 = smul.u32 2, %s19
      %p184 = scmp.lt.s32.totalorder %s18, 1
      %s185 = scalar_select %p184, %s18, 1
      %p186 = scmp.lt.s32.totalorder %s183, 1
      %s187 = scalar_select %p186, %s183, 1
      %s188 = smul.addr %s185, 2
      %s189 = sadd.s32 %s187, %s188
      %s190 = scalar_lea.vmem %s3, %s189
      %s191 = smul.u32 2, %s19
      %s193 = smul.u32 %s19, 2
      %v194 = vld [vmem:[%s2] sm:$0x1]
      %s195 = smul.addr %s193, 2
      %s196 = scalar_lea.vmem %s182, %s195
      %v197 = vld [vmem:[%s196] sm:$0x1]
      %v198 = vld [vmem:[%s1] sm:$0xf]
      %v199 = vld [vmem:[%s1 + $0x4] sm:$0xf]
      %v200 = vld [vmem:[%s1 + $0x8] sm:$0xf]
      %v201 = vld [vmem:[%s1 + $0xc] sm:$0xf]
      %v202 = vld [vmem:[%s1 + $0x10] sm:$0xf]
      %v203 = vld [vmem:[%s1 + $0x14] sm:$0xf]
      %v204 = vld [vmem:[%s1 + $0x18] sm:$0xf]
      %v205 = vld [vmem:[%s1 + $0x1c] sm:$0xf]
      %v206 = vld [vmem:[%s1 + $0x20] sm:$0xf]
      %v207 = vld [vmem:[%s1 + $0x24] sm:$0xf]
      %v208 = vld [vmem:[%s1 + $0x28] sm:$0xf]
      %v209 = vld [vmem:[%s1 + $0x2c] sm:$0xf]
      %v210 = vld [vmem:[%s1 + $0x30] sm:$0xf]
      %v211 = vld [vmem:[%s1 + $0x34] sm:$0xf]
      %v212 = vld [vmem:[%s1 + $0x38] sm:$0xf]
      %v213 = vld [vmem:[%s1 + $0x3c] sm:$0xf]
      %v214 = vld [vmem:[%s196] sm:$0x3]
      %s215 = scalar_lea.vmem %s1, 64
      %v216 = vld [vmem:[%s215] sm:$0xf]
      %v217 = vld [vmem:[%s215 + $0x4] sm:$0xf]
      %v218 = vld [vmem:[%s215 + $0x8] sm:$0xf]
      %v219 = vld [vmem:[%s215 + $0xc] sm:$0xf]
      %v220 = vld [vmem:[%s215 + $0x10] sm:$0xf]
      %v221 = vld [vmem:[%s215 + $0x14] sm:$0xf]
      %v222 = vld [vmem:[%s215 + $0x18] sm:$0xf]
      %v223 = vld [vmem:[%s215 + $0x1c] sm:$0xf]
      %v224 = vld [vmem:[%s215 + $0x20] sm:$0xf]
      %v225 = vld [vmem:[%s215 + $0x24] sm:$0xf]
      %v226 = vld [vmem:[%s215 + $0x28] sm:$0xf]
      %v227 = vld [vmem:[%s215 + $0x2c] sm:$0xf]
      %v228 = vld [vmem:[%s215 + $0x30] sm:$0xf]
      %v229 = vld [vmem:[%s215 + $0x34] sm:$0xf]
      %v230 = vld [vmem:[%s215 + $0x38] sm:$0xf]
      %v231 = vld [vmem:[%s215 + $0x3c] sm:$0xf]
      %v234 = vunpack.c.l.s4 1983009808
      %v235 = vunpack.c.0.s8 %v234
      %v236 = vlaneseq
      %v237 = vshrl.u32 %v236, 7
      %v238 = vsub.s32 %v235, %v237
      %v239 = vrot.slane %v214, %v238
      %v241 = vshrl.u32 %v239, 16
      %v243 = vshll.u32 %v239, 16
      %v245 = vrot.slane %v243, 1
      %v246 = vor.u32 %v241, %v245
      %v264 = vunpack.c.l.b16 %v216
      %v265 = vunpack.c.l.b16 %v217
      %v266 = vunpack.c.l.b16 %v218
      %v267 = vunpack.c.l.b16 %v219
      %v268 = vunpack.c.l.b16 %v220
      %v269 = vunpack.c.l.b16 %v221
      %v270 = vunpack.c.l.b16 %v222
      %v271 = vunpack.c.l.b16 %v223
      %v272 = vunpack.c.l.b16 %v224
      %v273 = vunpack.c.l.b16 %v225
      %v274 = vunpack.c.l.b16 %v226
      %v275 = vunpack.c.l.b16 %v227
      %v276 = vunpack.c.l.b16 %v228
      %v277 = vunpack.c.l.b16 %v229
      %v278 = vunpack.c.l.b16 %v230
      %v279 = vunpack.c.l.b16 %v231
      %v280 = vpack.c.b16 %v265, %v264
      %v281 = vpack.c.b16 %v267, %v266
      %v282 = vpack.c.b16 %v269, %v268
      %v283 = vpack.c.b16 %v271, %v270
      %v284 = vpack.c.b16 %v273, %v272
      %v285 = vpack.c.b16 %v275, %v274
      %v286 = vpack.c.b16 %v277, %v276
      %v287 = vpack.c.b16 %v279, %v278
      %296 = vmatprep.subr.bf16.mxu0 0
      %297 = vmatpush1.bf16.msra.mxu0 %v280
      %298 = vmatprep.subr.bf16.mxu0 0
      %299 = vmatpush1.bf16.msra.mxu0 %v281
      %300 = vmatprep.subr.bf16.mxu0 0
      %301 = vmatpush1.bf16.msra.mxu0 %v282
      %302 = vmatprep.subr.bf16.mxu0 0
      %303 = vmatpush1.bf16.msra.mxu0 %v283
      %304 = vmatprep.subr.bf16.mxu0 0
      %305 = vmatpush1.bf16.msra.mxu0 %v284
      %306 = vmatprep.subr.bf16.mxu0 0
      %307 = vmatpush1.bf16.msra.mxu0 %v285
      %308 = vmatprep.subr.bf16.mxu0 0
      %309 = vmatpush1.bf16.msra.mxu0 %v286
      %310 = vmatprep.subr.bf16.mxu0 0
      %311 = vmatpush1.bf16.msra.mxu0 %v287
      %312 = vmatprep.subr.bf16.mxu0 0
      %313 = vmatpush1.bf16.msra.mxu0 0
      %314 = vmatprep.subr.bf16.mxu0 0
      %315 = vmatpush1.bf16.msra.mxu0 0
      %316 = vmatprep.subr.bf16.mxu0 0
      %317 = vmatpush1.bf16.msra.mxu0 0
      %318 = vmatprep.subr.bf16.mxu0 0
      %319 = vmatpush1.bf16.msra.mxu0 0
      %320 = vmatprep.subr.bf16.mxu0 0
      %321 = vmatpush1.bf16.msra.mxu0 0
      %322 = vmatprep.subr.bf16.mxu0 0
      %323 = vmatpush1.bf16.msra.mxu0 0
      %324 = vmatprep.subr.bf16.mxu0 0
      %325 = vmatpush1.bf16.msra.mxu0 0
      %326 = vmatprep.subr.bf16.mxu0 0
      %327 = vmatpush1.bf16.msra.mxu0 0
      %328 = vmatprep.mubr.bf16.mxu0 0
      %329 = vmatmul.mubr.bf16.gmra.mrb[0].mxu0 %v246
      %v330 = vpop.f32.mrb[0].mxu0
      %v331 = vadd.f32 0.0, %v330
      %v332 = vpop.f32.mrb[0].mxu0
      %v333 = vpop.f32.mrb[0].mxu0
      %v334 = vpop.f32.mrb[0].mxu0
      %335 = vdwg.mxu0
      %v352 = vunpack.c.l.b16 %v198
      %v353 = vunpack.c.l.b16 %v199
      %v354 = vunpack.c.l.b16 %v200
      %v355 = vunpack.c.l.b16 %v201
      %v356 = vunpack.c.l.b16 %v202
      %v357 = vunpack.c.l.b16 %v203
      %v358 = vunpack.c.l.b16 %v204
      %v359 = vunpack.c.l.b16 %v205
      %v360 = vunpack.c.l.b16 %v206
      %v361 = vunpack.c.l.b16 %v207
      %v362 = vunpack.c.l.b16 %v208
      %v363 = vunpack.c.l.b16 %v209
      %v364 = vunpack.c.l.b16 %v210
      %v365 = vunpack.c.l.b16 %v211
      %v366 = vunpack.c.l.b16 %v212
      %v367 = vunpack.c.l.b16 %v213
      %v368 = vpack.c.b16 %v353, %v352
      %v369 = vpack.c.b16 %v355, %v354
      %v370 = vpack.c.b16 %v357, %v356
      %v371 = vpack.c.b16 %v359, %v358
      %v372 = vpack.c.b16 %v361, %v360
      %v373 = vpack.c.b16 %v363, %v362
      %v374 = vpack.c.b16 %v365, %v364
      %v375 = vpack.c.b16 %v367, %v366
      %384 = vmatprep.subr.bf16.mxu0 0
      %385 = vmatpush1.bf16.msra.mxu0 %v368
      %386 = vmatprep.subr.bf16.mxu0 0
      %387 = vmatpush1.bf16.msra.mxu0 %v369
      %388 = vmatprep.subr.bf16.mxu0 0
      %389 = vmatpush1.bf16.msra.mxu0 %v370
      %390 = vmatprep.subr.bf16.mxu0 0
      %391 = vmatpush1.bf16.msra.mxu0 %v371
      %392 = vmatprep.subr.bf16.mxu0 0
      %393 = vmatpush1.bf16.msra.mxu0 %v372
      %394 = vmatprep.subr.bf16.mxu0 0
      %395 = vmatpush1.bf16.msra.mxu0 %v373
      %396 = vmatprep.subr.bf16.mxu0 0
      %397 = vmatpush1.bf16.msra.mxu0 %v374
      %398 = vmatprep.subr.bf16.mxu0 0
      %399 = vmatpush1.bf16.msra.mxu0 %v375
      %400 = vmatprep.subr.bf16.mxu0 0
      %401 = vmatpush1.bf16.msra.mxu0 0
      %402 = vmatprep.subr.bf16.mxu0 0
      %403 = vmatpush1.bf16.msra.mxu0 0
      %404 = vmatprep.subr.bf16.mxu0 0
      %405 = vmatpush1.bf16.msra.mxu0 0
      %406 = vmatprep.subr.bf16.mxu0 0
      %407 = vmatpush1.bf16.msra.mxu0 0
      %408 = vmatprep.subr.bf16.mxu0 0
      %409 = vmatpush1.bf16.msra.mxu0 0
      %410 = vmatprep.subr.bf16.mxu0 0
      %411 = vmatpush1.bf16.msra.mxu0 0
      %412 = vmatprep.subr.bf16.mxu0 0
      %413 = vmatpush1.bf16.msra.mxu0 0
      %414 = vmatprep.subr.bf16.mxu0 0
      %415 = vmatpush1.bf16.msra.mxu0 0
      %416 = vmatprep.mubr.bf16.mxu0 0
      %417 = vmatmul.mubr.bf16.gmra.mrb[0].mxu0 %v197
      %v418 = vpop.f32.mrb[0].mxu0
      %v419 = vadd.f32 %v331, %v418
      %v420 = vpop.f32.mrb[0].mxu0
      %v421 = vpop.f32.mrb[0].mxu0
      %v422 = vpop.f32.mrb[0].mxu0
      %423 = vdwg.mxu0
      %s424 = sadd.s32 %s193, 1
      %s425 = smul.addr %s424, 2
      %s426 = scalar_lea.vmem %s182, %s425
      %v427 = vld [vmem:[%s426] sm:$0x1]
      %s428 = scalar_lea.vmem %s1, 128
      %v429 = vld [vmem:[%s428] sm:$0xf]
      %v430 = vld [vmem:[%s428 + $0x4] sm:$0xf]
      %v431 = vld [vmem:[%s428 + $0x8] sm:$0xf]
      %v432 = vld [vmem:[%s428 + $0xc] sm:$0xf]
      %v433 = vld [vmem:[%s428 + $0x10] sm:$0xf]
      %v434 = vld [vmem:[%s428 + $0x14] sm:$0xf]
      %v435 = vld [vmem:[%s428 + $0x18] sm:$0xf]
      %v436 = vld [vmem:[%s428 + $0x1c] sm:$0xf]
      %v437 = vld [vmem:[%s428 + $0x20] sm:$0xf]
      %v438 = vld [vmem:[%s428 + $0x24] sm:$0xf]
      %v439 = vld [vmem:[%s428 + $0x28] sm:$0xf]
      %v440 = vld [vmem:[%s428 + $0x2c] sm:$0xf]
      %v441 = vld [vmem:[%s428 + $0x30] sm:$0xf]
      %v442 = vld [vmem:[%s428 + $0x34] sm:$0xf]
      %v443 = vld [vmem:[%s428 + $0x38] sm:$0xf]
      %v444 = vld [vmem:[%s428 + $0x3c] sm:$0xf]
      %v461 = vunpack.c.l.b16 %v429
      %v462 = vunpack.c.l.b16 %v430
      %v463 = vunpack.c.l.b16 %v431
      %v464 = vunpack.c.l.b16 %v432
      %v465 = vunpack.c.l.b16 %v433
      %v466 = vunpack.c.l.b16 %v434
      %v467 = vunpack.c.l.b16 %v435
      %v468 = vunpack.c.l.b16 %v436
      %v469 = vunpack.c.l.b16 %v437
      %v470 = vunpack.c.l.b16 %v438
      %v471 = vunpack.c.l.b16 %v439
      %v472 = vunpack.c.l.b16 %v440
      %v473 = vunpack.c.l.b16 %v441
      %v474 = vunpack.c.l.b16 %v442
      %v475 = vunpack.c.l.b16 %v443
      %v476 = vunpack.c.l.b16 %v444
      %v477 = vpack.c.b16 %v462, %v461
      %v478 = vpack.c.b16 %v464, %v463
      %v479 = vpack.c.b16 %v466, %v465
      %v480 = vpack.c.b16 %v468, %v467
      %v481 = vpack.c.b16 %v470, %v469
      %v482 = vpack.c.b16 %v472, %v471
      %v483 = vpack.c.b16 %v474, %v473
      %v484 = vpack.c.b16 %v476, %v475
      %493 = vmatprep.subr.bf16.mxu0 0
      %494 = vmatpush1.bf16.msra.mxu0 %v477
      %495 = vmatprep.subr.bf16.mxu0 0
      %496 = vmatpush1.bf16.msra.mxu0 %v478
      %497 = vmatprep.subr.bf16.mxu0 0
      %498 = vmatpush1.bf16.msra.mxu0 %v479
      %499 = vmatprep.subr.bf16.mxu0 0
      %500 = vmatpush1.bf16.msra.mxu0 %v480
      %501 = vmatprep.subr.bf16.mxu0 0
      %502 = vmatpush1.bf16.msra.mxu0 %v481
      %503 = vmatprep.subr.bf16.mxu0 0
      %504 = vmatpush1.bf16.msra.mxu0 %v482
      %505 = vmatprep.subr.bf16.mxu0 0
      %506 = vmatpush1.bf16.msra.mxu0 %v483
      %507 = vmatprep.subr.bf16.mxu0 0
      %508 = vmatpush1.bf16.msra.mxu0 %v484
      %509 = vmatprep.subr.bf16.mxu0 0
      %510 = vmatpush1.bf16.msra.mxu0 0
      %511 = vmatprep.subr.bf16.mxu0 0
      %512 = vmatpush1.bf16.msra.mxu0 0
      %513 = vmatprep.subr.bf16.mxu0 0
      %514 = vmatpush1.bf16.msra.mxu0 0
      %515 = vmatprep.subr.bf16.mxu0 0
      %516 = vmatpush1.bf16.msra.mxu0 0
      %517 = vmatprep.subr.bf16.mxu0 0
      %518 = vmatpush1.bf16.msra.mxu0 0
      %519 = vmatprep.subr.bf16.mxu0 0
      %520 = vmatpush1.bf16.msra.mxu0 0
      %521 = vmatprep.subr.bf16.mxu0 0
      %522 = vmatpush1.bf16.msra.mxu0 0
      %523 = vmatprep.subr.bf16.mxu0 0
      %524 = vmatpush1.bf16.msra.mxu0 0
      %525 = vmatprep.mubr.bf16.mxu0 0
      %526 = vmatmul.mubr.bf16.gmra.mrb[0].mxu0 %v427
      %v527 = vpop.f32.mrb[0].mxu0
      %v528 = vadd.f32 0.0, %v527
      %v529 = vpop.f32.mrb[0].mxu0
      %v530 = vpop.f32.mrb[0].mxu0
      %v531 = vpop.f32.mrb[0].mxu0
      %532 = vdwg.mxu0
      %v533 = vadd.f32 %v419, %v528
      %v534 = vld [vmem:[%s426] sm:$0x3]
      %s535 = scalar_lea.vmem %s1, 192
      %v536 = vld [vmem:[%s535] sm:$0xf]
      %v537 = vld [vmem:[%s535 + $0x4] sm:$0xf]
      %v538 = vld [vmem:[%s535 + $0x8] sm:$0xf]
      %v539 = vld [vmem:[%s535 + $0xc] sm:$0xf]
      %v540 = vld [vmem:[%s535 + $0x10] sm:$0xf]
      %v541 = vld [vmem:[%s535 + $0x14] sm:$0xf]
      %v542 = vld [vmem:[%s535 + $0x18] sm:$0xf]
      %v543 = vld [vmem:[%s535 + $0x1c] sm:$0xf]
      %v544 = vld [vmem:[%s535 + $0x20] sm:$0xf]
      %v545 = vld [vmem:[%s535 + $0x24] sm:$0xf]
      %v546 = vld [vmem:[%s535 + $0x28] sm:$0xf]
      %v547 = vld [vmem:[%s535 + $0x2c] sm:$0xf]
      %v548 = vld [vmem:[%s535 + $0x30] sm:$0xf]
      %v549 = vld [vmem:[%s535 + $0x34] sm:$0xf]
      %v550 = vld [vmem:[%s535 + $0x38] sm:$0xf]
      %v551 = vld [vmem:[%s535 + $0x3c] sm:$0xf]
      %v554 = vunpack.c.l.s4 1983009808
      %v555 = vunpack.c.0.s8 %v554
      %v556 = vlaneseq
      %v557 = vshrl.u32 %v556, 7
      %v558 = vsub.s32 %v555, %v557
      %v559 = vrot.slane %v534, %v558
      %v561 = vshrl.u32 %v559, 16
      %v563 = vshll.u32 %v559, 16
      %v565 = vrot.slane %v563, 1
      %v566 = vor.u32 %v561, %v565
      %v584 = vunpack.c.l.b16 %v536
      %v585 = vunpack.c.l.b16 %v537
      %v586 = vunpack.c.l.b16 %v538
      %v587 = vunpack.c.l.b16 %v539
      %v588 = vunpack.c.l.b16 %v540
      %v589 = vunpack.c.l.b16 %v541
      %v590 = vunpack.c.l.b16 %v542
      %v591 = vunpack.c.l.b16 %v543
      %v592 = vunpack.c.l.b16 %v544
      %v593 = vunpack.c.l.b16 %v545
      %v594 = vunpack.c.l.b16 %v546
      %v595 = vunpack.c.l.b16 %v547
      %v596 = vunpack.c.l.b16 %v548
      %v597 = vunpack.c.l.b16 %v549
      %v598 = vunpack.c.l.b16 %v550
      %v599 = vunpack.c.l.b16 %v551
      %v600 = vpack.c.b16 %v585, %v584
      %v601 = vpack.c.b16 %v587, %v586
      %v602 = vpack.c.b16 %v589, %v588
      %v603 = vpack.c.b16 %v591, %v590
      %v604 = vpack.c.b16 %v593, %v592
      %v605 = vpack.c.b16 %v595, %v594
      %v606 = vpack.c.b16 %v597, %v596
      %v607 = vpack.c.b16 %v599, %v598
      %616 = vmatprep.subr.bf16.mxu0 0
      %617 = vmatpush1.bf16.msra.mxu0 %v600
      %618 = vmatprep.subr.bf16.mxu0 0
      %619 = vmatpush1.bf16.msra.mxu0 %v601
      %620 = vmatprep.subr.bf16.mxu0 0
      %621 = vmatpush1.bf16.msra.mxu0 %v602
      %622 = vmatprep.subr.bf16.mxu0 0
      %623 = vmatpush1.bf16.msra.mxu0 %v603
      %624 = vmatprep.subr.bf16.mxu0 0
      %625 = vmatpush1.bf16.msra.mxu0 %v604
      %626 = vmatprep.subr.bf16.mxu0 0
      %627 = vmatpush1.bf16.msra.mxu0 %v605
      %628 = vmatprep.subr.bf16.mxu0 0
      %629 = vmatpush1.bf16.msra.mxu0 %v606
      %630 = vmatprep.subr.bf16.mxu0 0
      %631 = vmatpush1.bf16.msra.mxu0 %v607
      %632 = vmatprep.subr.bf16.mxu0 0
      %633 = vmatpush1.bf16.msra.mxu0 0
      %634 = vmatprep.subr.bf16.mxu0 0
      %635 = vmatpush1.bf16.msra.mxu0 0
      %636 = vmatprep.subr.bf16.mxu0 0
      %637 = vmatpush1.bf16.msra.mxu0 0
      %638 = vmatprep.subr.bf16.mxu0 0
      %639 = vmatpush1.bf16.msra.mxu0 0
      %640 = vmatprep.subr.bf16.mxu0 0
      %641 = vmatpush1.bf16.msra.mxu0 0
      %642 = vmatprep.subr.bf16.mxu0 0
      %643 = vmatpush1.bf16.msra.mxu0 0
      %644 = vmatprep.subr.bf16.mxu0 0
      %645 = vmatpush1.bf16.msra.mxu0 0
      %646 = vmatprep.subr.bf16.mxu0 0
      %647 = vmatpush1.bf16.msra.mxu0 0
      %648 = vmatprep.mubr.bf16.mxu0 0
      %649 = vmatmul.mubr.bf16.gmra.mrb[0].mxu0 %v566
      %v650 = vpop.f32.mrb[0].mxu0
      %v651 = vadd.f32 0.0, %v650
      %v652 = vpop.f32.mrb[0].mxu0
      %v653 = vpop.f32.mrb[0].mxu0
      %v654 = vpop.f32.mrb[0].mxu0
      %655 = vdwg.mxu0
      %v656 = vadd.f32 %v533, %v651
      %v658 = vlaneseq
      %v659 = vshrl.u32 %v658, 7
      %v660 = vsub.s32 0, %v659
      %v661 = vrot.slane %v194, %v660
      %v663 = vadd.f32 %v656, %v661
      %v664 = vmax.f32 %v663, 0.0
      %v665 = vpack.c.bf16 %v664, %v664
      %vm666 = vcmask 516096
      %667 = vst.msk [vmem:[%s190] sm:$0x1] %vm666, %v665
      %v668 = vld [vmem:[%s426] sm:$0x1]
      %v669 = vld [vmem:[%s1] sm:$0xf]
      %v670 = vld [vmem:[%s1 + $0x4] sm:$0xf]
      %v671 = vld [vmem:[%s1 + $0x8] sm:$0xf]
      %v672 = vld [vmem:[%s1 + $0xc] sm:$0xf]
      %v673 = vld [vmem:[%s1 + $0x10] sm:$0xf]
      %v674 = vld [vmem:[%s1 + $0x14] sm:$0xf]
      %v675 = vld [vmem:[%s1 + $0x18] sm:$0xf]
      %v676 = vld [vmem:[%s1 + $0x1c] sm:$0xf]
      %v677 = vld [vmem:[%s1 + $0x20] sm:$0xf]
      %v678 = vld [vmem:[%s1 + $0x24] sm:$0xf]
      %v679 = vld [vmem:[%s1 + $0x28] sm:$0xf]
      %v680 = vld [vmem:[%s1 + $0x2c] sm:$0xf]
      %v681 = vld [vmem:[%s1 + $0x30] sm:$0xf]
      %v682 = vld [vmem:[%s1 + $0x34] sm:$0xf]
      %v683 = vld [vmem:[%s1 + $0x38] sm:$0xf]
      %v684 = vld [vmem:[%s1 + $0x3c] sm:$0xf]
      %v685 = vld [vmem:[%s426] sm:$0x3]
      %v686 = vld [vmem:[%s215] sm:$0xf]
      %v687 = vld [vmem:[%s215 + $0x4] sm:$0xf]
      %v688 = vld [vmem:[%s215 + $0x8] sm:$0xf]
      %v689 = vld [vmem:[%s215 + $0xc] sm:$0xf]
      %v690 = vld [vmem:[%s215 + $0x10] sm:$0xf]
      %v691 = vld [vmem:[%s215 + $0x14] sm:$0xf]
      %v692 = vld [vmem:[%s215 + $0x18] sm:$0xf]
      %v693 = vld [vmem:[%s215 + $0x1c] sm:$0xf]
      %v694 = vld [vmem:[%s215 + $0x20] sm:$0xf]
      %v695 = vld [vmem:[%s215 + $0x24] sm:$0xf]
      %v696 = vld [vmem:[%s215 + $0x28] sm:$0xf]
      %v697 = vld [vmem:[%s215 + $0x2c] sm:$0xf]
      %v698 = vld [vmem:[%s215 + $0x30] sm:$0xf]
      %v699 = vld [vmem:[%s215 + $0x34] sm:$0xf]
      %v700 = vld [vmem:[%s215 + $0x38] sm:$0xf]
      %v701 = vld [vmem:[%s215 + $0x3c] sm:$0xf]
      %v704 = vunpack.c.l.s4 1983009808
      %v705 = vunpack.c.0.s8 %v704
      %v706 = vlaneseq
      %v707 = vshrl.u32 %v706, 7
      %v708 = vsub.s32 %v705, %v707
      %v709 = vrot.slane %v685, %v708
      %v711 = vshrl.u32 %v709, 16
      %v713 = vshll.u32 %v709, 16
      %v715 = vrot.slane %v713, 1
      %v716 = vor.u32 %v711, %v715
      %v734 = vunpack.c.l.b16 %v686
      %v735 = vunpack.c.l.b16 %v687
      %v736 = vunpack.c.l.b16 %v688
      %v737 = vunpack.c.l.b16 %v689
      %v738 = vunpack.c.l.b16 %v690
      %v739 = vunpack.c.l.b16 %v691
      %v740 = vunpack.c.l.b16 %v692
      %v741 = vunpack.c.l.b16 %v693
      %v742 = vunpack.c.l.b16 %v694
      %v743 = vunpack.c.l.b16 %v695
      %v744 = vunpack.c.l.b16 %v696
      %v745 = vunpack.c.l.b16 %v697
      %v746 = vunpack.c.l.b16 %v698
      %v747 = vunpack.c.l.b16 %v699
      %v748 = vunpack.c.l.b16 %v700
      %v749 = vunpack.c.l.b16 %v701
      %v750 = vpack.c.b16 %v735, %v734
      %v751 = vpack.c.b16 %v737, %v736
      %v752 = vpack.c.b16 %v739, %v738
      %v753 = vpack.c.b16 %v741, %v740
      %v754 = vpack.c.b16 %v743, %v742
      %v755 = vpack.c.b16 %v745, %v744
      %v756 = vpack.c.b16 %v747, %v746
      %v757 = vpack.c.b16 %v749, %v748
      %766 = vmatprep.subr.bf16.mxu0 0
      %767 = vmatpush1.bf16.msra.mxu0 %v750
      %768 = vmatprep.subr.bf16.mxu0 0
      %769 = vmatpush1.bf16.msra.mxu0 %v751
      %770 = vmatprep.subr.bf16.mxu0 0
      %771 = vmatpush1.bf16.msra.mxu0 %v752
      %772 = vmatprep.subr.bf16.mxu0 0
      %773 = vmatpush1.bf16.msra.mxu0 %v753
      %774 = vmatprep.subr.bf16.mxu0 0
      %775 = vmatpush1.bf16.msra.mxu0 %v754
      %776 = vmatprep.subr.bf16.mxu0 0
      %777 = vmatpush1.bf16.msra.mxu0 %v755
      %778 = vmatprep.subr.bf16.mxu0 0
      %779 = vmatpush1.bf16.msra.mxu0 %v756
      %780 = vmatprep.subr.bf16.mxu0 0
      %781 = vmatpush1.bf16.msra.mxu0 %v757
      %782 = vmatprep.subr.bf16.mxu0 0
      %783 = vmatpush1.bf16.msra.mxu0 0
      %784 = vmatprep.subr.bf16.mxu0 0
      %785 = vmatpush1.bf16.msra.mxu0 0
      %786 = vmatprep.subr.bf16.mxu0 0
      %787 = vmatpush1.bf16.msra.mxu0 0
      %788 = vmatprep.subr.bf16.mxu0 0
      %789 = vmatpush1.bf16.msra.mxu0 0
      %790 = vmatprep.subr.bf16.mxu0 0
      %791 = vmatpush1.bf16.msra.mxu0 0
      %792 = vmatprep.subr.bf16.mxu0 0
      %793 = vmatpush1.bf16.msra.mxu0 0
      %794 = vmatprep.subr.bf16.mxu0 0
      %795 = vmatpush1.bf16.msra.mxu0 0
      %796 = vmatprep.subr.bf16.mxu0 0
      %797 = vmatpush1.bf16.msra.mxu0 0
      %798 = vmatprep.mubr.bf16.mxu0 0
      %799 = vmatmul.mubr.bf16.gmra.mrb[0].mxu0 %v716
      %v800 = vpop.f32.mrb[0].mxu0
      %v801 = vadd.f32 0.0, %v800
      %v802 = vpop.f32.mrb[0].mxu0
      %v803 = vpop.f32.mrb[0].mxu0
      %v804 = vpop.f32.mrb[0].mxu0
      %805 = vdwg.mxu0
      %v822 = vunpack.c.l.b16 %v669
      %v823 = vunpack.c.l.b16 %v670
      %v824 = vunpack.c.l.b16 %v671
      %v825 = vunpack.c.l.b16 %v672
      %v826 = vunpack.c.l.b16 %v673
      %v827 = vunpack.c.l.b16 %v674
      %v828 = vunpack.c.l.b16 %v675
      %v829 = vunpack.c.l.b16 %v676
      %v830 = vunpack.c.l.b16 %v677
      %v831 = vunpack.c.l.b16 %v678
      %v832 = vunpack.c.l.b16 %v679
      %v833 = vunpack.c.l.b16 %v680
      %v834 = vunpack.c.l.b16 %v681
      %v835 = vunpack.c.l.b16 %v682
      %v836 = vunpack.c.l.b16 %v683
      %v837 = vunpack.c.l.b16 %v684
      %v838 = vpack.c.b16 %v823, %v822
      %v839 = vpack.c.b16 %v825, %v824
      %v840 = vpack.c.b16 %v827, %v826
      %v841 = vpack.c.b16 %v829, %v828
      %v842 = vpack.c.b16 %v831, %v830
      %v843 = vpack.c.b16 %v833, %v832
      %v844 = vpack.c.b16 %v835, %v834
      %v845 = vpack.c.b16 %v837, %v836
      %854 = vmatprep.subr.bf16.mxu0 0
      %855 = vmatpush1.bf16.msra.mxu0 %v838
      %856 = vmatprep.subr.bf16.mxu0 0
      %857 = vmatpush1.bf16.msra.mxu0 %v839
      %858 = vmatprep.subr.bf16.mxu0 0
      %859 = vmatpush1.bf16.msra.mxu0 %v840
      %860 = vmatprep.subr.bf16.mxu0 0
      %861 = vmatpush1.bf16.msra.mxu0 %v841
      %862 = vmatprep.subr.bf16.mxu0 0
      %863 = vmatpush1.bf16.msra.mxu0 %v842
      %864 = vmatprep.subr.bf16.mxu0 0
      %865 = vmatpush1.bf16.msra.mxu0 %v843
      %866 = vmatprep.subr.bf16.mxu0 0
      %867 = vmatpush1.bf16.msra.mxu0 %v844
      %868 = vmatprep.subr.bf16.mxu0 0
      %869 = vmatpush1.bf16.msra.mxu0 %v845
      %870 = vmatprep.subr.bf16.mxu0 0
      %871 = vmatpush1.bf16.msra.mxu0 0
      %872 = vmatprep.subr.bf16.mxu0 0
      %873 = vmatpush1.bf16.msra.mxu0 0
      %874 = vmatprep.subr.bf16.mxu0 0
      %875 = vmatpush1.bf16.msra.mxu0 0
      %876 = vmatprep.subr.bf16.mxu0 0
      %877 = vmatpush1.bf16.msra.mxu0 0
      %878 = vmatprep.subr.bf16.mxu0 0
      %879 = vmatpush1.bf16.msra.mxu0 0
      %880 = vmatprep.subr.bf16.mxu0 0
      %881 = vmatpush1.bf16.msra.mxu0 0
      %882 = vmatprep.subr.bf16.mxu0 0
      %883 = vmatpush1.bf16.msra.mxu0 0
      %884 = vmatprep.subr.bf16.mxu0 0
      %885 = vmatpush1.bf16.msra.mxu0 0
      %886 = vmatprep.mubr.bf16.mxu0 0
      %887 = vmatmul.mubr.bf16.gmra.mrb[0].mxu0 %v668
      %v888 = vpop.f32.mrb[0].mxu0
      %v889 = vadd.f32 %v801, %v888
      %v890 = vpop.f32.mrb[0].mxu0
      %v891 = vpop.f32.mrb[0].mxu0
      %v892 = vpop.f32.mrb[0].mxu0
      %893 = vdwg.mxu0
      %s894 = sadd.s32 %s193, 2
      %s895 = smul.addr %s894, 2
      %s896 = scalar_lea.vmem %s182, %s895
      %v897 = vld [vmem:[%s896] sm:$0x1]
      %v898 = vld [vmem:[%s428] sm:$0xf]
      %v899 = vld [vmem:[%s428 + $0x4] sm:$0xf]
      %v900 = vld [vmem:[%s428 + $0x8] sm:$0xf]
      %v901 = vld [vmem:[%s428 + $0xc] sm:$0xf]
      %v902 = vld [vmem:[%s428 + $0x10] sm:$0xf]
      %v903 = vld [vmem:[%s428 + $0x14] sm:$0xf]
      %v904 = vld [vmem:[%s428 + $0x18] sm:$0xf]
      %v905 = vld [vmem:[%s428 + $0x1c] sm:$0xf]
      %v906 = vld [vmem:[%s428 + $0x20] sm:$0xf]
      %v907 = vld [vmem:[%s428 + $0x24] sm:$0xf]
      %v908 = vld [vmem:[%s428 + $0x28] sm:$0xf]
      %v909 = vld [vmem:[%s428 + $0x2c] sm:$0xf]
      %v910 = vld [vmem:[%s428 + $0x30] sm:$0xf]
      %v911 = vld [vmem:[%s428 + $0x34] sm:$0xf]
      %v912 = vld [vmem:[%s428 + $0x38] sm:$0xf]
      %v913 = vld [vmem:[%s428 + $0x3c] sm:$0xf]
      %v930 = vunpack.c.l.b16 %v898
      %v931 = vunpack.c.l.b16 %v899
      %v932 = vunpack.c.l.b16 %v900
      %v933 = vunpack.c.l.b16 %v901
      %v934 = vunpack.c.l.b16 %v902
      %v935 = vunpack.c.l.b16 %v903
      %v936 = vunpack.c.l.b16 %v904
      %v937 = vunpack.c.l.b16 %v905
      %v938 = vunpack.c.l.b16 %v906
      %v939 = vunpack.c.l.b16 %v907
      %v940 = vunpack.c.l.b16 %v908
      %v941 = vunpack.c.l.b16 %v909
      %v942 = vunpack.c.l.b16 %v910
      %v943 = vunpack.c.l.b16 %v911
      %v944 = vunpack.c.l.b16 %v912
      %v945 = vunpack.c.l.b16 %v913
      %v946 = vpack.c.b16 %v931, %v930
      %v947 = vpack.c.b16 %v933, %v932
      %v948 = vpack.c.b16 %v935, %v934
      %v949 = vpack.c.b16 %v937, %v936
      %v950 = vpack.c.b16 %v939, %v938
      %v951 = vpack.c.b16 %v941, %v940
      %v952 = vpack.c.b16 %v943, %v942
      %v953 = vpack.c.b16 %v945, %v944
      %962 = vmatprep.subr.bf16.mxu0 0
      %963 = vmatpush1.bf16.msra.mxu0 %v946
      %964 = vmatprep.subr.bf16.mxu0 0
      %965 = vmatpush1.bf16.msra.mxu0 %v947
      %966 = vmatprep.subr.bf16.mxu0 0
      %967 = vmatpush1.bf16.msra.mxu0 %v948
      %968 = vmatprep.subr.bf16.mxu0 0
      %969 = vmatpush1.bf16.msra.mxu0 %v949
      %970 = vmatprep.subr.bf16.mxu0 0
      %971 = vmatpush1.bf16.msra.mxu0 %v950
      %972 = vmatprep.subr.bf16.mxu0 0
      %973 = vmatpush1.bf16.msra.mxu0 %v951
      %974 = vmatprep.subr.bf16.mxu0 0
      %975 = vmatpush1.bf16.msra.mxu0 %v952
      %976 = vmatprep.subr.bf16.mxu0 0
      %977 = vmatpush1.bf16.msra.mxu0 %v953
      %978 = vmatprep.subr.bf16.mxu0 0
      %979 = vmatpush1.bf16.msra.mxu0 0
      %980 = vmatprep.subr.bf16.mxu0 0
      %981 = vmatpush1.bf16.msra.mxu0 0
      %982 = vmatprep.subr.bf16.mxu0 0
      %983 = vmatpush1.bf16.msra.mxu0 0
      %984 = vmatprep.subr.bf16.mxu0 0
      %985 = vmatpush1.bf16.msra.mxu0 0
      %986 = vmatprep.subr.bf16.mxu0 0
      %987 = vmatpush1.bf16.msra.mxu0 0
      %988 = vmatprep.subr.bf16.mxu0 0
      %989 = vmatpush1.bf16.msra.mxu0 0
      %990 = vmatprep.subr.bf16.mxu0 0
      %991 = vmatpush1.bf16.msra.mxu0 0
      %992 = vmatprep.subr.bf16.mxu0 0
      %993 = vmatpush1.bf16.msra.mxu0 0
      %994 = vmatprep.mubr.bf16.mxu0 0
      %995 = vmatmul.mubr.bf16.gmra.mrb[0].mxu0 %v897
      %v996 = vpop.f32.mrb[0].mxu0
      %v997 = vadd.f32 0.0, %v996
      %v998 = vpop.f32.mrb[0].mxu0
      %v999 = vpop.f32.mrb[0].mxu0
      %v1000 = vpop.f32.mrb[0].mxu0
      %1001 = vdwg.mxu0
      %v1002 = vadd.f32 %v889, %v997
      %v1003 = vld [vmem:[%s896] sm:$0x3]
      %v1004 = vld [vmem:[%s535] sm:$0xf]
      %v1005 = vld [vmem:[%s535 + $0x4] sm:$0xf]
      %v1006 = vld [vmem:[%s535 + $0x8] sm:$0xf]
      %v1007 = vld [vmem:[%s535 + $0xc] sm:$0xf]
      %v1008 = vld [vmem:[%s535 + $0x10] sm:$0xf]
      %v1009 = vld [vmem:[%s535 + $0x14] sm:$0xf]
      %v1010 = vld [vmem:[%s535 + $0x18] sm:$0xf]
      %v1011 = vld [vmem:[%s535 + $0x1c] sm:$0xf]
      %v1012 = vld [vmem:[%s535 + $0x20] sm:$0xf]
      %v1013 = vld [vmem:[%s535 + $0x24] sm:$0xf]
      %v1014 = vld [vmem:[%s535 + $0x28] sm:$0xf]
      %v1015 = vld [vmem:[%s535 + $0x2c] sm:$0xf]
      %v1016 = vld [vmem:[%s535 + $0x30] sm:$0xf]
      %v1017 = vld [vmem:[%s535 + $0x34] sm:$0xf]
      %v1018 = vld [vmem:[%s535 + $0x38] sm:$0xf]
      %v1019 = vld [vmem:[%s535 + $0x3c] sm:$0xf]
      %v1022 = vunpack.c.l.s4 1983009808
      %v1023 = vunpack.c.0.s8 %v1022
      %v1024 = vlaneseq
      %v1025 = vshrl.u32 %v1024, 7
      %v1026 = vsub.s32 %v1023, %v1025
      %v1027 = vrot.slane %v1003, %v1026
      %v1029 = vshrl.u32 %v1027, 16
      %v1031 = vshll.u32 %v1027, 16
      %v1033 = vrot.slane %v1031, 1
      %v1034 = vor.u32 %v1029, %v1033
      %v1052 = vunpack.c.l.b16 %v1004
      %v1053 = vunpack.c.l.b16 %v1005
      %v1054 = vunpack.c.l.b16 %v1006
      %v1055 = vunpack.c.l.b16 %v1007
      %v1056 = vunpack.c.l.b16 %v1008
      %v1057 = vunpack.c.l.b16 %v1009
      %v1058 = vunpack.c.l.b16 %v1010
      %v1059 = vunpack.c.l.b16 %v1011
      %v1060 = vunpack.c.l.b16 %v1012
      %v1061 = vunpack.c.l.b16 %v1013
      %v1062 = vunpack.c.l.b16 %v1014
      %v1063 = vunpack.c.l.b16 %v1015
      %v1064 = vunpack.c.l.b16 %v1016
      %v1065 = vunpack.c.l.b16 %v1017
      %v1066 = vunpack.c.l.b16 %v1018
      %v1067 = vunpack.c.l.b16 %v1019
      %v1068 = vpack.c.b16 %v1053, %v1052
      %v1069 = vpack.c.b16 %v1055, %v1054
      %v1070 = vpack.c.b16 %v1057, %v1056
      %v1071 = vpack.c.b16 %v1059, %v1058
      %v1072 = vpack.c.b16 %v1061, %v1060
      %v1073 = vpack.c.b16 %v1063, %v1062
      %v1074 = vpack.c.b16 %v1065, %v1064
      %v1075 = vpack.c.b16 %v1067, %v1066
      %1084 = vmatprep.subr.bf16.mxu0 0
      %1085 = vmatpush1.bf16.msra.mxu0 %v1068
      %1086 = vmatprep.subr.bf16.mxu0 0
      %1087 = vmatpush1.bf16.msra.mxu0 %v1069
      %1088 = vmatprep.subr.bf16.mxu0 0
      %1089 = vmatpush1.bf16.msra.mxu0 %v1070
      %1090 = vmatprep.subr.bf16.mxu0 0
      %1091 = vmatpush1.bf16.msra.mxu0 %v1071
      %1092 = vmatprep.subr.bf16.mxu0 0
      %1093 = vmatpush1.bf16.msra.mxu0 %v1072
      %1094 = vmatprep.subr.bf16.mxu0 0
      %1095 = vmatpush1.bf16.msra.mxu0 %v1073
      %1096 = vmatprep.subr.bf16.mxu0 0
      %1097 = vmatpush1.bf16.msra.mxu0 %v1074
      %1098 = vmatprep.subr.bf16.mxu0 0
      %1099 = vmatpush1.bf16.msra.mxu0 %v1075
      %1100 = vmatprep.subr.bf16.mxu0 0
      %1101 = vmatpush1.bf16.msra.mxu0 0
      %1102 = vmatprep.subr.bf16.mxu0 0
      %1103 = vmatpush1.bf16.msra.mxu0 0
      %1104 = vmatprep.subr.bf16.mxu0 0
      %1105 = vmatpush1.bf16.msra.mxu0 0
      %1106 = vmatprep.subr.bf16.mxu0 0
      %1107 = vmatpush1.bf16.msra.mxu0 0
      %1108 = vmatprep.subr.bf16.mxu0 0
      %1109 = vmatpush1.bf16.msra.mxu0 0
      %1110 = vmatprep.subr.bf16.mxu0 0
      %1111 = vmatpush1.bf16.msra.mxu0 0
      %1112 = vmatprep.subr.bf16.mxu0 0
      %1113 = vmatpush1.bf16.msra.mxu0 0
      %1114 = vmatprep.subr.bf16.mxu0 0
      %1115 = vmatpush1.bf16.msra.mxu0 0
      %1116 = vmatprep.mubr.bf16.mxu0 0
      %1117 = vmatmul.mubr.bf16.gmra.mrb[0].mxu0 %v1034
      %v1118 = vpop.f32.mrb[0].mxu0
      %v1119 = vadd.f32 0.0, %v1118
      %v1120 = vpop.f32.mrb[0].mxu0
      %v1121 = vpop.f32.mrb[0].mxu0
      %v1122 = vpop.f32.mrb[0].mxu0
      %1123 = vdwg.mxu0
      %v1124 = vadd.f32 %v1002, %v1119
      %v1125 = vadd.f32 %v1124, %v661
      %v1126 = vmax.f32 %v1125, 0.0
      %v1127 = vpack.c.bf16 %v1126, %v1126
      %s1128 = scalar_lea.vmem %s190, 1
      %1129 = vst.msk [vmem:[%s1128] sm:$0x1] %vm666, %v1127
      %s1130 = smul.u32 2, %s19
      %p1131 = scmp.lt.s32.totalorder %s18, 1
      %s1132 = scalar_select %p1131, %s18, 1
      %p1133 = scmp.lt.s32.totalorder %s1130, 1
      %s1134 = scalar_select %p1133, %s1130, 1
      %s1135 = smul.addr %s1132, 2
      %s1136 = sadd.s32 %s1134, %s1135
      %s1137 = scalar_lea.vmem %s3, %s1136
      // Predicated region
      $region33: #{_lambda_.6} parent=31 // pred_check
        %p1138 = pneg %p114
      $region34: #{_lambda_.6} parent=31 // pred_check_branch
        %1140 = sbr.rel (%p1138) target = $region36
      $region35: #{_lambda_.6} parent=31 // pred_region
        %s1141 = smul.u32 2, %s19
      $region36: #{_lambda_.6} parent=31 // pred_fallthru
        _
    $region32: #{_lambda_.6} parent=5 // pred_fallthru
      _
    %p1142 = scmp.le.s32.totalorder 2, %s9
    // Predicated region
    $region37: #{_lambda_.6} parent=5 // pred_check
      %p1143 = pneg %p1142
    $region38: #{_lambda_.6} parent=5 // pred_check_branch
      %1145 = sbr.rel (%p1143) target = $region40
    $region39: #{_lambda_.6} parent=5 // pred_region
      %s1146 = ssub.s32 %s9, 2
      // Predicated region
      $region41: #{_lambda_.6} parent=39 // pred_check
        %p1147 = pneg %p120
      $region42: #{_lambda_.6} parent=39 // pred_check_branch
        %1149 = sbr.rel (%p1147) target = $region44
      $region43: #{_lambda_.6} parent=39 // pred_region
        %s1150 = smul.u32 2, %s21
        %p1151 = scmp.lt.s32.totalorder %s20, 1
        %s1152 = scalar_select %p1151, %s20, 1
        %p1153 = scmp.lt.s32.totalorder %s1150, 1
        %s1154 = scalar_select %p1153, %s1150, 1
        %s1155 = smul.addr %s1152, 2
        %s1156 = sadd.s32 %s1154, %s1155
        %s1157 = scalar_lea.vmem %s3, %s1156
      $region44: #{_lambda_.6} parent=39 // pred_fallthru
        _
    $region40: #{_lambda_.6} parent=5 // pred_fallthru
      _
  $region6: #{_lambda_.6} parent=0 // loop_footer
    %s13 = sadd.s32 1, %s9
  $region7: #{_lambda_.6} parent=0 // loop_footer_branch
    %8 = sbr.rel target = $region3
  $region8: #{_lambda_.6} parent=0 // loop_exit
    _

// kernel: _lambda_.7
$region0: #{_lambda_.7}
  #allocation0 [shape = 'u32[]', space=smem, size = 0x4, offset = 0x4, fixed_abs, tag = 'smem constant byte address 0x4 - core index']
  #allocation1 [shape = 'u32[144,128]{1,0:T(1,128)}', space=vmem, size = 0x12000, scoped, tag = 'internal scratch']
  %s0 = inlined_call_operand.vmem [shape: bf16[2,2,2,256], index: 0, kind: input, shape index: {}]
  %s1 = inlined_call_operand.vmem [shape: bf16[4,256,128], index: 1, kind: input, shape index: {}]
  %s2 = inlined_call_operand.vmem [shape: f32[1,128], index: 2, kind: input, shape index: {}]
  %s3 = inlined_call_operand.vmem [shape: bf16[2,1,1,128], index: 3, kind: output, shape index: {}]
  %s4 = sld [smem:[#allocation0]]
  $region45: #{_lambda_.7} parent=0
    _
  %s6 = ssub.s32 1, %s4
  %s7 = scalar_select 0, %s6, %s4
  loop: start=0, step=1, limit=4
  $region2: #{_lambda_.7} parent=0 // loop_pre_header
    _
  $region3: #{_lambda_.7} parent=0 // loop_header
    %s9 = sphi 0, %s13
    %p10 = scmp.ge.s32.totalorder %s9, 4
    %s16 = sphi 0, %s28
    %s17 = sphi 0, %s24
    %s18 = sphi 0, %s16
    %s19 = sphi 0, %s17
    %s20 = sphi 0, %s18
    %s21 = sphi 0, %s19
    %s31 = sphi 0, %s33
    %s34 = sphi 0, %s31
    %s35 = sphi 0, %s34
    %s51 = sphi 0, %s35
    %s55 = sphi 0, %s55
    %s57 = sphi 0, %s55
    %s58 = sphi 0, %s57
    %s72 = sphi 0, %s58
    %s76 = sphi 0, %s76
    %s78 = sphi 0, %s76
    %s79 = sphi 0, %s78
    %s93 = sphi 0, %s79
    %s101 = sphi 0, %s103
    %s104 = sphi 0, %s101
    %s105 = sphi 0, %s104
    %s121 = sphi 0, %s105
  $region4: #{_lambda_.7} parent=0 // loop_header_branch
    %12 = sbr.rel (%p10) target = $region8
  $region5: #{_lambda_.7} parent=0 // loop_body
    %s14 = ssub.s32 %s9, 1
    %s15 = ssub.s32 %s9, 2
    %s22 = sadd.s32 1, %s17
    %p23 = scmp.ge.s32.totalorder %s22, 1
    %s24 = scalar_select %p23, 0, %s22
    %s25 = sadd.s32 1, %s16
    %s26 = scalar_select %p23, %s25, %s16
    %p27 = scmp.ge.s32.totalorder %s26, 2
    %s28 = scalar_select %p27, 0, %s26
    %s29 = ssub.s32 %s16, %s28
    %p30 = scmp.eq.s32.totalorder %s29, 0
    %s32 = sadd.s32 %s31, 1
    %s33 = scalar_select %p30, %s31, %s32
    %p36 = pneg %p30
    %p37 = scmp.eq.s32.totalorder %s9, 1
    %p38 = por %p36, %p37
    %p39 = scmp.ne.s32.totalorder %s31, %s34
    %p40 = scmp.eq.s32.totalorder %s9, 0
    %p41 = por %p39, %p40
    %p42 = scmp.ne.s32.totalorder %s31, %s34
    %p43 = scmp.eq.s32.totalorder %s14, 1
    %p44 = por %p42, %p43
    %p45 = scmp.ne.s32.totalorder %s34, %s35
    %p46 = scmp.eq.s32.totalorder %s14, 0
    %p47 = por %p45, %p46
    %p48 = scmp.ne.s32.totalorder %s34, %s35
    %p49 = scmp.eq.s32.totalorder %s15, 1
    %p50 = por %p48, %p49
    %p52 = scmp.ne.s32.totalorder %s35, %s51
    %p53 = scmp.eq.s32.totalorder %s15, 0
    %p54 = por %p52, %p53
    %s56 = sadd.s32 %s55, 1
    %p59 = scmp.eq.s32.totalorder %s9, 1
    %p60 = scmp.ne.s32.totalorder %s55, %s57
    %p61 = scmp.eq.s32.totalorder %s9, 0
    %p62 = por %p60, %p61
    %p63 = scmp.ne.s32.totalorder %s55, %s57
    %p64 = scmp.eq.s32.totalorder %s14, 1
    %p65 = por %p63, %p64
    %p66 = scmp.ne.s32.totalorder %s57, %s58
    %p67 = scmp.eq.s32.totalorder %s14, 0
    %p68 = por %p66, %p67
    %p69 = scmp.ne.s32.totalorder %s57, %s58
    %p70 = scmp.eq.s32.totalorder %s15, 1
    %p71 = por %p69, %p70
    %p73 = scmp.ne.s32.totalorder %s58, %s72
    %p74 = scmp.eq.s32.totalorder %s15, 0
    %p75 = por %p73, %p74
    %s77 = sadd.s32 %s76, 1
    %p80 = scmp.eq.s32.totalorder %s9, 1
    %p81 = scmp.ne.s32.totalorder %s76, %s78
    %p82 = scmp.eq.s32.totalorder %s9, 0
    %p83 = por %p81, %p82
    %p84 = scmp.ne.s32.totalorder %s76, %s78
    %p85 = scmp.eq.s32.totalorder %s14, 1
    %p86 = por %p84, %p85
    %p87 = scmp.ne.s32.totalorder %s78, %s79
    %p88 = scmp.eq.s32.totalorder %s14, 0
    %p89 = por %p87, %p88
    %p90 = scmp.ne.s32.totalorder %s78, %s79
    %p91 = scmp.eq.s32.totalorder %s15, 1
    %p92 = por %p90, %p91
    %p94 = scmp.ne.s32.totalorder %s79, %s93
    %p95 = scmp.eq.s32.totalorder %s15, 0
    %p96 = por %p94, %p95
    %s97 = ssub.s32 %s16, %s28
    %s98 = ssub.s32 %s17, %s24
    %s99 = sor.u32 %s97, %s98
    %p100 = scmp.eq.s32.totalorder %s99, 0
    %s102 = sadd.s32 %s101, 1
    %s103 = scalar_select %p100, %s101, %s102
    %p106 = pneg %p100
    %p107 = scmp.eq.s32.totalorder %s9, 1
    %p108 = por %p106, %p107
    %p109 = scmp.ne.s32.totalorder %s101, %s104
    %p110 = scmp.eq.s32.totalorder %s9, 0
    %p111 = por %p109, %p110
    %p112 = scmp.ne.s32.totalorder %s101, %s104
    %p113 = scmp.eq.s32.totalorder %s14, 1
    %p114 = por %p112, %p113
    %p115 = scmp.ne.s32.totalorder %s104, %s105
    %p116 = scmp.eq.s32.totalorder %s14, 0
    %p117 = por %p115, %p116
    %p118 = scmp.ne.s32.totalorder %s104, %s105
    %p119 = scmp.eq.s32.totalorder %s15, 1
    %p120 = por %p118, %p119
    %p122 = scmp.ne.s32.totalorder %s105, %s121
    %p123 = scmp.eq.s32.totalorder %s15, 0
    %p124 = por %p122, %p123
    %p125 = scmp.le.s32.totalorder 1, %s9
    %p126 = scmp.lt.s32.totalorder %s9, 3
    %p127 = pnand %p125, %p126
    %p128 = pneg %p127
    // Predicated region
    $region9: #{_lambda_.7} parent=5 // pred_check
      _
    $region10: #{_lambda_.7} parent=5 // pred_check_branch
      %130 = sbr.rel (%p127) target = $region12
    $region11: #{_lambda_.7} parent=5 // pred_region
      %s131 = ssub.s32 %s9, 1
      // Predicated region
      $region13: #{_lambda_.7} parent=11 // pred_check
        %p132 = pneg %p68
      $region14: #{_lambda_.7} parent=11 // pred_check_branch
        %134 = sbr.rel (%p132) target = $region16
      $region15: #{_lambda_.7} parent=11 // pred_region
        _
      $region16: #{_lambda_.7} parent=11 // pred_fallthru
        _
      // Predicated region
      $region17: #{_lambda_.7} parent=11 // pred_check
        %p135 = pneg %p89
      $region18: #{_lambda_.7} parent=11 // pred_check_branch
        %137 = sbr.rel (%p135) target = $region20
      $region19: #{_lambda_.7} parent=11 // pred_region
        _
      $region20: #{_lambda_.7} parent=11 // pred_fallthru
        _
    $region12: #{_lambda_.7} parent=5 // pred_fallthru
      _
    %p138 = scmp.lt.s32.totalorder %s9, 2
    // Predicated region
    $region21: #{_lambda_.7} parent=5 // pred_check
      %p139 = pneg %p138
    $region22: #{_lambda_.7} parent=5 // pred_check_branch
      %141 = sbr.rel (%p139) target = $region24
    $region23: #{_lambda_.7} parent=5 // pred_region
      // Predicated region
      $region25: #{_lambda_.7} parent=23 // pred_check
        %p142 = pneg %p41
      $region26: #{_lambda_.7} parent=23 // pred_check_branch
        %144 = sbr.rel (%p142) target = $region28
      $region27: #{_lambda_.7} parent=23 // pred_region
        %p145 = scmp.lt.s32.totalorder %s16, 1
        %s146 = scalar_select %p145, %s16, 1
        %s147 = smul.addr %s146, 4
        %s148 = scalar_lea.vmem %s0, %s147
      $region28: #{_lambda_.7} parent=23 // pred_fallthru
        _
    $region24: #{_lambda_.7} parent=5 // pred_fallthru
      _
    %p149 = scmp.le.s32.totalorder 1, %s9
    %p150 = scmp.lt.s32.totalorder %s9, 3
    %p151 = pnand %p149, %p150
    %p152 = pneg %p151
    // Predicated region
    $region29: #{_lambda_.7} parent=5 // pred_check
      _
    $region30: #{_lambda_.7} parent=5 // pred_check_branch
      %154 = sbr.rel (%p151) target = $region32
    $region31: #{_lambda_.7} parent=5 // pred_region
      %s155 = ssub.s32 %s9, 1
      %p156 = scmp.lt.s32.totalorder %s18, 1
      %s157 = scalar_select %p156, %s18, 1
      %s158 = smul.addr %s157, 4
      %s159 = scalar_lea.vmem %s0, %s158
      %p160 = pneg %p47
      %p161 = pneg %p44
      %p162 = pneg %p68
      %p163 = pneg %p65
      %p164 = pneg %p89
      %p165 = pneg %p86
      %p166 = pneg %p117
      %p167 = pneg %p114
      %p168 = scmp.lt.s32.totalorder %s18, 1
      %s169 = scalar_select %p168, %s18, 1
      %p170 = scmp.lt.s32.totalorder %s19, 0
      %s171 = scalar_select %p170, %s19, 0
      %s172 = sadd.s32 %s171, %s169
      %s173 = scalar_lea.vmem %s3, %s172
      %p174 = scmp.lt.s32.totalorder %s18, 1
      %s175 = scalar_select %p174, %s18, 1
      %s176 = smul.addr %s175, 4
      %s177 = scalar_lea.vmem %s0, %s176
      %p178 = scmp.lt.s32.totalorder %s18, 1
      %s179 = scalar_select %p178, %s18, 1
      %p180 = scmp.lt.s32.totalorder %s19, 0
      %s181 = scalar_select %p180, %s19, 0
      %s182 = sadd.s32 %s181, %s179
      %s183 = scalar_lea.vmem %s3, %s182
      %v185 = vld [vmem:[%s2] sm:$0x1]
      %s186 = smul.u32 %s19, 2
      %s187 = scalar_lea.vmem %s177, %s186
      %v188 = vld [vmem:[%s187] sm:$0x3]
      %v189 = vld [vmem:[%s1] sm:$0xf]
      %v190 = vld [vmem:[%s1 + $0x4] sm:$0xf]
      %v191 = vld [vmem:[%s1 + $0x8] sm:$0xf]
      %v192 = vld [vmem:[%s1 + $0xc] sm:$0xf]
      %v193 = vld [vmem:[%s1 + $0x10] sm:$0xf]
      %v194 = vld [vmem:[%s1 + $0x14] sm:$0xf]
      %v195 = vld [vmem:[%s1 + $0x18] sm:$0xf]
      %v196 = vld [vmem:[%s1 + $0x1c] sm:$0xf]
      %v197 = vld [vmem:[%s1 + $0x20] sm:$0xf]
      %v198 = vld [vmem:[%s1 + $0x24] sm:$0xf]
      %v199 = vld [vmem:[%s1 + $0x28] sm:$0xf]
      %v200 = vld [vmem:[%s1 + $0x2c] sm:$0xf]
      %v201 = vld [vmem:[%s1 + $0x30] sm:$0xf]
      %v202 = vld [vmem:[%s1 + $0x34] sm:$0xf]
      %v203 = vld [vmem:[%s1 + $0x38] sm:$0xf]
      %v204 = vld [vmem:[%s1 + $0x3c] sm:$0xf]
      %v205 = vld [vmem:[%s1 + $0x40] sm:$0xf]
      %v206 = vld [vmem:[%s1 + $0x44] sm:$0xf]
      %v207 = vld [vmem:[%s1 + $0x48] sm:$0xf]
      %v208 = vld [vmem:[%s1 + $0x4c] sm:$0xf]
      %v209 = vld [vmem:[%s1 + $0x50] sm:$0xf]
      %v210 = vld [vmem:[%s1 + $0x54] sm:$0xf]
      %v211 = vld [vmem:[%s1 + $0x58] sm:$0xf]
      %v212 = vld [vmem:[%s1 + $0x5c] sm:$0xf]
      %v213 = vld [vmem:[%s1 + $0x60] sm:$0xf]
      %v214 = vld [vmem:[%s1 + $0x64] sm:$0xf]
      %v215 = vld [vmem:[%s1 + $0x68] sm:$0xf]
      %v216 = vld [vmem:[%s1 + $0x6c] sm:$0xf]
      %v217 = vld [vmem:[%s1 + $0x70] sm:$0xf]
      %v218 = vld [vmem:[%s1 + $0x74] sm:$0xf]
      %v219 = vld [vmem:[%s1 + $0x78] sm:$0xf]
      %v220 = vld [vmem:[%s1 + $0x7c] sm:$0xf]
      %s221 = scalar_lea.vmem %s1, 128
      %v222 = vld [vmem:[%s221] sm:$0xf]
      %v223 = vld [vmem:[%s221 + $0x4] sm:$0xf]
      %v224 = vld [vmem:[%s221 + $0x8] sm:$0xf]
      %v225 = vld [vmem:[%s221 + $0xc] sm:$0xf]
      %v226 = vld [vmem:[%s221 + $0x10] sm:$0xf]
      %v227 = vld [vmem:[%s221 + $0x14] sm:$0xf]
      %v228 = vld [vmem:[%s221 + $0x18] sm:$0xf]
      %v229 = vld [vmem:[%s221 + $0x1c] sm:$0xf]
      %v230 = vld [vmem:[%s221 + $0x20] sm:$0xf]
      %v231 = vld [vmem:[%s221 + $0x24] sm:$0xf]
      %v232 = vld [vmem:[%s221 + $0x28] sm:$0xf]
      %v233 = vld [vmem:[%s221 + $0x2c] sm:$0xf]
      %v234 = vld [vmem:[%s221 + $0x30] sm:$0xf]
      %v235 = vld [vmem:[%s221 + $0x34] sm:$0xf]
      %v236 = vld [vmem:[%s221 + $0x38] sm:$0xf]
      %v237 = vld [vmem:[%s221 + $0x3c] sm:$0xf]
      %v238 = vld [vmem:[%s221 + $0x40] sm:$0xf]
      %v239 = vld [vmem:[%s221 + $0x44] sm:$0xf]
      %v240 = vld [vmem:[%s221 + $0x48] sm:$0xf]
      %v241 = vld [vmem:[%s221 + $0x4c] sm:$0xf]
      %v242 = vld [vmem:[%s221 + $0x50] sm:$0xf]
      %v243 = vld [vmem:[%s221 + $0x54] sm:$0xf]
      %v244 = vld [vmem:[%s221 + $0x58] sm:$0xf]
      %v245 = vld [vmem:[%s221 + $0x5c] sm:$0xf]
      %v246 = vld [vmem:[%s221 + $0x60] sm:$0xf]
      %v247 = vld [vmem:[%s221 + $0x64] sm:$0xf]
      %v248 = vld [vmem:[%s221 + $0x68] sm:$0xf]
      %v249 = vld [vmem:[%s221 + $0x6c] sm:$0xf]
      %v250 = vld [vmem:[%s221 + $0x70] sm:$0xf]
      %v251 = vld [vmem:[%s221 + $0x74] sm:$0xf]
      %v252 = vld [vmem:[%s221 + $0x78] sm:$0xf]
      %v253 = vld [vmem:[%s221 + $0x7c] sm:$0xf]
      %v256 = vunpack.c.l.s4 1966171168
      %v257 = vunpack.c.0.s8 %v256
      %v258 = vlaneseq
      %v259 = vshrl.u32 %v258, 7
      %v260 = vsub.s32 %v257, %v259
      %v261 = vrot.slane %v188, %v260
      %v262 = vcombine.high %v261, %v261
      %v264 = vunpack.c.l.s4 1966171168
      %v265 = vunpack.c.0.s8 %v264
      %v266 = vlaneseq
      %v267 = vshrl.u32 %v266, 7
      %v268 = vsub.s32 %v265, %v267
      %v269 = vrot.slane %v261, %v268
      %v271 = vunpack.c.l.s4 1966171168
      %v272 = vunpack.c.0.s8 %v271
      %v273 = vlaneseq
      %v274 = vshrl.u32 %v273, 7
      %v275 = vsub.s32 %v272, %v274
      %v276 = vrot.slane %v262, %v275
      %v278 = vshrl.u32 %v269, 16
      %v281 = vshrl.u32 %v276, 16
      %v317 = vunpack.c.l.b16 %v222
      %v318 = vunpack.c.l.b16 %v223
      %v319 = vunpack.c.l.b16 %v224
      %v320 = vunpack.c.l.b16 %v225
      %v321 = vunpack.c.l.b16 %v226
      %v322 = vunpack.c.l.b16 %v227
      %v323 = vunpack.c.l.b16 %v228
      %v324 = vunpack.c.l.b16 %v229
      %v325 = vunpack.c.l.b16 %v230
      %v326 = vunpack.c.l.b16 %v231
      %v327 = vunpack.c.l.b16 %v232
      %v328 = vunpack.c.l.b16 %v233
      %v329 = vunpack.c.l.b16 %v234
      %v330 = vunpack.c.l.b16 %v235
      %v331 = vunpack.c.l.b16 %v236
      %v332 = vunpack.c.l.b16 %v237
      %v333 = vunpack.c.l.b16 %v238
      %v334 = vunpack.c.l.b16 %v239
      %v335 = vunpack.c.l.b16 %v240
      %v336 = vunpack.c.l.b16 %v241
      %v337 = vunpack.c.l.b16 %v242
      %v338 = vunpack.c.l.b16 %v243
      %v339 = vunpack.c.l.b16 %v244
      %v340 = vunpack.c.l.b16 %v245
      %v341 = vunpack.c.l.b16 %v246
      %v342 = vunpack.c.l.b16 %v247
      %v343 = vunpack.c.l.b16 %v248
      %v344 = vunpack.c.l.b16 %v249
      %v345 = vunpack.c.l.b16 %v250
      %v346 = vunpack.c.l.b16 %v251
      %v347 = vunpack.c.l.b16 %v252
      %v348 = vunpack.c.l.b16 %v253
      %v349 = vpack.c.b16 %v318, %v317
      %v350 = vpack.c.b16 %v320, %v319
      %v351 = vpack.c.b16 %v322, %v321
      %v352 = vpack.c.b16 %v324, %v323
      %v353 = vpack.c.b16 %v326, %v325
      %v354 = vpack.c.b16 %v328, %v327
      %v355 = vpack.c.b16 %v330, %v329
      %v356 = vpack.c.b16 %v332, %v331
      %v357 = vpack.c.b16 %v334, %v333
      %v358 = vpack.c.b16 %v336, %v335
      %v359 = vpack.c.b16 %v338, %v337
      %v360 = vpack.c.b16 %v340, %v339
      %v361 = vpack.c.b16 %v342, %v341
      %v362 = vpack.c.b16 %v344, %v343
      %v363 = vpack.c.b16 %v346, %v345
      %v364 = vpack.c.b16 %v348, %v347
      %381 = vmatprep.subr.bf16.mxu0 0
      %382 = vmatpush1.bf16.msra.mxu0 %v349
      %383 = vmatprep.subr.bf16.mxu0 0
      %384 = vmatpush1.bf16.msra.mxu0 %v350
      %385 = vmatprep.subr.bf16.mxu0 0
      %386 = vmatpush1.bf16.msra.mxu0 %v351
      %387 = vmatprep.subr.bf16.mxu0 0
      %388 = vmatpush1.bf16.msra.mxu0 %v352
      %389 = vmatprep.subr.bf16.mxu0 0
      %390 = vmatpush1.bf16.msra.mxu0 %v353
      %391 = vmatprep.subr.bf16.mxu0 0
      %392 = vmatpush1.bf16.msra.mxu0 %v354
      %393 = vmatprep.subr.bf16.mxu0 0
      %394 = vmatpush1.bf16.msra.mxu0 %v355
      %395 = vmatprep.subr.bf16.mxu0 0
      %396 = vmatpush1.bf16.msra.mxu0 %v356
      %397 = vmatprep.subr.bf16.mxu0 0
      %398 = vmatpush1.bf16.msra.mxu0 %v357
      %399 = vmatprep.subr.bf16.mxu0 0
      %400 = vmatpush1.bf16.msra.mxu0 %v358
      %401 = vmatprep.subr.bf16.mxu0 0
      %402 = vmatpush1.bf16.msra.mxu0 %v359
      %403 = vmatprep.subr.bf16.mxu0 0
      %404 = vmatpush1.bf16.msra.mxu0 %v360
      %405 = vmatprep.subr.bf16.mxu0 0
      %406 = vmatpush1.bf16.msra.mxu0 %v361
      %407 = vmatprep.subr.bf16.mxu0 0
      %408 = vmatpush1.bf16.msra.mxu0 %v362
      %409 = vmatprep.subr.bf16.mxu0 0
      %410 = vmatpush1.bf16.msra.mxu0 %v363
      %411 = vmatprep.subr.bf16.mxu0 0
      %412 = vmatpush1.bf16.msra.mxu0 %v364
      %413 = vmatprep.mubr.bf16.mxu0 %v281
      %414 = vmatmul.mubr.bf16.gmra.mrb[0].mxu0 %v278
      %v415 = vpop.f32.mrb[0].mxu0
      %v416 = vadd.f32 0.0, %v415
      %v417 = vpop.f32.mrb[0].mxu0
      %v418 = vpop.f32.mrb[0].mxu0
      %v419 = vpop.f32.mrb[0].mxu0
      %420 = vdwg.mxu0
      %v455 = vunpack.c.l.b16 %v189
      %v456 = vunpack.c.l.b16 %v190
      %v457 = vunpack.c.l.b16 %v191
      %v458 = vunpack.c.l.b16 %v192
      %v459 = vunpack.c.l.b16 %v193
      %v460 = vunpack.c.l.b16 %v194
      %v461 = vunpack.c.l.b16 %v195
      %v462 = vunpack.c.l.b16 %v196
      %v463 = vunpack.c.l.b16 %v197
      %v464 = vunpack.c.l.b16 %v198
      %v465 = vunpack.c.l.b16 %v199
      %v466 = vunpack.c.l.b16 %v200
      %v467 = vunpack.c.l.b16 %v201
      %v468 = vunpack.c.l.b16 %v202
      %v469 = vunpack.c.l.b16 %v203
      %v470 = vunpack.c.l.b16 %v204
      %v471 = vunpack.c.l.b16 %v205
      %v472 = vunpack.c.l.b16 %v206
      %v473 = vunpack.c.l.b16 %v207
      %v474 = vunpack.c.l.b16 %v208
      %v475 = vunpack.c.l.b16 %v209
      %v476 = vunpack.c.l.b16 %v210
      %v477 = vunpack.c.l.b16 %v211
      %v478 = vunpack.c.l.b16 %v212
      %v479 = vunpack.c.l.b16 %v213
      %v480 = vunpack.c.l.b16 %v214
      %v481 = vunpack.c.l.b16 %v215
      %v482 = vunpack.c.l.b16 %v216
      %v483 = vunpack.c.l.b16 %v217
      %v484 = vunpack.c.l.b16 %v218
      %v485 = vunpack.c.l.b16 %v219
      %v486 = vunpack.c.l.b16 %v220
      %v487 = vpack.c.b16 %v456, %v455
      %v488 = vpack.c.b16 %v458, %v457
      %v489 = vpack.c.b16 %v460, %v459
      %v490 = vpack.c.b16 %v462, %v461
      %v491 = vpack.c.b16 %v464, %v463
      %v492 = vpack.c.b16 %v466, %v465
      %v493 = vpack.c.b16 %v468, %v467
      %v494 = vpack.c.b16 %v470, %v469
      %v495 = vpack.c.b16 %v472, %v471
      %v496 = vpack.c.b16 %v474, %v473
      %v497 = vpack.c.b16 %v476, %v475
      %v498 = vpack.c.b16 %v478, %v477
      %v499 = vpack.c.b16 %v480, %v479
      %v500 = vpack.c.b16 %v482, %v481
      %v501 = vpack.c.b16 %v484, %v483
      %v502 = vpack.c.b16 %v486, %v485
      %519 = vmatprep.subr.bf16.mxu0 0
      %520 = vmatpush1.bf16.msra.mxu0 %v487
      %521 = vmatprep.subr.bf16.mxu0 0
      %522 = vmatpush1.bf16.msra.mxu0 %v488
      %523 = vmatprep.subr.bf16.mxu0 0
      %524 = vmatpush1.bf16.msra.mxu0 %v489
      %525 = vmatprep.subr.bf16.mxu0 0
      %526 = vmatpush1.bf16.msra.mxu0 %v490
      %527 = vmatprep.subr.bf16.mxu0 0
      %528 = vmatpush1.bf16.msra.mxu0 %v491
      %529 = vmatprep.subr.bf16.mxu0 0
      %530 = vmatpush1.bf16.msra.mxu0 %v492
      %531 = vmatprep.subr.bf16.mxu0 0
      %532 = vmatpush1.bf16.msra.mxu0 %v493
      %533 = vmatprep.subr.bf16.mxu0 0
      %534 = vmatpush1.bf16.msra.mxu0 %v494
      %535 = vmatprep.subr.bf16.mxu0 0
      %536 = vmatpush1.bf16.msra.mxu0 %v495
      %537 = vmatprep.subr.bf16.mxu0 0
      %538 = vmatpush1.bf16.msra.mxu0 %v496
      %539 = vmatprep.subr.bf16.mxu0 0
      %540 = vmatpush1.bf16.msra.mxu0 %v497
      %541 = vmatprep.subr.bf16.mxu0 0
      %542 = vmatpush1.bf16.msra.mxu0 %v498
      %543 = vmatprep.subr.bf16.mxu0 0
      %544 = vmatpush1.bf16.msra.mxu0 %v499
      %545 = vmatprep.subr.bf16.mxu0 0
      %546 = vmatpush1.bf16.msra.mxu0 %v500
      %547 = vmatprep.subr.bf16.mxu0 0
      %548 = vmatpush1.bf16.msra.mxu0 %v501
      %549 = vmatprep.subr.bf16.mxu0 0
      %550 = vmatpush1.bf16.msra.mxu0 %v502
      %551 = vmatprep.mubr.bf16.mxu0 %v276
      %552 = vmatmul.mubr.bf16.gmra.mrb[0].mxu0 %v269
      %v553 = vpop.f32.mrb[0].mxu0
      %v554 = vadd.f32 %v416, %v553
      %v555 = vpop.f32.mrb[0].mxu0
      %v556 = vpop.f32.mrb[0].mxu0
      %v557 = vpop.f32.mrb[0].mxu0
      %558 = vdwg.mxu0
      %s559 = sadd.s32 %s19, 1
      %s560 = smul.u32 %s559, 2
      %s561 = scalar_lea.vmem %s177, %s560
      %v562 = vld [vmem:[%s561] sm:$0x3]
      %s563 = scalar_lea.vmem %s1, 256
      %v564 = vld [vmem:[%s563] sm:$0xf]
      %v565 = vld [vmem:[%s563 + $0x4] sm:$0xf]
      %v566 = vld [vmem:[%s563 + $0x8] sm:$0xf]
      %v567 = vld [vmem:[%s563 + $0xc] sm:$0xf]
      %v568 = vld [vmem:[%s563 + $0x10] sm:$0xf]
      %v569 = vld [vmem:[%s563 + $0x14] sm:$0xf]
      %v570 = vld [vmem:[%s563 + $0x18] sm:$0xf]
      %v571 = vld [vmem:[%s563 + $0x1c] sm:$0xf]
      %v572 = vld [vmem:[%s563 + $0x20] sm:$0xf]
      %v573 = vld [vmem:[%s563 + $0x24] sm:$0xf]
      %v574 = vld [vmem:[%s563 + $0x28] sm:$0xf]
      %v575 = vld [vmem:[%s563 + $0x2c] sm:$0xf]
      %v576 = vld [vmem:[%s563 + $0x30] sm:$0xf]
      %v577 = vld [vmem:[%s563 + $0x34] sm:$0xf]
      %v578 = vld [vmem:[%s563 + $0x38] sm:$0xf]
      %v579 = vld [vmem:[%s563 + $0x3c] sm:$0xf]
      %v580 = vld [vmem:[%s563 + $0x40] sm:$0xf]
      %v581 = vld [vmem:[%s563 + $0x44] sm:$0xf]
      %v582 = vld [vmem:[%s563 + $0x48] sm:$0xf]
      %v583 = vld [vmem:[%s563 + $0x4c] sm:$0xf]
      %v584 = vld [vmem:[%s563 + $0x50] sm:$0xf]
      %v585 = vld [vmem:[%s563 + $0x54] sm:$0xf]
      %v586 = vld [vmem:[%s563 + $0x58] sm:$0xf]
      %v587 = vld [vmem:[%s563 + $0x5c] sm:$0xf]
      %v588 = vld [vmem:[%s563 + $0x60] sm:$0xf]
      %v589 = vld [vmem:[%s563 + $0x64] sm:$0xf]
      %v590 = vld [vmem:[%s563 + $0x68] sm:$0xf]
      %v591 = vld [vmem:[%s563 + $0x6c] sm:$0xf]
      %v592 = vld [vmem:[%s563 + $0x70] sm:$0xf]
      %v593 = vld [vmem:[%s563 + $0x74] sm:$0xf]
      %v594 = vld [vmem:[%s563 + $0x78] sm:$0xf]
      %v595 = vld [vmem:[%s563 + $0x7c] sm:$0xf]
      %v598 = vunpack.c.l.s4 1966171168
      %v599 = vunpack.c.0.s8 %v598
      %v600 = vlaneseq
      %v601 = vshrl.u32 %v600, 7
      %v602 = vsub.s32 %v599, %v601
      %v603 = vrot.slane %v562, %v602
      %v604 = vcombine.high %v603, %v603
      %v606 = vunpack.c.l.s4 1966171168
      %v607 = vunpack.c.0.s8 %v606
      %v608 = vlaneseq
      %v609 = vshrl.u32 %v608, 7
      %v610 = vsub.s32 %v607, %v609
      %v611 = vrot.slane %v603, %v610
      %v613 = vunpack.c.l.s4 1966171168
      %v614 = vunpack.c.0.s8 %v613
      %v615 = vlaneseq
      %v616 = vshrl.u32 %v615, 7
      %v617 = vsub.s32 %v614, %v616
      %v618 = vrot.slane %v604, %v617
      %v653 = vunpack.c.l.b16 %v564
      %v654 = vunpack.c.l.b16 %v565
      %v655 = vunpack.c.l.b16 %v566
      %v656 = vunpack.c.l.b16 %v567
      %v657 = vunpack.c.l.b16 %v568
      %v658 = vunpack.c.l.b16 %v569
      %v659 = vunpack.c.l.b16 %v570
      %v660 = vunpack.c.l.b16 %v571
      %v661 = vunpack.c.l.b16 %v572
      %v662 = vunpack.c.l.b16 %v573
      %v663 = vunpack.c.l.b16 %v574
      %v664 = vunpack.c.l.b16 %v575
      %v665 = vunpack.c.l.b16 %v576
      %v666 = vunpack.c.l.b16 %v577
      %v667 = vunpack.c.l.b16 %v578
      %v668 = vunpack.c.l.b16 %v579
      %v669 = vunpack.c.l.b16 %v580
      %v670 = vunpack.c.l.b16 %v581
      %v671 = vunpack.c.l.b16 %v582
      %v672 = vunpack.c.l.b16 %v583
      %v673 = vunpack.c.l.b16 %v584
      %v674 = vunpack.c.l.b16 %v585
      %v675 = vunpack.c.l.b16 %v586
      %v676 = vunpack.c.l.b16 %v587
      %v677 = vunpack.c.l.b16 %v588
      %v678 = vunpack.c.l.b16 %v589
      %v679 = vunpack.c.l.b16 %v590
      %v680 = vunpack.c.l.b16 %v591
      %v681 = vunpack.c.l.b16 %v592
      %v682 = vunpack.c.l.b16 %v593
      %v683 = vunpack.c.l.b16 %v594
      %v684 = vunpack.c.l.b16 %v595
      %v685 = vpack.c.b16 %v654, %v653
      %v686 = vpack.c.b16 %v656, %v655
      %v687 = vpack.c.b16 %v658, %v657
      %v688 = vpack.c.b16 %v660, %v659
      %v689 = vpack.c.b16 %v662, %v661
      %v690 = vpack.c.b16 %v664, %v663
      %v691 = vpack.c.b16 %v666, %v665
      %v692 = vpack.c.b16 %v668, %v667
      %v693 = vpack.c.b16 %v670, %v669
      %v694 = vpack.c.b16 %v672, %v671
      %v695 = vpack.c.b16 %v674, %v673
      %v696 = vpack.c.b16 %v676, %v675
      %v697 = vpack.c.b16 %v678, %v677
      %v698 = vpack.c.b16 %v680, %v679
      %v699 = vpack.c.b16 %v682, %v681
      %v700 = vpack.c.b16 %v684, %v683
      %717 = vmatprep.subr.bf16.mxu0 0
      %718 = vmatpush1.bf16.msra.mxu0 %v685
      %719 = vmatprep.subr.bf16.mxu0 0
      %720 = vmatpush1.bf16.msra.mxu0 %v686
      %721 = vmatprep.subr.bf16.mxu0 0
      %722 = vmatpush1.bf16.msra.mxu0 %v687
      %723 = vmatprep.subr.bf16.mxu0 0
      %724 = vmatpush1.bf16.msra.mxu0 %v688
      %725 = vmatprep.subr.bf16.mxu0 0
      %726 = vmatpush1.bf16.msra.mxu0 %v689
      %727 = vmatprep.subr.bf16.mxu0 0
      %728 = vmatpush1.bf16.msra.mxu0 %v690
      %729 = vmatprep.subr.bf16.mxu0 0
      %730 = vmatpush1.bf16.msra.mxu0 %v691
      %731 = vmatprep.subr.bf16.mxu0 0
      %732 = vmatpush1.bf16.msra.mxu0 %v692
      %733 = vmatprep.subr.bf16.mxu0 0
      %734 = vmatpush1.bf16.msra.mxu0 %v693
      %735 = vmatprep.subr.bf16.mxu0 0
      %736 = vmatpush1.bf16.msra.mxu0 %v694
      %737 = vmatprep.subr.bf16.mxu0 0
      %738 = vmatpush1.bf16.msra.mxu0 %v695
      %739 = vmatprep.subr.bf16.mxu0 0
      %740 = vmatpush1.bf16.msra.mxu0 %v696
      %741 = vmatprep.subr.bf16.mxu0 0
      %742 = vmatpush1.bf16.msra.mxu0 %v697
      %743 = vmatprep.subr.bf16.mxu0 0
      %744 = vmatpush1.bf16.msra.mxu0 %v698
      %745 = vmatprep.subr.bf16.mxu0 0
      %746 = vmatpush1.bf16.msra.mxu0 %v699
      %747 = vmatprep.subr.bf16.mxu0 0
      %748 = vmatpush1.bf16.msra.mxu0 %v700
      %749 = vmatprep.mubr.bf16.mxu0 %v618
      %750 = vmatmul.mubr.bf16.gmra.mrb[0].mxu0 %v611
      %v751 = vpop.f32.mrb[0].mxu0
      %v752 = vadd.f32 0.0, %v751
      %v753 = vpop.f32.mrb[0].mxu0
      %v754 = vpop.f32.mrb[0].mxu0
      %v755 = vpop.f32.mrb[0].mxu0
      %756 = vdwg.mxu0
      %v757 = vadd.f32 %v554, %v752
      %v758 = vld [vmem:[%s561] sm:$0x3]
      %s759 = scalar_lea.vmem %s1, 384
      %v760 = vld [vmem:[%s759] sm:$0xf]
      %v761 = vld [vmem:[%s759 + $0x4] sm:$0xf]
      %v762 = vld [vmem:[%s759 + $0x8] sm:$0xf]
      %v763 = vld [vmem:[%s759 + $0xc] sm:$0xf]
      %v764 = vld [vmem:[%s759 + $0x10] sm:$0xf]
      %v765 = vld [vmem:[%s759 + $0x14] sm:$0xf]
      %v766 = vld [vmem:[%s759 + $0x18] sm:$0xf]
      %v767 = vld [vmem:[%s759 + $0x1c] sm:$0xf]
      %v768 = vld [vmem:[%s759 + $0x20] sm:$0xf]
      %v769 = vld [vmem:[%s759 + $0x24] sm:$0xf]
      %v770 = vld [vmem:[%s759 + $0x28] sm:$0xf]
      %v771 = vld [vmem:[%s759 + $0x2c] sm:$0xf]
      %v772 = vld [vmem:[%s759 + $0x30] sm:$0xf]
      %v773 = vld [vmem:[%s759 + $0x34] sm:$0xf]
      %v774 = vld [vmem:[%s759 + $0x38] sm:$0xf]
      %v775 = vld [vmem:[%s759 + $0x3c] sm:$0xf]
      %v776 = vld [vmem:[%s759 + $0x40] sm:$0xf]
      %v777 = vld [vmem:[%s759 + $0x44] sm:$0xf]
      %v778 = vld [vmem:[%s759 + $0x48] sm:$0xf]
      %v779 = vld [vmem:[%s759 + $0x4c] sm:$0xf]
      %v780 = vld [vmem:[%s759 + $0x50] sm:$0xf]
      %v781 = vld [vmem:[%s759 + $0x54] sm:$0xf]
      %v782 = vld [vmem:[%s759 + $0x58] sm:$0xf]
      %v783 = vld [vmem:[%s759 + $0x5c] sm:$0xf]
      %v784 = vld [vmem:[%s759 + $0x60] sm:$0xf]
      %v785 = vld [vmem:[%s759 + $0x64] sm:$0xf]
      %v786 = vld [vmem:[%s759 + $0x68] sm:$0xf]
      %v787 = vld [vmem:[%s759 + $0x6c] sm:$0xf]
      %v788 = vld [vmem:[%s759 + $0x70] sm:$0xf]
      %v789 = vld [vmem:[%s759 + $0x74] sm:$0xf]
      %v790 = vld [vmem:[%s759 + $0x78] sm:$0xf]
      %v791 = vld [vmem:[%s759 + $0x7c] sm:$0xf]
      %v794 = vunpack.c.l.s4 1966171168
      %v795 = vunpack.c.0.s8 %v794
      %v796 = vlaneseq
      %v797 = vshrl.u32 %v796, 7
      %v798 = vsub.s32 %v795, %v797
      %v799 = vrot.slane %v758, %v798
      %v800 = vcombine.high %v799, %v799
      %v802 = vunpack.c.l.s4 1966171168
      %v803 = vunpack.c.0.s8 %v802
      %v804 = vlaneseq
      %v805 = vshrl.u32 %v804, 7
      %v806 = vsub.s32 %v803, %v805
      %v807 = vrot.slane %v799, %v806
      %v809 = vunpack.c.l.s4 1966171168
      %v810 = vunpack.c.0.s8 %v809
      %v811 = vlaneseq
      %v812 = vshrl.u32 %v811, 7
      %v813 = vsub.s32 %v810, %v812
      %v814 = vrot.slane %v800, %v813
      %v816 = vshrl.u32 %v807, 16
      %v819 = vshrl.u32 %v814, 16
      %v855 = vunpack.c.l.b16 %v760
      %v856 = vunpack.c.l.b16 %v761
      %v857 = vunpack.c.l.b16 %v762
      %v858 = vunpack.c.l.b16 %v763
      %v859 = vunpack.c.l.b16 %v764
      %v860 = vunpack.c.l.b16 %v765
      %v861 = vunpack.c.l.b16 %v766
      %v862 = vunpack.c.l.b16 %v767
      %v863 = vunpack.c.l.b16 %v768
      %v864 = vunpack.c.l.b16 %v769
      %v865 = vunpack.c.l.b16 %v770
      %v866 = vunpack.c.l.b16 %v771
      %v867 = vunpack.c.l.b16 %v772
      %v868 = vunpack.c.l.b16 %v773
      %v869 = vunpack.c.l.b16 %v774
      %v870 = vunpack.c.l.b16 %v775
      %v871 = vunpack.c.l.b16 %v776
      %v872 = vunpack.c.l.b16 %v777
      %v873 = vunpack.c.l.b16 %v778
      %v874 = vunpack.c.l.b16 %v779
      %v875 = vunpack.c.l.b16 %v780
      %v876 = vunpack.c.l.b16 %v781
      %v877 = vunpack.c.l.b16 %v782
      %v878 = vunpack.c.l.b16 %v783
      %v879 = vunpack.c.l.b16 %v784
      %v880 = vunpack.c.l.b16 %v785
      %v881 = vunpack.c.l.b16 %v786
      %v882 = vunpack.c.l.b16 %v787
      %v883 = vunpack.c.l.b16 %v788
      %v884 = vunpack.c.l.b16 %v789
      %v885 = vunpack.c.l.b16 %v790
      %v886 = vunpack.c.l.b16 %v791
      %v887 = vpack.c.b16 %v856, %v855
      %v888 = vpack.c.b16 %v858, %v857
      %v889 = vpack.c.b16 %v860, %v859
      %v890 = vpack.c.b16 %v862, %v861
      %v891 = vpack.c.b16 %v864, %v863
      %v892 = vpack.c.b16 %v866, %v865
      %v893 = vpack.c.b16 %v868, %v867
      %v894 = vpack.c.b16 %v870, %v869
      %v895 = vpack.c.b16 %v872, %v871
      %v896 = vpack.c.b16 %v874, %v873
      %v897 = vpack.c.b16 %v876, %v875
      %v898 = vpack.c.b16 %v878, %v877
      %v899 = vpack.c.b16 %v880, %v879
      %v900 = vpack.c.b16 %v882, %v881
      %v901 = vpack.c.b16 %v884, %v883
      %v902 = vpack.c.b16 %v886, %v885
      %919 = vmatprep.subr.bf16.mxu0 0
      %920 = vmatpush1.bf16.msra.mxu0 %v887
      %921 = vmatprep.subr.bf16.mxu0 0
      %922 = vmatpush1.bf16.msra.mxu0 %v888
      %923 = vmatprep.subr.bf16.mxu0 0
      %924 = vmatpush1.bf16.msra.mxu0 %v889
      %925 = vmatprep.subr.bf16.mxu0 0
      %926 = vmatpush1.bf16.msra.mxu0 %v890
      %927 = vmatprep.subr.bf16.mxu0 0
      %928 = vmatpush1.bf16.msra.mxu0 %v891
      %929 = vmatprep.subr.bf16.mxu0 0
      %930 = vmatpush1.bf16.msra.mxu0 %v892
      %931 = vmatprep.subr.bf16.mxu0 0
      %932 = vmatpush1.bf16.msra.mxu0 %v893
      %933 = vmatprep.subr.bf16.mxu0 0
      %934 = vmatpush1.bf16.msra.mxu0 %v894
      %935 = vmatprep.subr.bf16.mxu0 0
      %936 = vmatpush1.bf16.msra.mxu0 %v895
      %937 = vmatprep.subr.bf16.mxu0 0
      %938 = vmatpush1.bf16.msra.mxu0 %v896
      %939 = vmatprep.subr.bf16.mxu0 0
      %940 = vmatpush1.bf16.msra.mxu0 %v897
      %941 = vmatprep.subr.bf16.mxu0 0
      %942 = vmatpush1.bf16.msra.mxu0 %v898
      %943 = vmatprep.subr.bf16.mxu0 0
      %944 = vmatpush1.bf16.msra.mxu0 %v899
      %945 = vmatprep.subr.bf16.mxu0 0
      %946 = vmatpush1.bf16.msra.mxu0 %v900
      %947 = vmatprep.subr.bf16.mxu0 0
      %948 = vmatpush1.bf16.msra.mxu0 %v901
      %949 = vmatprep.subr.bf16.mxu0 0
      %950 = vmatpush1.bf16.msra.mxu0 %v902
      %951 = vmatprep.mubr.bf16.mxu0 %v819
      %952 = vmatmul.mubr.bf16.gmra.mrb[0].mxu0 %v816
      %v953 = vpop.f32.mrb[0].mxu0
      %v954 = vadd.f32 0.0, %v953
      %v955 = vpop.f32.mrb[0].mxu0
      %v956 = vpop.f32.mrb[0].mxu0
      %v957 = vpop.f32.mrb[0].mxu0
      %958 = vdwg.mxu0
      %v959 = vadd.f32 %v757, %v954
      %v960 = vadd.f32 %v959, %v185
      %v961 = vmax.f32 %v960, 0.0
      %v962 = vpack.c.bf16 %v961, %v961
      %vm963 = vcmask 1040384
      %vm964 = vsmask.f32 256
      %vm965 = vmand %vm963, %vm964
      %v966 = vld [vmem:[%s183] sm:$0x1]
      %v967 = vsel %vm965, %v962, %v966
      %968 = vst [vmem:[%s183] sm:$0x1] %v967
      %p969 = scmp.lt.s32.totalorder %s18, 1
      %s970 = scalar_select %p969, %s18, 1
      %p971 = scmp.lt.s32.totalorder %s19, 0
      %s972 = scalar_select %p971, %s19, 0
      %s973 = sadd.s32 %s972, %s970
      %s974 = scalar_lea.vmem %s3, %s973
      // Predicated region
      $region33: #{_lambda_.7} parent=31 // pred_check
        %p975 = pneg %p114
      $region34: #{_lambda_.7} parent=31 // pred_check_branch
        %977 = sbr.rel (%p975) target = $region36
      $region35: #{_lambda_.7} parent=31 // pred_region
        _
      $region36: #{_lambda_.7} parent=31 // pred_fallthru
        _
    $region32: #{_lambda_.7} parent=5 // pred_fallthru
      _
    %p978 = scmp.le.s32.totalorder 2, %s9
    // Predicated region
    $region37: #{_lambda_.7} parent=5 // pred_check
      %p979 = pneg %p978
    $region38: #{_lambda_.7} parent=5 // pred_check_branch
      %981 = sbr.rel (%p979) target = $region40
    $region39: #{_lambda_.7} parent=5 // pred_region
      %s982 = ssub.s32 %s9, 2
      // Predicated region
      $region41: #{_lambda_.7} parent=39 // pred_check
        %p983 = pneg %p120
      $region42: #{_lambda_.7} parent=39 // pred_check_branch
        %985 = sbr.rel (%p983) target = $region44
      $region43: #{_lambda_.7} parent=39 // pred_region
        %p986 = scmp.lt.s32.totalorder %s20, 1
        %s987 = scalar_select %p986, %s20, 1
        %p988 = scmp.lt.s32.totalorder %s21, 0
        %s989 = scalar_select %p988, %s21, 0
        %s990 = sadd.s32 %s989, %s987
        %s991 = scalar_lea.vmem %s3, %s990
      $region44: #{_lambda_.7} parent=39 // pred_fallthru
        _
    $region40: #{_lambda_.7} parent=5 // pred_fallthru
      _
  $region6: #{_lambda_.7} parent=0 // loop_footer
    %s13 = sadd.s32 1, %s9
  $region7: #{_lambda_.7} parent=0 // loop_footer_branch
    %8 = sbr.rel target = $region3
  $region8: #{_lambda_.7} parent=0 // loop_exit
    _

</llo_original>
